<compile_context>
chip_gen: v7x
topology: tpu7x:2x2x1
jax: 0.10.0
libtpu: 0.0.40
codegen_flags: <defaults>
</compile_context>

<pallas_src>
import functools

import jax
import jax.numpy as jnp
from jax.experimental import pallas as pl
from jax.experimental.pallas import tpu as pltpu


def _round_up(x, m):
    return (x + m - 1) // m * m


def _auto_time_chunk():
    # Bigger chunks amortize grid dispatch; v7x (64 MiB VMEM/TC) prefers smaller
    # chunks so the f32 gx scratch + single-buffered weights fit with headroom.
    try:
        vmem = getattr(pltpu.get_tpu_info(), "vmem_capacity_bytes", 128 * 2 ** 20)
    except Exception:
        vmem = 128 * 2 ** 20
    return 16 if vmem >= 100 * 2 ** 20 else 8


def _sigmoid_tanh(x):
    # sigmoid(x) == 0.5 * tanh(0.5 x) + 0.5 : one EUP transcendental per element
    # (vs exp + reciprocal), f32 in / f32 out.
    return 0.5 * jnp.tanh(0.5 * x) + 0.5


# ----------------------------------------------------------------------------
# Pallas kernel: one chunk of Tc LSTM timesteps per grid iteration.
# The x-projection (x @ W_ih^T + b) is computed in-kernel into a VMEM scratch
# (off the serial dependence chain); the recurrence then does four per-gate
# h @ W_hh^T matmuls per step and the elementwise cell update.
# ----------------------------------------------------------------------------
def _lstm_chunk_kernel(maxlen_ref,                                      # scalar prefetch (SMEM)
                       emb_ref, len_ref, wih_ref, whh_ref, bias_ref,    # inputs
                       h0_ref, c0_ref,
                       out_ref, hn_ref, cn_ref,                         # outputs
                       gx_scr, h_scr, c_scr,                            # VMEM scratch
                       *, Tc, TB, Hp):
    tchunk = pl.program_id(1)

    # Initialize the recurrent state at the first time chunk of each batch tile.
    @pl.when(tchunk == 0)
    def _():
        h_scr[...] = h0_ref[...]
        c_scr[...] = c0_ref[...]

    t0 = tchunk * Tc
    max_len = maxlen_ref[0]

    # Chunks entirely past the longest sequence: zero output, frozen state,
    # no MXU/EUP work at all.
    @pl.when(t0 >= max_len)
    def _():
        out_ref[...] = jnp.zeros(out_ref.shape, out_ref.dtype)

    @pl.when(t0 < max_len)
    def _():
        # ---- fused input projection for the whole chunk (independent of h,
        #      so it sits off the serial critical path) ------------------------
        w_ih = wih_ref[...]                      # (Hp, 4Hp) bf16, VMEM resident
        bias = bias_ref[...]                     # (1, 4Hp)  f32
        for tt in range(Tc):
            gx_scr[tt] = jnp.dot(emb_ref[tt], w_ih,
                                 preferred_element_type=jnp.float32) + bias

        # ---- recurrence ------------------------------------------------------
        lengths = len_ref[...]                   # (TB, 1) int32
        # Per-gate slabs of W_hh^T (128-lane aligned), hoisted out of the loop.
        w_hh_i = whh_ref[:, 0 * Hp:1 * Hp]
        w_hh_f = whh_ref[:, 1 * Hp:2 * Hp]
        w_hh_g = whh_ref[:, 2 * Hp:3 * Hp]
        w_hh_o = whh_ref[:, 3 * Hp:4 * Hp]

        h = h_scr[...]                           # (TB, Hp) f32
        c = c_scr[...]                           # (TB, Hp) f32

        # Fully unrolled inner loop over the Tc timesteps of this chunk
        # (static indices keep every load/store tile-aligned).
        for tt in range(Tc):
            h_b = h.astype(jnp.bfloat16)

            # Four (TB,Hp)x(Hp,Hp) bf16 matmuls with f32 accumulation; each
            # gate's activation is consumed right after its matmul so the EUP
            # starts on gate i while the MXU streams f/g/o, and the live f32
            # intermediate stays (TB,Hp) instead of (TB,4Hp).
            pre_i = gx_scr[tt, :, 0 * Hp:1 * Hp] + jnp.dot(
                h_b, w_hh_i, preferred_element_type=jnp.float32)
            i_g = _sigmoid_tanh(pre_i)
            pre_f = gx_scr[tt, :, 1 * Hp:2 * Hp] + jnp.dot(
                h_b, w_hh_f, preferred_element_type=jnp.float32)
            f_g = _sigmoid_tanh(pre_f)
            pre_g = gx_scr[tt, :, 2 * Hp:3 * Hp] + jnp.dot(
                h_b, w_hh_g, preferred_element_type=jnp.float32)
            g_g = jnp.tanh(pre_g)
            pre_o = gx_scr[tt, :, 3 * Hp:4 * Hp] + jnp.dot(
                h_b, w_hh_o, preferred_element_type=jnp.float32)
            o_g = _sigmoid_tanh(pre_o)

            c_new = f_g * c + i_g * g_g
            h_new = o_g * jnp.tanh(c_new)

            # packed-sequence semantics: state freezes once t >= length[b],
            # padded output positions are exactly zero.  One explicit broadcast
            # per step (JAX does not CSE broadcast_in_dim).
            valid = jnp.broadcast_to((t0 + tt) < lengths, (TB, Hp))
            h = jnp.where(valid, h_new, h)
            c = jnp.where(valid, c_new, c)
            out_ref[tt] = jnp.where(valid, h_new, 0.0).astype(out_ref.dtype)

        h_scr[...] = h
        c_scr[...] = c

    @pl.when(tchunk == pl.num_programs(1) - 1)
    def _():
        hn_ref[...] = h_scr[...].astype(hn_ref.dtype)
        cn_ref[...] = c_scr[...].astype(cn_ref.dtype)


def lstm_recurrence_pallas(emb_tbh, lengths, w_ih_t, w_hh_t, bias, h0, c0,
                           *, time_chunk=8):
    """emb_tbh: (Tp, Bp, Hp) bf16 time-major embeddings, lengths: (Bp,) int32,
    w_ih_t / w_hh_t: (Hp, 4Hp) bf16, bias: (1, 4Hp) f32, h0/c0: (Bp, Hp) f32.
    Returns (out (Tp,Bp,Hp) f32, h_n (Bp,Hp), c_n (Bp,Hp))."""
    Tp, Bp, Hp = emb_tbh.shape
    Tc = time_chunk
    assert Tp % Tc == 0 and Bp % 8 == 0 and Hp % 128 == 0

    # Megacore (v7x): split the batch across the two TensorCores only when it is
    # big enough to be throughput-bound; tiny batches are latency-bound on the
    # serial matmul->EUP chain and a single tile is better (also optimal for the
    # single-TC v5e/v6e).
    TB = Bp // 2 if (Bp >= 128 and (Bp // 2) % 8 == 0) else Bp
    n_b = Bp // TB
    n_t = Tp // Tc

    len_2d = lengths.reshape(Bp, 1).astype(jnp.int32)
    max_len = jnp.max(lengths).astype(jnp.int32).reshape(1)

    # Grid-(near-)constant inputs: single-buffer them (no point double-buffering
    # blocks whose index never / rarely changes; saves W-sized VMEM on v7x).
    single = pl.Buffered(1)

    grid_spec = pltpu.PrefetchScalarGridSpec(
        num_scalar_prefetch=1,                 # max_len -> SMEM
        grid=(n_b, n_t),
        in_specs=[
            pl.BlockSpec((Tc, TB, Hp), lambda b, t, ml: (t, b, 0)),      # emb chunk (bf16)
            pl.BlockSpec((TB, 1), lambda b, t, ml: (b, 0),
                         pipeline_mode=single),                          # lengths
            pl.BlockSpec((Hp, 4 * Hp), lambda b, t, ml: (0, 0),
                         pipeline_mode=single),                          # W_ih^T (bf16)
            pl.BlockSpec((Hp, 4 * Hp), lambda b, t, ml: (0, 0),
                         pipeline_mode=single),                          # W_hh^T (bf16)
            pl.BlockSpec((1, 4 * Hp), lambda b, t, ml: (0, 0),
                         pipeline_mode=single),                          # bias (f32)
            pl.BlockSpec((TB, Hp), lambda b, t, ml: (b, 0),
                         pipeline_mode=single),                          # h0
            pl.BlockSpec((TB, Hp), lambda b, t, ml: (b, 0),
                         pipeline_mode=single),                          # c0
        ],
        out_specs=[
            pl.BlockSpec((Tc, TB, Hp), lambda b, t, ml: (t, b, 0)),      # per-step output
            pl.BlockSpec((TB, Hp), lambda b, t, ml: (b, 0)),             # h_n
            pl.BlockSpec((TB, Hp), lambda b, t, ml: (b, 0)),             # c_n
        ],
        scratch_shapes=[
            pltpu.VMEM((Tc, TB, 4 * Hp), jnp.float32),   # in-kernel gates_x chunk
            pltpu.VMEM((TB, Hp), jnp.float32),           # h state
            pltpu.VMEM((TB, Hp), jnp.float32),           # c state
        ],
    )

    # TODO(synk): out could be emitted bf16 if downstream accepts it (halves the
    # writeback stream); kept f32 to match the PyTorch module's output dtype.
    out_shapes = (
        jax.ShapeDtypeStruct((Tp, Bp, Hp), jnp.float32),
        jax.ShapeDtypeStruct((Bp, Hp), jnp.float32),
        jax.ShapeDtypeStruct((Bp, Hp), jnp.float32),
    )

    fn = pl.pallas_call(
        functools.partial(_lstm_chunk_kernel, Tc=Tc, TB=TB, Hp=Hp),
        grid_spec=grid_spec,
        out_shape=out_shapes,
        compiler_params=pltpu.CompilerParams(
            dimension_semantics=("parallel", "arbitrary"),   # batch || , time sequential
            vmem_limit_bytes=48 * 1024 * 1024,               # headroom under v7x's 64 MiB
        ),
    )
    return fn(max_len, emb_tbh, len_2d, w_ih_t, w_hh_t, bias, h0, c0)


# ----------------------------------------------------------------------------
# Weight padding helpers: pad each gate's H columns to Hp separately so gate
# slabs stay 128-lane aligned, then transpose to (Hp, 4Hp).
# ----------------------------------------------------------------------------
def _pad_gate_weight(w, H, Hp):
    """w: (4H, H) PyTorch LSTM weight, gate order [i|f|g|o] -> (Hp, 4Hp)."""
    w4 = w.reshape(4, H, H)
    w4 = jnp.pad(w4, ((0, 0), (0, Hp - H), (0, Hp - H)))
    return jnp.transpose(w4, (2, 0, 1)).reshape(Hp, 4 * Hp)


def _pad_gate_bias(b, H, Hp):
    return jnp.pad(b.reshape(4, H), ((0, 0), (0, Hp - H))).reshape(4 * Hp)


# ----------------------------------------------------------------------------
# EncoderLSTM wrapper (embedding + dropout glue in plain JAX)
# ----------------------------------------------------------------------------
class EncoderLSTMPallas:
    def __init__(self, input_size, hidden_size, forget_bias=1.0,
                 init_weight=0.1, seed=0, time_chunk=None):
        self.hidden_size = hidden_size
        self.time_chunk = time_chunk if time_chunk is not None else _auto_time_chunk()
        H = hidden_size
        k = jax.random.PRNGKey(seed)
        k_emb, k_wih, k_whh, k_bih, k_bhh = jax.random.split(k, 5)

        # nn.Embedding(input_size, hidden_size): N(0, 1)
        self.embedding = jax.random.normal(k_emb, (input_size, H), jnp.float32)

        # nn.LSTM(hidden, hidden) params, gate order [i|f|g|o]
        def unif(key, shape, a):
            return jax.random.uniform(key, shape, jnp.float32, -a, a)

        self.w_ih = unif(k_wih, (4 * H, H), init_weight)
        self.w_hh = unif(k_whh, (4 * H, H), init_weight)
        bound = 1.0 / (H ** 0.5)
        b_ih = unif(k_bih, (4 * H,), bound)
        b_hh = unif(k_bhh, (4 * H,), bound)
        # The PyTorch module fills forget_bias into BOTH biases (effective 2x),
        # mirrored here intentionally.
        b_ih = b_ih.at[H:2 * H].set(forget_bias)
        b_hh = b_hh.at[H:2 * H].set(forget_bias)
        self.b_ih, self.b_hh = b_ih, b_hh

        # Pre-pad / pre-transpose / bf16-cast weights + embedding table once.
        Hp = _round_up(H, 128)
        self._Hp = Hp
        self._emb_p = jnp.pad(self.embedding, ((0, 0), (0, Hp - H))).astype(jnp.bfloat16)
        self._w_ih_p = _pad_gate_weight(self.w_ih, H, Hp).astype(jnp.bfloat16)
        self._w_hh_p = _pad_gate_weight(self.w_hh, H, Hp).astype(jnp.bfloat16)
        self._bias_p = _pad_gate_bias(self.b_ih + self.b_hh, H, Hp).reshape(1, 4 * Hp)

    def __call__(self, tokens, lengths, prev_h, prev_c):
        """tokens: (B, T) int32 padded with 0, lengths: (B,) int32,
        prev_h/prev_c: (1, B, H).  Returns (output (B,T,H), h_n (1,B,H), c_n (1,B,H))."""
        B, T = tokens.shape
        H, Hp = self.hidden_size, self._Hp
        Tc = self.time_chunk
        Bp = _round_up(B, 8)
        Tp = _round_up(T, Tc)

        # Pad tokens (cheap int32), not the big activation; padded positions use
        # embedding row 0 but are fully masked by lengths in the kernel.
        tok_p = jnp.pad(tokens.astype(jnp.int32), ((0, Bp - B), (0, Tp - T)))
        # Embedding gather produced directly time-major, already Hp-padded, bf16.
        emb_t = jnp.take(self._emb_p, tok_p.T, axis=0)        # (Tp, Bp, Hp) bf16
        # TODO(synk): nn.Dropout is identity here (p=0 / eval mode); no RNG mask applied.

        lengths_p = jnp.pad(lengths.astype(jnp.int32), (0, Bp - B))
        h0 = jnp.pad(prev_h[0].astype(jnp.float32), ((0, Bp - B), (0, Hp - H)))
        c0 = jnp.pad(prev_c[0].astype(jnp.float32), ((0, Bp - B), (0, Hp - H)))

        out_tbh, h_n, c_n = lstm_recurrence_pallas(
            emb_t, lengths_p, self._w_ih_p, self._w_hh_p, self._bias_p,
            h0, c0, time_chunk=Tc)

        # Slice off padding; one transpose to honor the module's batch_first output.
        # TODO(synk): have downstream consume time-major (T,B,H) to skip this transpose.
        output = jnp.transpose(out_tbh[:T, :B, :H], (1, 0, 2))
        return output, h_n[:B, :H][None], c_n[:B, :H][None]


# ----------------------------------------------------------------------------
# Pure-JAX reference (lax.scan) for verification.  Matmul operands are rounded
# through bf16 to mirror the MXU path (f32 accumulation), so tolerances stay tight.
# ----------------------------------------------------------------------------
def lstm_reference(x_tbh, lengths, w_ih, w_hh, b_ih, b_hh, h0, c0):
    rt = lambda a: a.astype(jnp.bfloat16).astype(jnp.float32)
    wih_t = rt(w_ih).T
    whh_t = rt(w_hh).T
    T, B, H = x_tbh.shape

    def step(carry, inp):
        h, c = carry
        x, t = inp
        gates = rt(x) @ wih_t + rt(h) @ whh_t + b_ih + b_hh
        i = jax.nn.sigmoid(gates[:, 0 * H:1 * H])
        f = jax.nn.sigmoid(gates[:, 1 * H:2 * H])
        g = jnp.tanh(gates[:, 2 * H:3 * H])
        o = jax.nn.sigmoid(gates[:, 3 * H:4 * H])
        c_new = f * c + i * g
        h_new = o * jnp.tanh(c_new)
        valid = (t < lengths)[:, None]
        h2 = jnp.where(valid, h_new, h)
        c2 = jnp.where(valid, c_new, c)
        return (h2, c2), jnp.where(valid, h_new, 0.0)

    (h_n, c_n), outs = jax.lax.scan(step, (h0, c0),
                                    (x_tbh, jnp.arange(T, dtype=jnp.int32)))
    return outs, h_n, c_n


if __name__ == "__main__":
    VOCAB, H, B, T = 50, 32, 2, 8

    enc = EncoderLSTMPallas(VOCAB, H, forget_bias=1.0, init_weight=0.1, seed=0)

    key = jax.random.PRNGKey(0)
    k_tok, _ = jax.random.split(key)
    tokens = jax.random.randint(k_tok, (B, T), 1, VOCAB, dtype=jnp.int32)
    lengths = jnp.array([8, 5], dtype=jnp.int32)  # descending (packed convention)
    # zero out padding positions (padding_value=0)
    pad_mask = jnp.arange(T)[None, :] < lengths[:, None]
    tokens = jnp.where(pad_mask, tokens, 0)

    prev_h = jnp.zeros((1, B, H), jnp.float32)   # initHidden
    prev_c = jnp.zeros((1, B, H), jnp.float32)

    output, h_n, c_n = enc(tokens, lengths, prev_h, prev_c)
    jax.block_until_ready((output, h_n, c_n))

    # verify against the pure-JAX reference
    emb = jnp.take(enc.embedding, tokens, axis=0)            # (B, T, H)
    x_tbh = jnp.transpose(emb, (1, 0, 2))
    ref_out, ref_h, ref_c = lstm_reference(
        x_tbh, lengths, enc.w_ih, enc.w_hh, enc.b_ih, enc.b_hh,
        prev_h[0], prev_c[0])
    ref_out = jnp.transpose(ref_out, (1, 0, 2))

    assert jnp.allclose(output, ref_out, atol=5e-3, rtol=5e-3), \
        float(jnp.max(jnp.abs(output - ref_out)))
    assert jnp.allclose(h_n[0], ref_h, atol=5e-3, rtol=5e-3)
    assert jnp.allclose(c_n[0], ref_c, atol=5e-3, rtol=5e-3)

    print("KERNEL_OK")
</pallas_src>

<mosaic_0001>
module attributes {stable_mosaic.version = 11 : i64} {
  func.func @_lstm_chunk_kernel(%arg0: i32, %arg1: i32, %arg2: memref<1xi32, #tpu.memory_space<smem>>, %arg3: memref<16x8x128xbf16, #tpu.memory_space<vmem>>, %arg4: memref<8x1xi32, #tpu.memory_space<vmem>>, %arg5: memref<128x512xbf16, #tpu.memory_space<vmem>>, %arg6: memref<128x512xbf16, #tpu.memory_space<vmem>>, %arg7: memref<1x512xf32, #tpu.memory_space<vmem>>, %arg8: memref<8x128xf32, #tpu.memory_space<vmem>>, %arg9: memref<8x128xf32, #tpu.memory_space<vmem>>, %arg10: memref<16x8x128xf32, #tpu.memory_space<vmem>>, %arg11: memref<8x128xf32, #tpu.memory_space<vmem>>, %arg12: memref<8x128xf32, #tpu.memory_space<vmem>>, %arg13: memref<16x8x512xf32, #tpu.memory_space<vmem>>, %arg14: memref<8x128xf32, #tpu.memory_space<vmem>>, %arg15: memref<8x128xf32, #tpu.memory_space<vmem>>) attributes {dimension_semantics = [#tpu.dimension_semantics<parallel>, #tpu.dimension_semantics<arbitrary>], iteration_bounds = array<i64: 1, 1>, scalar_prefetch = 1 : i64, scratch_operands = 3 : i64, tpu.core_type = #tpu.core_type<tc>, window_params = [{transform_indices = @transform_0, window_bounds = array<i64: 16, 8, 128>}, {pipeline_mode = #tpu.pipeline_mode<synchronous>, transform_indices = @transform_1, window_bounds = array<i64: 8, 1>}, {pipeline_mode = #tpu.pipeline_mode<synchronous>, transform_indices = @transform_2, window_bounds = array<i64: 128, 512>}, {pipeline_mode = #tpu.pipeline_mode<synchronous>, transform_indices = @transform_3, window_bounds = array<i64: 128, 512>}, {pipeline_mode = #tpu.pipeline_mode<synchronous>, transform_indices = @transform_4, window_bounds = array<i64: 1, 512>}, {pipeline_mode = #tpu.pipeline_mode<synchronous>, transform_indices = @transform_5, window_bounds = array<i64: 8, 128>}, {pipeline_mode = #tpu.pipeline_mode<synchronous>, transform_indices = @transform_6, window_bounds = array<i64: 8, 128>}, {transform_indices = @transform_7, window_bounds = array<i64: 16, 8, 128>}, {transform_indices = @transform_8, window_bounds = array<i64: 8, 128>}, {transform_indices = @transform_9, window_bounds = array<i64: 8, 128>}]} {
    %c0_i32 = arith.constant 0 : i32
    %0 = arith.cmpi eq, %arg1, %c0_i32 : i32
    %1 = arith.extui %0 : i1 to i32
    %c0_i32_0 = arith.constant 0 : i32
    %2 = arith.cmpi ne, %1, %c0_i32_0 : i32
    scf.if %2 {
      %c0_5 = arith.constant 0 : index
      %c0_6 = arith.constant 0 : index
      %14 = vector.load %arg8[%c0_5, %c0_6] : memref<8x128xf32, #tpu.memory_space<vmem>>, vector<8x128xf32>
      %c0_7 = arith.constant 0 : index
      %c0_8 = arith.constant 0 : index
      %15 = vector.load %arg14[%c0_7, %c0_8] : memref<8x128xf32, #tpu.memory_space<vmem>>, vector<8x128xf32>
      tpu.vector_store %arg14[%c0_7, %c0_8], %14 {strides = array<i32>} : memref<8x128xf32, #tpu.memory_space<vmem>>, vector<8x128xf32>,
      %c0_9 = arith.constant 0 : index
      %c0_10 = arith.constant 0 : index
      %16 = vector.load %arg9[%c0_9, %c0_10] : memref<8x128xf32, #tpu.memory_space<vmem>>, vector<8x128xf32>
      %c0_11 = arith.constant 0 : index
      %c0_12 = arith.constant 0 : index
      %17 = vector.load %arg15[%c0_11, %c0_12] : memref<8x128xf32, #tpu.memory_space<vmem>>, vector<8x128xf32>
      tpu.vector_store %arg15[%c0_11, %c0_12], %16 {strides = array<i32>} : memref<8x128xf32, #tpu.memory_space<vmem>>, vector<8x128xf32>,
    } else {
    }
    %c16_i32 = arith.constant 16 : i32
    %3 = arith.muli %arg1, %c16_i32 : i32
    %c0 = arith.constant 0 : index
    %4 = memref.load %arg2[%c0] : memref<1xi32, #tpu.memory_space<smem>>
    %5 = arith.cmpi sge, %3, %4 : i32
    %6 = arith.extui %5 : i1 to i32
    %c0_i32_1 = arith.constant 0 : i32
    %7 = arith.cmpi ne, %6, %c0_i32_1 : i32
    scf.if %7 {
      %cst = arith.constant 0.000000e+00 : f32
      %14 = vector.broadcast %cst : f32 to vector<16x8x128xf32>
      %c0_5 = arith.constant 0 : index
      %c0_6 = arith.constant 0 : index
      %c0_7 = arith.constant 0 : index
      %15 = vector.load %arg10[%c0_5, %c0_6, %c0_7] : memref<16x8x128xf32, #tpu.memory_space<vmem>>, vector<16x8x128xf32>
      tpu.vector_store %arg10[%c0_5, %c0_6, %c0_7], %14 {strides = array<i32>} : memref<16x8x128xf32, #tpu.memory_space<vmem>>, vector<16x8x128xf32>,
    } else {
    }
    %8 = arith.cmpi slt, %3, %4 : i32
    %9 = arith.extui %8 : i1 to i32
    %c0_i32_2 = arith.constant 0 : i32
    %10 = arith.cmpi ne, %9, %c0_i32_2 : i32
    scf.if %10 {
      %c0_5 = arith.constant 0 : index
      %c0_6 = arith.constant 0 : index
      %14 = vector.load %arg5[%c0_5, %c0_6] : memref<128x512xbf16, #tpu.memory_space<vmem>>, vector<128x512xbf16>
      %c0_7 = arith.constant 0 : index
      %c0_8 = arith.constant 0 : index
      %15 = vector.load %arg7[%c0_7, %c0_8] : memref<1x512xf32, #tpu.memory_space<vmem>>, vector<1x512xf32>
      %c0_9 = arith.constant 0 : index
      %c0_10 = arith.constant 0 : index
      %c0_11 = arith.constant 0 : index
      %16 = vector.load %arg3[%c0_9, %c0_10, %c0_11] : memref<16x8x128xbf16, #tpu.memory_space<vmem>>, vector<1x8x128xbf16>
      %17 = vector.shape_cast %16 : vector<1x8x128xbf16> to vector<8x128xbf16>
      %cst = arith.constant dense<0.000000e+00> : vector<8x512xf32>
      %18 = tpu.matmul %17, %14, %cst {dimension_numbers = #tpu.dot_dimension_numbers<[1], [0], [0], [1], [0, 0, 1, 1], [], []>} : vector<8x128xbf16>, vector<128x512xbf16>, vector<8x512xf32> -> vector<8x512xf32>
      %19 = vector.broadcast %15 : vector<1x512xf32> to vector<8x512xf32>
      %20 = arith.addf %18, %19 : vector<8x512xf32>
      %c0_12 = arith.constant 0 : index
      %c0_13 = arith.constant 0 : index
      %c0_14 = arith.constant 0 : index
      %21 = vector.load %arg13[%c0_12, %c0_13, %c0_14] : memref<16x8x512xf32, #tpu.memory_space<vmem>>, vector<1x8x512xf32>
      %22 = vector.shape_cast %21 : vector<1x8x512xf32> to vector<8x512xf32>
      %23 = vector.shape_cast %20 : vector<8x512xf32> to vector<1x8x512xf32>
      tpu.vector_store %arg13[%c0_12, %c0_13, %c0_14], %23 {strides = array<i32>} : memref<16x8x512xf32, #tpu.memory_space<vmem>>, vector<1x8x512xf32>,
      %c1 = arith.constant 1 : index
      %c0_15 = arith.constant 0 : index
      %c0_16 = arith.constant 0 : index
      %24 = vector.load %arg3[%c1, %c0_15, %c0_16] : memref<16x8x128xbf16, #tpu.memory_space<vmem>>, vector<1x8x128xbf16>
      %25 = vector.shape_cast %24 : vector<1x8x128xbf16> to vector<8x128xbf16>
      %cst_17 = arith.constant dense<0.000000e+00> : vector<8x512xf32>
      %26 = tpu.matmul %25, %14, %cst_17 {dimension_numbers = #tpu.dot_dimension_numbers<[1], [0], [0], [1], [0, 0, 1, 1], [], []>} : vector<8x128xbf16>, vector<128x512xbf16>, vector<8x512xf32> -> vector<8x512xf32>
      %27 = vector.broadcast %15 : vector<1x512xf32> to vector<8x512xf32>
      %28 = arith.addf %26, %27 : vector<8x512xf32>
      %c1_18 = arith.constant 1 : index
      %c0_19 = arith.constant 0 : index
      %c0_20 = arith.constant 0 : index
      %29 = vector.load %arg13[%c1_18, %c0_19, %c0_20] : memref<16x8x512xf32, #tpu.memory_space<vmem>>, vector<1x8x512xf32>
      %30 = vector.shape_cast %29 : vector<1x8x512xf32> to vector<8x512xf32>
      %31 = vector.shape_cast %28 : vector<8x512xf32> to vector<1x8x512xf32>
      tpu.vector_store %arg13[%c1_18, %c0_19, %c0_20], %31 {strides = array<i32>} : memref<16x8x512xf32, #tpu.memory_space<vmem>>, vector<1x8x512xf32>,
      %c2 = arith.constant 2 : index
      %c0_21 = arith.constant 0 : index
      %c0_22 = arith.constant 0 : index
      %32 = vector.load %arg3[%c2, %c0_21, %c0_22] : memref<16x8x128xbf16, #tpu.memory_space<vmem>>, vector<1x8x128xbf16>
      %33 = vector.shape_cast %32 : vector<1x8x128xbf16> to vector<8x128xbf16>
      %cst_23 = arith.constant dense<0.000000e+00> : vector<8x512xf32>
      %34 = tpu.matmul %33, %14, %cst_23 {dimension_numbers = #tpu.dot_dimension_numbers<[1], [0], [0], [1], [0, 0, 1, 1], [], []>} : vector<8x128xbf16>, vector<128x512xbf16>, vector<8x512xf32> -> vector<8x512xf32>
      %35 = vector.broadcast %15 : vector<1x512xf32> to vector<8x512xf32>
      %36 = arith.addf %34, %35 : vector<8x512xf32>
      %c2_24 = arith.constant 2 : index
      %c0_25 = arith.constant 0 : index
      %c0_26 = arith.constant 0 : index
      %37 = vector.load %arg13[%c2_24, %c0_25, %c0_26] : memref<16x8x512xf32, #tpu.memory_space<vmem>>, vector<1x8x512xf32>
      %38 = vector.shape_cast %37 : vector<1x8x512xf32> to vector<8x512xf32>
      %39 = vector.shape_cast %36 : vector<8x512xf32> to vector<1x8x512xf32>
      tpu.vector_store %arg13[%c2_24, %c0_25, %c0_26], %39 {strides = array<i32>} : memref<16x8x512xf32, #tpu.memory_space<vmem>>, vector<1x8x512xf32>,
      %c3 = arith.constant 3 : index
      %c0_27 = arith.constant 0 : index
      %c0_28 = arith.constant 0 : index
      %40 = vector.load %arg3[%c3, %c0_27, %c0_28] : memref<16x8x128xbf16, #tpu.memory_space<vmem>>, vector<1x8x128xbf16>
      %41 = vector.shape_cast %40 : vector<1x8x128xbf16> to vector<8x128xbf16>
      %cst_29 = arith.constant dense<0.000000e+00> : vector<8x512xf32>
      %42 = tpu.matmul %41, %14, %cst_29 {dimension_numbers = #tpu.dot_dimension_numbers<[1], [0], [0], [1], [0, 0, 1, 1], [], []>} : vector<8x128xbf16>, vector<128x512xbf16>, vector<8x512xf32> -> vector<8x512xf32>
      %43 = vector.broadcast %15 : vector<1x512xf32> to vector<8x512xf32>
      %44 = arith.addf %42, %43 : vector<8x512xf32>
      %c3_30 = arith.constant 3 : index
      %c0_31 = arith.constant 0 : index
      %c0_32 = arith.constant 0 : index
      %45 = vector.load %arg13[%c3_30, %c0_31, %c0_32] : memref<16x8x512xf32, #tpu.memory_space<vmem>>, vector<1x8x512xf32>
      %46 = vector.shape_cast %45 : vector<1x8x512xf32> to vector<8x512xf32>
      %47 = vector.shape_cast %44 : vector<8x512xf32> to vector<1x8x512xf32>
      tpu.vector_store %arg13[%c3_30, %c0_31, %c0_32], %47 {strides = array<i32>} : memref<16x8x512xf32, #tpu.memory_space<vmem>>, vector<1x8x512xf32>,
      %c4 = arith.constant 4 : index
      %c0_33 = arith.constant 0 : index
      %c0_34 = arith.constant 0 : index
      %48 = vector.load %arg3[%c4, %c0_33, %c0_34] : memref<16x8x128xbf16, #tpu.memory_space<vmem>>, vector<1x8x128xbf16>
      %49 = vector.shape_cast %48 : vector<1x8x128xbf16> to vector<8x128xbf16>
      %cst_35 = arith.constant dense<0.000000e+00> : vector<8x512xf32>
      %50 = tpu.matmul %49, %14, %cst_35 {dimension_numbers = #tpu.dot_dimension_numbers<[1], [0], [0], [1], [0, 0, 1, 1], [], []>} : vector<8x128xbf16>, vector<128x512xbf16>, vector<8x512xf32> -> vector<8x512xf32>
      %51 = vector.broadcast %15 : vector<1x512xf32> to vector<8x512xf32>
      %52 = arith.addf %50, %51 : vector<8x512xf32>
      %c4_36 = arith.constant 4 : index
      %c0_37 = arith.constant 0 : index
      %c0_38 = arith.constant 0 : index
      %53 = vector.load %arg13[%c4_36, %c0_37, %c0_38] : memref<16x8x512xf32, #tpu.memory_space<vmem>>, vector<1x8x512xf32>
      %54 = vector.shape_cast %53 : vector<1x8x512xf32> to vector<8x512xf32>
      %55 = vector.shape_cast %52 : vector<8x512xf32> to vector<1x8x512xf32>
      tpu.vector_store %arg13[%c4_36, %c0_37, %c0_38], %55 {strides = array<i32>} : memref<16x8x512xf32, #tpu.memory_space<vmem>>, vector<1x8x512xf32>,
      %c5 = arith.constant 5 : index
      %c0_39 = arith.constant 0 : index
      %c0_40 = arith.constant 0 : index
      %56 = vector.load %arg3[%c5, %c0_39, %c0_40] : memref<16x8x128xbf16, #tpu.memory_space<vmem>>, vector<1x8x128xbf16>
      %57 = vector.shape_cast %56 : vector<1x8x128xbf16> to vector<8x128xbf16>
      %cst_41 = arith.constant dense<0.000000e+00> : vector<8x512xf32>
      %58 = tpu.matmul %57, %14, %cst_41 {dimension_numbers = #tpu.dot_dimension_numbers<[1], [0], [0], [1], [0, 0, 1, 1], [], []>} : vector<8x128xbf16>, vector<128x512xbf16>, vector<8x512xf32> -> vector<8x512xf32>
      %59 = vector.broadcast %15 : vector<1x512xf32> to vector<8x512xf32>
      %60 = arith.addf %58, %59 : vector<8x512xf32>
      %c5_42 = arith.constant 5 : index
      %c0_43 = arith.constant 0 : index
      %c0_44 = arith.constant 0 : index
      %61 = vector.load %arg13[%c5_42, %c0_43, %c0_44] : memref<16x8x512xf32, #tpu.memory_space<vmem>>, vector<1x8x512xf32>
      %62 = vector.shape_cast %61 : vector<1x8x512xf32> to vector<8x512xf32>
      %63 = vector.shape_cast %60 : vector<8x512xf32> to vector<1x8x512xf32>
      tpu.vector_store %arg13[%c5_42, %c0_43, %c0_44], %63 {strides = array<i32>} : memref<16x8x512xf32, #tpu.memory_space<vmem>>, vector<1x8x512xf32>,
      %c6 = arith.constant 6 : index
      %c0_45 = arith.constant 0 : index
      %c0_46 = arith.constant 0 : index
      %64 = vector.load %arg3[%c6, %c0_45, %c0_46] : memref<16x8x128xbf16, #tpu.memory_space<vmem>>, vector<1x8x128xbf16>
      %65 = vector.shape_cast %64 : vector<1x8x128xbf16> to vector<8x128xbf16>
      %cst_47 = arith.constant dense<0.000000e+00> : vector<8x512xf32>
      %66 = tpu.matmul %65, %14, %cst_47 {dimension_numbers = #tpu.dot_dimension_numbers<[1], [0], [0], [1], [0, 0, 1, 1], [], []>} : vector<8x128xbf16>, vector<128x512xbf16>, vector<8x512xf32> -> vector<8x512xf32>
      %67 = vector.broadcast %15 : vector<1x512xf32> to vector<8x512xf32>
      %68 = arith.addf %66, %67 : vector<8x512xf32>
      %c6_48 = arith.constant 6 : index
      %c0_49 = arith.constant 0 : index
      %c0_50 = arith.constant 0 : index
      %69 = vector.load %arg13[%c6_48, %c0_49, %c0_50] : memref<16x8x512xf32, #tpu.memory_space<vmem>>, vector<1x8x512xf32>
      %70 = vector.shape_cast %69 : vector<1x8x512xf32> to vector<8x512xf32>
      %71 = vector.shape_cast %68 : vector<8x512xf32> to vector<1x8x512xf32>
      tpu.vector_store %arg13[%c6_48, %c0_49, %c0_50], %71 {strides = array<i32>} : memref<16x8x512xf32, #tpu.memory_space<vmem>>, vector<1x8x512xf32>,
      %c7 = arith.constant 7 : index
      %c0_51 = arith.constant 0 : index
      %c0_52 = arith.constant 0 : index
      %72 = vector.load %arg3[%c7, %c0_51, %c0_52] : memref<16x8x128xbf16, #tpu.memory_space<vmem>>, vector<1x8x128xbf16>
      %73 = vector.shape_cast %72 : vector<1x8x128xbf16> to vector<8x128xbf16>
      %cst_53 = arith.constant dense<0.000000e+00> : vector<8x512xf32>
      %74 = tpu.matmul %73, %14, %cst_53 {dimension_numbers = #tpu.dot_dimension_numbers<[1], [0], [0], [1], [0, 0, 1, 1], [], []>} : vector<8x128xbf16>, vector<128x512xbf16>, vector<8x512xf32> -> vector<8x512xf32>
      %75 = vector.broadcast %15 : vector<1x512xf32> to vector<8x512xf32>
      %76 = arith.addf %74, %75 : vector<8x512xf32>
      %c7_54 = arith.constant 7 : index
      %c0_55 = arith.constant 0 : index
      %c0_56 = arith.constant 0 : index
      %77 = vector.load %arg13[%c7_54, %c0_55, %c0_56] : memref<16x8x512xf32, #tpu.memory_space<vmem>>, vector<1x8x512xf32>
      %78 = vector.shape_cast %77 : vector<1x8x512xf32> to vector<8x512xf32>
      %79 = vector.shape_cast %76 : vector<8x512xf32> to vector<1x8x512xf32>
      tpu.vector_store %arg13[%c7_54, %c0_55, %c0_56], %79 {strides = array<i32>} : memref<16x8x512xf32, #tpu.memory_space<vmem>>, vector<1x8x512xf32>,
      %c8 = arith.constant 8 : index
      %c0_57 = arith.constant 0 : index
      %c0_58 = arith.constant 0 : index
      %80 = vector.load %arg3[%c8, %c0_57, %c0_58] : memref<16x8x128xbf16, #tpu.memory_space<vmem>>, vector<1x8x128xbf16>
      %81 = vector.shape_cast %80 : vector<1x8x128xbf16> to vector<8x128xbf16>
      %cst_59 = arith.constant dense<0.000000e+00> : vector<8x512xf32>
      %82 = tpu.matmul %81, %14, %cst_59 {dimension_numbers = #tpu.dot_dimension_numbers<[1], [0], [0], [1], [0, 0, 1, 1], [], []>} : vector<8x128xbf16>, vector<128x512xbf16>, vector<8x512xf32> -> vector<8x512xf32>
      %83 = vector.broadcast %15 : vector<1x512xf32> to vector<8x512xf32>
      %84 = arith.addf %82, %83 : vector<8x512xf32>
      %c8_60 = arith.constant 8 : index
      %c0_61 = arith.constant 0 : index
      %c0_62 = arith.constant 0 : index
      %85 = vector.load %arg13[%c8_60, %c0_61, %c0_62] : memref<16x8x512xf32, #tpu.memory_space<vmem>>, vector<1x8x512xf32>
      %86 = vector.shape_cast %85 : vector<1x8x512xf32> to vector<8x512xf32>
      %87 = vector.shape_cast %84 : vector<8x512xf32> to vector<1x8x512xf32>
      tpu.vector_store %arg13[%c8_60, %c0_61, %c0_62], %87 {strides = array<i32>} : memref<16x8x512xf32, #tpu.memory_space<vmem>>, vector<1x8x512xf32>,
      %c9 = arith.constant 9 : index
      %c0_63 = arith.constant 0 : index
      %c0_64 = arith.constant 0 : index
      %88 = vector.load %arg3[%c9, %c0_63, %c0_64] : memref<16x8x128xbf16, #tpu.memory_space<vmem>>, vector<1x8x128xbf16>
      %89 = vector.shape_cast %88 : vector<1x8x128xbf16> to vector<8x128xbf16>
      %cst_65 = arith.constant dense<0.000000e+00> : vector<8x512xf32>
      %90 = tpu.matmul %89, %14, %cst_65 {dimension_numbers = #tpu.dot_dimension_numbers<[1], [0], [0], [1], [0, 0, 1, 1], [], []>} : vector<8x128xbf16>, vector<128x512xbf16>, vector<8x512xf32> -> vector<8x512xf32>
      %91 = vector.broadcast %15 : vector<1x512xf32> to vector<8x512xf32>
      %92 = arith.addf %90, %91 : vector<8x512xf32>
      %c9_66 = arith.constant 9 : index
      %c0_67 = arith.constant 0 : index
      %c0_68 = arith.constant 0 : index
      %93 = vector.load %arg13[%c9_66, %c0_67, %c0_68] : memref<16x8x512xf32, #tpu.memory_space<vmem>>, vector<1x8x512xf32>
      %94 = vector.shape_cast %93 : vector<1x8x512xf32> to vector<8x512xf32>
      %95 = vector.shape_cast %92 : vector<8x512xf32> to vector<1x8x512xf32>
      tpu.vector_store %arg13[%c9_66, %c0_67, %c0_68], %95 {strides = array<i32>} : memref<16x8x512xf32, #tpu.memory_space<vmem>>, vector<1x8x512xf32>,
      %c10 = arith.constant 10 : index
      %c0_69 = arith.constant 0 : index
      %c0_70 = arith.constant 0 : index
      %96 = vector.load %arg3[%c10, %c0_69, %c0_70] : memref<16x8x128xbf16, #tpu.memory_space<vmem>>, vector<1x8x128xbf16>
      %97 = vector.shape_cast %96 : vector<1x8x128xbf16> to vector<8x128xbf16>
      %cst_71 = arith.constant dense<0.000000e+00> : vector<8x512xf32>
      %98 = tpu.matmul %97, %14, %cst_71 {dimension_numbers = #tpu.dot_dimension_numbers<[1], [0], [0], [1], [0, 0, 1, 1], [], []>} : vector<8x128xbf16>, vector<128x512xbf16>, vector<8x512xf32> -> vector<8x512xf32>
      %99 = vector.broadcast %15 : vector<1x512xf32> to vector<8x512xf32>
      %100 = arith.addf %98, %99 : vector<8x512xf32>
      %c10_72 = arith.constant 10 : index
      %c0_73 = arith.constant 0 : index
      %c0_74 = arith.constant 0 : index
      %101 = vector.load %arg13[%c10_72, %c0_73, %c0_74] : memref<16x8x512xf32, #tpu.memory_space<vmem>>, vector<1x8x512xf32>
      %102 = vector.shape_cast %101 : vector<1x8x512xf32> to vector<8x512xf32>
      %103 = vector.shape_cast %100 : vector<8x512xf32> to vector<1x8x512xf32>
      tpu.vector_store %arg13[%c10_72, %c0_73, %c0_74], %103 {strides = array<i32>} : memref<16x8x512xf32, #tpu.memory_space<vmem>>, vector<1x8x512xf32>,
      %c11 = arith.constant 11 : index
      %c0_75 = arith.constant 0 : index
      %c0_76 = arith.constant 0 : index
      %104 = vector.load %arg3[%c11, %c0_75, %c0_76] : memref<16x8x128xbf16, #tpu.memory_space<vmem>>, vector<1x8x128xbf16>
      %105 = vector.shape_cast %104 : vector<1x8x128xbf16> to vector<8x128xbf16>
      %cst_77 = arith.constant dense<0.000000e+00> : vector<8x512xf32>
      %106 = tpu.matmul %105, %14, %cst_77 {dimension_numbers = #tpu.dot_dimension_numbers<[1], [0], [0], [1], [0, 0, 1, 1], [], []>} : vector<8x128xbf16>, vector<128x512xbf16>, vector<8x512xf32> -> vector<8x512xf32>
      %107 = vector.broadcast %15 : vector<1x512xf32> to vector<8x512xf32>
      %108 = arith.addf %106, %107 : vector<8x512xf32>
      %c11_78 = arith.constant 11 : index
      %c0_79 = arith.constant 0 : index
      %c0_80 = arith.constant 0 : index
      %109 = vector.load %arg13[%c11_78, %c0_79, %c0_80] : memref<16x8x512xf32, #tpu.memory_space<vmem>>, vector<1x8x512xf32>
      %110 = vector.shape_cast %109 : vector<1x8x512xf32> to vector<8x512xf32>
      %111 = vector.shape_cast %108 : vector<8x512xf32> to vector<1x8x512xf32>
      tpu.vector_store %arg13[%c11_78, %c0_79, %c0_80], %111 {strides = array<i32>} : memref<16x8x512xf32, #tpu.memory_space<vmem>>, vector<1x8x512xf32>,
      %c12 = arith.constant 12 : index
      %c0_81 = arith.constant 0 : index
      %c0_82 = arith.constant 0 : index
      %112 = vector.load %arg3[%c12, %c0_81, %c0_82] : memref<16x8x128xbf16, #tpu.memory_space<vmem>>, vector<1x8x128xbf16>
      %113 = vector.shape_cast %112 : vector<1x8x128xbf16> to vector<8x128xbf16>
      %cst_83 = arith.constant dense<0.000000e+00> : vector<8x512xf32>
      %114 = tpu.matmul %113, %14, %cst_83 {dimension_numbers = #tpu.dot_dimension_numbers<[1], [0], [0], [1], [0, 0, 1, 1], [], []>} : vector<8x128xbf16>, vector<128x512xbf16>, vector<8x512xf32> -> vector<8x512xf32>
      %115 = vector.broadcast %15 : vector<1x512xf32> to vector<8x512xf32>
      %116 = arith.addf %114, %115 : vector<8x512xf32>
      %c12_84 = arith.constant 12 : index
      %c0_85 = arith.constant 0 : index
      %c0_86 = arith.constant 0 : index
      %117 = vector.load %arg13[%c12_84, %c0_85, %c0_86] : memref<16x8x512xf32, #tpu.memory_space<vmem>>, vector<1x8x512xf32>
      %118 = vector.shape_cast %117 : vector<1x8x512xf32> to vector<8x512xf32>
      %119 = vector.shape_cast %116 : vector<8x512xf32> to vector<1x8x512xf32>
      tpu.vector_store %arg13[%c12_84, %c0_85, %c0_86], %119 {strides = array<i32>} : memref<16x8x512xf32, #tpu.memory_space<vmem>>, vector<1x8x512xf32>,
      %c13 = arith.constant 13 : index
      %c0_87 = arith.constant 0 : index
      %c0_88 = arith.constant 0 : index
      %120 = vector.load %arg3[%c13, %c0_87, %c0_88] : memref<16x8x128xbf16, #tpu.memory_space<vmem>>, vector<1x8x128xbf16>
      %121 = vector.shape_cast %120 : vector<1x8x128xbf16> to vector<8x128xbf16>
      %cst_89 = arith.constant dense<0.000000e+00> : vector<8x512xf32>
      %122 = tpu.matmul %121, %14, %cst_89 {dimension_numbers = #tpu.dot_dimension_numbers<[1], [0], [0], [1], [0, 0, 1, 1], [], []>} : vector<8x128xbf16>, vector<128x512xbf16>, vector<8x512xf32> -> vector<8x512xf32>
      %123 = vector.broadcast %15 : vector<1x512xf32> to vector<8x512xf32>
      %124 = arith.addf %122, %123 : vector<8x512xf32>
      %c13_90 = arith.constant 13 : index
      %c0_91 = arith.constant 0 : index
      %c0_92 = arith.constant 0 : index
      %125 = vector.load %arg13[%c13_90, %c0_91, %c0_92] : memref<16x8x512xf32, #tpu.memory_space<vmem>>, vector<1x8x512xf32>
      %126 = vector.shape_cast %125 : vector<1x8x512xf32> to vector<8x512xf32>
      %127 = vector.shape_cast %124 : vector<8x512xf32> to vector<1x8x512xf32>
      tpu.vector_store %arg13[%c13_90, %c0_91, %c0_92], %127 {strides = array<i32>} : memref<16x8x512xf32, #tpu.memory_space<vmem>>, vector<1x8x512xf32>,
      %c14 = arith.constant 14 : index
      %c0_93 = arith.constant 0 : index
      %c0_94 = arith.constant 0 : index
      %128 = vector.load %arg3[%c14, %c0_93, %c0_94] : memref<16x8x128xbf16, #tpu.memory_space<vmem>>, vector<1x8x128xbf16>
      %129 = vector.shape_cast %128 : vector<1x8x128xbf16> to vector<8x128xbf16>
      %cst_95 = arith.constant dense<0.000000e+00> : vector<8x512xf32>
      %130 = tpu.matmul %129, %14, %cst_95 {dimension_numbers = #tpu.dot_dimension_numbers<[1], [0], [0], [1], [0, 0, 1, 1], [], []>} : vector<8x128xbf16>, vector<128x512xbf16>, vector<8x512xf32> -> vector<8x512xf32>
      %131 = vector.broadcast %15 : vector<1x512xf32> to vector<8x512xf32>
      %132 = arith.addf %130, %131 : vector<8x512xf32>
      %c14_96 = arith.constant 14 : index
      %c0_97 = arith.constant 0 : index
      %c0_98 = arith.constant 0 : index
      %133 = vector.load %arg13[%c14_96, %c0_97, %c0_98] : memref<16x8x512xf32, #tpu.memory_space<vmem>>, vector<1x8x512xf32>
      %134 = vector.shape_cast %133 : vector<1x8x512xf32> to vector<8x512xf32>
      %135 = vector.shape_cast %132 : vector<8x512xf32> to vector<1x8x512xf32>
      tpu.vector_store %arg13[%c14_96, %c0_97, %c0_98], %135 {strides = array<i32>} : memref<16x8x512xf32, #tpu.memory_space<vmem>>, vector<1x8x512xf32>,
      %c15 = arith.constant 15 : index
      %c0_99 = arith.constant 0 : index
      %c0_100 = arith.constant 0 : index
      %136 = vector.load %arg3[%c15, %c0_99, %c0_100] : memref<16x8x128xbf16, #tpu.memory_space<vmem>>, vector<1x8x128xbf16>
      %137 = vector.shape_cast %136 : vector<1x8x128xbf16> to vector<8x128xbf16>
      %cst_101 = arith.constant dense<0.000000e+00> : vector<8x512xf32>
      %138 = tpu.matmul %137, %14, %cst_101 {dimension_numbers = #tpu.dot_dimension_numbers<[1], [0], [0], [1], [0, 0, 1, 1], [], []>} : vector<8x128xbf16>, vector<128x512xbf16>, vector<8x512xf32> -> vector<8x512xf32>
      %139 = vector.broadcast %15 : vector<1x512xf32> to vector<8x512xf32>
      %140 = arith.addf %138, %139 : vector<8x512xf32>
      %c15_102 = arith.constant 15 : index
      %c0_103 = arith.constant 0 : index
      %c0_104 = arith.constant 0 : index
      %141 = vector.load %arg13[%c15_102, %c0_103, %c0_104] : memref<16x8x512xf32, #tpu.memory_space<vmem>>, vector<1x8x512xf32>
      %142 = vector.shape_cast %141 : vector<1x8x512xf32> to vector<8x512xf32>
      %143 = vector.shape_cast %140 : vector<8x512xf32> to vector<1x8x512xf32>
      tpu.vector_store %arg13[%c15_102, %c0_103, %c0_104], %143 {strides = array<i32>} : memref<16x8x512xf32, #tpu.memory_space<vmem>>, vector<1x8x512xf32>,
      %c0_105 = arith.constant 0 : index
      %c0_106 = arith.constant 0 : index
      %144 = vector.load %arg4[%c0_105, %c0_106] : memref<8x1xi32, #tpu.memory_space<vmem>>, vector<8x1xi32>
      %c0_107 = arith.constant 0 : index
      %c0_108 = arith.constant 0 : index
      %145 = vector.load %arg6[%c0_107, %c0_108] : memref<128x512xbf16, #tpu.memory_space<vmem>>, vector<128x128xbf16>
      %c0_109 = arith.constant 0 : index
      %c128 = arith.constant 128 : index
      %146 = vector.load %arg6[%c0_109, %c128] : memref<128x512xbf16, #tpu.memory_space<vmem>>, vector<128x128xbf16>
      %c0_110 = arith.constant 0 : index
      %c256 = arith.constant 256 : index
      %147 = vector.load %arg6[%c0_110, %c256] : memref<128x512xbf16, #tpu.memory_space<vmem>>, vector<128x128xbf16>
      %c0_111 = arith.constant 0 : index
      %c384 = arith.constant 384 : index
      %148 = vector.load %arg6[%c0_111, %c384] : memref<128x512xbf16, #tpu.memory_space<vmem>>, vector<128x128xbf16>
      %c0_112 = arith.constant 0 : index
      %c0_113 = arith.constant 0 : index
      %149 = vector.load %arg14[%c0_112, %c0_113] : memref<8x128xf32, #tpu.memory_space<vmem>>, vector<8x128xf32>
      %c0_114 = arith.constant 0 : index
      %c0_115 = arith.constant 0 : index
      %150 = vector.load %arg15[%c0_114, %c0_115] : memref<8x128xf32, #tpu.memory_space<vmem>>, vector<8x128xf32>
      %151 = arith.truncf %149 : vector<8x128xf32> to vector<8x128xbf16>
      %c0_116 = arith.constant 0 : index
      %c0_117 = arith.constant 0 : index
      %c0_118 = arith.constant 0 : index
      %152 = vector.load %arg13[%c0_116, %c0_117, %c0_118] : memref<16x8x512xf32, #tpu.memory_space<vmem>>, vector<1x8x128xf32>
      %153 = vector.shape_cast %152 : vector<1x8x128xf32> to vector<8x128xf32>
      %cst_119 = arith.constant dense<0.000000e+00> : vector<8x128xf32>
      %154 = tpu.matmul %151, %145, %cst_119 {dimension_numbers = #tpu.dot_dimension_numbers<[1], [0], [0], [1], [0, 0, 1, 1], [], []>} : vector<8x128xbf16>, vector<128x128xbf16>, vector<8x128xf32> -> vector<8x128xf32>
      %155 = arith.addf %153, %154 : vector<8x128xf32>
      %cst_120 = arith.constant 5.000000e-01 : f32
      %156 = vector.broadcast %cst_120 : f32 to vector<8x128xf32>
      %157 = arith.mulf %156, %155 : vector<8x128xf32>
      %158 = math.tanh %157 : vector<8x128xf32>
      %cst_121 = arith.constant 5.000000e-01 : f32
      %159 = vector.broadcast %cst_121 : f32 to vector<8x128xf32>
      %160 = arith.mulf %159, %158 : vector<8x128xf32>
      %cst_122 = arith.constant 5.000000e-01 : f32
      %161 = vector.broadcast %cst_122 : f32 to vector<8x128xf32>
      %162 = arith.addf %160, %161 : vector<8x128xf32>
      %c0_123 = arith.constant 0 : index
      %c0_124 = arith.constant 0 : index
      %c128_125 = arith.constant 128 : index
      %163 = vector.load %arg13[%c0_123, %c0_124, %c128_125] : memref<16x8x512xf32, #tpu.memory_space<vmem>>, vector<1x8x128xf32>
      %164 = vector.shape_cast %163 : vector<1x8x128xf32> to vector<8x128xf32>
      %cst_126 = arith.constant dense<0.000000e+00> : vector<8x128xf32>
      %165 = tpu.matmul %151, %146, %cst_126 {dimension_numbers = #tpu.dot_dimension_numbers<[1], [0], [0], [1], [0, 0, 1, 1], [], []>} : vector<8x128xbf16>, vector<128x128xbf16>, vector<8x128xf32> -> vector<8x128xf32>
      %166 = arith.addf %164, %165 : vector<8x128xf32>
      %cst_127 = arith.constant 5.000000e-01 : f32
      %167 = vector.broadcast %cst_127 : f32 to vector<8x128xf32>
      %168 = arith.mulf %167, %166 : vector<8x128xf32>
      %169 = math.tanh %168 : vector<8x128xf32>
      %cst_128 = arith.constant 5.000000e-01 : f32
      %170 = vector.broadcast %cst_128 : f32 to vector<8x128xf32>
      %171 = arith.mulf %170, %169 : vector<8x128xf32>
      %cst_129 = arith.constant 5.000000e-01 : f32
      %172 = vector.broadcast %cst_129 : f32 to vector<8x128xf32>
      %173 = arith.addf %171, %172 : vector<8x128xf32>
      %c0_130 = arith.constant 0 : index
      %c0_131 = arith.constant 0 : index
      %c256_132 = arith.constant 256 : index
      %174 = vector.load %arg13[%c0_130, %c0_131, %c256_132] : memref<16x8x512xf32, #tpu.memory_space<vmem>>, vector<1x8x128xf32>
      %175 = vector.shape_cast %174 : vector<1x8x128xf32> to vector<8x128xf32>
      %cst_133 = arith.constant dense<0.000000e+00> : vector<8x128xf32>
      %176 = tpu.matmul %151, %147, %cst_133 {dimension_numbers = #tpu.dot_dimension_numbers<[1], [0], [0], [1], [0, 0, 1, 1], [], []>} : vector<8x128xbf16>, vector<128x128xbf16>, vector<8x128xf32> -> vector<8x128xf32>
      %177 = arith.addf %175, %176 : vector<8x128xf32>
      %178 = math.tanh %177 : vector<8x128xf32>
      %c0_134 = arith.constant 0 : index
      %c0_135 = arith.constant 0 : index
      %c384_136 = arith.constant 384 : index
      %179 = vector.load %arg13[%c0_134, %c0_135, %c384_136] : memref<16x8x512xf32, #tpu.memory_space<vmem>>, vector<1x8x128xf32>
      %180 = vector.shape_cast %179 : vector<1x8x128xf32> to vector<8x128xf32>
      %cst_137 = arith.constant dense<0.000000e+00> : vector<8x128xf32>
      %181 = tpu.matmul %151, %148, %cst_137 {dimension_numbers = #tpu.dot_dimension_numbers<[1], [0], [0], [1], [0, 0, 1, 1], [], []>} : vector<8x128xbf16>, vector<128x128xbf16>, vector<8x128xf32> -> vector<8x128xf32>
      %182 = arith.addf %180, %181 : vector<8x128xf32>
      %cst_138 = arith.constant 5.000000e-01 : f32
      %183 = vector.broadcast %cst_138 : f32 to vector<8x128xf32>
      %184 = arith.mulf %183, %182 : vector<8x128xf32>
      %185 = math.tanh %184 : vector<8x128xf32>
      %cst_139 = arith.constant 5.000000e-01 : f32
      %186 = vector.broadcast %cst_139 : f32 to vector<8x128xf32>
      %187 = arith.mulf %186, %185 : vector<8x128xf32>
      %cst_140 = arith.constant 5.000000e-01 : f32
      %188 = vector.broadcast %cst_140 : f32 to vector<8x128xf32>
      %189 = arith.addf %187, %188 : vector<8x128xf32>
      %190 = arith.mulf %173, %150 : vector<8x128xf32>
      %191 = arith.mulf %162, %178 : vector<8x128xf32>
      %192 = arith.addf %190, %191 : vector<8x128xf32>
      %193 = math.tanh %192 : vector<8x128xf32>
      %194 = arith.mulf %189, %193 : vector<8x128xf32>
      %c0_i32_141 = arith.constant 0 : i32
      %195 = arith.addi %3, %c0_i32_141 : i32
      %196 = vector.broadcast %195 : i32 to vector<8x1xi32>
      %197 = arith.cmpi slt, %196, %144 : vector<8x1xi32>
      %198 = vector.shape_cast %197 : vector<8x1xi1> to vector<8x1xi1>
      %199 = vector.broadcast %198 : vector<8x1xi1> to vector<8x128xi1>
      %200 = arith.select %199, %194, %149 : vector<8x128xi1>, vector<8x128xf32>
      %201 = arith.select %199, %192, %150 : vector<8x128xi1>, vector<8x128xf32>
      %cst_142 = arith.constant 0.000000e+00 : f32
      %202 = vector.broadcast %cst_142 : f32 to vector<8x128xf32>
      %203 = arith.select %199, %194, %202 : vector<8x128xi1>, vector<8x128xf32>
      %c0_143 = arith.constant 0 : index
      %c0_144 = arith.constant 0 : index
      %c0_145 = arith.constant 0 : index
      %204 = vector.load %arg10[%c0_143, %c0_144, %c0_145] : memref<16x8x128xf32, #tpu.memory_space<vmem>>, vector<1x8x128xf32>
      %205 = vector.shape_cast %204 : vector<1x8x128xf32> to vector<8x128xf32>
      %206 = vector.shape_cast %203 : vector<8x128xf32> to vector<1x8x128xf32>
      tpu.vector_store %arg10[%c0_143, %c0_144, %c0_145], %206 {strides = array<i32>} : memref<16x8x128xf32, #tpu.memory_space<vmem>>, vector<1x8x128xf32>,
      %207 = arith.truncf %200 : vector<8x128xf32> to vector<8x128xbf16>
      %c1_146 = arith.constant 1 : index
      %c0_147 = arith.constant 0 : index
      %c0_148 = arith.constant 0 : index
      %208 = vector.load %arg13[%c1_146, %c0_147, %c0_148] : memref<16x8x512xf32, #tpu.memory_space<vmem>>, vector<1x8x128xf32>
      %209 = vector.shape_cast %208 : vector<1x8x128xf32> to vector<8x128xf32>
      %cst_149 = arith.constant dense<0.000000e+00> : vector<8x128xf32>
      %210 = tpu.matmul %207, %145, %cst_149 {dimension_numbers = #tpu.dot_dimension_numbers<[1], [0], [0], [1], [0, 0, 1, 1], [], []>} : vector<8x128xbf16>, vector<128x128xbf16>, vector<8x128xf32> -> vector<8x128xf32>
      %211 = arith.addf %209, %210 : vector<8x128xf32>
      %cst_150 = arith.constant 5.000000e-01 : f32
      %212 = vector.broadcast %cst_150 : f32 to vector<8x128xf32>
      %213 = arith.mulf %212, %211 : vector<8x128xf32>
      %214 = math.tanh %213 : vector<8x128xf32>
      %cst_151 = arith.constant 5.000000e-01 : f32
      %215 = vector.broadcast %cst_151 : f32 to vector<8x128xf32>
      %216 = arith.mulf %215, %214 : vector<8x128xf32>
      %cst_152 = arith.constant 5.000000e-01 : f32
      %217 = vector.broadcast %cst_152 : f32 to vector<8x128xf32>
      %218 = arith.addf %216, %217 : vector<8x128xf32>
      %c1_153 = arith.constant 1 : index
      %c0_154 = arith.constant 0 : index
      %c128_155 = arith.constant 128 : index
      %219 = vector.load %arg13[%c1_153, %c0_154, %c128_155] : memref<16x8x512xf32, #tpu.memory_space<vmem>>, vector<1x8x128xf32>
      %220 = vector.shape_cast %219 : vector<1x8x128xf32> to vector<8x128xf32>
      %cst_156 = arith.constant dense<0.000000e+00> : vector<8x128xf32>
      %221 = tpu.matmul %207, %146, %cst_156 {dimension_numbers = #tpu.dot_dimension_numbers<[1], [0], [0], [1], [0, 0, 1, 1], [], []>} : vector<8x128xbf16>, vector<128x128xbf16>, vector<8x128xf32> -> vector<8x128xf32>
      %222 = arith.addf %220, %221 : vector<8x128xf32>
      %cst_157 = arith.constant 5.000000e-01 : f32
      %223 = vector.broadcast %cst_157 : f32 to vector<8x128xf32>
      %224 = arith.mulf %223, %222 : vector<8x128xf32>
      %225 = math.tanh %224 : vector<8x128xf32>
      %cst_158 = arith.constant 5.000000e-01 : f32
      %226 = vector.broadcast %cst_158 : f32 to vector<8x128xf32>
      %227 = arith.mulf %226, %225 : vector<8x128xf32>
      %cst_159 = arith.constant 5.000000e-01 : f32
      %228 = vector.broadcast %cst_159 : f32 to vector<8x128xf32>
      %229 = arith.addf %227, %228 : vector<8x128xf32>
      %c1_160 = arith.constant 1 : index
      %c0_161 = arith.constant 0 : index
      %c256_162 = arith.constant 256 : index
      %230 = vector.load %arg13[%c1_160, %c0_161, %c256_162] : memref<16x8x512xf32, #tpu.memory_space<vmem>>, vector<1x8x128xf32>
      %231 = vector.shape_cast %230 : vector<1x8x128xf32> to vector<8x128xf32>
      %cst_163 = arith.constant dense<0.000000e+00> : vector<8x128xf32>
      %232 = tpu.matmul %207, %147, %cst_163 {dimension_numbers = #tpu.dot_dimension_numbers<[1], [0], [0], [1], [0, 0, 1, 1], [], []>} : vector<8x128xbf16>, vector<128x128xbf16>, vector<8x128xf32> -> vector<8x128xf32>
      %233 = arith.addf %231, %232 : vector<8x128xf32>
      %234 = math.tanh %233 : vector<8x128xf32>
      %c1_164 = arith.constant 1 : index
      %c0_165 = arith.constant 0 : index
      %c384_166 = arith.constant 384 : index
      %235 = vector.load %arg13[%c1_164, %c0_165, %c384_166] : memref<16x8x512xf32, #tpu.memory_space<vmem>>, vector<1x8x128xf32>
      %236 = vector.shape_cast %235 : vector<1x8x128xf32> to vector<8x128xf32>
      %cst_167 = arith.constant dense<0.000000e+00> : vector<8x128xf32>
      %237 = tpu.matmul %207, %148, %cst_167 {dimension_numbers = #tpu.dot_dimension_numbers<[1], [0], [0], [1], [0, 0, 1, 1], [], []>} : vector<8x128xbf16>, vector<128x128xbf16>, vector<8x128xf32> -> vector<8x128xf32>
      %238 = arith.addf %236, %237 : vector<8x128xf32>
      %cst_168 = arith.constant 5.000000e-01 : f32
      %239 = vector.broadcast %cst_168 : f32 to vector<8x128xf32>
      %240 = arith.mulf %239, %238 : vector<8x128xf32>
      %241 = math.tanh %240 : vector<8x128xf32>
      %cst_169 = arith.constant 5.000000e-01 : f32
      %242 = vector.broadcast %cst_169 : f32 to vector<8x128xf32>
      %243 = arith.mulf %242, %241 : vector<8x128xf32>
      %cst_170 = arith.constant 5.000000e-01 : f32
      %244 = vector.broadcast %cst_170 : f32 to vector<8x128xf32>
      %245 = arith.addf %243, %244 : vector<8x128xf32>
      %246 = arith.mulf %229, %201 : vector<8x128xf32>
      %247 = arith.mulf %218, %234 : vector<8x128xf32>
      %248 = arith.addf %246, %247 : vector<8x128xf32>
      %249 = math.tanh %248 : vector<8x128xf32>
      %250 = arith.mulf %245, %249 : vector<8x128xf32>
      %c1_i32 = arith.constant 1 : i32
      %251 = arith.addi %3, %c1_i32 : i32
      %252 = vector.broadcast %251 : i32 to vector<8x1xi32>
      %253 = arith.cmpi slt, %252, %144 : vector<8x1xi32>
      %254 = vector.shape_cast %253 : vector<8x1xi1> to vector<8x1xi1>
      %255 = vector.broadcast %254 : vector<8x1xi1> to vector<8x128xi1>
      %256 = arith.select %255, %250, %200 : vector<8x128xi1>, vector<8x128xf32>
      %257 = arith.select %255, %248, %201 : vector<8x128xi1>, vector<8x128xf32>
      %cst_171 = arith.constant 0.000000e+00 : f32
      %258 = vector.broadcast %cst_171 : f32 to vector<8x128xf32>
      %259 = arith.select %255, %250, %258 : vector<8x128xi1>, vector<8x128xf32>
      %c1_172 = arith.constant 1 : index
      %c0_173 = arith.constant 0 : index
      %c0_174 = arith.constant 0 : index
      %260 = vector.load %arg10[%c1_172, %c0_173, %c0_174] : memref<16x8x128xf32, #tpu.memory_space<vmem>>, vector<1x8x128xf32>
      %261 = vector.shape_cast %260 : vector<1x8x128xf32> to vector<8x128xf32>
      %262 = vector.shape_cast %259 : vector<8x128xf32> to vector<1x8x128xf32>
      tpu.vector_store %arg10[%c1_172, %c0_173, %c0_174], %262 {strides = array<i32>} : memref<16x8x128xf32, #tpu.memory_space<vmem>>, vector<1x8x128xf32>,
      %263 = arith.truncf %256 : vector<8x128xf32> to vector<8x128xbf16>
      %c2_175 = arith.constant 2 : index
      %c0_176 = arith.constant 0 : index
      %c0_177 = arith.constant 0 : index
      %264 = vector.load %arg13[%c2_175, %c0_176, %c0_177] : memref<16x8x512xf32, #tpu.memory_space<vmem>>, vector<1x8x128xf32>
      %265 = vector.shape_cast %264 : vector<1x8x128xf32> to vector<8x128xf32>
      %cst_178 = arith.constant dense<0.000000e+00> : vector<8x128xf32>
      %266 = tpu.matmul %263, %145, %cst_178 {dimension_numbers = #tpu.dot_dimension_numbers<[1], [0], [0], [1], [0, 0, 1, 1], [], []>} : vector<8x128xbf16>, vector<128x128xbf16>, vector<8x128xf32> -> vector<8x128xf32>
      %267 = arith.addf %265, %266 : vector<8x128xf32>
      %cst_179 = arith.constant 5.000000e-01 : f32
      %268 = vector.broadcast %cst_179 : f32 to vector<8x128xf32>
      %269 = arith.mulf %268, %267 : vector<8x128xf32>
      %270 = math.tanh %269 : vector<8x128xf32>
      %cst_180 = arith.constant 5.000000e-01 : f32
      %271 = vector.broadcast %cst_180 : f32 to vector<8x128xf32>
      %272 = arith.mulf %271, %270 : vector<8x128xf32>
      %cst_181 = arith.constant 5.000000e-01 : f32
      %273 = vector.broadcast %cst_181 : f32 to vector<8x128xf32>
      %274 = arith.addf %272, %273 : vector<8x128xf32>
      %c2_182 = arith.constant 2 : index
      %c0_183 = arith.constant 0 : index
      %c128_184 = arith.constant 128 : index
      %275 = vector.load %arg13[%c2_182, %c0_183, %c128_184] : memref<16x8x512xf32, #tpu.memory_space<vmem>>, vector<1x8x128xf32>
      %276 = vector.shape_cast %275 : vector<1x8x128xf32> to vector<8x128xf32>
      %cst_185 = arith.constant dense<0.000000e+00> : vector<8x128xf32>
      %277 = tpu.matmul %263, %146, %cst_185 {dimension_numbers = #tpu.dot_dimension_numbers<[1], [0], [0], [1], [0, 0, 1, 1], [], []>} : vector<8x128xbf16>, vector<128x128xbf16>, vector<8x128xf32> -> vector<8x128xf32>
      %278 = arith.addf %276, %277 : vector<8x128xf32>
      %cst_186 = arith.constant 5.000000e-01 : f32
      %279 = vector.broadcast %cst_186 : f32 to vector<8x128xf32>
      %280 = arith.mulf %279, %278 : vector<8x128xf32>
      %281 = math.tanh %280 : vector<8x128xf32>
      %cst_187 = arith.constant 5.000000e-01 : f32
      %282 = vector.broadcast %cst_187 : f32 to vector<8x128xf32>
      %283 = arith.mulf %282, %281 : vector<8x128xf32>
      %cst_188 = arith.constant 5.000000e-01 : f32
      %284 = vector.broadcast %cst_188 : f32 to vector<8x128xf32>
      %285 = arith.addf %283, %284 : vector<8x128xf32>
      %c2_189 = arith.constant 2 : index
      %c0_190 = arith.constant 0 : index
      %c256_191 = arith.constant 256 : index
      %286 = vector.load %arg13[%c2_189, %c0_190, %c256_191] : memref<16x8x512xf32, #tpu.memory_space<vmem>>, vector<1x8x128xf32>
      %287 = vector.shape_cast %286 : vector<1x8x128xf32> to vector<8x128xf32>
      %cst_192 = arith.constant dense<0.000000e+00> : vector<8x128xf32>
      %288 = tpu.matmul %263, %147, %cst_192 {dimension_numbers = #tpu.dot_dimension_numbers<[1], [0], [0], [1], [0, 0, 1, 1], [], []>} : vector<8x128xbf16>, vector<128x128xbf16>, vector<8x128xf32> -> vector<8x128xf32>
      %289 = arith.addf %287, %288 : vector<8x128xf32>
      %290 = math.tanh %289 : vector<8x128xf32>
      %c2_193 = arith.constant 2 : index
      %c0_194 = arith.constant 0 : index
      %c384_195 = arith.constant 384 : index
      %291 = vector.load %arg13[%c2_193, %c0_194, %c384_195] : memref<16x8x512xf32, #tpu.memory_space<vmem>>, vector<1x8x128xf32>
      %292 = vector.shape_cast %291 : vector<1x8x128xf32> to vector<8x128xf32>
      %cst_196 = arith.constant dense<0.000000e+00> : vector<8x128xf32>
      %293 = tpu.matmul %263, %148, %cst_196 {dimension_numbers = #tpu.dot_dimension_numbers<[1], [0], [0], [1], [0, 0, 1, 1], [], []>} : vector<8x128xbf16>, vector<128x128xbf16>, vector<8x128xf32> -> vector<8x128xf32>
      %294 = arith.addf %292, %293 : vector<8x128xf32>
      %cst_197 = arith.constant 5.000000e-01 : f32
      %295 = vector.broadcast %cst_197 : f32 to vector<8x128xf32>
      %296 = arith.mulf %295, %294 : vector<8x128xf32>
      %297 = math.tanh %296 : vector<8x128xf32>
      %cst_198 = arith.constant 5.000000e-01 : f32
      %298 = vector.broadcast %cst_198 : f32 to vector<8x128xf32>
      %299 = arith.mulf %298, %297 : vector<8x128xf32>
      %cst_199 = arith.constant 5.000000e-01 : f32
      %300 = vector.broadcast %cst_199 : f32 to vector<8x128xf32>
      %301 = arith.addf %299, %300 : vector<8x128xf32>
      %302 = arith.mulf %285, %257 : vector<8x128xf32>
      %303 = arith.mulf %274, %290 : vector<8x128xf32>
      %304 = arith.addf %302, %303 : vector<8x128xf32>
      %305 = math.tanh %304 : vector<8x128xf32>
      %306 = arith.mulf %301, %305 : vector<8x128xf32>
      %c2_i32 = arith.constant 2 : i32
      %307 = arith.addi %3, %c2_i32 : i32
      %308 = vector.broadcast %307 : i32 to vector<8x1xi32>
      %309 = arith.cmpi slt, %308, %144 : vector<8x1xi32>
      %310 = vector.shape_cast %309 : vector<8x1xi1> to vector<8x1xi1>
      %311 = vector.broadcast %310 : vector<8x1xi1> to vector<8x128xi1>
      %312 = arith.select %311, %306, %256 : vector<8x128xi1>, vector<8x128xf32>
      %313 = arith.select %311, %304, %257 : vector<8x128xi1>, vector<8x128xf32>
      %cst_200 = arith.constant 0.000000e+00 : f32
      %314 = vector.broadcast %cst_200 : f32 to vector<8x128xf32>
      %315 = arith.select %311, %306, %314 : vector<8x128xi1>, vector<8x128xf32>
      %c2_201 = arith.constant 2 : index
      %c0_202 = arith.constant 0 : index
      %c0_203 = arith.constant 0 : index
      %316 = vector.load %arg10[%c2_201, %c0_202, %c0_203] : memref<16x8x128xf32, #tpu.memory_space<vmem>>, vector<1x8x128xf32>
      %317 = vector.shape_cast %316 : vector<1x8x128xf32> to vector<8x128xf32>
      %318 = vector.shape_cast %315 : vector<8x128xf32> to vector<1x8x128xf32>
      tpu.vector_store %arg10[%c2_201, %c0_202, %c0_203], %318 {strides = array<i32>} : memref<16x8x128xf32, #tpu.memory_space<vmem>>, vector<1x8x128xf32>,
      %319 = arith.truncf %312 : vector<8x128xf32> to vector<8x128xbf16>
      %c3_204 = arith.constant 3 : index
      %c0_205 = arith.constant 0 : index
      %c0_206 = arith.constant 0 : index
      %320 = vector.load %arg13[%c3_204, %c0_205, %c0_206] : memref<16x8x512xf32, #tpu.memory_space<vmem>>, vector<1x8x128xf32>
      %321 = vector.shape_cast %320 : vector<1x8x128xf32> to vector<8x128xf32>
      %cst_207 = arith.constant dense<0.000000e+00> : vector<8x128xf32>
      %322 = tpu.matmul %319, %145, %cst_207 {dimension_numbers = #tpu.dot_dimension_numbers<[1], [0], [0], [1], [0, 0, 1, 1], [], []>} : vector<8x128xbf16>, vector<128x128xbf16>, vector<8x128xf32> -> vector<8x128xf32>
      %323 = arith.addf %321, %322 : vector<8x128xf32>
      %cst_208 = arith.constant 5.000000e-01 : f32
      %324 = vector.broadcast %cst_208 : f32 to vector<8x128xf32>
      %325 = arith.mulf %324, %323 : vector<8x128xf32>
      %326 = math.tanh %325 : vector<8x128xf32>
      %cst_209 = arith.constant 5.000000e-01 : f32
      %327 = vector.broadcast %cst_209 : f32 to vector<8x128xf32>
      %328 = arith.mulf %327, %326 : vector<8x128xf32>
      %cst_210 = arith.constant 5.000000e-01 : f32
      %329 = vector.broadcast %cst_210 : f32 to vector<8x128xf32>
      %330 = arith.addf %328, %329 : vector<8x128xf32>
      %c3_211 = arith.constant 3 : index
      %c0_212 = arith.constant 0 : index
      %c128_213 = arith.constant 128 : index
      %331 = vector.load %arg13[%c3_211, %c0_212, %c128_213] : memref<16x8x512xf32, #tpu.memory_space<vmem>>, vector<1x8x128xf32>
      %332 = vector.shape_cast %331 : vector<1x8x128xf32> to vector<8x128xf32>
      %cst_214 = arith.constant dense<0.000000e+00> : vector<8x128xf32>
      %333 = tpu.matmul %319, %146, %cst_214 {dimension_numbers = #tpu.dot_dimension_numbers<[1], [0], [0], [1], [0, 0, 1, 1], [], []>} : vector<8x128xbf16>, vector<128x128xbf16>, vector<8x128xf32> -> vector<8x128xf32>
      %334 = arith.addf %332, %333 : vector<8x128xf32>
      %cst_215 = arith.constant 5.000000e-01 : f32
      %335 = vector.broadcast %cst_215 : f32 to vector<8x128xf32>
      %336 = arith.mulf %335, %334 : vector<8x128xf32>
      %337 = math.tanh %336 : vector<8x128xf32>
      %cst_216 = arith.constant 5.000000e-01 : f32
      %338 = vector.broadcast %cst_216 : f32 to vector<8x128xf32>
      %339 = arith.mulf %338, %337 : vector<8x128xf32>
      %cst_217 = arith.constant 5.000000e-01 : f32
      %340 = vector.broadcast %cst_217 : f32 to vector<8x128xf32>
      %341 = arith.addf %339, %340 : vector<8x128xf32>
      %c3_218 = arith.constant 3 : index
      %c0_219 = arith.constant 0 : index
      %c256_220 = arith.constant 256 : index
      %342 = vector.load %arg13[%c3_218, %c0_219, %c256_220] : memref<16x8x512xf32, #tpu.memory_space<vmem>>, vector<1x8x128xf32>
      %343 = vector.shape_cast %342 : vector<1x8x128xf32> to vector<8x128xf32>
      %cst_221 = arith.constant dense<0.000000e+00> : vector<8x128xf32>
      %344 = tpu.matmul %319, %147, %cst_221 {dimension_numbers = #tpu.dot_dimension_numbers<[1], [0], [0], [1], [0, 0, 1, 1], [], []>} : vector<8x128xbf16>, vector<128x128xbf16>, vector<8x128xf32> -> vector<8x128xf32>
      %345 = arith.addf %343, %344 : vector<8x128xf32>
      %346 = math.tanh %345 : vector<8x128xf32>
      %c3_222 = arith.constant 3 : index
      %c0_223 = arith.constant 0 : index
      %c384_224 = arith.constant 384 : index
      %347 = vector.load %arg13[%c3_222, %c0_223, %c384_224] : memref<16x8x512xf32, #tpu.memory_space<vmem>>, vector<1x8x128xf32>
      %348 = vector.shape_cast %347 : vector<1x8x128xf32> to vector<8x128xf32>
      %cst_225 = arith.constant dense<0.000000e+00> : vector<8x128xf32>
      %349 = tpu.matmul %319, %148, %cst_225 {dimension_numbers = #tpu.dot_dimension_numbers<[1], [0], [0], [1], [0, 0, 1, 1], [], []>} : vector<8x128xbf16>, vector<128x128xbf16>, vector<8x128xf32> -> vector<8x128xf32>
      %350 = arith.addf %348, %349 : vector<8x128xf32>
      %cst_226 = arith.constant 5.000000e-01 : f32
      %351 = vector.broadcast %cst_226 : f32 to vector<8x128xf32>
      %352 = arith.mulf %351, %350 : vector<8x128xf32>
      %353 = math.tanh %352 : vector<8x128xf32>
      %cst_227 = arith.constant 5.000000e-01 : f32
      %354 = vector.broadcast %cst_227 : f32 to vector<8x128xf32>
      %355 = arith.mulf %354, %353 : vector<8x128xf32>
      %cst_228 = arith.constant 5.000000e-01 : f32
      %356 = vector.broadcast %cst_228 : f32 to vector<8x128xf32>
      %357 = arith.addf %355, %356 : vector<8x128xf32>
      %358 = arith.mulf %341, %313 : vector<8x128xf32>
      %359 = arith.mulf %330, %346 : vector<8x128xf32>
      %360 = arith.addf %358, %359 : vector<8x128xf32>
      %361 = math.tanh %360 : vector<8x128xf32>
      %362 = arith.mulf %357, %361 : vector<8x128xf32>
      %c3_i32 = arith.constant 3 : i32
      %363 = arith.addi %3, %c3_i32 : i32
      %364 = vector.broadcast %363 : i32 to vector<8x1xi32>
      %365 = arith.cmpi slt, %364, %144 : vector<8x1xi32>
      %366 = vector.shape_cast %365 : vector<8x1xi1> to vector<8x1xi1>
      %367 = vector.broadcast %366 : vector<8x1xi1> to vector<8x128xi1>
      %368 = arith.select %367, %362, %312 : vector<8x128xi1>, vector<8x128xf32>
      %369 = arith.select %367, %360, %313 : vector<8x128xi1>, vector<8x128xf32>
      %cst_229 = arith.constant 0.000000e+00 : f32
      %370 = vector.broadcast %cst_229 : f32 to vector<8x128xf32>
      %371 = arith.select %367, %362, %370 : vector<8x128xi1>, vector<8x128xf32>
      %c3_230 = arith.constant 3 : index
      %c0_231 = arith.constant 0 : index
      %c0_232 = arith.constant 0 : index
      %372 = vector.load %arg10[%c3_230, %c0_231, %c0_232] : memref<16x8x128xf32, #tpu.memory_space<vmem>>, vector<1x8x128xf32>
      %373 = vector.shape_cast %372 : vector<1x8x128xf32> to vector<8x128xf32>
      %374 = vector.shape_cast %371 : vector<8x128xf32> to vector<1x8x128xf32>
      tpu.vector_store %arg10[%c3_230, %c0_231, %c0_232], %374 {strides = array<i32>} : memref<16x8x128xf32, #tpu.memory_space<vmem>>, vector<1x8x128xf32>,
      %375 = arith.truncf %368 : vector<8x128xf32> to vector<8x128xbf16>
      %c4_233 = arith.constant 4 : index
      %c0_234 = arith.constant 0 : index
      %c0_235 = arith.constant 0 : index
      %376 = vector.load %arg13[%c4_233, %c0_234, %c0_235] : memref<16x8x512xf32, #tpu.memory_space<vmem>>, vector<1x8x128xf32>
      %377 = vector.shape_cast %376 : vector<1x8x128xf32> to vector<8x128xf32>
      %cst_236 = arith.constant dense<0.000000e+00> : vector<8x128xf32>
      %378 = tpu.matmul %375, %145, %cst_236 {dimension_numbers = #tpu.dot_dimension_numbers<[1], [0], [0], [1], [0, 0, 1, 1], [], []>} : vector<8x128xbf16>, vector<128x128xbf16>, vector<8x128xf32> -> vector<8x128xf32>
      %379 = arith.addf %377, %378 : vector<8x128xf32>
      %cst_237 = arith.constant 5.000000e-01 : f32
      %380 = vector.broadcast %cst_237 : f32 to vector<8x128xf32>
      %381 = arith.mulf %380, %379 : vector<8x128xf32>
      %382 = math.tanh %381 : vector<8x128xf32>
      %cst_238 = arith.constant 5.000000e-01 : f32
      %383 = vector.broadcast %cst_238 : f32 to vector<8x128xf32>
      %384 = arith.mulf %383, %382 : vector<8x128xf32>
      %cst_239 = arith.constant 5.000000e-01 : f32
      %385 = vector.broadcast %cst_239 : f32 to vector<8x128xf32>
      %386 = arith.addf %384, %385 : vector<8x128xf32>
      %c4_240 = arith.constant 4 : index
      %c0_241 = arith.constant 0 : index
      %c128_242 = arith.constant 128 : index
      %387 = vector.load %arg13[%c4_240, %c0_241, %c128_242] : memref<16x8x512xf32, #tpu.memory_space<vmem>>, vector<1x8x128xf32>
      %388 = vector.shape_cast %387 : vector<1x8x128xf32> to vector<8x128xf32>
      %cst_243 = arith.constant dense<0.000000e+00> : vector<8x128xf32>
      %389 = tpu.matmul %375, %146, %cst_243 {dimension_numbers = #tpu.dot_dimension_numbers<[1], [0], [0], [1], [0, 0, 1, 1], [], []>} : vector<8x128xbf16>, vector<128x128xbf16>, vector<8x128xf32> -> vector<8x128xf32>
      %390 = arith.addf %388, %389 : vector<8x128xf32>
      %cst_244 = arith.constant 5.000000e-01 : f32
      %391 = vector.broadcast %cst_244 : f32 to vector<8x128xf32>
      %392 = arith.mulf %391, %390 : vector<8x128xf32>
      %393 = math.tanh %392 : vector<8x128xf32>
      %cst_245 = arith.constant 5.000000e-01 : f32
      %394 = vector.broadcast %cst_245 : f32 to vector<8x128xf32>
      %395 = arith.mulf %394, %393 : vector<8x128xf32>
      %cst_246 = arith.constant 5.000000e-01 : f32
      %396 = vector.broadcast %cst_246 : f32 to vector<8x128xf32>
      %397 = arith.addf %395, %396 : vector<8x128xf32>
      %c4_247 = arith.constant 4 : index
      %c0_248 = arith.constant 0 : index
      %c256_249 = arith.constant 256 : index
      %398 = vector.load %arg13[%c4_247, %c0_248, %c256_249] : memref<16x8x512xf32, #tpu.memory_space<vmem>>, vector<1x8x128xf32>
      %399 = vector.shape_cast %398 : vector<1x8x128xf32> to vector<8x128xf32>
      %cst_250 = arith.constant dense<0.000000e+00> : vector<8x128xf32>
      %400 = tpu.matmul %375, %147, %cst_250 {dimension_numbers = #tpu.dot_dimension_numbers<[1], [0], [0], [1], [0, 0, 1, 1], [], []>} : vector<8x128xbf16>, vector<128x128xbf16>, vector<8x128xf32> -> vector<8x128xf32>
      %401 = arith.addf %399, %400 : vector<8x128xf32>
      %402 = math.tanh %401 : vector<8x128xf32>
      %c4_251 = arith.constant 4 : index
      %c0_252 = arith.constant 0 : index
      %c384_253 = arith.constant 384 : index
      %403 = vector.load %arg13[%c4_251, %c0_252, %c384_253] : memref<16x8x512xf32, #tpu.memory_space<vmem>>, vector<1x8x128xf32>
      %404 = vector.shape_cast %403 : vector<1x8x128xf32> to vector<8x128xf32>
      %cst_254 = arith.constant dense<0.000000e+00> : vector<8x128xf32>
      %405 = tpu.matmul %375, %148, %cst_254 {dimension_numbers = #tpu.dot_dimension_numbers<[1], [0], [0], [1], [0, 0, 1, 1], [], []>} : vector<8x128xbf16>, vector<128x128xbf16>, vector<8x128xf32> -> vector<8x128xf32>
      %406 = arith.addf %404, %405 : vector<8x128xf32>
      %cst_255 = arith.constant 5.000000e-01 : f32
      %407 = vector.broadcast %cst_255 : f32 to vector<8x128xf32>
      %408 = arith.mulf %407, %406 : vector<8x128xf32>
      %409 = math.tanh %408 : vector<8x128xf32>
      %cst_256 = arith.constant 5.000000e-01 : f32
      %410 = vector.broadcast %cst_256 : f32 to vector<8x128xf32>
      %411 = arith.mulf %410, %409 : vector<8x128xf32>
      %cst_257 = arith.constant 5.000000e-01 : f32
      %412 = vector.broadcast %cst_257 : f32 to vector<8x128xf32>
      %413 = arith.addf %411, %412 : vector<8x128xf32>
      %414 = arith.mulf %397, %369 : vector<8x128xf32>
      %415 = arith.mulf %386, %402 : vector<8x128xf32>
      %416 = arith.addf %414, %415 : vector<8x128xf32>
      %417 = math.tanh %416 : vector<8x128xf32>
      %418 = arith.mulf %413, %417 : vector<8x128xf32>
      %c4_i32 = arith.constant 4 : i32
      %419 = arith.addi %3, %c4_i32 : i32
      %420 = vector.broadcast %419 : i32 to vector<8x1xi32>
      %421 = arith.cmpi slt, %420, %144 : vector<8x1xi32>
      %422 = vector.shape_cast %421 : vector<8x1xi1> to vector<8x1xi1>
      %423 = vector.broadcast %422 : vector<8x1xi1> to vector<8x128xi1>
      %424 = arith.select %423, %418, %368 : vector<8x128xi1>, vector<8x128xf32>
      %425 = arith.select %423, %416, %369 : vector<8x128xi1>, vector<8x128xf32>
      %cst_258 = arith.constant 0.000000e+00 : f32
      %426 = vector.broadcast %cst_258 : f32 to vector<8x128xf32>
      %427 = arith.select %423, %418, %426 : vector<8x128xi1>, vector<8x128xf32>
      %c4_259 = arith.constant 4 : index
      %c0_260 = arith.constant 0 : index
      %c0_261 = arith.constant 0 : index
      %428 = vector.load %arg10[%c4_259, %c0_260, %c0_261] : memref<16x8x128xf32, #tpu.memory_space<vmem>>, vector<1x8x128xf32>
      %429 = vector.shape_cast %428 : vector<1x8x128xf32> to vector<8x128xf32>
      %430 = vector.shape_cast %427 : vector<8x128xf32> to vector<1x8x128xf32>
      tpu.vector_store %arg10[%c4_259, %c0_260, %c0_261], %430 {strides = array<i32>} : memref<16x8x128xf32, #tpu.memory_space<vmem>>, vector<1x8x128xf32>,
      %431 = arith.truncf %424 : vector<8x128xf32> to vector<8x128xbf16>
      %c5_262 = arith.constant 5 : index
      %c0_263 = arith.constant 0 : index
      %c0_264 = arith.constant 0 : index
      %432 = vector.load %arg13[%c5_262, %c0_263, %c0_264] : memref<16x8x512xf32, #tpu.memory_space<vmem>>, vector<1x8x128xf32>
      %433 = vector.shape_cast %432 : vector<1x8x128xf32> to vector<8x128xf32>
      %cst_265 = arith.constant dense<0.000000e+00> : vector<8x128xf32>
      %434 = tpu.matmul %431, %145, %cst_265 {dimension_numbers = #tpu.dot_dimension_numbers<[1], [0], [0], [1], [0, 0, 1, 1], [], []>} : vector<8x128xbf16>, vector<128x128xbf16>, vector<8x128xf32> -> vector<8x128xf32>
      %435 = arith.addf %433, %434 : vector<8x128xf32>
      %cst_266 = arith.constant 5.000000e-01 : f32
      %436 = vector.broadcast %cst_266 : f32 to vector<8x128xf32>
      %437 = arith.mulf %436, %435 : vector<8x128xf32>
      %438 = math.tanh %437 : vector<8x128xf32>
      %cst_267 = arith.constant 5.000000e-01 : f32
      %439 = vector.broadcast %cst_267 : f32 to vector<8x128xf32>
      %440 = arith.mulf %439, %438 : vector<8x128xf32>
      %cst_268 = arith.constant 5.000000e-01 : f32
      %441 = vector.broadcast %cst_268 : f32 to vector<8x128xf32>
      %442 = arith.addf %440, %441 : vector<8x128xf32>
      %c5_269 = arith.constant 5 : index
      %c0_270 = arith.constant 0 : index
      %c128_271 = arith.constant 128 : index
      %443 = vector.load %arg13[%c5_269, %c0_270, %c128_271] : memref<16x8x512xf32, #tpu.memory_space<vmem>>, vector<1x8x128xf32>
      %444 = vector.shape_cast %443 : vector<1x8x128xf32> to vector<8x128xf32>
      %cst_272 = arith.constant dense<0.000000e+00> : vector<8x128xf32>
      %445 = tpu.matmul %431, %146, %cst_272 {dimension_numbers = #tpu.dot_dimension_numbers<[1], [0], [0], [1], [0, 0, 1, 1], [], []>} : vector<8x128xbf16>, vector<128x128xbf16>, vector<8x128xf32> -> vector<8x128xf32>
      %446 = arith.addf %444, %445 : vector<8x128xf32>
      %cst_273 = arith.constant 5.000000e-01 : f32
      %447 = vector.broadcast %cst_273 : f32 to vector<8x128xf32>
      %448 = arith.mulf %447, %446 : vector<8x128xf32>
      %449 = math.tanh %448 : vector<8x128xf32>
      %cst_274 = arith.constant 5.000000e-01 : f32
      %450 = vector.broadcast %cst_274 : f32 to vector<8x128xf32>
      %451 = arith.mulf %450, %449 : vector<8x128xf32>
      %cst_275 = arith.constant 5.000000e-01 : f32
      %452 = vector.broadcast %cst_275 : f32 to vector<8x128xf32>
      %453 = arith.addf %451, %452 : vector<8x128xf32>
      %c5_276 = arith.constant 5 : index
      %c0_277 = arith.constant 0 : index
      %c256_278 = arith.constant 256 : index
      %454 = vector.load %arg13[%c5_276, %c0_277, %c256_278] : memref<16x8x512xf32, #tpu.memory_space<vmem>>, vector<1x8x128xf32>
      %455 = vector.shape_cast %454 : vector<1x8x128xf32> to vector<8x128xf32>
      %cst_279 = arith.constant dense<0.000000e+00> : vector<8x128xf32>
      %456 = tpu.matmul %431, %147, %cst_279 {dimension_numbers = #tpu.dot_dimension_numbers<[1], [0], [0], [1], [0, 0, 1, 1], [], []>} : vector<8x128xbf16>, vector<128x128xbf16>, vector<8x128xf32> -> vector<8x128xf32>
      %457 = arith.addf %455, %456 : vector<8x128xf32>
      %458 = math.tanh %457 : vector<8x128xf32>
      %c5_280 = arith.constant 5 : index
      %c0_281 = arith.constant 0 : index
      %c384_282 = arith.constant 384 : index
      %459 = vector.load %arg13[%c5_280, %c0_281, %c384_282] : memref<16x8x512xf32, #tpu.memory_space<vmem>>, vector<1x8x128xf32>
      %460 = vector.shape_cast %459 : vector<1x8x128xf32> to vector<8x128xf32>
      %cst_283 = arith.constant dense<0.000000e+00> : vector<8x128xf32>
      %461 = tpu.matmul %431, %148, %cst_283 {dimension_numbers = #tpu.dot_dimension_numbers<[1], [0], [0], [1], [0, 0, 1, 1], [], []>} : vector<8x128xbf16>, vector<128x128xbf16>, vector<8x128xf32> -> vector<8x128xf32>
      %462 = arith.addf %460, %461 : vector<8x128xf32>
      %cst_284 = arith.constant 5.000000e-01 : f32
      %463 = vector.broadcast %cst_284 : f32 to vector<8x128xf32>
      %464 = arith.mulf %463, %462 : vector<8x128xf32>
      %465 = math.tanh %464 : vector<8x128xf32>
      %cst_285 = arith.constant 5.000000e-01 : f32
      %466 = vector.broadcast %cst_285 : f32 to vector<8x128xf32>
      %467 = arith.mulf %466, %465 : vector<8x128xf32>
      %cst_286 = arith.constant 5.000000e-01 : f32
      %468 = vector.broadcast %cst_286 : f32 to vector<8x128xf32>
      %469 = arith.addf %467, %468 : vector<8x128xf32>
      %470 = arith.mulf %453, %425 : vector<8x128xf32>
      %471 = arith.mulf %442, %458 : vector<8x128xf32>
      %472 = arith.addf %470, %471 : vector<8x128xf32>
      %473 = math.tanh %472 : vector<8x128xf32>
      %474 = arith.mulf %469, %473 : vector<8x128xf32>
      %c5_i32 = arith.constant 5 : i32
      %475 = arith.addi %3, %c5_i32 : i32
      %476 = vector.broadcast %475 : i32 to vector<8x1xi32>
      %477 = arith.cmpi slt, %476, %144 : vector<8x1xi32>
      %478 = vector.shape_cast %477 : vector<8x1xi1> to vector<8x1xi1>
      %479 = vector.broadcast %478 : vector<8x1xi1> to vector<8x128xi1>
      %480 = arith.select %479, %474, %424 : vector<8x128xi1>, vector<8x128xf32>
      %481 = arith.select %479, %472, %425 : vector<8x128xi1>, vector<8x128xf32>
      %cst_287 = arith.constant 0.000000e+00 : f32
      %482 = vector.broadcast %cst_287 : f32 to vector<8x128xf32>
      %483 = arith.select %479, %474, %482 : vector<8x128xi1>, vector<8x128xf32>
      %c5_288 = arith.constant 5 : index
      %c0_289 = arith.constant 0 : index
      %c0_290 = arith.constant 0 : index
      %484 = vector.load %arg10[%c5_288, %c0_289, %c0_290] : memref<16x8x128xf32, #tpu.memory_space<vmem>>, vector<1x8x128xf32>
      %485 = vector.shape_cast %484 : vector<1x8x128xf32> to vector<8x128xf32>
      %486 = vector.shape_cast %483 : vector<8x128xf32> to vector<1x8x128xf32>
      tpu.vector_store %arg10[%c5_288, %c0_289, %c0_290], %486 {strides = array<i32>} : memref<16x8x128xf32, #tpu.memory_space<vmem>>, vector<1x8x128xf32>,
      %487 = arith.truncf %480 : vector<8x128xf32> to vector<8x128xbf16>
      %c6_291 = arith.constant 6 : index
      %c0_292 = arith.constant 0 : index
      %c0_293 = arith.constant 0 : index
      %488 = vector.load %arg13[%c6_291, %c0_292, %c0_293] : memref<16x8x512xf32, #tpu.memory_space<vmem>>, vector<1x8x128xf32>
      %489 = vector.shape_cast %488 : vector<1x8x128xf32> to vector<8x128xf32>
      %cst_294 = arith.constant dense<0.000000e+00> : vector<8x128xf32>
      %490 = tpu.matmul %487, %145, %cst_294 {dimension_numbers = #tpu.dot_dimension_numbers<[1], [0], [0], [1], [0, 0, 1, 1], [], []>} : vector<8x128xbf16>, vector<128x128xbf16>, vector<8x128xf32> -> vector<8x128xf32>
      %491 = arith.addf %489, %490 : vector<8x128xf32>
      %cst_295 = arith.constant 5.000000e-01 : f32
      %492 = vector.broadcast %cst_295 : f32 to vector<8x128xf32>
      %493 = arith.mulf %492, %491 : vector<8x128xf32>
      %494 = math.tanh %493 : vector<8x128xf32>
      %cst_296 = arith.constant 5.000000e-01 : f32
      %495 = vector.broadcast %cst_296 : f32 to vector<8x128xf32>
      %496 = arith.mulf %495, %494 : vector<8x128xf32>
      %cst_297 = arith.constant 5.000000e-01 : f32
      %497 = vector.broadcast %cst_297 : f32 to vector<8x128xf32>
      %498 = arith.addf %496, %497 : vector<8x128xf32>
      %c6_298 = arith.constant 6 : index
      %c0_299 = arith.constant 0 : index
      %c128_300 = arith.constant 128 : index
      %499 = vector.load %arg13[%c6_298, %c0_299, %c128_300] : memref<16x8x512xf32, #tpu.memory_space<vmem>>, vector<1x8x128xf32>
      %500 = vector.shape_cast %499 : vector<1x8x128xf32> to vector<8x128xf32>
      %cst_301 = arith.constant dense<0.000000e+00> : vector<8x128xf32>
      %501 = tpu.matmul %487, %146, %cst_301 {dimension_numbers = #tpu.dot_dimension_numbers<[1], [0], [0], [1], [0, 0, 1, 1], [], []>} : vector<8x128xbf16>, vector<128x128xbf16>, vector<8x128xf32> -> vector<8x128xf32>
      %502 = arith.addf %500, %501 : vector<8x128xf32>
      %cst_302 = arith.constant 5.000000e-01 : f32
      %503 = vector.broadcast %cst_302 : f32 to vector<8x128xf32>
      %504 = arith.mulf %503, %502 : vector<8x128xf32>
      %505 = math.tanh %504 : vector<8x128xf32>
      %cst_303 = arith.constant 5.000000e-01 : f32
      %506 = vector.broadcast %cst_303 : f32 to vector<8x128xf32>
      %507 = arith.mulf %506, %505 : vector<8x128xf32>
      %cst_304 = arith.constant 5.000000e-01 : f32
      %508 = vector.broadcast %cst_304 : f32 to vector<8x128xf32>
      %509 = arith.addf %507, %508 : vector<8x128xf32>
      %c6_305 = arith.constant 6 : index
      %c0_306 = arith.constant 0 : index
      %c256_307 = arith.constant 256 : index
      %510 = vector.load %arg13[%c6_305, %c0_306, %c256_307] : memref<16x8x512xf32, #tpu.memory_space<vmem>>, vector<1x8x128xf32>
      %511 = vector.shape_cast %510 : vector<1x8x128xf32> to vector<8x128xf32>
      %cst_308 = arith.constant dense<0.000000e+00> : vector<8x128xf32>
      %512 = tpu.matmul %487, %147, %cst_308 {dimension_numbers = #tpu.dot_dimension_numbers<[1], [0], [0], [1], [0, 0, 1, 1], [], []>} : vector<8x128xbf16>, vector<128x128xbf16>, vector<8x128xf32> -> vector<8x128xf32>
      %513 = arith.addf %511, %512 : vector<8x128xf32>
      %514 = math.tanh %513 : vector<8x128xf32>
      %c6_309 = arith.constant 6 : index
      %c0_310 = arith.constant 0 : index
      %c384_311 = arith.constant 384 : index
      %515 = vector.load %arg13[%c6_309, %c0_310, %c384_311] : memref<16x8x512xf32, #tpu.memory_space<vmem>>, vector<1x8x128xf32>
      %516 = vector.shape_cast %515 : vector<1x8x128xf32> to vector<8x128xf32>
      %cst_312 = arith.constant dense<0.000000e+00> : vector<8x128xf32>
      %517 = tpu.matmul %487, %148, %cst_312 {dimension_numbers = #tpu.dot_dimension_numbers<[1], [0], [0], [1], [0, 0, 1, 1], [], []>} : vector<8x128xbf16>, vector<128x128xbf16>, vector<8x128xf32> -> vector<8x128xf32>
      %518 = arith.addf %516, %517 : vector<8x128xf32>
      %cst_313 = arith.constant 5.000000e-01 : f32
      %519 = vector.broadcast %cst_313 : f32 to vector<8x128xf32>
      %520 = arith.mulf %519, %518 : vector<8x128xf32>
      %521 = math.tanh %520 : vector<8x128xf32>
      %cst_314 = arith.constant 5.000000e-01 : f32
      %522 = vector.broadcast %cst_314 : f32 to vector<8x128xf32>
      %523 = arith.mulf %522, %521 : vector<8x128xf32>
      %cst_315 = arith.constant 5.000000e-01 : f32
      %524 = vector.broadcast %cst_315 : f32 to vector<8x128xf32>
      %525 = arith.addf %523, %524 : vector<8x128xf32>
      %526 = arith.mulf %509, %481 : vector<8x128xf32>
      %527 = arith.mulf %498, %514 : vector<8x128xf32>
      %528 = arith.addf %526, %527 : vector<8x128xf32>
      %529 = math.tanh %528 : vector<8x128xf32>
      %530 = arith.mulf %525, %529 : vector<8x128xf32>
      %c6_i32 = arith.constant 6 : i32
      %531 = arith.addi %3, %c6_i32 : i32
      %532 = vector.broadcast %531 : i32 to vector<8x1xi32>
      %533 = arith.cmpi slt, %532, %144 : vector<8x1xi32>
      %534 = vector.shape_cast %533 : vector<8x1xi1> to vector<8x1xi1>
      %535 = vector.broadcast %534 : vector<8x1xi1> to vector<8x128xi1>
      %536 = arith.select %535, %530, %480 : vector<8x128xi1>, vector<8x128xf32>
      %537 = arith.select %535, %528, %481 : vector<8x128xi1>, vector<8x128xf32>
      %cst_316 = arith.constant 0.000000e+00 : f32
      %538 = vector.broadcast %cst_316 : f32 to vector<8x128xf32>
      %539 = arith.select %535, %530, %538 : vector<8x128xi1>, vector<8x128xf32>
      %c6_317 = arith.constant 6 : index
      %c0_318 = arith.constant 0 : index
      %c0_319 = arith.constant 0 : index
      %540 = vector.load %arg10[%c6_317, %c0_318, %c0_319] : memref<16x8x128xf32, #tpu.memory_space<vmem>>, vector<1x8x128xf32>
      %541 = vector.shape_cast %540 : vector<1x8x128xf32> to vector<8x128xf32>
      %542 = vector.shape_cast %539 : vector<8x128xf32> to vector<1x8x128xf32>
      tpu.vector_store %arg10[%c6_317, %c0_318, %c0_319], %542 {strides = array<i32>} : memref<16x8x128xf32, #tpu.memory_space<vmem>>, vector<1x8x128xf32>,
      %543 = arith.truncf %536 : vector<8x128xf32> to vector<8x128xbf16>
      %c7_320 = arith.constant 7 : index
      %c0_321 = arith.constant 0 : index
      %c0_322 = arith.constant 0 : index
      %544 = vector.load %arg13[%c7_320, %c0_321, %c0_322] : memref<16x8x512xf32, #tpu.memory_space<vmem>>, vector<1x8x128xf32>
      %545 = vector.shape_cast %544 : vector<1x8x128xf32> to vector<8x128xf32>
      %cst_323 = arith.constant dense<0.000000e+00> : vector<8x128xf32>
      %546 = tpu.matmul %543, %145, %cst_323 {dimension_numbers = #tpu.dot_dimension_numbers<[1], [0], [0], [1], [0, 0, 1, 1], [], []>} : vector<8x128xbf16>, vector<128x128xbf16>, vector<8x128xf32> -> vector<8x128xf32>
      %547 = arith.addf %545, %546 : vector<8x128xf32>
      %cst_324 = arith.constant 5.000000e-01 : f32
      %548 = vector.broadcast %cst_324 : f32 to vector<8x128xf32>
      %549 = arith.mulf %548, %547 : vector<8x128xf32>
      %550 = math.tanh %549 : vector<8x128xf32>
      %cst_325 = arith.constant 5.000000e-01 : f32
      %551 = vector.broadcast %cst_325 : f32 to vector<8x128xf32>
      %552 = arith.mulf %551, %550 : vector<8x128xf32>
      %cst_326 = arith.constant 5.000000e-01 : f32
      %553 = vector.broadcast %cst_326 : f32 to vector<8x128xf32>
      %554 = arith.addf %552, %553 : vector<8x128xf32>
      %c7_327 = arith.constant 7 : index
      %c0_328 = arith.constant 0 : index
      %c128_329 = arith.constant 128 : index
      %555 = vector.load %arg13[%c7_327, %c0_328, %c128_329] : memref<16x8x512xf32, #tpu.memory_space<vmem>>, vector<1x8x128xf32>
      %556 = vector.shape_cast %555 : vector<1x8x128xf32> to vector<8x128xf32>
      %cst_330 = arith.constant dense<0.000000e+00> : vector<8x128xf32>
      %557 = tpu.matmul %543, %146, %cst_330 {dimension_numbers = #tpu.dot_dimension_numbers<[1], [0], [0], [1], [0, 0, 1, 1], [], []>} : vector<8x128xbf16>, vector<128x128xbf16>, vector<8x128xf32> -> vector<8x128xf32>
      %558 = arith.addf %556, %557 : vector<8x128xf32>
      %cst_331 = arith.constant 5.000000e-01 : f32
      %559 = vector.broadcast %cst_331 : f32 to vector<8x128xf32>
      %560 = arith.mulf %559, %558 : vector<8x128xf32>
      %561 = math.tanh %560 : vector<8x128xf32>
      %cst_332 = arith.constant 5.000000e-01 : f32
      %562 = vector.broadcast %cst_332 : f32 to vector<8x128xf32>
      %563 = arith.mulf %562, %561 : vector<8x128xf32>
      %cst_333 = arith.constant 5.000000e-01 : f32
      %564 = vector.broadcast %cst_333 : f32 to vector<8x128xf32>
      %565 = arith.addf %563, %564 : vector<8x128xf32>
      %c7_334 = arith.constant 7 : index
      %c0_335 = arith.constant 0 : index
      %c256_336 = arith.constant 256 : index
      %566 = vector.load %arg13[%c7_334, %c0_335, %c256_336] : memref<16x8x512xf32, #tpu.memory_space<vmem>>, vector<1x8x128xf32>
      %567 = vector.shape_cast %566 : vector<1x8x128xf32> to vector<8x128xf32>
      %cst_337 = arith.constant dense<0.000000e+00> : vector<8x128xf32>
      %568 = tpu.matmul %543, %147, %cst_337 {dimension_numbers = #tpu.dot_dimension_numbers<[1], [0], [0], [1], [0, 0, 1, 1], [], []>} : vector<8x128xbf16>, vector<128x128xbf16>, vector<8x128xf32> -> vector<8x128xf32>
      %569 = arith.addf %567, %568 : vector<8x128xf32>
      %570 = math.tanh %569 : vector<8x128xf32>
      %c7_338 = arith.constant 7 : index
      %c0_339 = arith.constant 0 : index
      %c384_340 = arith.constant 384 : index
      %571 = vector.load %arg13[%c7_338, %c0_339, %c384_340] : memref<16x8x512xf32, #tpu.memory_space<vmem>>, vector<1x8x128xf32>
      %572 = vector.shape_cast %571 : vector<1x8x128xf32> to vector<8x128xf32>
      %cst_341 = arith.constant dense<0.000000e+00> : vector<8x128xf32>
      %573 = tpu.matmul %543, %148, %cst_341 {dimension_numbers = #tpu.dot_dimension_numbers<[1], [0], [0], [1], [0, 0, 1, 1], [], []>} : vector<8x128xbf16>, vector<128x128xbf16>, vector<8x128xf32> -> vector<8x128xf32>
      %574 = arith.addf %572, %573 : vector<8x128xf32>
      %cst_342 = arith.constant 5.000000e-01 : f32
      %575 = vector.broadcast %cst_342 : f32 to vector<8x128xf32>
      %576 = arith.mulf %575, %574 : vector<8x128xf32>
      %577 = math.tanh %576 : vector<8x128xf32>
      %cst_343 = arith.constant 5.000000e-01 : f32
      %578 = vector.broadcast %cst_343 : f32 to vector<8x128xf32>
      %579 = arith.mulf %578, %577 : vector<8x128xf32>
      %cst_344 = arith.constant 5.000000e-01 : f32
      %580 = vector.broadcast %cst_344 : f32 to vector<8x128xf32>
      %581 = arith.addf %579, %580 : vector<8x128xf32>
      %582 = arith.mulf %565, %537 : vector<8x128xf32>
      %583 = arith.mulf %554, %570 : vector<8x128xf32>
      %584 = arith.addf %582, %583 : vector<8x128xf32>
      %585 = math.tanh %584 : vector<8x128xf32>
      %586 = arith.mulf %581, %585 : vector<8x128xf32>
      %c7_i32 = arith.constant 7 : i32
      %587 = arith.addi %3, %c7_i32 : i32
      %588 = vector.broadcast %587 : i32 to vector<8x1xi32>
      %589 = arith.cmpi slt, %588, %144 : vector<8x1xi32>
      %590 = vector.shape_cast %589 : vector<8x1xi1> to vector<8x1xi1>
      %591 = vector.broadcast %590 : vector<8x1xi1> to vector<8x128xi1>
      %592 = arith.select %591, %586, %536 : vector<8x128xi1>, vector<8x128xf32>
      %593 = arith.select %591, %584, %537 : vector<8x128xi1>, vector<8x128xf32>
      %cst_345 = arith.constant 0.000000e+00 : f32
      %594 = vector.broadcast %cst_345 : f32 to vector<8x128xf32>
      %595 = arith.select %591, %586, %594 : vector<8x128xi1>, vector<8x128xf32>
      %c7_346 = arith.constant 7 : index
      %c0_347 = arith.constant 0 : index
      %c0_348 = arith.constant 0 : index
      %596 = vector.load %arg10[%c7_346, %c0_347, %c0_348] : memref<16x8x128xf32, #tpu.memory_space<vmem>>, vector<1x8x128xf32>
      %597 = vector.shape_cast %596 : vector<1x8x128xf32> to vector<8x128xf32>
      %598 = vector.shape_cast %595 : vector<8x128xf32> to vector<1x8x128xf32>
      tpu.vector_store %arg10[%c7_346, %c0_347, %c0_348], %598 {strides = array<i32>} : memref<16x8x128xf32, #tpu.memory_space<vmem>>, vector<1x8x128xf32>,
      %599 = arith.truncf %592 : vector<8x128xf32> to vector<8x128xbf16>
      %c8_349 = arith.constant 8 : index
      %c0_350 = arith.constant 0 : index
      %c0_351 = arith.constant 0 : index
      %600 = vector.load %arg13[%c8_349, %c0_350, %c0_351] : memref<16x8x512xf32, #tpu.memory_space<vmem>>, vector<1x8x128xf32>
      %601 = vector.shape_cast %600 : vector<1x8x128xf32> to vector<8x128xf32>
      %cst_352 = arith.constant dense<0.000000e+00> : vector<8x128xf32>
      %602 = tpu.matmul %599, %145, %cst_352 {dimension_numbers = #tpu.dot_dimension_numbers<[1], [0], [0], [1], [0, 0, 1, 1], [], []>} : vector<8x128xbf16>, vector<128x128xbf16>, vector<8x128xf32> -> vector<8x128xf32>
      %603 = arith.addf %601, %602 : vector<8x128xf32>
      %cst_353 = arith.constant 5.000000e-01 : f32
      %604 = vector.broadcast %cst_353 : f32 to vector<8x128xf32>
      %605 = arith.mulf %604, %603 : vector<8x128xf32>
      %606 = math.tanh %605 : vector<8x128xf32>
      %cst_354 = arith.constant 5.000000e-01 : f32
      %607 = vector.broadcast %cst_354 : f32 to vector<8x128xf32>
      %608 = arith.mulf %607, %606 : vector<8x128xf32>
      %cst_355 = arith.constant 5.000000e-01 : f32
      %609 = vector.broadcast %cst_355 : f32 to vector<8x128xf32>
      %610 = arith.addf %608, %609 : vector<8x128xf32>
      %c8_356 = arith.constant 8 : index
      %c0_357 = arith.constant 0 : index
      %c128_358 = arith.constant 128 : index
      %611 = vector.load %arg13[%c8_356, %c0_357, %c128_358] : memref<16x8x512xf32, #tpu.memory_space<vmem>>, vector<1x8x128xf32>
      %612 = vector.shape_cast %611 : vector<1x8x128xf32> to vector<8x128xf32>
      %cst_359 = arith.constant dense<0.000000e+00> : vector<8x128xf32>
      %613 = tpu.matmul %599, %146, %cst_359 {dimension_numbers = #tpu.dot_dimension_numbers<[1], [0], [0], [1], [0, 0, 1, 1], [], []>} : vector<8x128xbf16>, vector<128x128xbf16>, vector<8x128xf32> -> vector<8x128xf32>
      %614 = arith.addf %612, %613 : vector<8x128xf32>
      %cst_360 = arith.constant 5.000000e-01 : f32
      %615 = vector.broadcast %cst_360 : f32 to vector<8x128xf32>
      %616 = arith.mulf %615, %614 : vector<8x128xf32>
      %617 = math.tanh %616 : vector<8x128xf32>
      %cst_361 = arith.constant 5.000000e-01 : f32
      %618 = vector.broadcast %cst_361 : f32 to vector<8x128xf32>
      %619 = arith.mulf %618, %617 : vector<8x128xf32>
      %cst_362 = arith.constant 5.000000e-01 : f32
      %620 = vector.broadcast %cst_362 : f32 to vector<8x128xf32>
      %621 = arith.addf %619, %620 : vector<8x128xf32>
      %c8_363 = arith.constant 8 : index
      %c0_364 = arith.constant 0 : index
      %c256_365 = arith.constant 256 : index
      %622 = vector.load %arg13[%c8_363, %c0_364, %c256_365] : memref<16x8x512xf32, #tpu.memory_space<vmem>>, vector<1x8x128xf32>
      %623 = vector.shape_cast %622 : vector<1x8x128xf32> to vector<8x128xf32>
      %cst_366 = arith.constant dense<0.000000e+00> : vector<8x128xf32>
      %624 = tpu.matmul %599, %147, %cst_366 {dimension_numbers = #tpu.dot_dimension_numbers<[1], [0], [0], [1], [0, 0, 1, 1], [], []>} : vector<8x128xbf16>, vector<128x128xbf16>, vector<8x128xf32> -> vector<8x128xf32>
      %625 = arith.addf %623, %624 : vector<8x128xf32>
      %626 = math.tanh %625 : vector<8x128xf32>
      %c8_367 = arith.constant 8 : index
      %c0_368 = arith.constant 0 : index
      %c384_369 = arith.constant 384 : index
      %627 = vector.load %arg13[%c8_367, %c0_368, %c384_369] : memref<16x8x512xf32, #tpu.memory_space<vmem>>, vector<1x8x128xf32>
      %628 = vector.shape_cast %627 : vector<1x8x128xf32> to vector<8x128xf32>
      %cst_370 = arith.constant dense<0.000000e+00> : vector<8x128xf32>
      %629 = tpu.matmul %599, %148, %cst_370 {dimension_numbers = #tpu.dot_dimension_numbers<[1], [0], [0], [1], [0, 0, 1, 1], [], []>} : vector<8x128xbf16>, vector<128x128xbf16>, vector<8x128xf32> -> vector<8x128xf32>
      %630 = arith.addf %628, %629 : vector<8x128xf32>
      %cst_371 = arith.constant 5.000000e-01 : f32
      %631 = vector.broadcast %cst_371 : f32 to vector<8x128xf32>
      %632 = arith.mulf %631, %630 : vector<8x128xf32>
      %633 = math.tanh %632 : vector<8x128xf32>
      %cst_372 = arith.constant 5.000000e-01 : f32
      %634 = vector.broadcast %cst_372 : f32 to vector<8x128xf32>
      %635 = arith.mulf %634, %633 : vector<8x128xf32>
      %cst_373 = arith.constant 5.000000e-01 : f32
      %636 = vector.broadcast %cst_373 : f32 to vector<8x128xf32>
      %637 = arith.addf %635, %636 : vector<8x128xf32>
      %638 = arith.mulf %621, %593 : vector<8x128xf32>
      %639 = arith.mulf %610, %626 : vector<8x128xf32>
      %640 = arith.addf %638, %639 : vector<8x128xf32>
      %641 = math.tanh %640 : vector<8x128xf32>
      %642 = arith.mulf %637, %641 : vector<8x128xf32>
      %c8_i32 = arith.constant 8 : i32
      %643 = arith.addi %3, %c8_i32 : i32
      %644 = vector.broadcast %643 : i32 to vector<8x1xi32>
      %645 = arith.cmpi slt, %644, %144 : vector<8x1xi32>
      %646 = vector.shape_cast %645 : vector<8x1xi1> to vector<8x1xi1>
      %647 = vector.broadcast %646 : vector<8x1xi1> to vector<8x128xi1>
      %648 = arith.select %647, %642, %592 : vector<8x128xi1>, vector<8x128xf32>
      %649 = arith.select %647, %640, %593 : vector<8x128xi1>, vector<8x128xf32>
      %cst_374 = arith.constant 0.000000e+00 : f32
      %650 = vector.broadcast %cst_374 : f32 to vector<8x128xf32>
      %651 = arith.select %647, %642, %650 : vector<8x128xi1>, vector<8x128xf32>
      %c8_375 = arith.constant 8 : index
      %c0_376 = arith.constant 0 : index
      %c0_377 = arith.constant 0 : index
      %652 = vector.load %arg10[%c8_375, %c0_376, %c0_377] : memref<16x8x128xf32, #tpu.memory_space<vmem>>, vector<1x8x128xf32>
      %653 = vector.shape_cast %652 : vector<1x8x128xf32> to vector<8x128xf32>
      %654 = vector.shape_cast %651 : vector<8x128xf32> to vector<1x8x128xf32>
      tpu.vector_store %arg10[%c8_375, %c0_376, %c0_377], %654 {strides = array<i32>} : memref<16x8x128xf32, #tpu.memory_space<vmem>>, vector<1x8x128xf32>,
      %655 = arith.truncf %648 : vector<8x128xf32> to vector<8x128xbf16>
      %c9_378 = arith.constant 9 : index
      %c0_379 = arith.constant 0 : index
      %c0_380 = arith.constant 0 : index
      %656 = vector.load %arg13[%c9_378, %c0_379, %c0_380] : memref<16x8x512xf32, #tpu.memory_space<vmem>>, vector<1x8x128xf32>
      %657 = vector.shape_cast %656 : vector<1x8x128xf32> to vector<8x128xf32>
      %cst_381 = arith.constant dense<0.000000e+00> : vector<8x128xf32>
      %658 = tpu.matmul %655, %145, %cst_381 {dimension_numbers = #tpu.dot_dimension_numbers<[1], [0], [0], [1], [0, 0, 1, 1], [], []>} : vector<8x128xbf16>, vector<128x128xbf16>, vector<8x128xf32> -> vector<8x128xf32>
      %659 = arith.addf %657, %658 : vector<8x128xf32>
      %cst_382 = arith.constant 5.000000e-01 : f32
      %660 = vector.broadcast %cst_382 : f32 to vector<8x128xf32>
      %661 = arith.mulf %660, %659 : vector<8x128xf32>
      %662 = math.tanh %661 : vector<8x128xf32>
      %cst_383 = arith.constant 5.000000e-01 : f32
      %663 = vector.broadcast %cst_383 : f32 to vector<8x128xf32>
      %664 = arith.mulf %663, %662 : vector<8x128xf32>
      %cst_384 = arith.constant 5.000000e-01 : f32
      %665 = vector.broadcast %cst_384 : f32 to vector<8x128xf32>
      %666 = arith.addf %664, %665 : vector<8x128xf32>
      %c9_385 = arith.constant 9 : index
      %c0_386 = arith.constant 0 : index
      %c128_387 = arith.constant 128 : index
      %667 = vector.load %arg13[%c9_385, %c0_386, %c128_387] : memref<16x8x512xf32, #tpu.memory_space<vmem>>, vector<1x8x128xf32>
      %668 = vector.shape_cast %667 : vector<1x8x128xf32> to vector<8x128xf32>
      %cst_388 = arith.constant dense<0.000000e+00> : vector<8x128xf32>
      %669 = tpu.matmul %655, %146, %cst_388 {dimension_numbers = #tpu.dot_dimension_numbers<[1], [0], [0], [1], [0, 0, 1, 1], [], []>} : vector<8x128xbf16>, vector<128x128xbf16>, vector<8x128xf32> -> vector<8x128xf32>
      %670 = arith.addf %668, %669 : vector<8x128xf32>
      %cst_389 = arith.constant 5.000000e-01 : f32
      %671 = vector.broadcast %cst_389 : f32 to vector<8x128xf32>
      %672 = arith.mulf %671, %670 : vector<8x128xf32>
      %673 = math.tanh %672 : vector<8x128xf32>
      %cst_390 = arith.constant 5.000000e-01 : f32
      %674 = vector.broadcast %cst_390 : f32 to vector<8x128xf32>
      %675 = arith.mulf %674, %673 : vector<8x128xf32>
      %cst_391 = arith.constant 5.000000e-01 : f32
      %676 = vector.broadcast %cst_391 : f32 to vector<8x128xf32>
      %677 = arith.addf %675, %676 : vector<8x128xf32>
      %c9_392 = arith.constant 9 : index
      %c0_393 = arith.constant 0 : index
      %c256_394 = arith.constant 256 : index
      %678 = vector.load %arg13[%c9_392, %c0_393, %c256_394] : memref<16x8x512xf32, #tpu.memory_space<vmem>>, vector<1x8x128xf32>
      %679 = vector.shape_cast %678 : vector<1x8x128xf32> to vector<8x128xf32>
      %cst_395 = arith.constant dense<0.000000e+00> : vector<8x128xf32>
      %680 = tpu.matmul %655, %147, %cst_395 {dimension_numbers = #tpu.dot_dimension_numbers<[1], [0], [0], [1], [0, 0, 1, 1], [], []>} : vector<8x128xbf16>, vector<128x128xbf16>, vector<8x128xf32> -> vector<8x128xf32>
      %681 = arith.addf %679, %680 : vector<8x128xf32>
      %682 = math.tanh %681 : vector<8x128xf32>
      %c9_396 = arith.constant 9 : index
      %c0_397 = arith.constant 0 : index
      %c384_398 = arith.constant 384 : index
      %683 = vector.load %arg13[%c9_396, %c0_397, %c384_398] : memref<16x8x512xf32, #tpu.memory_space<vmem>>, vector<1x8x128xf32>
      %684 = vector.shape_cast %683 : vector<1x8x128xf32> to vector<8x128xf32>
      %cst_399 = arith.constant dense<0.000000e+00> : vector<8x128xf32>
      %685 = tpu.matmul %655, %148, %cst_399 {dimension_numbers = #tpu.dot_dimension_numbers<[1], [0], [0], [1], [0, 0, 1, 1], [], []>} : vector<8x128xbf16>, vector<128x128xbf16>, vector<8x128xf32> -> vector<8x128xf32>
      %686 = arith.addf %684, %685 : vector<8x128xf32>
      %cst_400 = arith.constant 5.000000e-01 : f32
      %687 = vector.broadcast %cst_400 : f32 to vector<8x128xf32>
      %688 = arith.mulf %687, %686 : vector<8x128xf32>
      %689 = math.tanh %688 : vector<8x128xf32>
      %cst_401 = arith.constant 5.000000e-01 : f32
      %690 = vector.broadcast %cst_401 : f32 to vector<8x128xf32>
      %691 = arith.mulf %690, %689 : vector<8x128xf32>
      %cst_402 = arith.constant 5.000000e-01 : f32
      %692 = vector.broadcast %cst_402 : f32 to vector<8x128xf32>
      %693 = arith.addf %691, %692 : vector<8x128xf32>
      %694 = arith.mulf %677, %649 : vector<8x128xf32>
      %695 = arith.mulf %666, %682 : vector<8x128xf32>
      %696 = arith.addf %694, %695 : vector<8x128xf32>
      %697 = math.tanh %696 : vector<8x128xf32>
      %698 = arith.mulf %693, %697 : vector<8x128xf32>
      %c9_i32 = arith.constant 9 : i32
      %699 = arith.addi %3, %c9_i32 : i32
      %700 = vector.broadcast %699 : i32 to vector<8x1xi32>
      %701 = arith.cmpi slt, %700, %144 : vector<8x1xi32>
      %702 = vector.shape_cast %701 : vector<8x1xi1> to vector<8x1xi1>
      %703 = vector.broadcast %702 : vector<8x1xi1> to vector<8x128xi1>
      %704 = arith.select %703, %698, %648 : vector<8x128xi1>, vector<8x128xf32>
      %705 = arith.select %703, %696, %649 : vector<8x128xi1>, vector<8x128xf32>
      %cst_403 = arith.constant 0.000000e+00 : f32
      %706 = vector.broadcast %cst_403 : f32 to vector<8x128xf32>
      %707 = arith.select %703, %698, %706 : vector<8x128xi1>, vector<8x128xf32>
      %c9_404 = arith.constant 9 : index
      %c0_405 = arith.constant 0 : index
      %c0_406 = arith.constant 0 : index
      %708 = vector.load %arg10[%c9_404, %c0_405, %c0_406] : memref<16x8x128xf32, #tpu.memory_space<vmem>>, vector<1x8x128xf32>
      %709 = vector.shape_cast %708 : vector<1x8x128xf32> to vector<8x128xf32>
      %710 = vector.shape_cast %707 : vector<8x128xf32> to vector<1x8x128xf32>
      tpu.vector_store %arg10[%c9_404, %c0_405, %c0_406], %710 {strides = array<i32>} : memref<16x8x128xf32, #tpu.memory_space<vmem>>, vector<1x8x128xf32>,
      %711 = arith.truncf %704 : vector<8x128xf32> to vector<8x128xbf16>
      %c10_407 = arith.constant 10 : index
      %c0_408 = arith.constant 0 : index
      %c0_409 = arith.constant 0 : index
      %712 = vector.load %arg13[%c10_407, %c0_408, %c0_409] : memref<16x8x512xf32, #tpu.memory_space<vmem>>, vector<1x8x128xf32>
      %713 = vector.shape_cast %712 : vector<1x8x128xf32> to vector<8x128xf32>
      %cst_410 = arith.constant dense<0.000000e+00> : vector<8x128xf32>
      %714 = tpu.matmul %711, %145, %cst_410 {dimension_numbers = #tpu.dot_dimension_numbers<[1], [0], [0], [1], [0, 0, 1, 1], [], []>} : vector<8x128xbf16>, vector<128x128xbf16>, vector<8x128xf32> -> vector<8x128xf32>
      %715 = arith.addf %713, %714 : vector<8x128xf32>
      %cst_411 = arith.constant 5.000000e-01 : f32
      %716 = vector.broadcast %cst_411 : f32 to vector<8x128xf32>
      %717 = arith.mulf %716, %715 : vector<8x128xf32>
      %718 = math.tanh %717 : vector<8x128xf32>
      %cst_412 = arith.constant 5.000000e-01 : f32
      %719 = vector.broadcast %cst_412 : f32 to vector<8x128xf32>
      %720 = arith.mulf %719, %718 : vector<8x128xf32>
      %cst_413 = arith.constant 5.000000e-01 : f32
      %721 = vector.broadcast %cst_413 : f32 to vector<8x128xf32>
      %722 = arith.addf %720, %721 : vector<8x128xf32>
      %c10_414 = arith.constant 10 : index
      %c0_415 = arith.constant 0 : index
      %c128_416 = arith.constant 128 : index
      %723 = vector.load %arg13[%c10_414, %c0_415, %c128_416] : memref<16x8x512xf32, #tpu.memory_space<vmem>>, vector<1x8x128xf32>
      %724 = vector.shape_cast %723 : vector<1x8x128xf32> to vector<8x128xf32>
      %cst_417 = arith.constant dense<0.000000e+00> : vector<8x128xf32>
      %725 = tpu.matmul %711, %146, %cst_417 {dimension_numbers = #tpu.dot_dimension_numbers<[1], [0], [0], [1], [0, 0, 1, 1], [], []>} : vector<8x128xbf16>, vector<128x128xbf16>, vector<8x128xf32> -> vector<8x128xf32>
      %726 = arith.addf %724, %725 : vector<8x128xf32>
      %cst_418 = arith.constant 5.000000e-01 : f32
      %727 = vector.broadcast %cst_418 : f32 to vector<8x128xf32>
      %728 = arith.mulf %727, %726 : vector<8x128xf32>
      %729 = math.tanh %728 : vector<8x128xf32>
      %cst_419 = arith.constant 5.000000e-01 : f32
      %730 = vector.broadcast %cst_419 : f32 to vector<8x128xf32>
      %731 = arith.mulf %730, %729 : vector<8x128xf32>
      %cst_420 = arith.constant 5.000000e-01 : f32
      %732 = vector.broadcast %cst_420 : f32 to vector<8x128xf32>
      %733 = arith.addf %731, %732 : vector<8x128xf32>
      %c10_421 = arith.constant 10 : index
      %c0_422 = arith.constant 0 : index
      %c256_423 = arith.constant 256 : index
      %734 = vector.load %arg13[%c10_421, %c0_422, %c256_423] : memref<16x8x512xf32, #tpu.memory_space<vmem>>, vector<1x8x128xf32>
      %735 = vector.shape_cast %734 : vector<1x8x128xf32> to vector<8x128xf32>
      %cst_424 = arith.constant dense<0.000000e+00> : vector<8x128xf32>
      %736 = tpu.matmul %711, %147, %cst_424 {dimension_numbers = #tpu.dot_dimension_numbers<[1], [0], [0], [1], [0, 0, 1, 1], [], []>} : vector<8x128xbf16>, vector<128x128xbf16>, vector<8x128xf32> -> vector<8x128xf32>
      %737 = arith.addf %735, %736 : vector<8x128xf32>
      %738 = math.tanh %737 : vector<8x128xf32>
      %c10_425 = arith.constant 10 : index
      %c0_426 = arith.constant 0 : index
      %c384_427 = arith.constant 384 : index
      %739 = vector.load %arg13[%c10_425, %c0_426, %c384_427] : memref<16x8x512xf32, #tpu.memory_space<vmem>>, vector<1x8x128xf32>
      %740 = vector.shape_cast %739 : vector<1x8x128xf32> to vector<8x128xf32>
      %cst_428 = arith.constant dense<0.000000e+00> : vector<8x128xf32>
      %741 = tpu.matmul %711, %148, %cst_428 {dimension_numbers = #tpu.dot_dimension_numbers<[1], [0], [0], [1], [0, 0, 1, 1], [], []>} : vector<8x128xbf16>, vector<128x128xbf16>, vector<8x128xf32> -> vector<8x128xf32>
      %742 = arith.addf %740, %741 : vector<8x128xf32>
      %cst_429 = arith.constant 5.000000e-01 : f32
      %743 = vector.broadcast %cst_429 : f32 to vector<8x128xf32>
      %744 = arith.mulf %743, %742 : vector<8x128xf32>
      %745 = math.tanh %744 : vector<8x128xf32>
      %cst_430 = arith.constant 5.000000e-01 : f32
      %746 = vector.broadcast %cst_430 : f32 to vector<8x128xf32>
      %747 = arith.mulf %746, %745 : vector<8x128xf32>
      %cst_431 = arith.constant 5.000000e-01 : f32
      %748 = vector.broadcast %cst_431 : f32 to vector<8x128xf32>
      %749 = arith.addf %747, %748 : vector<8x128xf32>
      %750 = arith.mulf %733, %705 : vector<8x128xf32>
      %751 = arith.mulf %722, %738 : vector<8x128xf32>
      %752 = arith.addf %750, %751 : vector<8x128xf32>
      %753 = math.tanh %752 : vector<8x128xf32>
      %754 = arith.mulf %749, %753 : vector<8x128xf32>
      %c10_i32 = arith.constant 10 : i32
      %755 = arith.addi %3, %c10_i32 : i32
      %756 = vector.broadcast %755 : i32 to vector<8x1xi32>
      %757 = arith.cmpi slt, %756, %144 : vector<8x1xi32>
      %758 = vector.shape_cast %757 : vector<8x1xi1> to vector<8x1xi1>
      %759 = vector.broadcast %758 : vector<8x1xi1> to vector<8x128xi1>
      %760 = arith.select %759, %754, %704 : vector<8x128xi1>, vector<8x128xf32>
      %761 = arith.select %759, %752, %705 : vector<8x128xi1>, vector<8x128xf32>
      %cst_432 = arith.constant 0.000000e+00 : f32
      %762 = vector.broadcast %cst_432 : f32 to vector<8x128xf32>
      %763 = arith.select %759, %754, %762 : vector<8x128xi1>, vector<8x128xf32>
      %c10_433 = arith.constant 10 : index
      %c0_434 = arith.constant 0 : index
      %c0_435 = arith.constant 0 : index
      %764 = vector.load %arg10[%c10_433, %c0_434, %c0_435] : memref<16x8x128xf32, #tpu.memory_space<vmem>>, vector<1x8x128xf32>
      %765 = vector.shape_cast %764 : vector<1x8x128xf32> to vector<8x128xf32>
      %766 = vector.shape_cast %763 : vector<8x128xf32> to vector<1x8x128xf32>
      tpu.vector_store %arg10[%c10_433, %c0_434, %c0_435], %766 {strides = array<i32>} : memref<16x8x128xf32, #tpu.memory_space<vmem>>, vector<1x8x128xf32>,
      %767 = arith.truncf %760 : vector<8x128xf32> to vector<8x128xbf16>
      %c11_436 = arith.constant 11 : index
      %c0_437 = arith.constant 0 : index
      %c0_438 = arith.constant 0 : index
      %768 = vector.load %arg13[%c11_436, %c0_437, %c0_438] : memref<16x8x512xf32, #tpu.memory_space<vmem>>, vector<1x8x128xf32>
      %769 = vector.shape_cast %768 : vector<1x8x128xf32> to vector<8x128xf32>
      %cst_439 = arith.constant dense<0.000000e+00> : vector<8x128xf32>
      %770 = tpu.matmul %767, %145, %cst_439 {dimension_numbers = #tpu.dot_dimension_numbers<[1], [0], [0], [1], [0, 0, 1, 1], [], []>} : vector<8x128xbf16>, vector<128x128xbf16>, vector<8x128xf32> -> vector<8x128xf32>
      %771 = arith.addf %769, %770 : vector<8x128xf32>
      %cst_440 = arith.constant 5.000000e-01 : f32
      %772 = vector.broadcast %cst_440 : f32 to vector<8x128xf32>
      %773 = arith.mulf %772, %771 : vector<8x128xf32>
      %774 = math.tanh %773 : vector<8x128xf32>
      %cst_441 = arith.constant 5.000000e-01 : f32
      %775 = vector.broadcast %cst_441 : f32 to vector<8x128xf32>
      %776 = arith.mulf %775, %774 : vector<8x128xf32>
      %cst_442 = arith.constant 5.000000e-01 : f32
      %777 = vector.broadcast %cst_442 : f32 to vector<8x128xf32>
      %778 = arith.addf %776, %777 : vector<8x128xf32>
      %c11_443 = arith.constant 11 : index
      %c0_444 = arith.constant 0 : index
      %c128_445 = arith.constant 128 : index
      %779 = vector.load %arg13[%c11_443, %c0_444, %c128_445] : memref<16x8x512xf32, #tpu.memory_space<vmem>>, vector<1x8x128xf32>
      %780 = vector.shape_cast %779 : vector<1x8x128xf32> to vector<8x128xf32>
      %cst_446 = arith.constant dense<0.000000e+00> : vector<8x128xf32>
      %781 = tpu.matmul %767, %146, %cst_446 {dimension_numbers = #tpu.dot_dimension_numbers<[1], [0], [0], [1], [0, 0, 1, 1], [], []>} : vector<8x128xbf16>, vector<128x128xbf16>, vector<8x128xf32> -> vector<8x128xf32>
      %782 = arith.addf %780, %781 : vector<8x128xf32>
      %cst_447 = arith.constant 5.000000e-01 : f32
      %783 = vector.broadcast %cst_447 : f32 to vector<8x128xf32>
      %784 = arith.mulf %783, %782 : vector<8x128xf32>
      %785 = math.tanh %784 : vector<8x128xf32>
      %cst_448 = arith.constant 5.000000e-01 : f32
      %786 = vector.broadcast %cst_448 : f32 to vector<8x128xf32>
      %787 = arith.mulf %786, %785 : vector<8x128xf32>
      %cst_449 = arith.constant 5.000000e-01 : f32
      %788 = vector.broadcast %cst_449 : f32 to vector<8x128xf32>
      %789 = arith.addf %787, %788 : vector<8x128xf32>
      %c11_450 = arith.constant 11 : index
      %c0_451 = arith.constant 0 : index
      %c256_452 = arith.constant 256 : index
      %790 = vector.load %arg13[%c11_450, %c0_451, %c256_452] : memref<16x8x512xf32, #tpu.memory_space<vmem>>, vector<1x8x128xf32>
      %791 = vector.shape_cast %790 : vector<1x8x128xf32> to vector<8x128xf32>
      %cst_453 = arith.constant dense<0.000000e+00> : vector<8x128xf32>
      %792 = tpu.matmul %767, %147, %cst_453 {dimension_numbers = #tpu.dot_dimension_numbers<[1], [0], [0], [1], [0, 0, 1, 1], [], []>} : vector<8x128xbf16>, vector<128x128xbf16>, vector<8x128xf32> -> vector<8x128xf32>
      %793 = arith.addf %791, %792 : vector<8x128xf32>
      %794 = math.tanh %793 : vector<8x128xf32>
      %c11_454 = arith.constant 11 : index
      %c0_455 = arith.constant 0 : index
      %c384_456 = arith.constant 384 : index
      %795 = vector.load %arg13[%c11_454, %c0_455, %c384_456] : memref<16x8x512xf32, #tpu.memory_space<vmem>>, vector<1x8x128xf32>
      %796 = vector.shape_cast %795 : vector<1x8x128xf32> to vector<8x128xf32>
      %cst_457 = arith.constant dense<0.000000e+00> : vector<8x128xf32>
      %797 = tpu.matmul %767, %148, %cst_457 {dimension_numbers = #tpu.dot_dimension_numbers<[1], [0], [0], [1], [0, 0, 1, 1], [], []>} : vector<8x128xbf16>, vector<128x128xbf16>, vector<8x128xf32> -> vector<8x128xf32>
      %798 = arith.addf %796, %797 : vector<8x128xf32>
      %cst_458 = arith.constant 5.000000e-01 : f32
      %799 = vector.broadcast %cst_458 : f32 to vector<8x128xf32>
      %800 = arith.mulf %799, %798 : vector<8x128xf32>
      %801 = math.tanh %800 : vector<8x128xf32>
      %cst_459 = arith.constant 5.000000e-01 : f32
      %802 = vector.broadcast %cst_459 : f32 to vector<8x128xf32>
      %803 = arith.mulf %802, %801 : vector<8x128xf32>
      %cst_460 = arith.constant 5.000000e-01 : f32
      %804 = vector.broadcast %cst_460 : f32 to vector<8x128xf32>
      %805 = arith.addf %803, %804 : vector<8x128xf32>
      %806 = arith.mulf %789, %761 : vector<8x128xf32>
      %807 = arith.mulf %778, %794 : vector<8x128xf32>
      %808 = arith.addf %806, %807 : vector<8x128xf32>
      %809 = math.tanh %808 : vector<8x128xf32>
      %810 = arith.mulf %805, %809 : vector<8x128xf32>
      %c11_i32 = arith.constant 11 : i32
      %811 = arith.addi %3, %c11_i32 : i32
      %812 = vector.broadcast %811 : i32 to vector<8x1xi32>
      %813 = arith.cmpi slt, %812, %144 : vector<8x1xi32>
      %814 = vector.shape_cast %813 : vector<8x1xi1> to vector<8x1xi1>
      %815 = vector.broadcast %814 : vector<8x1xi1> to vector<8x128xi1>
      %816 = arith.select %815, %810, %760 : vector<8x128xi1>, vector<8x128xf32>
      %817 = arith.select %815, %808, %761 : vector<8x128xi1>, vector<8x128xf32>
      %cst_461 = arith.constant 0.000000e+00 : f32
      %818 = vector.broadcast %cst_461 : f32 to vector<8x128xf32>
      %819 = arith.select %815, %810, %818 : vector<8x128xi1>, vector<8x128xf32>
      %c11_462 = arith.constant 11 : index
      %c0_463 = arith.constant 0 : index
      %c0_464 = arith.constant 0 : index
      %820 = vector.load %arg10[%c11_462, %c0_463, %c0_464] : memref<16x8x128xf32, #tpu.memory_space<vmem>>, vector<1x8x128xf32>
      %821 = vector.shape_cast %820 : vector<1x8x128xf32> to vector<8x128xf32>
      %822 = vector.shape_cast %819 : vector<8x128xf32> to vector<1x8x128xf32>
      tpu.vector_store %arg10[%c11_462, %c0_463, %c0_464], %822 {strides = array<i32>} : memref<16x8x128xf32, #tpu.memory_space<vmem>>, vector<1x8x128xf32>,
      %823 = arith.truncf %816 : vector<8x128xf32> to vector<8x128xbf16>
      %c12_465 = arith.constant 12 : index
      %c0_466 = arith.constant 0 : index
      %c0_467 = arith.constant 0 : index
      %824 = vector.load %arg13[%c12_465, %c0_466, %c0_467] : memref<16x8x512xf32, #tpu.memory_space<vmem>>, vector<1x8x128xf32>
      %825 = vector.shape_cast %824 : vector<1x8x128xf32> to vector<8x128xf32>
      %cst_468 = arith.constant dense<0.000000e+00> : vector<8x128xf32>
      %826 = tpu.matmul %823, %145, %cst_468 {dimension_numbers = #tpu.dot_dimension_numbers<[1], [0], [0], [1], [0, 0, 1, 1], [], []>} : vector<8x128xbf16>, vector<128x128xbf16>, vector<8x128xf32> -> vector<8x128xf32>
      %827 = arith.addf %825, %826 : vector<8x128xf32>
      %cst_469 = arith.constant 5.000000e-01 : f32
      %828 = vector.broadcast %cst_469 : f32 to vector<8x128xf32>
      %829 = arith.mulf %828, %827 : vector<8x128xf32>
      %830 = math.tanh %829 : vector<8x128xf32>
      %cst_470 = arith.constant 5.000000e-01 : f32
      %831 = vector.broadcast %cst_470 : f32 to vector<8x128xf32>
      %832 = arith.mulf %831, %830 : vector<8x128xf32>
      %cst_471 = arith.constant 5.000000e-01 : f32
      %833 = vector.broadcast %cst_471 : f32 to vector<8x128xf32>
      %834 = arith.addf %832, %833 : vector<8x128xf32>
      %c12_472 = arith.constant 12 : index
      %c0_473 = arith.constant 0 : index
      %c128_474 = arith.constant 128 : index
      %835 = vector.load %arg13[%c12_472, %c0_473, %c128_474] : memref<16x8x512xf32, #tpu.memory_space<vmem>>, vector<1x8x128xf32>
      %836 = vector.shape_cast %835 : vector<1x8x128xf32> to vector<8x128xf32>
      %cst_475 = arith.constant dense<0.000000e+00> : vector<8x128xf32>
      %837 = tpu.matmul %823, %146, %cst_475 {dimension_numbers = #tpu.dot_dimension_numbers<[1], [0], [0], [1], [0, 0, 1, 1], [], []>} : vector<8x128xbf16>, vector<128x128xbf16>, vector<8x128xf32> -> vector<8x128xf32>
      %838 = arith.addf %836, %837 : vector<8x128xf32>
      %cst_476 = arith.constant 5.000000e-01 : f32
      %839 = vector.broadcast %cst_476 : f32 to vector<8x128xf32>
      %840 = arith.mulf %839, %838 : vector<8x128xf32>
      %841 = math.tanh %840 : vector<8x128xf32>
      %cst_477 = arith.constant 5.000000e-01 : f32
      %842 = vector.broadcast %cst_477 : f32 to vector<8x128xf32>
      %843 = arith.mulf %842, %841 : vector<8x128xf32>
      %cst_478 = arith.constant 5.000000e-01 : f32
      %844 = vector.broadcast %cst_478 : f32 to vector<8x128xf32>
      %845 = arith.addf %843, %844 : vector<8x128xf32>
      %c12_479 = arith.constant 12 : index
      %c0_480 = arith.constant 0 : index
      %c256_481 = arith.constant 256 : index
      %846 = vector.load %arg13[%c12_479, %c0_480, %c256_481] : memref<16x8x512xf32, #tpu.memory_space<vmem>>, vector<1x8x128xf32>
      %847 = vector.shape_cast %846 : vector<1x8x128xf32> to vector<8x128xf32>
      %cst_482 = arith.constant dense<0.000000e+00> : vector<8x128xf32>
      %848 = tpu.matmul %823, %147, %cst_482 {dimension_numbers = #tpu.dot_dimension_numbers<[1], [0], [0], [1], [0, 0, 1, 1], [], []>} : vector<8x128xbf16>, vector<128x128xbf16>, vector<8x128xf32> -> vector<8x128xf32>
      %849 = arith.addf %847, %848 : vector<8x128xf32>
      %850 = math.tanh %849 : vector<8x128xf32>
      %c12_483 = arith.constant 12 : index
      %c0_484 = arith.constant 0 : index
      %c384_485 = arith.constant 384 : index
      %851 = vector.load %arg13[%c12_483, %c0_484, %c384_485] : memref<16x8x512xf32, #tpu.memory_space<vmem>>, vector<1x8x128xf32>
      %852 = vector.shape_cast %851 : vector<1x8x128xf32> to vector<8x128xf32>
      %cst_486 = arith.constant dense<0.000000e+00> : vector<8x128xf32>
      %853 = tpu.matmul %823, %148, %cst_486 {dimension_numbers = #tpu.dot_dimension_numbers<[1], [0], [0], [1], [0, 0, 1, 1], [], []>} : vector<8x128xbf16>, vector<128x128xbf16>, vector<8x128xf32> -> vector<8x128xf32>
      %854 = arith.addf %852, %853 : vector<8x128xf32>
      %cst_487 = arith.constant 5.000000e-01 : f32
      %855 = vector.broadcast %cst_487 : f32 to vector<8x128xf32>
      %856 = arith.mulf %855, %854 : vector<8x128xf32>
      %857 = math.tanh %856 : vector<8x128xf32>
      %cst_488 = arith.constant 5.000000e-01 : f32
      %858 = vector.broadcast %cst_488 : f32 to vector<8x128xf32>
      %859 = arith.mulf %858, %857 : vector<8x128xf32>
      %cst_489 = arith.constant 5.000000e-01 : f32
      %860 = vector.broadcast %cst_489 : f32 to vector<8x128xf32>
      %861 = arith.addf %859, %860 : vector<8x128xf32>
      %862 = arith.mulf %845, %817 : vector<8x128xf32>
      %863 = arith.mulf %834, %850 : vector<8x128xf32>
      %864 = arith.addf %862, %863 : vector<8x128xf32>
      %865 = math.tanh %864 : vector<8x128xf32>
      %866 = arith.mulf %861, %865 : vector<8x128xf32>
      %c12_i32 = arith.constant 12 : i32
      %867 = arith.addi %3, %c12_i32 : i32
      %868 = vector.broadcast %867 : i32 to vector<8x1xi32>
      %869 = arith.cmpi slt, %868, %144 : vector<8x1xi32>
      %870 = vector.shape_cast %869 : vector<8x1xi1> to vector<8x1xi1>
      %871 = vector.broadcast %870 : vector<8x1xi1> to vector<8x128xi1>
      %872 = arith.select %871, %866, %816 : vector<8x128xi1>, vector<8x128xf32>
      %873 = arith.select %871, %864, %817 : vector<8x128xi1>, vector<8x128xf32>
      %cst_490 = arith.constant 0.000000e+00 : f32
      %874 = vector.broadcast %cst_490 : f32 to vector<8x128xf32>
      %875 = arith.select %871, %866, %874 : vector<8x128xi1>, vector<8x128xf32>
      %c12_491 = arith.constant 12 : index
      %c0_492 = arith.constant 0 : index
      %c0_493 = arith.constant 0 : index
      %876 = vector.load %arg10[%c12_491, %c0_492, %c0_493] : memref<16x8x128xf32, #tpu.memory_space<vmem>>, vector<1x8x128xf32>
      %877 = vector.shape_cast %876 : vector<1x8x128xf32> to vector<8x128xf32>
      %878 = vector.shape_cast %875 : vector<8x128xf32> to vector<1x8x128xf32>
      tpu.vector_store %arg10[%c12_491, %c0_492, %c0_493], %878 {strides = array<i32>} : memref<16x8x128xf32, #tpu.memory_space<vmem>>, vector<1x8x128xf32>,
      %879 = arith.truncf %872 : vector<8x128xf32> to vector<8x128xbf16>
      %c13_494 = arith.constant 13 : index
      %c0_495 = arith.constant 0 : index
      %c0_496 = arith.constant 0 : index
      %880 = vector.load %arg13[%c13_494, %c0_495, %c0_496] : memref<16x8x512xf32, #tpu.memory_space<vmem>>, vector<1x8x128xf32>
      %881 = vector.shape_cast %880 : vector<1x8x128xf32> to vector<8x128xf32>
      %cst_497 = arith.constant dense<0.000000e+00> : vector<8x128xf32>
      %882 = tpu.matmul %879, %145, %cst_497 {dimension_numbers = #tpu.dot_dimension_numbers<[1], [0], [0], [1], [0, 0, 1, 1], [], []>} : vector<8x128xbf16>, vector<128x128xbf16>, vector<8x128xf32> -> vector<8x128xf32>
      %883 = arith.addf %881, %882 : vector<8x128xf32>
      %cst_498 = arith.constant 5.000000e-01 : f32
      %884 = vector.broadcast %cst_498 : f32 to vector<8x128xf32>
      %885 = arith.mulf %884, %883 : vector<8x128xf32>
      %886 = math.tanh %885 : vector<8x128xf32>
      %cst_499 = arith.constant 5.000000e-01 : f32
      %887 = vector.broadcast %cst_499 : f32 to vector<8x128xf32>
      %888 = arith.mulf %887, %886 : vector<8x128xf32>
      %cst_500 = arith.constant 5.000000e-01 : f32
      %889 = vector.broadcast %cst_500 : f32 to vector<8x128xf32>
      %890 = arith.addf %888, %889 : vector<8x128xf32>
      %c13_501 = arith.constant 13 : index
      %c0_502 = arith.constant 0 : index
      %c128_503 = arith.constant 128 : index
      %891 = vector.load %arg13[%c13_501, %c0_502, %c128_503] : memref<16x8x512xf32, #tpu.memory_space<vmem>>, vector<1x8x128xf32>
      %892 = vector.shape_cast %891 : vector<1x8x128xf32> to vector<8x128xf32>
      %cst_504 = arith.constant dense<0.000000e+00> : vector<8x128xf32>
      %893 = tpu.matmul %879, %146, %cst_504 {dimension_numbers = #tpu.dot_dimension_numbers<[1], [0], [0], [1], [0, 0, 1, 1], [], []>} : vector<8x128xbf16>, vector<128x128xbf16>, vector<8x128xf32> -> vector<8x128xf32>
      %894 = arith.addf %892, %893 : vector<8x128xf32>
      %cst_505 = arith.constant 5.000000e-01 : f32
      %895 = vector.broadcast %cst_505 : f32 to vector<8x128xf32>
      %896 = arith.mulf %895, %894 : vector<8x128xf32>
      %897 = math.tanh %896 : vector<8x128xf32>
      %cst_506 = arith.constant 5.000000e-01 : f32
      %898 = vector.broadcast %cst_506 : f32 to vector<8x128xf32>
      %899 = arith.mulf %898, %897 : vector<8x128xf32>
      %cst_507 = arith.constant 5.000000e-01 : f32
      %900 = vector.broadcast %cst_507 : f32 to vector<8x128xf32>
      %901 = arith.addf %899, %900 : vector<8x128xf32>
      %c13_508 = arith.constant 13 : index
      %c0_509 = arith.constant 0 : index
      %c256_510 = arith.constant 256 : index
      %902 = vector.load %arg13[%c13_508, %c0_509, %c256_510] : memref<16x8x512xf32, #tpu.memory_space<vmem>>, vector<1x8x128xf32>
      %903 = vector.shape_cast %902 : vector<1x8x128xf32> to vector<8x128xf32>
      %cst_511 = arith.constant dense<0.000000e+00> : vector<8x128xf32>
      %904 = tpu.matmul %879, %147, %cst_511 {dimension_numbers = #tpu.dot_dimension_numbers<[1], [0], [0], [1], [0, 0, 1, 1], [], []>} : vector<8x128xbf16>, vector<128x128xbf16>, vector<8x128xf32> -> vector<8x128xf32>
      %905 = arith.addf %903, %904 : vector<8x128xf32>
      %906 = math.tanh %905 : vector<8x128xf32>
      %c13_512 = arith.constant 13 : index
      %c0_513 = arith.constant 0 : index
      %c384_514 = arith.constant 384 : index
      %907 = vector.load %arg13[%c13_512, %c0_513, %c384_514] : memref<16x8x512xf32, #tpu.memory_space<vmem>>, vector<1x8x128xf32>
      %908 = vector.shape_cast %907 : vector<1x8x128xf32> to vector<8x128xf32>
      %cst_515 = arith.constant dense<0.000000e+00> : vector<8x128xf32>
      %909 = tpu.matmul %879, %148, %cst_515 {dimension_numbers = #tpu.dot_dimension_numbers<[1], [0], [0], [1], [0, 0, 1, 1], [], []>} : vector<8x128xbf16>, vector<128x128xbf16>, vector<8x128xf32> -> vector<8x128xf32>
      %910 = arith.addf %908, %909 : vector<8x128xf32>
      %cst_516 = arith.constant 5.000000e-01 : f32
      %911 = vector.broadcast %cst_516 : f32 to vector<8x128xf32>
      %912 = arith.mulf %911, %910 : vector<8x128xf32>
      %913 = math.tanh %912 : vector<8x128xf32>
      %cst_517 = arith.constant 5.000000e-01 : f32
      %914 = vector.broadcast %cst_517 : f32 to vector<8x128xf32>
      %915 = arith.mulf %914, %913 : vector<8x128xf32>
      %cst_518 = arith.constant 5.000000e-01 : f32
      %916 = vector.broadcast %cst_518 : f32 to vector<8x128xf32>
      %917 = arith.addf %915, %916 : vector<8x128xf32>
      %918 = arith.mulf %901, %873 : vector<8x128xf32>
      %919 = arith.mulf %890, %906 : vector<8x128xf32>
      %920 = arith.addf %918, %919 : vector<8x128xf32>
      %921 = math.tanh %920 : vector<8x128xf32>
      %922 = arith.mulf %917, %921 : vector<8x128xf32>
      %c13_i32 = arith.constant 13 : i32
      %923 = arith.addi %3, %c13_i32 : i32
      %924 = vector.broadcast %923 : i32 to vector<8x1xi32>
      %925 = arith.cmpi slt, %924, %144 : vector<8x1xi32>
      %926 = vector.shape_cast %925 : vector<8x1xi1> to vector<8x1xi1>
      %927 = vector.broadcast %926 : vector<8x1xi1> to vector<8x128xi1>
      %928 = arith.select %927, %922, %872 : vector<8x128xi1>, vector<8x128xf32>
      %929 = arith.select %927, %920, %873 : vector<8x128xi1>, vector<8x128xf32>
      %cst_519 = arith.constant 0.000000e+00 : f32
      %930 = vector.broadcast %cst_519 : f32 to vector<8x128xf32>
      %931 = arith.select %927, %922, %930 : vector<8x128xi1>, vector<8x128xf32>
      %c13_520 = arith.constant 13 : index
      %c0_521 = arith.constant 0 : index
      %c0_522 = arith.constant 0 : index
      %932 = vector.load %arg10[%c13_520, %c0_521, %c0_522] : memref<16x8x128xf32, #tpu.memory_space<vmem>>, vector<1x8x128xf32>
      %933 = vector.shape_cast %932 : vector<1x8x128xf32> to vector<8x128xf32>
      %934 = vector.shape_cast %931 : vector<8x128xf32> to vector<1x8x128xf32>
      tpu.vector_store %arg10[%c13_520, %c0_521, %c0_522], %934 {strides = array<i32>} : memref<16x8x128xf32, #tpu.memory_space<vmem>>, vector<1x8x128xf32>,
      %935 = arith.truncf %928 : vector<8x128xf32> to vector<8x128xbf16>
      %c14_523 = arith.constant 14 : index
      %c0_524 = arith.constant 0 : index
      %c0_525 = arith.constant 0 : index
      %936 = vector.load %arg13[%c14_523, %c0_524, %c0_525] : memref<16x8x512xf32, #tpu.memory_space<vmem>>, vector<1x8x128xf32>
      %937 = vector.shape_cast %936 : vector<1x8x128xf32> to vector<8x128xf32>
      %cst_526 = arith.constant dense<0.000000e+00> : vector<8x128xf32>
      %938 = tpu.matmul %935, %145, %cst_526 {dimension_numbers = #tpu.dot_dimension_numbers<[1], [0], [0], [1], [0, 0, 1, 1], [], []>} : vector<8x128xbf16>, vector<128x128xbf16>, vector<8x128xf32> -> vector<8x128xf32>
      %939 = arith.addf %937, %938 : vector<8x128xf32>
      %cst_527 = arith.constant 5.000000e-01 : f32
      %940 = vector.broadcast %cst_527 : f32 to vector<8x128xf32>
      %941 = arith.mulf %940, %939 : vector<8x128xf32>
      %942 = math.tanh %941 : vector<8x128xf32>
      %cst_528 = arith.constant 5.000000e-01 : f32
      %943 = vector.broadcast %cst_528 : f32 to vector<8x128xf32>
      %944 = arith.mulf %943, %942 : vector<8x128xf32>
      %cst_529 = arith.constant 5.000000e-01 : f32
      %945 = vector.broadcast %cst_529 : f32 to vector<8x128xf32>
      %946 = arith.addf %944, %945 : vector<8x128xf32>
      %c14_530 = arith.constant 14 : index
      %c0_531 = arith.constant 0 : index
      %c128_532 = arith.constant 128 : index
      %947 = vector.load %arg13[%c14_530, %c0_531, %c128_532] : memref<16x8x512xf32, #tpu.memory_space<vmem>>, vector<1x8x128xf32>
      %948 = vector.shape_cast %947 : vector<1x8x128xf32> to vector<8x128xf32>
      %cst_533 = arith.constant dense<0.000000e+00> : vector<8x128xf32>
      %949 = tpu.matmul %935, %146, %cst_533 {dimension_numbers = #tpu.dot_dimension_numbers<[1], [0], [0], [1], [0, 0, 1, 1], [], []>} : vector<8x128xbf16>, vector<128x128xbf16>, vector<8x128xf32> -> vector<8x128xf32>
      %950 = arith.addf %948, %949 : vector<8x128xf32>
      %cst_534 = arith.constant 5.000000e-01 : f32
      %951 = vector.broadcast %cst_534 : f32 to vector<8x128xf32>
      %952 = arith.mulf %951, %950 : vector<8x128xf32>
      %953 = math.tanh %952 : vector<8x128xf32>
      %cst_535 = arith.constant 5.000000e-01 : f32
      %954 = vector.broadcast %cst_535 : f32 to vector<8x128xf32>
      %955 = arith.mulf %954, %953 : vector<8x128xf32>
      %cst_536 = arith.constant 5.000000e-01 : f32
      %956 = vector.broadcast %cst_536 : f32 to vector<8x128xf32>
      %957 = arith.addf %955, %956 : vector<8x128xf32>
      %c14_537 = arith.constant 14 : index
      %c0_538 = arith.constant 0 : index
      %c256_539 = arith.constant 256 : index
      %958 = vector.load %arg13[%c14_537, %c0_538, %c256_539] : memref<16x8x512xf32, #tpu.memory_space<vmem>>, vector<1x8x128xf32>
      %959 = vector.shape_cast %958 : vector<1x8x128xf32> to vector<8x128xf32>
      %cst_540 = arith.constant dense<0.000000e+00> : vector<8x128xf32>
      %960 = tpu.matmul %935, %147, %cst_540 {dimension_numbers = #tpu.dot_dimension_numbers<[1], [0], [0], [1], [0, 0, 1, 1], [], []>} : vector<8x128xbf16>, vector<128x128xbf16>, vector<8x128xf32> -> vector<8x128xf32>
      %961 = arith.addf %959, %960 : vector<8x128xf32>
      %962 = math.tanh %961 : vector<8x128xf32>
      %c14_541 = arith.constant 14 : index
      %c0_542 = arith.constant 0 : index
      %c384_543 = arith.constant 384 : index
      %963 = vector.load %arg13[%c14_541, %c0_542, %c384_543] : memref<16x8x512xf32, #tpu.memory_space<vmem>>, vector<1x8x128xf32>
      %964 = vector.shape_cast %963 : vector<1x8x128xf32> to vector<8x128xf32>
      %cst_544 = arith.constant dense<0.000000e+00> : vector<8x128xf32>
      %965 = tpu.matmul %935, %148, %cst_544 {dimension_numbers = #tpu.dot_dimension_numbers<[1], [0], [0], [1], [0, 0, 1, 1], [], []>} : vector<8x128xbf16>, vector<128x128xbf16>, vector<8x128xf32> -> vector<8x128xf32>
      %966 = arith.addf %964, %965 : vector<8x128xf32>
      %cst_545 = arith.constant 5.000000e-01 : f32
      %967 = vector.broadcast %cst_545 : f32 to vector<8x128xf32>
      %968 = arith.mulf %967, %966 : vector<8x128xf32>
      %969 = math.tanh %968 : vector<8x128xf32>
      %cst_546 = arith.constant 5.000000e-01 : f32
      %970 = vector.broadcast %cst_546 : f32 to vector<8x128xf32>
      %971 = arith.mulf %970, %969 : vector<8x128xf32>
      %cst_547 = arith.constant 5.000000e-01 : f32
      %972 = vector.broadcast %cst_547 : f32 to vector<8x128xf32>
      %973 = arith.addf %971, %972 : vector<8x128xf32>
      %974 = arith.mulf %957, %929 : vector<8x128xf32>
      %975 = arith.mulf %946, %962 : vector<8x128xf32>
      %976 = arith.addf %974, %975 : vector<8x128xf32>
      %977 = math.tanh %976 : vector<8x128xf32>
      %978 = arith.mulf %973, %977 : vector<8x128xf32>
      %c14_i32 = arith.constant 14 : i32
      %979 = arith.addi %3, %c14_i32 : i32
      %980 = vector.broadcast %979 : i32 to vector<8x1xi32>
      %981 = arith.cmpi slt, %980, %144 : vector<8x1xi32>
      %982 = vector.shape_cast %981 : vector<8x1xi1> to vector<8x1xi1>
      %983 = vector.broadcast %982 : vector<8x1xi1> to vector<8x128xi1>
      %984 = arith.select %983, %978, %928 : vector<8x128xi1>, vector<8x128xf32>
      %985 = arith.select %983, %976, %929 : vector<8x128xi1>, vector<8x128xf32>
      %cst_548 = arith.constant 0.000000e+00 : f32
      %986 = vector.broadcast %cst_548 : f32 to vector<8x128xf32>
      %987 = arith.select %983, %978, %986 : vector<8x128xi1>, vector<8x128xf32>
      %c14_549 = arith.constant 14 : index
      %c0_550 = arith.constant 0 : index
      %c0_551 = arith.constant 0 : index
      %988 = vector.load %arg10[%c14_549, %c0_550, %c0_551] : memref<16x8x128xf32, #tpu.memory_space<vmem>>, vector<1x8x128xf32>
      %989 = vector.shape_cast %988 : vector<1x8x128xf32> to vector<8x128xf32>
      %990 = vector.shape_cast %987 : vector<8x128xf32> to vector<1x8x128xf32>
      tpu.vector_store %arg10[%c14_549, %c0_550, %c0_551], %990 {strides = array<i32>} : memref<16x8x128xf32, #tpu.memory_space<vmem>>, vector<1x8x128xf32>,
      %991 = arith.truncf %984 : vector<8x128xf32> to vector<8x128xbf16>
      %c15_552 = arith.constant 15 : index
      %c0_553 = arith.constant 0 : index
      %c0_554 = arith.constant 0 : index
      %992 = vector.load %arg13[%c15_552, %c0_553, %c0_554] : memref<16x8x512xf32, #tpu.memory_space<vmem>>, vector<1x8x128xf32>
      %993 = vector.shape_cast %992 : vector<1x8x128xf32> to vector<8x128xf32>
      %cst_555 = arith.constant dense<0.000000e+00> : vector<8x128xf32>
      %994 = tpu.matmul %991, %145, %cst_555 {dimension_numbers = #tpu.dot_dimension_numbers<[1], [0], [0], [1], [0, 0, 1, 1], [], []>} : vector<8x128xbf16>, vector<128x128xbf16>, vector<8x128xf32> -> vector<8x128xf32>
      %995 = arith.addf %993, %994 : vector<8x128xf32>
      %cst_556 = arith.constant 5.000000e-01 : f32
      %996 = vector.broadcast %cst_556 : f32 to vector<8x128xf32>
      %997 = arith.mulf %996, %995 : vector<8x128xf32>
      %998 = math.tanh %997 : vector<8x128xf32>
      %cst_557 = arith.constant 5.000000e-01 : f32
      %999 = vector.broadcast %cst_557 : f32 to vector<8x128xf32>
      %1000 = arith.mulf %999, %998 : vector<8x128xf32>
      %cst_558 = arith.constant 5.000000e-01 : f32
      %1001 = vector.broadcast %cst_558 : f32 to vector<8x128xf32>
      %1002 = arith.addf %1000, %1001 : vector<8x128xf32>
      %c15_559 = arith.constant 15 : index
      %c0_560 = arith.constant 0 : index
      %c128_561 = arith.constant 128 : index
      %1003 = vector.load %arg13[%c15_559, %c0_560, %c128_561] : memref<16x8x512xf32, #tpu.memory_space<vmem>>, vector<1x8x128xf32>
      %1004 = vector.shape_cast %1003 : vector<1x8x128xf32> to vector<8x128xf32>
      %cst_562 = arith.constant dense<0.000000e+00> : vector<8x128xf32>
      %1005 = tpu.matmul %991, %146, %cst_562 {dimension_numbers = #tpu.dot_dimension_numbers<[1], [0], [0], [1], [0, 0, 1, 1], [], []>} : vector<8x128xbf16>, vector<128x128xbf16>, vector<8x128xf32> -> vector<8x128xf32>
      %1006 = arith.addf %1004, %1005 : vector<8x128xf32>
      %cst_563 = arith.constant 5.000000e-01 : f32
      %1007 = vector.broadcast %cst_563 : f32 to vector<8x128xf32>
      %1008 = arith.mulf %1007, %1006 : vector<8x128xf32>
      %1009 = math.tanh %1008 : vector<8x128xf32>
      %cst_564 = arith.constant 5.000000e-01 : f32
      %1010 = vector.broadcast %cst_564 : f32 to vector<8x128xf32>
      %1011 = arith.mulf %1010, %1009 : vector<8x128xf32>
      %cst_565 = arith.constant 5.000000e-01 : f32
      %1012 = vector.broadcast %cst_565 : f32 to vector<8x128xf32>
      %1013 = arith.addf %1011, %1012 : vector<8x128xf32>
      %c15_566 = arith.constant 15 : index
      %c0_567 = arith.constant 0 : index
      %c256_568 = arith.constant 256 : index
      %1014 = vector.load %arg13[%c15_566, %c0_567, %c256_568] : memref<16x8x512xf32, #tpu.memory_space<vmem>>, vector<1x8x128xf32>
      %1015 = vector.shape_cast %1014 : vector<1x8x128xf32> to vector<8x128xf32>
      %cst_569 = arith.constant dense<0.000000e+00> : vector<8x128xf32>
      %1016 = tpu.matmul %991, %147, %cst_569 {dimension_numbers = #tpu.dot_dimension_numbers<[1], [0], [0], [1], [0, 0, 1, 1], [], []>} : vector<8x128xbf16>, vector<128x128xbf16>, vector<8x128xf32> -> vector<8x128xf32>
      %1017 = arith.addf %1015, %1016 : vector<8x128xf32>
      %1018 = math.tanh %1017 : vector<8x128xf32>
      %c15_570 = arith.constant 15 : index
      %c0_571 = arith.constant 0 : index
      %c384_572 = arith.constant 384 : index
      %1019 = vector.load %arg13[%c15_570, %c0_571, %c384_572] : memref<16x8x512xf32, #tpu.memory_space<vmem>>, vector<1x8x128xf32>
      %1020 = vector.shape_cast %1019 : vector<1x8x128xf32> to vector<8x128xf32>
      %cst_573 = arith.constant dense<0.000000e+00> : vector<8x128xf32>
      %1021 = tpu.matmul %991, %148, %cst_573 {dimension_numbers = #tpu.dot_dimension_numbers<[1], [0], [0], [1], [0, 0, 1, 1], [], []>} : vector<8x128xbf16>, vector<128x128xbf16>, vector<8x128xf32> -> vector<8x128xf32>
      %1022 = arith.addf %1020, %1021 : vector<8x128xf32>
      %cst_574 = arith.constant 5.000000e-01 : f32
      %1023 = vector.broadcast %cst_574 : f32 to vector<8x128xf32>
      %1024 = arith.mulf %1023, %1022 : vector<8x128xf32>
      %1025 = math.tanh %1024 : vector<8x128xf32>
      %cst_575 = arith.constant 5.000000e-01 : f32
      %1026 = vector.broadcast %cst_575 : f32 to vector<8x128xf32>
      %1027 = arith.mulf %1026, %1025 : vector<8x128xf32>
      %cst_576 = arith.constant 5.000000e-01 : f32
      %1028 = vector.broadcast %cst_576 : f32 to vector<8x128xf32>
      %1029 = arith.addf %1027, %1028 : vector<8x128xf32>
      %1030 = arith.mulf %1013, %985 : vector<8x128xf32>
      %1031 = arith.mulf %1002, %1018 : vector<8x128xf32>
      %1032 = arith.addf %1030, %1031 : vector<8x128xf32>
      %1033 = math.tanh %1032 : vector<8x128xf32>
      %1034 = arith.mulf %1029, %1033 : vector<8x128xf32>
      %c15_i32 = arith.constant 15 : i32
      %1035 = arith.addi %3, %c15_i32 : i32
      %1036 = vector.broadcast %1035 : i32 to vector<8x1xi32>
      %1037 = arith.cmpi slt, %1036, %144 : vector<8x1xi32>
      %1038 = vector.shape_cast %1037 : vector<8x1xi1> to vector<8x1xi1>
      %1039 = vector.broadcast %1038 : vector<8x1xi1> to vector<8x128xi1>
      %1040 = arith.select %1039, %1034, %984 : vector<8x128xi1>, vector<8x128xf32>
      %1041 = arith.select %1039, %1032, %985 : vector<8x128xi1>, vector<8x128xf32>
      %cst_577 = arith.constant 0.000000e+00 : f32
      %1042 = vector.broadcast %cst_577 : f32 to vector<8x128xf32>
      %1043 = arith.select %1039, %1034, %1042 : vector<8x128xi1>, vector<8x128xf32>
      %c15_578 = arith.constant 15 : index
      %c0_579 = arith.constant 0 : index
      %c0_580 = arith.constant 0 : index
      %1044 = vector.load %arg10[%c15_578, %c0_579, %c0_580] : memref<16x8x128xf32, #tpu.memory_space<vmem>>, vector<1x8x128xf32>
      %1045 = vector.shape_cast %1044 : vector<1x8x128xf32> to vector<8x128xf32>
      %1046 = vector.shape_cast %1043 : vector<8x128xf32> to vector<1x8x128xf32>
      tpu.vector_store %arg10[%c15_578, %c0_579, %c0_580], %1046 {strides = array<i32>} : memref<16x8x128xf32, #tpu.memory_space<vmem>>, vector<1x8x128xf32>,
      %c0_581 = arith.constant 0 : index
      %c0_582 = arith.constant 0 : index
      %1047 = vector.load %arg14[%c0_581, %c0_582] : memref<8x128xf32, #tpu.memory_space<vmem>>, vector<8x128xf32>
      tpu.vector_store %arg14[%c0_581, %c0_582], %1040 {strides = array<i32>} : memref<8x128xf32, #tpu.memory_space<vmem>>, vector<8x128xf32>,
      %c0_583 = arith.constant 0 : index
      %c0_584 = arith.constant 0 : index
      %1048 = vector.load %arg15[%c0_583, %c0_584] : memref<8x128xf32, #tpu.memory_space<vmem>>, vector<8x128xf32>
      tpu.vector_store %arg15[%c0_583, %c0_584], %1041 {strides = array<i32>} : memref<8x128xf32, #tpu.memory_space<vmem>>, vector<8x128xf32>,
    } else {
    }
    %c0_i32_3 = arith.constant 0 : i32
    %11 = arith.cmpi eq, %arg1, %c0_i32_3 : i32
    %12 = arith.extui %11 : i1 to i32
    %c0_i32_4 = arith.constant 0 : i32
    %13 = arith.cmpi ne, %12, %c0_i32_4 : i32
    scf.if %13 {
      %c0_5 = arith.constant 0 : index
      %c0_6 = arith.constant 0 : index
      %14 = vector.load %arg14[%c0_5, %c0_6] : memref<8x128xf32, #tpu.memory_space<vmem>>, vector<8x128xf32>
      %c0_7 = arith.constant 0 : index
      %c0_8 = arith.constant 0 : index
      %15 = vector.load %arg11[%c0_7, %c0_8] : memref<8x128xf32, #tpu.memory_space<vmem>>, vector<8x128xf32>
      tpu.vector_store %arg11[%c0_7, %c0_8], %14 {strides = array<i32>} : memref<8x128xf32, #tpu.memory_space<vmem>>, vector<8x128xf32>,
      %c0_9 = arith.constant 0 : index
      %c0_10 = arith.constant 0 : index
      %16 = vector.load %arg15[%c0_9, %c0_10] : memref<8x128xf32, #tpu.memory_space<vmem>>, vector<8x128xf32>
      %c0_11 = arith.constant 0 : index
      %c0_12 = arith.constant 0 : index
      %17 = vector.load %arg12[%c0_11, %c0_12] : memref<8x128xf32, #tpu.memory_space<vmem>>, vector<8x128xf32>
      tpu.vector_store %arg12[%c0_11, %c0_12], %16 {strides = array<i32>} : memref<8x128xf32, #tpu.memory_space<vmem>>, vector<8x128xf32>,
    } else {
    }
    return
  }
  func.func @transform_0(%arg0: i32, %arg1: i32, %arg2: memref<1xi32, #tpu.memory_space<smem>>) -> (i32, i32, i32) {
    %c0_i32 = arith.constant 0 : i32
    %c0_i32_0 = arith.constant 0 : i32
    return %arg1, %arg0, %c0_i32 : i32, i32, i32
  }
  func.func @transform_1(%arg0: i32, %arg1: i32, %arg2: memref<1xi32, #tpu.memory_space<smem>>) -> (i32, i32) {
    %c0_i32 = arith.constant 0 : i32
    %c0_i32_0 = arith.constant 0 : i32
    return %arg0, %c0_i32 : i32, i32
  }
  func.func @transform_2(%arg0: i32, %arg1: i32, %arg2: memref<1xi32, #tpu.memory_space<smem>>) -> (i32, i32) {
    %c0_i32 = arith.constant 0 : i32
    %c0_i32_0 = arith.constant 0 : i32
    %c0_i32_1 = arith.constant 0 : i32
    return %c0_i32, %c0_i32_0 : i32, i32
  }
  func.func @transform_3(%arg0: i32, %arg1: i32, %arg2: memref<1xi32, #tpu.memory_space<smem>>) -> (i32, i32) {
    %c0_i32 = arith.constant 0 : i32
    %c0_i32_0 = arith.constant 0 : i32
    %c0_i32_1 = arith.constant 0 : i32
    return %c0_i32, %c0_i32_0 : i32, i32
  }
  func.func @transform_4(%arg0: i32, %arg1: i32, %arg2: memref<1xi32, #tpu.memory_space<smem>>) -> (i32, i32) {
    %c0_i32 = arith.constant 0 : i32
    %c0_i32_0 = arith.constant 0 : i32
    %c0_i32_1 = arith.constant 0 : i32
    return %c0_i32, %c0_i32_0 : i32, i32
  }
  func.func @transform_5(%arg0: i32, %arg1: i32, %arg2: memref<1xi32, #tpu.memory_space<smem>>) -> (i32, i32) {
    %c0_i32 = arith.constant 0 : i32
    %c0_i32_0 = arith.constant 0 : i32
    return %arg0, %c0_i32 : i32, i32
  }
  func.func @transform_6(%arg0: i32, %arg1: i32, %arg2: memref<1xi32, #tpu.memory_space<smem>>) -> (i32, i32) {
    %c0_i32 = arith.constant 0 : i32
    %c0_i32_0 = arith.constant 0 : i32
    return %arg0, %c0_i32 : i32, i32
  }
  func.func @transform_7(%arg0: i32, %arg1: i32, %arg2: memref<1xi32, #tpu.memory_space<smem>>) -> (i32, i32, i32) {
    %c0_i32 = arith.constant 0 : i32
    %c0_i32_0 = arith.constant 0 : i32
    return %arg1, %arg0, %c0_i32 : i32, i32, i32
  }
  func.func @transform_8(%arg0: i32, %arg1: i32, %arg2: memref<1xi32, #tpu.memory_space<smem>>) -> (i32, i32) {
    %c0_i32 = arith.constant 0 : i32
    %c0_i32_0 = arith.constant 0 : i32
    return %arg0, %c0_i32 : i32, i32
  }
  func.func @transform_9(%arg0: i32, %arg1: i32, %arg2: memref<1xi32, #tpu.memory_space<smem>>) -> (i32, i32) {
    %c0_i32 = arith.constant 0 : i32
    %c0_i32_0 = arith.constant 0 : i32
    return %arg0, %c0_i32 : i32, i32
  }
}

</mosaic_0001>

<llo_original>
// kernel: tpu_custom_call.1
$region0: #{tpu_custom_call.1}
  #allocation0 [shape = 'u32[]', space=smem, size = 0x4, offset = 0x4, fixed_abs, tag = 'smem constant byte address 0x4 - core index']
  #allocation1 [shape = 'u32[144,128]{1,0:T(1,128)}', space=vmem, size = 0x12000, scoped, tag = 'internal scratch']
  #allocation2 [shape = 'f32[16,8,512]{2,1,0:T(8,128)}', space=vmem, size = 0x40000, scoped, tag = 'scratch operand']
  #allocation3 [shape = 'f32[8,128]{1,0:T(8,128)}', space=vmem, size = 0x1000, scoped, tag = 'scratch operand']
  #allocation4 [shape = 'f32[8,128]{1,0:T(8,128)}', space=vmem, size = 0x1000, scoped, tag = 'scratch operand']
  #allocation5 [shape = 's32[1]{0}', space=sflag, size = 0x4, scoped, tag = 'scoped memory for tpu_custom_call.1']
  #allocation6 [shape = 's32[1]{0:T(128)S(6)}', space=smem, size = 0x200, scoped, tag = 'prefetched SMEM operand 0']
  %s0 = inlined_call_operand.<no memory space> [shape: s32[1], index: 0, kind: input, shape index: {}]
  %s1 = inlined_call_operand.hbm [shape: bf16[16,8,128], index: 1, kind: input, shape index: {}]
  %s2 = inlined_call_operand.vmem [shape: s32[8,1], index: 2, kind: input, shape index: {}]
  %s3 = inlined_call_operand.hbm [shape: bf16[128,512], index: 3, kind: input, shape index: {}]
  %s4 = inlined_call_operand.hbm [shape: bf16[128,512], index: 4, kind: input, shape index: {}]
  %s5 = inlined_call_operand.vmem [shape: f32[1,512], index: 5, kind: input, shape index: {}]
  %s6 = inlined_call_operand.vmem [shape: f32[8,128], index: 6, kind: input, shape index: {}]
  %s7 = inlined_call_operand.vmem [shape: f32[8,128], index: 7, kind: input, shape index: {}]
  %s8 = inlined_call_operand.hbm [shape: f32[16,8,128], index: 8, kind: output, shape index: {0}]
  %s9 = inlined_call_operand.hbm [shape: f32[8,128], index: 9, kind: output, shape index: {1}]
  %s10 = inlined_call_operand.hbm [shape: f32[8,128], index: 10, kind: output, shape index: {2}]
  %11 = xla_tuple %s8, %s9, %s10
  %s12 = sld [smem:[#allocation0]]
  $region82: #{tpu_custom_call.1} parent=0
    _
  %s14 = ssub.s32 1, %s12
  %s15 = scalar_select 0, %s14, %s12
  %16 = sst [smem:[#allocation6]] %s0
  $region1: #{tpu_custom_call.1} parent=0
    #allocation7 [shape = 'u8[32768]{0}', space=vmem, size = 0x8000, scoped, tag = 'input window, operand 1, single buffered']
    #allocation8 [shape = 's32[1]{0}', space=sflag, size = 0x4, scoped, tag = 'scoped memory for tpu_custom_call.1']
    #allocation9 [shape = 's32[1]{0}', space=sflag, size = 0x4, scoped, tag = 'scoped memory for tpu_custom_call.1']
    #allocation10 [shape = 'u8[131072]{0}', space=vmem, size = 0x20000, scoped, tag = 'input window, operand 3, single buffered']
    #allocation11 [shape = 's32[1]{0}', space=sflag, size = 0x4, scoped, tag = 'scoped memory for tpu_custom_call.1']
    #allocation12 [shape = 'u8[131072]{0}', space=vmem, size = 0x20000, scoped, tag = 'input window, operand 4, single buffered']
    #allocation13 [shape = 'u8[65536]{0}', space=vmem, size = 0x10000, scoped, tag = 'output window, operand 0, single buffered']
    #allocation14 [shape = 'u8[4096]{0}', space=vmem, size = 0x1000, scoped, tag = 'output window, operand 1, single buffered']
    #allocation15 [shape = 's32[1]{0}', space=sflag, size = 0x4, scoped, tag = 'scoped memory for tpu_custom_call.1']
    #allocation16 [shape = 'u8[4096]{0}', space=vmem, size = 0x1000, scoped, tag = 'output window, operand 2, single buffered']
    %17 = vsyncpa [#allocation8], 0
    %18 = vsyncpa [#allocation11], 0
    %19 = vsyncpa [#allocation9], 0
    %20 = vsyncpa [#allocation15], 0
    // Predicated region
    $region2: #{tpu_custom_call.1} parent=1 // pred_check
      _
    $region3: #{tpu_custom_call.1} parent=1 // pred_check_branch
      %22 = sbr.rel (0) target = $region5
    $region4: #{tpu_custom_call.1} parent=1 // pred_region
      %s24 = ssub.s32 1024, 1024
      %25 = vsyncadd [#allocation8], %s24
      %s26 = sshll.u32 [#allocation7], 4
      %s27 = int_to_ptr.vmem [resolvable:$true] %s26
      %32 = dma.hbm_to_vmem [thread:$0]  %s1, 1024, %s27, [#allocation8], 64, 64, 4
    $region5: #{tpu_custom_call.1} parent=1 // pred_fallthru
      _
    // Predicated region
    $region6: #{tpu_custom_call.1} parent=1 // pred_check
      _
    $region7: #{tpu_custom_call.1} parent=1 // pred_check_branch
      %34 = sbr.rel (0) target = $region9
    $region8: #{tpu_custom_call.1} parent=1 // pred_region
      _
    $region9: #{tpu_custom_call.1} parent=1 // pred_fallthru
      _
    // Predicated region
    $region10: #{tpu_custom_call.1} parent=1 // pred_check
      _
    $region11: #{tpu_custom_call.1} parent=1 // pred_check_branch
      %36 = sbr.rel (0) target = $region13
    $region12: #{tpu_custom_call.1} parent=1 // pred_region
      %s38 = ssub.s32 4096, 4096
      %39 = vsyncadd [#allocation11], %s38
      %s40 = sshll.u32 [#allocation10], 4
      %s41 = int_to_ptr.vmem [resolvable:$true] %s40
      %46 = dma.hbm_to_vmem [thread:$0]  %s3, 4096, %s41, [#allocation11], 256, 256, 16
    $region13: #{tpu_custom_call.1} parent=1 // pred_fallthru
      _
    // Predicated region
    $region14: #{tpu_custom_call.1} parent=1 // pred_check
      _
    $region15: #{tpu_custom_call.1} parent=1 // pred_check_branch
      %48 = sbr.rel (0) target = $region17
    $region16: #{tpu_custom_call.1} parent=1 // pred_region
      %s50 = ssub.s32 4096, 4096
      %51 = vsyncadd [#allocation11], %s50
      %s52 = sshll.u32 [#allocation12], 4
      %s53 = int_to_ptr.vmem [resolvable:$true] %s52
      %58 = dma.hbm_to_vmem [thread:$0]  %s4, 4096, %s53, [#allocation11], 256, 256, 16
    $region17: #{tpu_custom_call.1} parent=1 // pred_fallthru
      _
    // Predicated region
    $region18: #{tpu_custom_call.1} parent=1 // pred_check
      _
    $region19: #{tpu_custom_call.1} parent=1 // pred_check_branch
      %60 = sbr.rel (0) target = $region21
    $region20: #{tpu_custom_call.1} parent=1 // pred_region
      _
    $region21: #{tpu_custom_call.1} parent=1 // pred_fallthru
      _
    // Predicated region
    $region22: #{tpu_custom_call.1} parent=1 // pred_check
      _
    $region23: #{tpu_custom_call.1} parent=1 // pred_check_branch
      %62 = sbr.rel (0) target = $region25
    $region24: #{tpu_custom_call.1} parent=1 // pred_region
      _
    $region25: #{tpu_custom_call.1} parent=1 // pred_fallthru
      _
    // Predicated region
    $region26: #{tpu_custom_call.1} parent=1 // pred_check
      _
    $region27: #{tpu_custom_call.1} parent=1 // pred_check_branch
      %64 = sbr.rel (0) target = $region29
    $region28: #{tpu_custom_call.1} parent=1 // pred_region
      _
    $region29: #{tpu_custom_call.1} parent=1 // pred_fallthru
      _
    // Predicated region
    $region30: #{tpu_custom_call.1} parent=1 // pred_check
      _
    $region31: #{tpu_custom_call.1} parent=1 // pred_check_branch
      %66 = sbr.rel (0) target = $region33
    $region32: #{tpu_custom_call.1} parent=1 // pred_region
      %67 = dma.done [#allocation8], 1024
    $region33: #{tpu_custom_call.1} parent=1 // pred_fallthru
      _
    // Predicated region
    $region34: #{tpu_custom_call.1} parent=1 // pred_check
      _
    $region35: #{tpu_custom_call.1} parent=1 // pred_check_branch
      %69 = sbr.rel (0) target = $region37
    $region36: #{tpu_custom_call.1} parent=1 // pred_region
      %70 = dma.done [#allocation11], 4096
    $region37: #{tpu_custom_call.1} parent=1 // pred_fallthru
      _
    // Predicated region
    $region38: #{tpu_custom_call.1} parent=1 // pred_check
      _
    $region39: #{tpu_custom_call.1} parent=1 // pred_check_branch
      %72 = sbr.rel (0) target = $region41
    $region40: #{tpu_custom_call.1} parent=1 // pred_region
      %73 = dma.done [#allocation11], 4096
    $region41: #{tpu_custom_call.1} parent=1 // pred_fallthru
      _
    %p75 = scmp.eq.s32.totalorder 0, 0
    // Predicated region
    $region42: #{tpu_custom_call.1} parent=1 // pred_check
      %p76 = pneg %p75
    $region43: #{tpu_custom_call.1} parent=1 // pred_check_branch
      %78 = sbr.rel (%p76) target = $region45
    $region44: #{tpu_custom_call.1} parent=1 // pred_region
      %v79 = vld [vmem:[%s6] sm:$0xff]
      %80 = vst [vmem:[#allocation3] sm:$0xff] %v79
      %v81 = vld [vmem:[%s7] sm:$0xff]
      %82 = vst [vmem:[#allocation4] sm:$0xff] %v81
    $region45: #{tpu_custom_call.1} parent=1 // pred_fallthru
      _
    %s83 = smul.u32 0, 16
    %s84 = sld [smem:[#allocation6]]
    %p85 = scmp.ge.s32.totalorder %s83, %s84
    // Predicated region
    $region46: #{tpu_custom_call.1} parent=1 // pred_check
      %p86 = pneg %p85
    $region47: #{tpu_custom_call.1} parent=1 // pred_check_branch
      %88 = sbr.rel (%p86) target = $region49
    $region48: #{tpu_custom_call.1} parent=1 // pred_region
      %89 = vst [vmem:[#allocation13] sm:$0xff] 0.0
      %90 = vst [vmem:[#allocation13 + $0x8] sm:$0xff] 0.0
      %91 = vst [vmem:[#allocation13 + $0x10] sm:$0xff] 0.0
      %92 = vst [vmem:[#allocation13 + $0x18] sm:$0xff] 0.0
      %93 = vst [vmem:[#allocation13 + $0x20] sm:$0xff] 0.0
      %94 = vst [vmem:[#allocation13 + $0x28] sm:$0xff] 0.0
      %95 = vst [vmem:[#allocation13 + $0x30] sm:$0xff] 0.0
      %96 = vst [vmem:[#allocation13 + $0x38] sm:$0xff] 0.0
      %97 = vst [vmem:[#allocation13 + $0x40] sm:$0xff] 0.0
      %98 = vst [vmem:[#allocation13 + $0x48] sm:$0xff] 0.0
      %99 = vst [vmem:[#allocation13 + $0x50] sm:$0xff] 0.0
      %100 = vst [vmem:[#allocation13 + $0x58] sm:$0xff] 0.0
      %101 = vst [vmem:[#allocation13 + $0x60] sm:$0xff] 0.0
      %102 = vst [vmem:[#allocation13 + $0x68] sm:$0xff] 0.0
      %103 = vst [vmem:[#allocation13 + $0x70] sm:$0xff] 0.0
      %104 = vst [vmem:[#allocation13 + $0x78] sm:$0xff] 0.0
    $region49: #{tpu_custom_call.1} parent=1 // pred_fallthru
      _
    %p105 = scmp.lt.s32.totalorder %s83, %s84
    // Predicated region
    $region50: #{tpu_custom_call.1} parent=1 // pred_check
      %p106 = pneg %p105
    $region51: #{tpu_custom_call.1} parent=1 // pred_check_branch
      %108 = sbr.rel (%p106) target = $region53
    $region52: #{tpu_custom_call.1} parent=1 // pred_region
      %v109 = vld [vmem:[#allocation10] sm:$0xff]
      %v110 = vld [vmem:[#allocation10 + $0x8] sm:$0xff]
      %v111 = vld [vmem:[#allocation10 + $0x10] sm:$0xff]
      %v112 = vld [vmem:[#allocation10 + $0x18] sm:$0xff]
      %v113 = vld [vmem:[#allocation10 + $0x20] sm:$0xff]
      %v114 = vld [vmem:[#allocation10 + $0x28] sm:$0xff]
      %v115 = vld [vmem:[#allocation10 + $0x30] sm:$0xff]
      %v116 = vld [vmem:[#allocation10 + $0x38] sm:$0xff]
      %v117 = vld [vmem:[#allocation10 + $0x40] sm:$0xff]
      %v118 = vld [vmem:[#allocation10 + $0x48] sm:$0xff]
      %v119 = vld [vmem:[#allocation10 + $0x50] sm:$0xff]
      %v120 = vld [vmem:[#allocation10 + $0x58] sm:$0xff]
      %v121 = vld [vmem:[#allocation10 + $0x60] sm:$0xff]
      %v122 = vld [vmem:[#allocation10 + $0x68] sm:$0xff]
      %v123 = vld [vmem:[#allocation10 + $0x70] sm:$0xff]
      %v124 = vld [vmem:[#allocation10 + $0x78] sm:$0xff]
      %v125 = vld [vmem:[#allocation10 + $0x80] sm:$0xff]
      %v126 = vld [vmem:[#allocation10 + $0x88] sm:$0xff]
      %v127 = vld [vmem:[#allocation10 + $0x90] sm:$0xff]
      %v128 = vld [vmem:[#allocation10 + $0x98] sm:$0xff]
      %v129 = vld [vmem:[#allocation10 + $0xa0] sm:$0xff]
      %v130 = vld [vmem:[#allocation10 + $0xa8] sm:$0xff]
      %v131 = vld [vmem:[#allocation10 + $0xb0] sm:$0xff]
      %v132 = vld [vmem:[#allocation10 + $0xb8] sm:$0xff]
      %v133 = vld [vmem:[#allocation10 + $0xc0] sm:$0xff]
      %v134 = vld [vmem:[#allocation10 + $0xc8] sm:$0xff]
      %v135 = vld [vmem:[#allocation10 + $0xd0] sm:$0xff]
      %v136 = vld [vmem:[#allocation10 + $0xd8] sm:$0xff]
      %v137 = vld [vmem:[#allocation10 + $0xe0] sm:$0xff]
      %v138 = vld [vmem:[#allocation10 + $0xe8] sm:$0xff]
      %v139 = vld [vmem:[#allocation10 + $0xf0] sm:$0xff]
      %v140 = vld [vmem:[#allocation10 + $0xf8] sm:$0xff]
      %v141 = vld [vmem:[%s5] sm:$0xf]
      %v142 = vld [vmem:[#allocation7] sm:$0xf]
      %v144 = vlaneseq
      %v145 = vshrl.u32 %v144, 7
      %v146 = vsub.s32 0, %v145
      %v147 = vrot.slane %v141, %v146
      %v148 = vlaneseq
      %v149 = vshrl.u32 %v148, 7
      %v150 = vsub.s32 1, %v149
      %v151 = vrot.slane %v141, %v150
      %v152 = vlaneseq
      %v153 = vshrl.u32 %v152, 7
      %v154 = vsub.s32 2, %v153
      %v155 = vrot.slane %v141, %v154
      %v156 = vlaneseq
      %v157 = vshrl.u32 %v156, 7
      %v158 = vsub.s32 3, %v157
      %v159 = vrot.slane %v141, %v158
      %v196 = vunpack.c.l.b16 %v109
      %v197 = vunpack.c.h.b16 %v109
      %v198 = vunpack.c.l.b16 %v110
      %v199 = vunpack.c.h.b16 %v110
      %v200 = vunpack.c.l.b16 %v111
      %v201 = vunpack.c.h.b16 %v111
      %v202 = vunpack.c.l.b16 %v112
      %v203 = vunpack.c.h.b16 %v112
      %v204 = vunpack.c.l.b16 %v113
      %v205 = vunpack.c.h.b16 %v113
      %v206 = vunpack.c.l.b16 %v114
      %v207 = vunpack.c.h.b16 %v114
      %v208 = vunpack.c.l.b16 %v115
      %v209 = vunpack.c.h.b16 %v115
      %v210 = vunpack.c.l.b16 %v116
      %v211 = vunpack.c.h.b16 %v116
      %v212 = vunpack.c.l.b16 %v117
      %v213 = vunpack.c.h.b16 %v117
      %v214 = vunpack.c.l.b16 %v118
      %v215 = vunpack.c.h.b16 %v118
      %v216 = vunpack.c.l.b16 %v119
      %v217 = vunpack.c.h.b16 %v119
      %v218 = vunpack.c.l.b16 %v120
      %v219 = vunpack.c.h.b16 %v120
      %v220 = vunpack.c.l.b16 %v121
      %v221 = vunpack.c.h.b16 %v121
      %v222 = vunpack.c.l.b16 %v122
      %v223 = vunpack.c.h.b16 %v122
      %v224 = vunpack.c.l.b16 %v123
      %v225 = vunpack.c.h.b16 %v123
      %v226 = vunpack.c.l.b16 %v124
      %v227 = vunpack.c.h.b16 %v124
      %v228 = vunpack.c.l.b16 %v125
      %v229 = vunpack.c.h.b16 %v125
      %v230 = vunpack.c.l.b16 %v126
      %v231 = vunpack.c.h.b16 %v126
      %v232 = vunpack.c.l.b16 %v127
      %v233 = vunpack.c.h.b16 %v127
      %v234 = vunpack.c.l.b16 %v128
      %v235 = vunpack.c.h.b16 %v128
      %v236 = vunpack.c.l.b16 %v129
      %v237 = vunpack.c.h.b16 %v129
      %v238 = vunpack.c.l.b16 %v130
      %v239 = vunpack.c.h.b16 %v130
      %v240 = vunpack.c.l.b16 %v131
      %v241 = vunpack.c.h.b16 %v131
      %v242 = vunpack.c.l.b16 %v132
      %v243 = vunpack.c.h.b16 %v132
      %v244 = vunpack.c.l.b16 %v133
      %v245 = vunpack.c.h.b16 %v133
      %v246 = vunpack.c.l.b16 %v134
      %v247 = vunpack.c.h.b16 %v134
      %v248 = vunpack.c.l.b16 %v135
      %v249 = vunpack.c.h.b16 %v135
      %v250 = vunpack.c.l.b16 %v136
      %v251 = vunpack.c.h.b16 %v136
      %v252 = vunpack.c.l.b16 %v137
      %v253 = vunpack.c.h.b16 %v137
      %v254 = vunpack.c.l.b16 %v138
      %v255 = vunpack.c.h.b16 %v138
      %v256 = vunpack.c.l.b16 %v139
      %v257 = vunpack.c.h.b16 %v139
      %v258 = vunpack.c.l.b16 %v140
      %v259 = vunpack.c.h.b16 %v140
      %v260 = vpack.c.b16 %v200, %v196
      %v261 = vpack.c.b16 %v201, %v197
      %v262 = vpack.c.b16 %v202, %v198
      %v263 = vpack.c.b16 %v203, %v199
      %v264 = vpack.c.b16 %v208, %v204
      %v265 = vpack.c.b16 %v209, %v205
      %v266 = vpack.c.b16 %v210, %v206
      %v267 = vpack.c.b16 %v211, %v207
      %v268 = vpack.c.b16 %v216, %v212
      %v269 = vpack.c.b16 %v217, %v213
      %v270 = vpack.c.b16 %v218, %v214
      %v271 = vpack.c.b16 %v219, %v215
      %v272 = vpack.c.b16 %v224, %v220
      %v273 = vpack.c.b16 %v225, %v221
      %v274 = vpack.c.b16 %v226, %v222
      %v275 = vpack.c.b16 %v227, %v223
      %v276 = vpack.c.b16 %v232, %v228
      %v277 = vpack.c.b16 %v233, %v229
      %v278 = vpack.c.b16 %v234, %v230
      %v279 = vpack.c.b16 %v235, %v231
      %v280 = vpack.c.b16 %v240, %v236
      %v281 = vpack.c.b16 %v241, %v237
      %v282 = vpack.c.b16 %v242, %v238
      %v283 = vpack.c.b16 %v243, %v239
      %v284 = vpack.c.b16 %v248, %v244
      %v285 = vpack.c.b16 %v249, %v245
      %v286 = vpack.c.b16 %v250, %v246
      %v287 = vpack.c.b16 %v251, %v247
      %v288 = vpack.c.b16 %v256, %v252
      %v289 = vpack.c.b16 %v257, %v253
      %v290 = vpack.c.b16 %v258, %v254
      %v291 = vpack.c.b16 %v259, %v255
      %324 = vmatprep.subr.bf16.mxu0 %v261
      %325 = vmatpush1.bf16.msra.mxu0 %v260
      %326 = vmatprep.subr.bf16.mxu0 %v265
      %327 = vmatpush1.bf16.msra.mxu0 %v264
      %328 = vmatprep.subr.bf16.mxu0 %v269
      %329 = vmatpush1.bf16.msra.mxu0 %v268
      %330 = vmatprep.subr.bf16.mxu0 %v273
      %331 = vmatpush1.bf16.msra.mxu0 %v272
      %332 = vmatprep.subr.bf16.mxu0 %v277
      %333 = vmatpush1.bf16.msra.mxu0 %v276
      %334 = vmatprep.subr.bf16.mxu0 %v281
      %335 = vmatpush1.bf16.msra.mxu0 %v280
      %336 = vmatprep.subr.bf16.mxu0 %v285
      %337 = vmatpush1.bf16.msra.mxu0 %v284
      %338 = vmatprep.subr.bf16.mxu0 %v289
      %339 = vmatpush1.bf16.msra.mxu0 %v288
      %340 = vmatprep.subr.bf16.mxu0 0
      %341 = vmatpush1.bf16.msra.mxu0 0
      %342 = vmatprep.subr.bf16.mxu0 0
      %343 = vmatpush1.bf16.msra.mxu0 0
      %344 = vmatprep.subr.bf16.mxu0 0
      %345 = vmatpush1.bf16.msra.mxu0 0
      %346 = vmatprep.subr.bf16.mxu0 0
      %347 = vmatpush1.bf16.msra.mxu0 0
      %348 = vmatprep.subr.bf16.mxu0 0
      %349 = vmatpush1.bf16.msra.mxu0 0
      %350 = vmatprep.subr.bf16.mxu0 0
      %351 = vmatpush1.bf16.msra.mxu0 0
      %352 = vmatprep.subr.bf16.mxu0 0
      %353 = vmatpush1.bf16.msra.mxu0 0
      %354 = vmatprep.subr.bf16.mxu0 0
      %355 = vmatpush1.bf16.msra.mxu0 0
      %356 = vmatprep.mubr.bf16.mxu0 0
      %357 = vmatmul.mubr.bf16.gmra.mrb[0].mxu0 %v142
      %v358 = vpop.f32.mrb[0].mxu0
      %v359 = vadd.f32 %v147, %v358
      %v360 = vpop.f32.mrb[0].mxu0
      %v361 = vadd.f32 %v151, %v360
      %v362 = vpop.f32.mrb[0].mxu0
      %v363 = vpop.f32.mrb[0].mxu0
      %364 = vdwg.mxu0
      %365 = vmatprep.subr.bf16.mxu0 %v263
      %366 = vmatpush1.bf16.msra.mxu0 %v262
      %367 = vmatprep.subr.bf16.mxu0 %v267
      %368 = vmatpush1.bf16.msra.mxu0 %v266
      %369 = vmatprep.subr.bf16.mxu0 %v271
      %370 = vmatpush1.bf16.msra.mxu0 %v270
      %371 = vmatprep.subr.bf16.mxu0 %v275
      %372 = vmatpush1.bf16.msra.mxu0 %v274
      %373 = vmatprep.subr.bf16.mxu0 %v279
      %374 = vmatpush1.bf16.msra.mxu0 %v278
      %375 = vmatprep.subr.bf16.mxu0 %v283
      %376 = vmatpush1.bf16.msra.mxu0 %v282
      %377 = vmatprep.subr.bf16.mxu0 %v287
      %378 = vmatpush1.bf16.msra.mxu0 %v286
      %379 = vmatprep.subr.bf16.mxu0 %v291
      %380 = vmatpush1.bf16.msra.mxu0 %v290
      %381 = vmatprep.subr.bf16.mxu0 0
      %382 = vmatpush1.bf16.msra.mxu0 0
      %383 = vmatprep.subr.bf16.mxu0 0
      %384 = vmatpush1.bf16.msra.mxu0 0
      %385 = vmatprep.subr.bf16.mxu0 0
      %386 = vmatpush1.bf16.msra.mxu0 0
      %387 = vmatprep.subr.bf16.mxu0 0
      %388 = vmatpush1.bf16.msra.mxu0 0
      %389 = vmatprep.subr.bf16.mxu0 0
      %390 = vmatpush1.bf16.msra.mxu0 0
      %391 = vmatprep.subr.bf16.mxu0 0
      %392 = vmatpush1.bf16.msra.mxu0 0
      %393 = vmatprep.subr.bf16.mxu0 0
      %394 = vmatpush1.bf16.msra.mxu0 0
      %395 = vmatprep.subr.bf16.mxu0 0
      %396 = vmatpush1.bf16.msra.mxu0 0
      %397 = vmatprep.mubr.bf16.mxu0 0
      %398 = vmatmul.mubr.bf16.gmra.mrb[0].mxu0 %v142
      %v399 = vpop.f32.mrb[0].mxu0
      %v400 = vadd.f32 %v155, %v399
      %v401 = vpop.f32.mrb[0].mxu0
      %v402 = vadd.f32 %v159, %v401
      %v403 = vpop.f32.mrb[0].mxu0
      %v404 = vpop.f32.mrb[0].mxu0
      %405 = vdwg.mxu0
      %406 = vst [vmem:[#allocation2] sm:$0xff] %v359
      %407 = vst [vmem:[#allocation2 + $0x8] sm:$0xff] %v361
      %408 = vst [vmem:[#allocation2 + $0x10] sm:$0xff] %v400
      %409 = vst [vmem:[#allocation2 + $0x18] sm:$0xff] %v402
      %s410 = scalar_lea.vmem [#allocation7], 4
      %v411 = vld [vmem:[%s410] sm:$0xf]
      %412 = vmatprep.subr.bf16.mxu0 %v261
      %413 = vmatpush1.bf16.msra.mxu0 %v260
      %414 = vmatprep.subr.bf16.mxu0 %v265
      %415 = vmatpush1.bf16.msra.mxu0 %v264
      %416 = vmatprep.subr.bf16.mxu0 %v269
      %417 = vmatpush1.bf16.msra.mxu0 %v268
      %418 = vmatprep.subr.bf16.mxu0 %v273
      %419 = vmatpush1.bf16.msra.mxu0 %v272
      %420 = vmatprep.subr.bf16.mxu0 %v277
      %421 = vmatpush1.bf16.msra.mxu0 %v276
      %422 = vmatprep.subr.bf16.mxu0 %v281
      %423 = vmatpush1.bf16.msra.mxu0 %v280
      %424 = vmatprep.subr.bf16.mxu0 %v285
      %425 = vmatpush1.bf16.msra.mxu0 %v284
      %426 = vmatprep.subr.bf16.mxu0 %v289
      %427 = vmatpush1.bf16.msra.mxu0 %v288
      %428 = vmatprep.subr.bf16.mxu0 0
      %429 = vmatpush1.bf16.msra.mxu0 0
      %430 = vmatprep.subr.bf16.mxu0 0
      %431 = vmatpush1.bf16.msra.mxu0 0
      %432 = vmatprep.subr.bf16.mxu0 0
      %433 = vmatpush1.bf16.msra.mxu0 0
      %434 = vmatprep.subr.bf16.mxu0 0
      %435 = vmatpush1.bf16.msra.mxu0 0
      %436 = vmatprep.subr.bf16.mxu0 0
      %437 = vmatpush1.bf16.msra.mxu0 0
      %438 = vmatprep.subr.bf16.mxu0 0
      %439 = vmatpush1.bf16.msra.mxu0 0
      %440 = vmatprep.subr.bf16.mxu0 0
      %441 = vmatpush1.bf16.msra.mxu0 0
      %442 = vmatprep.subr.bf16.mxu0 0
      %443 = vmatpush1.bf16.msra.mxu0 0
      %444 = vmatprep.mubr.bf16.mxu0 0
      %445 = vmatmul.mubr.bf16.gmra.mrb[0].mxu0 %v411
      %v446 = vpop.f32.mrb[0].mxu0
      %v447 = vadd.f32 %v147, %v446
      %v448 = vpop.f32.mrb[0].mxu0
      %v449 = vadd.f32 %v151, %v448
      %v450 = vpop.f32.mrb[0].mxu0
      %v451 = vpop.f32.mrb[0].mxu0
      %452 = vdwg.mxu0
      %453 = vmatprep.subr.bf16.mxu0 %v263
      %454 = vmatpush1.bf16.msra.mxu0 %v262
      %455 = vmatprep.subr.bf16.mxu0 %v267
      %456 = vmatpush1.bf16.msra.mxu0 %v266
      %457 = vmatprep.subr.bf16.mxu0 %v271
      %458 = vmatpush1.bf16.msra.mxu0 %v270
      %459 = vmatprep.subr.bf16.mxu0 %v275
      %460 = vmatpush1.bf16.msra.mxu0 %v274
      %461 = vmatprep.subr.bf16.mxu0 %v279
      %462 = vmatpush1.bf16.msra.mxu0 %v278
      %463 = vmatprep.subr.bf16.mxu0 %v283
      %464 = vmatpush1.bf16.msra.mxu0 %v282
      %465 = vmatprep.subr.bf16.mxu0 %v287
      %466 = vmatpush1.bf16.msra.mxu0 %v286
      %467 = vmatprep.subr.bf16.mxu0 %v291
      %468 = vmatpush1.bf16.msra.mxu0 %v290
      %469 = vmatprep.subr.bf16.mxu0 0
      %470 = vmatpush1.bf16.msra.mxu0 0
      %471 = vmatprep.subr.bf16.mxu0 0
      %472 = vmatpush1.bf16.msra.mxu0 0
      %473 = vmatprep.subr.bf16.mxu0 0
      %474 = vmatpush1.bf16.msra.mxu0 0
      %475 = vmatprep.subr.bf16.mxu0 0
      %476 = vmatpush1.bf16.msra.mxu0 0
      %477 = vmatprep.subr.bf16.mxu0 0
      %478 = vmatpush1.bf16.msra.mxu0 0
      %479 = vmatprep.subr.bf16.mxu0 0
      %480 = vmatpush1.bf16.msra.mxu0 0
      %481 = vmatprep.subr.bf16.mxu0 0
      %482 = vmatpush1.bf16.msra.mxu0 0
      %483 = vmatprep.subr.bf16.mxu0 0
      %484 = vmatpush1.bf16.msra.mxu0 0
      %485 = vmatprep.mubr.bf16.mxu0 0
      %486 = vmatmul.mubr.bf16.gmra.mrb[0].mxu0 %v411
      %v487 = vpop.f32.mrb[0].mxu0
      %v488 = vadd.f32 %v155, %v487
      %v489 = vpop.f32.mrb[0].mxu0
      %v490 = vadd.f32 %v159, %v489
      %v491 = vpop.f32.mrb[0].mxu0
      %v492 = vpop.f32.mrb[0].mxu0
      %493 = vdwg.mxu0
      %s494 = scalar_lea.vmem [#allocation2], 32
      %495 = vst [vmem:[%s494] sm:$0xff] %v447
      %496 = vst [vmem:[%s494 + $0x8] sm:$0xff] %v449
      %497 = vst [vmem:[%s494 + $0x10] sm:$0xff] %v488
      %498 = vst [vmem:[%s494 + $0x18] sm:$0xff] %v490
      %s499 = scalar_lea.vmem [#allocation7], 8
      %v500 = vld [vmem:[%s499] sm:$0xf]
      %501 = vmatprep.subr.bf16.mxu0 %v261
      %502 = vmatpush1.bf16.msra.mxu0 %v260
      %503 = vmatprep.subr.bf16.mxu0 %v265
      %504 = vmatpush1.bf16.msra.mxu0 %v264
      %505 = vmatprep.subr.bf16.mxu0 %v269
      %506 = vmatpush1.bf16.msra.mxu0 %v268
      %507 = vmatprep.subr.bf16.mxu0 %v273
      %508 = vmatpush1.bf16.msra.mxu0 %v272
      %509 = vmatprep.subr.bf16.mxu0 %v277
      %510 = vmatpush1.bf16.msra.mxu0 %v276
      %511 = vmatprep.subr.bf16.mxu0 %v281
      %512 = vmatpush1.bf16.msra.mxu0 %v280
      %513 = vmatprep.subr.bf16.mxu0 %v285
      %514 = vmatpush1.bf16.msra.mxu0 %v284
      %515 = vmatprep.subr.bf16.mxu0 %v289
      %516 = vmatpush1.bf16.msra.mxu0 %v288
      %517 = vmatprep.subr.bf16.mxu0 0
      %518 = vmatpush1.bf16.msra.mxu0 0
      %519 = vmatprep.subr.bf16.mxu0 0
      %520 = vmatpush1.bf16.msra.mxu0 0
      %521 = vmatprep.subr.bf16.mxu0 0
      %522 = vmatpush1.bf16.msra.mxu0 0
      %523 = vmatprep.subr.bf16.mxu0 0
      %524 = vmatpush1.bf16.msra.mxu0 0
      %525 = vmatprep.subr.bf16.mxu0 0
      %526 = vmatpush1.bf16.msra.mxu0 0
      %527 = vmatprep.subr.bf16.mxu0 0
      %528 = vmatpush1.bf16.msra.mxu0 0
      %529 = vmatprep.subr.bf16.mxu0 0
      %530 = vmatpush1.bf16.msra.mxu0 0
      %531 = vmatprep.subr.bf16.mxu0 0
      %532 = vmatpush1.bf16.msra.mxu0 0
      %533 = vmatprep.mubr.bf16.mxu0 0
      %534 = vmatmul.mubr.bf16.gmra.mrb[0].mxu0 %v500
      %v535 = vpop.f32.mrb[0].mxu0
      %v536 = vadd.f32 %v147, %v535
      %v537 = vpop.f32.mrb[0].mxu0
      %v538 = vadd.f32 %v151, %v537
      %v539 = vpop.f32.mrb[0].mxu0
      %v540 = vpop.f32.mrb[0].mxu0
      %541 = vdwg.mxu0
      %542 = vmatprep.subr.bf16.mxu0 %v263
      %543 = vmatpush1.bf16.msra.mxu0 %v262
      %544 = vmatprep.subr.bf16.mxu0 %v267
      %545 = vmatpush1.bf16.msra.mxu0 %v266
      %546 = vmatprep.subr.bf16.mxu0 %v271
      %547 = vmatpush1.bf16.msra.mxu0 %v270
      %548 = vmatprep.subr.bf16.mxu0 %v275
      %549 = vmatpush1.bf16.msra.mxu0 %v274
      %550 = vmatprep.subr.bf16.mxu0 %v279
      %551 = vmatpush1.bf16.msra.mxu0 %v278
      %552 = vmatprep.subr.bf16.mxu0 %v283
      %553 = vmatpush1.bf16.msra.mxu0 %v282
      %554 = vmatprep.subr.bf16.mxu0 %v287
      %555 = vmatpush1.bf16.msra.mxu0 %v286
      %556 = vmatprep.subr.bf16.mxu0 %v291
      %557 = vmatpush1.bf16.msra.mxu0 %v290
      %558 = vmatprep.subr.bf16.mxu0 0
      %559 = vmatpush1.bf16.msra.mxu0 0
      %560 = vmatprep.subr.bf16.mxu0 0
      %561 = vmatpush1.bf16.msra.mxu0 0
      %562 = vmatprep.subr.bf16.mxu0 0
      %563 = vmatpush1.bf16.msra.mxu0 0
      %564 = vmatprep.subr.bf16.mxu0 0
      %565 = vmatpush1.bf16.msra.mxu0 0
      %566 = vmatprep.subr.bf16.mxu0 0
      %567 = vmatpush1.bf16.msra.mxu0 0
      %568 = vmatprep.subr.bf16.mxu0 0
      %569 = vmatpush1.bf16.msra.mxu0 0
      %570 = vmatprep.subr.bf16.mxu0 0
      %571 = vmatpush1.bf16.msra.mxu0 0
      %572 = vmatprep.subr.bf16.mxu0 0
      %573 = vmatpush1.bf16.msra.mxu0 0
      %574 = vmatprep.mubr.bf16.mxu0 0
      %575 = vmatmul.mubr.bf16.gmra.mrb[0].mxu0 %v500
      %v576 = vpop.f32.mrb[0].mxu0
      %v577 = vadd.f32 %v155, %v576
      %v578 = vpop.f32.mrb[0].mxu0
      %v579 = vadd.f32 %v159, %v578
      %v580 = vpop.f32.mrb[0].mxu0
      %v581 = vpop.f32.mrb[0].mxu0
      %582 = vdwg.mxu0
      %s583 = scalar_lea.vmem [#allocation2], 64
      %584 = vst [vmem:[%s583] sm:$0xff] %v536
      %585 = vst [vmem:[%s583 + $0x8] sm:$0xff] %v538
      %586 = vst [vmem:[%s583 + $0x10] sm:$0xff] %v577
      %587 = vst [vmem:[%s583 + $0x18] sm:$0xff] %v579
      %s588 = scalar_lea.vmem [#allocation7], 12
      %v589 = vld [vmem:[%s588] sm:$0xf]
      %590 = vmatprep.subr.bf16.mxu0 %v261
      %591 = vmatpush1.bf16.msra.mxu0 %v260
      %592 = vmatprep.subr.bf16.mxu0 %v265
      %593 = vmatpush1.bf16.msra.mxu0 %v264
      %594 = vmatprep.subr.bf16.mxu0 %v269
      %595 = vmatpush1.bf16.msra.mxu0 %v268
      %596 = vmatprep.subr.bf16.mxu0 %v273
      %597 = vmatpush1.bf16.msra.mxu0 %v272
      %598 = vmatprep.subr.bf16.mxu0 %v277
      %599 = vmatpush1.bf16.msra.mxu0 %v276
      %600 = vmatprep.subr.bf16.mxu0 %v281
      %601 = vmatpush1.bf16.msra.mxu0 %v280
      %602 = vmatprep.subr.bf16.mxu0 %v285
      %603 = vmatpush1.bf16.msra.mxu0 %v284
      %604 = vmatprep.subr.bf16.mxu0 %v289
      %605 = vmatpush1.bf16.msra.mxu0 %v288
      %606 = vmatprep.subr.bf16.mxu0 0
      %607 = vmatpush1.bf16.msra.mxu0 0
      %608 = vmatprep.subr.bf16.mxu0 0
      %609 = vmatpush1.bf16.msra.mxu0 0
      %610 = vmatprep.subr.bf16.mxu0 0
      %611 = vmatpush1.bf16.msra.mxu0 0
      %612 = vmatprep.subr.bf16.mxu0 0
      %613 = vmatpush1.bf16.msra.mxu0 0
      %614 = vmatprep.subr.bf16.mxu0 0
      %615 = vmatpush1.bf16.msra.mxu0 0
      %616 = vmatprep.subr.bf16.mxu0 0
      %617 = vmatpush1.bf16.msra.mxu0 0
      %618 = vmatprep.subr.bf16.mxu0 0
      %619 = vmatpush1.bf16.msra.mxu0 0
      %620 = vmatprep.subr.bf16.mxu0 0
      %621 = vmatpush1.bf16.msra.mxu0 0
      %622 = vmatprep.mubr.bf16.mxu0 0
      %623 = vmatmul.mubr.bf16.gmra.mrb[0].mxu0 %v589
      %v624 = vpop.f32.mrb[0].mxu0
      %v625 = vadd.f32 %v147, %v624
      %v626 = vpop.f32.mrb[0].mxu0
      %v627 = vadd.f32 %v151, %v626
      %v628 = vpop.f32.mrb[0].mxu0
      %v629 = vpop.f32.mrb[0].mxu0
      %630 = vdwg.mxu0
      %631 = vmatprep.subr.bf16.mxu0 %v263
      %632 = vmatpush1.bf16.msra.mxu0 %v262
      %633 = vmatprep.subr.bf16.mxu0 %v267
      %634 = vmatpush1.bf16.msra.mxu0 %v266
      %635 = vmatprep.subr.bf16.mxu0 %v271
      %636 = vmatpush1.bf16.msra.mxu0 %v270
      %637 = vmatprep.subr.bf16.mxu0 %v275
      %638 = vmatpush1.bf16.msra.mxu0 %v274
      %639 = vmatprep.subr.bf16.mxu0 %v279
      %640 = vmatpush1.bf16.msra.mxu0 %v278
      %641 = vmatprep.subr.bf16.mxu0 %v283
      %642 = vmatpush1.bf16.msra.mxu0 %v282
      %643 = vmatprep.subr.bf16.mxu0 %v287
      %644 = vmatpush1.bf16.msra.mxu0 %v286
      %645 = vmatprep.subr.bf16.mxu0 %v291
      %646 = vmatpush1.bf16.msra.mxu0 %v290
      %647 = vmatprep.subr.bf16.mxu0 0
      %648 = vmatpush1.bf16.msra.mxu0 0
      %649 = vmatprep.subr.bf16.mxu0 0
      %650 = vmatpush1.bf16.msra.mxu0 0
      %651 = vmatprep.subr.bf16.mxu0 0
      %652 = vmatpush1.bf16.msra.mxu0 0
      %653 = vmatprep.subr.bf16.mxu0 0
      %654 = vmatpush1.bf16.msra.mxu0 0
      %655 = vmatprep.subr.bf16.mxu0 0
      %656 = vmatpush1.bf16.msra.mxu0 0
      %657 = vmatprep.subr.bf16.mxu0 0
      %658 = vmatpush1.bf16.msra.mxu0 0
      %659 = vmatprep.subr.bf16.mxu0 0
      %660 = vmatpush1.bf16.msra.mxu0 0
      %661 = vmatprep.subr.bf16.mxu0 0
      %662 = vmatpush1.bf16.msra.mxu0 0
      %663 = vmatprep.mubr.bf16.mxu0 0
      %664 = vmatmul.mubr.bf16.gmra.mrb[0].mxu0 %v589
      %v665 = vpop.f32.mrb[0].mxu0
      %v666 = vadd.f32 %v155, %v665
      %v667 = vpop.f32.mrb[0].mxu0
      %v668 = vadd.f32 %v159, %v667
      %v669 = vpop.f32.mrb[0].mxu0
      %v670 = vpop.f32.mrb[0].mxu0
      %671 = vdwg.mxu0
      %s672 = scalar_lea.vmem [#allocation2], 96
      %673 = vst [vmem:[%s672] sm:$0xff] %v625
      %674 = vst [vmem:[%s672 + $0x8] sm:$0xff] %v627
      %675 = vst [vmem:[%s672 + $0x10] sm:$0xff] %v666
      %676 = vst [vmem:[%s672 + $0x18] sm:$0xff] %v668
      %s677 = scalar_lea.vmem [#allocation7], 16
      %v678 = vld [vmem:[%s677] sm:$0xf]
      %679 = vmatprep.subr.bf16.mxu0 %v261
      %680 = vmatpush1.bf16.msra.mxu0 %v260
      %681 = vmatprep.subr.bf16.mxu0 %v265
      %682 = vmatpush1.bf16.msra.mxu0 %v264
      %683 = vmatprep.subr.bf16.mxu0 %v269
      %684 = vmatpush1.bf16.msra.mxu0 %v268
      %685 = vmatprep.subr.bf16.mxu0 %v273
      %686 = vmatpush1.bf16.msra.mxu0 %v272
      %687 = vmatprep.subr.bf16.mxu0 %v277
      %688 = vmatpush1.bf16.msra.mxu0 %v276
      %689 = vmatprep.subr.bf16.mxu0 %v281
      %690 = vmatpush1.bf16.msra.mxu0 %v280
      %691 = vmatprep.subr.bf16.mxu0 %v285
      %692 = vmatpush1.bf16.msra.mxu0 %v284
      %693 = vmatprep.subr.bf16.mxu0 %v289
      %694 = vmatpush1.bf16.msra.mxu0 %v288
      %695 = vmatprep.subr.bf16.mxu0 0
      %696 = vmatpush1.bf16.msra.mxu0 0
      %697 = vmatprep.subr.bf16.mxu0 0
      %698 = vmatpush1.bf16.msra.mxu0 0
      %699 = vmatprep.subr.bf16.mxu0 0
      %700 = vmatpush1.bf16.msra.mxu0 0
      %701 = vmatprep.subr.bf16.mxu0 0
      %702 = vmatpush1.bf16.msra.mxu0 0
      %703 = vmatprep.subr.bf16.mxu0 0
      %704 = vmatpush1.bf16.msra.mxu0 0
      %705 = vmatprep.subr.bf16.mxu0 0
      %706 = vmatpush1.bf16.msra.mxu0 0
      %707 = vmatprep.subr.bf16.mxu0 0
      %708 = vmatpush1.bf16.msra.mxu0 0
      %709 = vmatprep.subr.bf16.mxu0 0
      %710 = vmatpush1.bf16.msra.mxu0 0
      %711 = vmatprep.mubr.bf16.mxu0 0
      %712 = vmatmul.mubr.bf16.gmra.mrb[0].mxu0 %v678
      %v713 = vpop.f32.mrb[0].mxu0
      %v714 = vadd.f32 %v147, %v713
      %v715 = vpop.f32.mrb[0].mxu0
      %v716 = vadd.f32 %v151, %v715
      %v717 = vpop.f32.mrb[0].mxu0
      %v718 = vpop.f32.mrb[0].mxu0
      %719 = vdwg.mxu0
      %720 = vmatprep.subr.bf16.mxu0 %v263
      %721 = vmatpush1.bf16.msra.mxu0 %v262
      %722 = vmatprep.subr.bf16.mxu0 %v267
      %723 = vmatpush1.bf16.msra.mxu0 %v266
      %724 = vmatprep.subr.bf16.mxu0 %v271
      %725 = vmatpush1.bf16.msra.mxu0 %v270
      %726 = vmatprep.subr.bf16.mxu0 %v275
      %727 = vmatpush1.bf16.msra.mxu0 %v274
      %728 = vmatprep.subr.bf16.mxu0 %v279
      %729 = vmatpush1.bf16.msra.mxu0 %v278
      %730 = vmatprep.subr.bf16.mxu0 %v283
      %731 = vmatpush1.bf16.msra.mxu0 %v282
      %732 = vmatprep.subr.bf16.mxu0 %v287
      %733 = vmatpush1.bf16.msra.mxu0 %v286
      %734 = vmatprep.subr.bf16.mxu0 %v291
      %735 = vmatpush1.bf16.msra.mxu0 %v290
      %736 = vmatprep.subr.bf16.mxu0 0
      %737 = vmatpush1.bf16.msra.mxu0 0
      %738 = vmatprep.subr.bf16.mxu0 0
      %739 = vmatpush1.bf16.msra.mxu0 0
      %740 = vmatprep.subr.bf16.mxu0 0
      %741 = vmatpush1.bf16.msra.mxu0 0
      %742 = vmatprep.subr.bf16.mxu0 0
      %743 = vmatpush1.bf16.msra.mxu0 0
      %744 = vmatprep.subr.bf16.mxu0 0
      %745 = vmatpush1.bf16.msra.mxu0 0
      %746 = vmatprep.subr.bf16.mxu0 0
      %747 = vmatpush1.bf16.msra.mxu0 0
      %748 = vmatprep.subr.bf16.mxu0 0
      %749 = vmatpush1.bf16.msra.mxu0 0
      %750 = vmatprep.subr.bf16.mxu0 0
      %751 = vmatpush1.bf16.msra.mxu0 0
      %752 = vmatprep.mubr.bf16.mxu0 0
      %753 = vmatmul.mubr.bf16.gmra.mrb[0].mxu0 %v678
      %v754 = vpop.f32.mrb[0].mxu0
      %v755 = vadd.f32 %v155, %v754
      %v756 = vpop.f32.mrb[0].mxu0
      %v757 = vadd.f32 %v159, %v756
      %v758 = vpop.f32.mrb[0].mxu0
      %v759 = vpop.f32.mrb[0].mxu0
      %760 = vdwg.mxu0
      %s761 = scalar_lea.vmem [#allocation2], 128
      %762 = vst [vmem:[%s761] sm:$0xff] %v714
      %763 = vst [vmem:[%s761 + $0x8] sm:$0xff] %v716
      %764 = vst [vmem:[%s761 + $0x10] sm:$0xff] %v755
      %765 = vst [vmem:[%s761 + $0x18] sm:$0xff] %v757
      %s766 = scalar_lea.vmem [#allocation7], 20
      %v767 = vld [vmem:[%s766] sm:$0xf]
      %768 = vmatprep.subr.bf16.mxu0 %v261
      %769 = vmatpush1.bf16.msra.mxu0 %v260
      %770 = vmatprep.subr.bf16.mxu0 %v265
      %771 = vmatpush1.bf16.msra.mxu0 %v264
      %772 = vmatprep.subr.bf16.mxu0 %v269
      %773 = vmatpush1.bf16.msra.mxu0 %v268
      %774 = vmatprep.subr.bf16.mxu0 %v273
      %775 = vmatpush1.bf16.msra.mxu0 %v272
      %776 = vmatprep.subr.bf16.mxu0 %v277
      %777 = vmatpush1.bf16.msra.mxu0 %v276
      %778 = vmatprep.subr.bf16.mxu0 %v281
      %779 = vmatpush1.bf16.msra.mxu0 %v280
      %780 = vmatprep.subr.bf16.mxu0 %v285
      %781 = vmatpush1.bf16.msra.mxu0 %v284
      %782 = vmatprep.subr.bf16.mxu0 %v289
      %783 = vmatpush1.bf16.msra.mxu0 %v288
      %784 = vmatprep.subr.bf16.mxu0 0
      %785 = vmatpush1.bf16.msra.mxu0 0
      %786 = vmatprep.subr.bf16.mxu0 0
      %787 = vmatpush1.bf16.msra.mxu0 0
      %788 = vmatprep.subr.bf16.mxu0 0
      %789 = vmatpush1.bf16.msra.mxu0 0
      %790 = vmatprep.subr.bf16.mxu0 0
      %791 = vmatpush1.bf16.msra.mxu0 0
      %792 = vmatprep.subr.bf16.mxu0 0
      %793 = vmatpush1.bf16.msra.mxu0 0
      %794 = vmatprep.subr.bf16.mxu0 0
      %795 = vmatpush1.bf16.msra.mxu0 0
      %796 = vmatprep.subr.bf16.mxu0 0
      %797 = vmatpush1.bf16.msra.mxu0 0
      %798 = vmatprep.subr.bf16.mxu0 0
      %799 = vmatpush1.bf16.msra.mxu0 0
      %800 = vmatprep.mubr.bf16.mxu0 0
      %801 = vmatmul.mubr.bf16.gmra.mrb[0].mxu0 %v767
      %v802 = vpop.f32.mrb[0].mxu0
      %v803 = vadd.f32 %v147, %v802
      %v804 = vpop.f32.mrb[0].mxu0
      %v805 = vadd.f32 %v151, %v804
      %v806 = vpop.f32.mrb[0].mxu0
      %v807 = vpop.f32.mrb[0].mxu0
      %808 = vdwg.mxu0
      %809 = vmatprep.subr.bf16.mxu0 %v263
      %810 = vmatpush1.bf16.msra.mxu0 %v262
      %811 = vmatprep.subr.bf16.mxu0 %v267
      %812 = vmatpush1.bf16.msra.mxu0 %v266
      %813 = vmatprep.subr.bf16.mxu0 %v271
      %814 = vmatpush1.bf16.msra.mxu0 %v270
      %815 = vmatprep.subr.bf16.mxu0 %v275
      %816 = vmatpush1.bf16.msra.mxu0 %v274
      %817 = vmatprep.subr.bf16.mxu0 %v279
      %818 = vmatpush1.bf16.msra.mxu0 %v278
      %819 = vmatprep.subr.bf16.mxu0 %v283
      %820 = vmatpush1.bf16.msra.mxu0 %v282
      %821 = vmatprep.subr.bf16.mxu0 %v287
      %822 = vmatpush1.bf16.msra.mxu0 %v286
      %823 = vmatprep.subr.bf16.mxu0 %v291
      %824 = vmatpush1.bf16.msra.mxu0 %v290
      %825 = vmatprep.subr.bf16.mxu0 0
      %826 = vmatpush1.bf16.msra.mxu0 0
      %827 = vmatprep.subr.bf16.mxu0 0
      %828 = vmatpush1.bf16.msra.mxu0 0
      %829 = vmatprep.subr.bf16.mxu0 0
      %830 = vmatpush1.bf16.msra.mxu0 0
      %831 = vmatprep.subr.bf16.mxu0 0
      %832 = vmatpush1.bf16.msra.mxu0 0
      %833 = vmatprep.subr.bf16.mxu0 0
      %834 = vmatpush1.bf16.msra.mxu0 0
      %835 = vmatprep.subr.bf16.mxu0 0
      %836 = vmatpush1.bf16.msra.mxu0 0
      %837 = vmatprep.subr.bf16.mxu0 0
      %838 = vmatpush1.bf16.msra.mxu0 0
      %839 = vmatprep.subr.bf16.mxu0 0
      %840 = vmatpush1.bf16.msra.mxu0 0
      %841 = vmatprep.mubr.bf16.mxu0 0
      %842 = vmatmul.mubr.bf16.gmra.mrb[0].mxu0 %v767
      %v843 = vpop.f32.mrb[0].mxu0
      %v844 = vadd.f32 %v155, %v843
      %v845 = vpop.f32.mrb[0].mxu0
      %v846 = vadd.f32 %v159, %v845
      %v847 = vpop.f32.mrb[0].mxu0
      %v848 = vpop.f32.mrb[0].mxu0
      %849 = vdwg.mxu0
      %s850 = scalar_lea.vmem [#allocation2], 160
      %851 = vst [vmem:[%s850] sm:$0xff] %v803
      %852 = vst [vmem:[%s850 + $0x8] sm:$0xff] %v805
      %853 = vst [vmem:[%s850 + $0x10] sm:$0xff] %v844
      %854 = vst [vmem:[%s850 + $0x18] sm:$0xff] %v846
      %s855 = scalar_lea.vmem [#allocation7], 24
      %v856 = vld [vmem:[%s855] sm:$0xf]
      %857 = vmatprep.subr.bf16.mxu0 %v261
      %858 = vmatpush1.bf16.msra.mxu0 %v260
      %859 = vmatprep.subr.bf16.mxu0 %v265
      %860 = vmatpush1.bf16.msra.mxu0 %v264
      %861 = vmatprep.subr.bf16.mxu0 %v269
      %862 = vmatpush1.bf16.msra.mxu0 %v268
      %863 = vmatprep.subr.bf16.mxu0 %v273
      %864 = vmatpush1.bf16.msra.mxu0 %v272
      %865 = vmatprep.subr.bf16.mxu0 %v277
      %866 = vmatpush1.bf16.msra.mxu0 %v276
      %867 = vmatprep.subr.bf16.mxu0 %v281
      %868 = vmatpush1.bf16.msra.mxu0 %v280
      %869 = vmatprep.subr.bf16.mxu0 %v285
      %870 = vmatpush1.bf16.msra.mxu0 %v284
      %871 = vmatprep.subr.bf16.mxu0 %v289
      %872 = vmatpush1.bf16.msra.mxu0 %v288
      %873 = vmatprep.subr.bf16.mxu0 0
      %874 = vmatpush1.bf16.msra.mxu0 0
      %875 = vmatprep.subr.bf16.mxu0 0
      %876 = vmatpush1.bf16.msra.mxu0 0
      %877 = vmatprep.subr.bf16.mxu0 0
      %878 = vmatpush1.bf16.msra.mxu0 0
      %879 = vmatprep.subr.bf16.mxu0 0
      %880 = vmatpush1.bf16.msra.mxu0 0
      %881 = vmatprep.subr.bf16.mxu0 0
      %882 = vmatpush1.bf16.msra.mxu0 0
      %883 = vmatprep.subr.bf16.mxu0 0
      %884 = vmatpush1.bf16.msra.mxu0 0
      %885 = vmatprep.subr.bf16.mxu0 0
      %886 = vmatpush1.bf16.msra.mxu0 0
      %887 = vmatprep.subr.bf16.mxu0 0
      %888 = vmatpush1.bf16.msra.mxu0 0
      %889 = vmatprep.mubr.bf16.mxu0 0
      %890 = vmatmul.mubr.bf16.gmra.mrb[0].mxu0 %v856
      %v891 = vpop.f32.mrb[0].mxu0
      %v892 = vadd.f32 %v147, %v891
      %v893 = vpop.f32.mrb[0].mxu0
      %v894 = vadd.f32 %v151, %v893
      %v895 = vpop.f32.mrb[0].mxu0
      %v896 = vpop.f32.mrb[0].mxu0
      %897 = vdwg.mxu0
      %898 = vmatprep.subr.bf16.mxu0 %v263
      %899 = vmatpush1.bf16.msra.mxu0 %v262
      %900 = vmatprep.subr.bf16.mxu0 %v267
      %901 = vmatpush1.bf16.msra.mxu0 %v266
      %902 = vmatprep.subr.bf16.mxu0 %v271
      %903 = vmatpush1.bf16.msra.mxu0 %v270
      %904 = vmatprep.subr.bf16.mxu0 %v275
      %905 = vmatpush1.bf16.msra.mxu0 %v274
      %906 = vmatprep.subr.bf16.mxu0 %v279
      %907 = vmatpush1.bf16.msra.mxu0 %v278
      %908 = vmatprep.subr.bf16.mxu0 %v283
      %909 = vmatpush1.bf16.msra.mxu0 %v282
      %910 = vmatprep.subr.bf16.mxu0 %v287
      %911 = vmatpush1.bf16.msra.mxu0 %v286
      %912 = vmatprep.subr.bf16.mxu0 %v291
      %913 = vmatpush1.bf16.msra.mxu0 %v290
      %914 = vmatprep.subr.bf16.mxu0 0
      %915 = vmatpush1.bf16.msra.mxu0 0
      %916 = vmatprep.subr.bf16.mxu0 0
      %917 = vmatpush1.bf16.msra.mxu0 0
      %918 = vmatprep.subr.bf16.mxu0 0
      %919 = vmatpush1.bf16.msra.mxu0 0
      %920 = vmatprep.subr.bf16.mxu0 0
      %921 = vmatpush1.bf16.msra.mxu0 0
      %922 = vmatprep.subr.bf16.mxu0 0
      %923 = vmatpush1.bf16.msra.mxu0 0
      %924 = vmatprep.subr.bf16.mxu0 0
      %925 = vmatpush1.bf16.msra.mxu0 0
      %926 = vmatprep.subr.bf16.mxu0 0
      %927 = vmatpush1.bf16.msra.mxu0 0
      %928 = vmatprep.subr.bf16.mxu0 0
      %929 = vmatpush1.bf16.msra.mxu0 0
      %930 = vmatprep.mubr.bf16.mxu0 0
      %931 = vmatmul.mubr.bf16.gmra.mrb[0].mxu0 %v856
      %v932 = vpop.f32.mrb[0].mxu0
      %v933 = vadd.f32 %v155, %v932
      %v934 = vpop.f32.mrb[0].mxu0
      %v935 = vadd.f32 %v159, %v934
      %v936 = vpop.f32.mrb[0].mxu0
      %v937 = vpop.f32.mrb[0].mxu0
      %938 = vdwg.mxu0
      %s939 = scalar_lea.vmem [#allocation2], 192
      %940 = vst [vmem:[%s939] sm:$0xff] %v892
      %941 = vst [vmem:[%s939 + $0x8] sm:$0xff] %v894
      %942 = vst [vmem:[%s939 + $0x10] sm:$0xff] %v933
      %943 = vst [vmem:[%s939 + $0x18] sm:$0xff] %v935
      %s944 = scalar_lea.vmem [#allocation7], 28
      %v945 = vld [vmem:[%s944] sm:$0xf]
      %946 = vmatprep.subr.bf16.mxu0 %v261
      %947 = vmatpush1.bf16.msra.mxu0 %v260
      %948 = vmatprep.subr.bf16.mxu0 %v265
      %949 = vmatpush1.bf16.msra.mxu0 %v264
      %950 = vmatprep.subr.bf16.mxu0 %v269
      %951 = vmatpush1.bf16.msra.mxu0 %v268
      %952 = vmatprep.subr.bf16.mxu0 %v273
      %953 = vmatpush1.bf16.msra.mxu0 %v272
      %954 = vmatprep.subr.bf16.mxu0 %v277
      %955 = vmatpush1.bf16.msra.mxu0 %v276
      %956 = vmatprep.subr.bf16.mxu0 %v281
      %957 = vmatpush1.bf16.msra.mxu0 %v280
      %958 = vmatprep.subr.bf16.mxu0 %v285
      %959 = vmatpush1.bf16.msra.mxu0 %v284
      %960 = vmatprep.subr.bf16.mxu0 %v289
      %961 = vmatpush1.bf16.msra.mxu0 %v288
      %962 = vmatprep.subr.bf16.mxu0 0
      %963 = vmatpush1.bf16.msra.mxu0 0
      %964 = vmatprep.subr.bf16.mxu0 0
      %965 = vmatpush1.bf16.msra.mxu0 0
      %966 = vmatprep.subr.bf16.mxu0 0
      %967 = vmatpush1.bf16.msra.mxu0 0
      %968 = vmatprep.subr.bf16.mxu0 0
      %969 = vmatpush1.bf16.msra.mxu0 0
      %970 = vmatprep.subr.bf16.mxu0 0
      %971 = vmatpush1.bf16.msra.mxu0 0
      %972 = vmatprep.subr.bf16.mxu0 0
      %973 = vmatpush1.bf16.msra.mxu0 0
      %974 = vmatprep.subr.bf16.mxu0 0
      %975 = vmatpush1.bf16.msra.mxu0 0
      %976 = vmatprep.subr.bf16.mxu0 0
      %977 = vmatpush1.bf16.msra.mxu0 0
      %978 = vmatprep.mubr.bf16.mxu0 0
      %979 = vmatmul.mubr.bf16.gmra.mrb[0].mxu0 %v945
      %v980 = vpop.f32.mrb[0].mxu0
      %v981 = vadd.f32 %v147, %v980
      %v982 = vpop.f32.mrb[0].mxu0
      %v983 = vadd.f32 %v151, %v982
      %v984 = vpop.f32.mrb[0].mxu0
      %v985 = vpop.f32.mrb[0].mxu0
      %986 = vdwg.mxu0
      %987 = vmatprep.subr.bf16.mxu0 %v263
      %988 = vmatpush1.bf16.msra.mxu0 %v262
      %989 = vmatprep.subr.bf16.mxu0 %v267
      %990 = vmatpush1.bf16.msra.mxu0 %v266
      %991 = vmatprep.subr.bf16.mxu0 %v271
      %992 = vmatpush1.bf16.msra.mxu0 %v270
      %993 = vmatprep.subr.bf16.mxu0 %v275
      %994 = vmatpush1.bf16.msra.mxu0 %v274
      %995 = vmatprep.subr.bf16.mxu0 %v279
      %996 = vmatpush1.bf16.msra.mxu0 %v278
      %997 = vmatprep.subr.bf16.mxu0 %v283
      %998 = vmatpush1.bf16.msra.mxu0 %v282
      %999 = vmatprep.subr.bf16.mxu0 %v287
      %1000 = vmatpush1.bf16.msra.mxu0 %v286
      %1001 = vmatprep.subr.bf16.mxu0 %v291
      %1002 = vmatpush1.bf16.msra.mxu0 %v290
      %1003 = vmatprep.subr.bf16.mxu0 0
      %1004 = vmatpush1.bf16.msra.mxu0 0
      %1005 = vmatprep.subr.bf16.mxu0 0
      %1006 = vmatpush1.bf16.msra.mxu0 0
      %1007 = vmatprep.subr.bf16.mxu0 0
      %1008 = vmatpush1.bf16.msra.mxu0 0
      %1009 = vmatprep.subr.bf16.mxu0 0
      %1010 = vmatpush1.bf16.msra.mxu0 0
      %1011 = vmatprep.subr.bf16.mxu0 0
      %1012 = vmatpush1.bf16.msra.mxu0 0
      %1013 = vmatprep.subr.bf16.mxu0 0
      %1014 = vmatpush1.bf16.msra.mxu0 0
      %1015 = vmatprep.subr.bf16.mxu0 0
      %1016 = vmatpush1.bf16.msra.mxu0 0
      %1017 = vmatprep.subr.bf16.mxu0 0
      %1018 = vmatpush1.bf16.msra.mxu0 0
      %1019 = vmatprep.mubr.bf16.mxu0 0
      %1020 = vmatmul.mubr.bf16.gmra.mrb[0].mxu0 %v945
      %v1021 = vpop.f32.mrb[0].mxu0
      %v1022 = vadd.f32 %v155, %v1021
      %v1023 = vpop.f32.mrb[0].mxu0
      %v1024 = vadd.f32 %v159, %v1023
      %v1025 = vpop.f32.mrb[0].mxu0
      %v1026 = vpop.f32.mrb[0].mxu0
      %1027 = vdwg.mxu0
      %s1028 = scalar_lea.vmem [#allocation2], 224
      %1029 = vst [vmem:[%s1028] sm:$0xff] %v981
      %1030 = vst [vmem:[%s1028 + $0x8] sm:$0xff] %v983
      %1031 = vst [vmem:[%s1028 + $0x10] sm:$0xff] %v1022
      %1032 = vst [vmem:[%s1028 + $0x18] sm:$0xff] %v1024
      %s1033 = scalar_lea.vmem [#allocation7], 32
      %v1034 = vld [vmem:[%s1033] sm:$0xf]
      %1035 = vmatprep.subr.bf16.mxu0 %v261
      %1036 = vmatpush1.bf16.msra.mxu0 %v260
      %1037 = vmatprep.subr.bf16.mxu0 %v265
      %1038 = vmatpush1.bf16.msra.mxu0 %v264
      %1039 = vmatprep.subr.bf16.mxu0 %v269
      %1040 = vmatpush1.bf16.msra.mxu0 %v268
      %1041 = vmatprep.subr.bf16.mxu0 %v273
      %1042 = vmatpush1.bf16.msra.mxu0 %v272
      %1043 = vmatprep.subr.bf16.mxu0 %v277
      %1044 = vmatpush1.bf16.msra.mxu0 %v276
      %1045 = vmatprep.subr.bf16.mxu0 %v281
      %1046 = vmatpush1.bf16.msra.mxu0 %v280
      %1047 = vmatprep.subr.bf16.mxu0 %v285
      %1048 = vmatpush1.bf16.msra.mxu0 %v284
      %1049 = vmatprep.subr.bf16.mxu0 %v289
      %1050 = vmatpush1.bf16.msra.mxu0 %v288
      %1051 = vmatprep.subr.bf16.mxu0 0
      %1052 = vmatpush1.bf16.msra.mxu0 0
      %1053 = vmatprep.subr.bf16.mxu0 0
      %1054 = vmatpush1.bf16.msra.mxu0 0
      %1055 = vmatprep.subr.bf16.mxu0 0
      %1056 = vmatpush1.bf16.msra.mxu0 0
      %1057 = vmatprep.subr.bf16.mxu0 0
      %1058 = vmatpush1.bf16.msra.mxu0 0
      %1059 = vmatprep.subr.bf16.mxu0 0
      %1060 = vmatpush1.bf16.msra.mxu0 0
      %1061 = vmatprep.subr.bf16.mxu0 0
      %1062 = vmatpush1.bf16.msra.mxu0 0
      %1063 = vmatprep.subr.bf16.mxu0 0
      %1064 = vmatpush1.bf16.msra.mxu0 0
      %1065 = vmatprep.subr.bf16.mxu0 0
      %1066 = vmatpush1.bf16.msra.mxu0 0
      %1067 = vmatprep.mubr.bf16.mxu0 0
      %1068 = vmatmul.mubr.bf16.gmra.mrb[0].mxu0 %v1034
      %v1069 = vpop.f32.mrb[0].mxu0
      %v1070 = vadd.f32 %v147, %v1069
      %v1071 = vpop.f32.mrb[0].mxu0
      %v1072 = vadd.f32 %v151, %v1071
      %v1073 = vpop.f32.mrb[0].mxu0
      %v1074 = vpop.f32.mrb[0].mxu0
      %1075 = vdwg.mxu0
      %1076 = vmatprep.subr.bf16.mxu0 %v263
      %1077 = vmatpush1.bf16.msra.mxu0 %v262
      %1078 = vmatprep.subr.bf16.mxu0 %v267
      %1079 = vmatpush1.bf16.msra.mxu0 %v266
      %1080 = vmatprep.subr.bf16.mxu0 %v271
      %1081 = vmatpush1.bf16.msra.mxu0 %v270
      %1082 = vmatprep.subr.bf16.mxu0 %v275
      %1083 = vmatpush1.bf16.msra.mxu0 %v274
      %1084 = vmatprep.subr.bf16.mxu0 %v279
      %1085 = vmatpush1.bf16.msra.mxu0 %v278
      %1086 = vmatprep.subr.bf16.mxu0 %v283
      %1087 = vmatpush1.bf16.msra.mxu0 %v282
      %1088 = vmatprep.subr.bf16.mxu0 %v287
      %1089 = vmatpush1.bf16.msra.mxu0 %v286
      %1090 = vmatprep.subr.bf16.mxu0 %v291
      %1091 = vmatpush1.bf16.msra.mxu0 %v290
      %1092 = vmatprep.subr.bf16.mxu0 0
      %1093 = vmatpush1.bf16.msra.mxu0 0
      %1094 = vmatprep.subr.bf16.mxu0 0
      %1095 = vmatpush1.bf16.msra.mxu0 0
      %1096 = vmatprep.subr.bf16.mxu0 0
      %1097 = vmatpush1.bf16.msra.mxu0 0
      %1098 = vmatprep.subr.bf16.mxu0 0
      %1099 = vmatpush1.bf16.msra.mxu0 0
      %1100 = vmatprep.subr.bf16.mxu0 0
      %1101 = vmatpush1.bf16.msra.mxu0 0
      %1102 = vmatprep.subr.bf16.mxu0 0
      %1103 = vmatpush1.bf16.msra.mxu0 0
      %1104 = vmatprep.subr.bf16.mxu0 0
      %1105 = vmatpush1.bf16.msra.mxu0 0
      %1106 = vmatprep.subr.bf16.mxu0 0
      %1107 = vmatpush1.bf16.msra.mxu0 0
      %1108 = vmatprep.mubr.bf16.mxu0 0
      %1109 = vmatmul.mubr.bf16.gmra.mrb[0].mxu0 %v1034
      %v1110 = vpop.f32.mrb[0].mxu0
      %v1111 = vadd.f32 %v155, %v1110
      %v1112 = vpop.f32.mrb[0].mxu0
      %v1113 = vadd.f32 %v159, %v1112
      %v1114 = vpop.f32.mrb[0].mxu0
      %v1115 = vpop.f32.mrb[0].mxu0
      %1116 = vdwg.mxu0
      %s1117 = scalar_lea.vmem [#allocation2], 256
      %1118 = vst [vmem:[%s1117] sm:$0xff] %v1070
      %1119 = vst [vmem:[%s1117 + $0x8] sm:$0xff] %v1072
      %1120 = vst [vmem:[%s1117 + $0x10] sm:$0xff] %v1111
      %1121 = vst [vmem:[%s1117 + $0x18] sm:$0xff] %v1113
      %s1122 = scalar_lea.vmem [#allocation7], 36
      %v1123 = vld [vmem:[%s1122] sm:$0xf]
      %1124 = vmatprep.subr.bf16.mxu0 %v261
      %1125 = vmatpush1.bf16.msra.mxu0 %v260
      %1126 = vmatprep.subr.bf16.mxu0 %v265
      %1127 = vmatpush1.bf16.msra.mxu0 %v264
      %1128 = vmatprep.subr.bf16.mxu0 %v269
      %1129 = vmatpush1.bf16.msra.mxu0 %v268
      %1130 = vmatprep.subr.bf16.mxu0 %v273
      %1131 = vmatpush1.bf16.msra.mxu0 %v272
      %1132 = vmatprep.subr.bf16.mxu0 %v277
      %1133 = vmatpush1.bf16.msra.mxu0 %v276
      %1134 = vmatprep.subr.bf16.mxu0 %v281
      %1135 = vmatpush1.bf16.msra.mxu0 %v280
      %1136 = vmatprep.subr.bf16.mxu0 %v285
      %1137 = vmatpush1.bf16.msra.mxu0 %v284
      %1138 = vmatprep.subr.bf16.mxu0 %v289
      %1139 = vmatpush1.bf16.msra.mxu0 %v288
      %1140 = vmatprep.subr.bf16.mxu0 0
      %1141 = vmatpush1.bf16.msra.mxu0 0
      %1142 = vmatprep.subr.bf16.mxu0 0
      %1143 = vmatpush1.bf16.msra.mxu0 0
      %1144 = vmatprep.subr.bf16.mxu0 0
      %1145 = vmatpush1.bf16.msra.mxu0 0
      %1146 = vmatprep.subr.bf16.mxu0 0
      %1147 = vmatpush1.bf16.msra.mxu0 0
      %1148 = vmatprep.subr.bf16.mxu0 0
      %1149 = vmatpush1.bf16.msra.mxu0 0
      %1150 = vmatprep.subr.bf16.mxu0 0
      %1151 = vmatpush1.bf16.msra.mxu0 0
      %1152 = vmatprep.subr.bf16.mxu0 0
      %1153 = vmatpush1.bf16.msra.mxu0 0
      %1154 = vmatprep.subr.bf16.mxu0 0
      %1155 = vmatpush1.bf16.msra.mxu0 0
      %1156 = vmatprep.mubr.bf16.mxu0 0
      %1157 = vmatmul.mubr.bf16.gmra.mrb[0].mxu0 %v1123
      %v1158 = vpop.f32.mrb[0].mxu0
      %v1159 = vadd.f32 %v147, %v1158
      %v1160 = vpop.f32.mrb[0].mxu0
      %v1161 = vadd.f32 %v151, %v1160
      %v1162 = vpop.f32.mrb[0].mxu0
      %v1163 = vpop.f32.mrb[0].mxu0
      %1164 = vdwg.mxu0
      %1165 = vmatprep.subr.bf16.mxu0 %v263
      %1166 = vmatpush1.bf16.msra.mxu0 %v262
      %1167 = vmatprep.subr.bf16.mxu0 %v267
      %1168 = vmatpush1.bf16.msra.mxu0 %v266
      %1169 = vmatprep.subr.bf16.mxu0 %v271
      %1170 = vmatpush1.bf16.msra.mxu0 %v270
      %1171 = vmatprep.subr.bf16.mxu0 %v275
      %1172 = vmatpush1.bf16.msra.mxu0 %v274
      %1173 = vmatprep.subr.bf16.mxu0 %v279
      %1174 = vmatpush1.bf16.msra.mxu0 %v278
      %1175 = vmatprep.subr.bf16.mxu0 %v283
      %1176 = vmatpush1.bf16.msra.mxu0 %v282
      %1177 = vmatprep.subr.bf16.mxu0 %v287
      %1178 = vmatpush1.bf16.msra.mxu0 %v286
      %1179 = vmatprep.subr.bf16.mxu0 %v291
      %1180 = vmatpush1.bf16.msra.mxu0 %v290
      %1181 = vmatprep.subr.bf16.mxu0 0
      %1182 = vmatpush1.bf16.msra.mxu0 0
      %1183 = vmatprep.subr.bf16.mxu0 0
      %1184 = vmatpush1.bf16.msra.mxu0 0
      %1185 = vmatprep.subr.bf16.mxu0 0
      %1186 = vmatpush1.bf16.msra.mxu0 0
      %1187 = vmatprep.subr.bf16.mxu0 0
      %1188 = vmatpush1.bf16.msra.mxu0 0
      %1189 = vmatprep.subr.bf16.mxu0 0
      %1190 = vmatpush1.bf16.msra.mxu0 0
      %1191 = vmatprep.subr.bf16.mxu0 0
      %1192 = vmatpush1.bf16.msra.mxu0 0
      %1193 = vmatprep.subr.bf16.mxu0 0
      %1194 = vmatpush1.bf16.msra.mxu0 0
      %1195 = vmatprep.subr.bf16.mxu0 0
      %1196 = vmatpush1.bf16.msra.mxu0 0
      %1197 = vmatprep.mubr.bf16.mxu0 0
      %1198 = vmatmul.mubr.bf16.gmra.mrb[0].mxu0 %v1123
      %v1199 = vpop.f32.mrb[0].mxu0
      %v1200 = vadd.f32 %v155, %v1199
      %v1201 = vpop.f32.mrb[0].mxu0
      %v1202 = vadd.f32 %v159, %v1201
      %v1203 = vpop.f32.mrb[0].mxu0
      %v1204 = vpop.f32.mrb[0].mxu0
      %1205 = vdwg.mxu0
      %s1206 = scalar_lea.vmem [#allocation2], 288
      %1207 = vst [vmem:[%s1206] sm:$0xff] %v1159
      %1208 = vst [vmem:[%s1206 + $0x8] sm:$0xff] %v1161
      %1209 = vst [vmem:[%s1206 + $0x10] sm:$0xff] %v1200
      %1210 = vst [vmem:[%s1206 + $0x18] sm:$0xff] %v1202
      %s1211 = scalar_lea.vmem [#allocation7], 40
      %v1212 = vld [vmem:[%s1211] sm:$0xf]
      %1213 = vmatprep.subr.bf16.mxu0 %v261
      %1214 = vmatpush1.bf16.msra.mxu0 %v260
      %1215 = vmatprep.subr.bf16.mxu0 %v265
      %1216 = vmatpush1.bf16.msra.mxu0 %v264
      %1217 = vmatprep.subr.bf16.mxu0 %v269
      %1218 = vmatpush1.bf16.msra.mxu0 %v268
      %1219 = vmatprep.subr.bf16.mxu0 %v273
      %1220 = vmatpush1.bf16.msra.mxu0 %v272
      %1221 = vmatprep.subr.bf16.mxu0 %v277
      %1222 = vmatpush1.bf16.msra.mxu0 %v276
      %1223 = vmatprep.subr.bf16.mxu0 %v281
      %1224 = vmatpush1.bf16.msra.mxu0 %v280
      %1225 = vmatprep.subr.bf16.mxu0 %v285
      %1226 = vmatpush1.bf16.msra.mxu0 %v284
      %1227 = vmatprep.subr.bf16.mxu0 %v289
      %1228 = vmatpush1.bf16.msra.mxu0 %v288
      %1229 = vmatprep.subr.bf16.mxu0 0
      %1230 = vmatpush1.bf16.msra.mxu0 0
      %1231 = vmatprep.subr.bf16.mxu0 0
      %1232 = vmatpush1.bf16.msra.mxu0 0
      %1233 = vmatprep.subr.bf16.mxu0 0
      %1234 = vmatpush1.bf16.msra.mxu0 0
      %1235 = vmatprep.subr.bf16.mxu0 0
      %1236 = vmatpush1.bf16.msra.mxu0 0
      %1237 = vmatprep.subr.bf16.mxu0 0
      %1238 = vmatpush1.bf16.msra.mxu0 0
      %1239 = vmatprep.subr.bf16.mxu0 0
      %1240 = vmatpush1.bf16.msra.mxu0 0
      %1241 = vmatprep.subr.bf16.mxu0 0
      %1242 = vmatpush1.bf16.msra.mxu0 0
      %1243 = vmatprep.subr.bf16.mxu0 0
      %1244 = vmatpush1.bf16.msra.mxu0 0
      %1245 = vmatprep.mubr.bf16.mxu0 0
      %1246 = vmatmul.mubr.bf16.gmra.mrb[0].mxu0 %v1212
      %v1247 = vpop.f32.mrb[0].mxu0
      %v1248 = vadd.f32 %v147, %v1247
      %v1249 = vpop.f32.mrb[0].mxu0
      %v1250 = vadd.f32 %v151, %v1249
      %v1251 = vpop.f32.mrb[0].mxu0
      %v1252 = vpop.f32.mrb[0].mxu0
      %1253 = vdwg.mxu0
      %1254 = vmatprep.subr.bf16.mxu0 %v263
      %1255 = vmatpush1.bf16.msra.mxu0 %v262
      %1256 = vmatprep.subr.bf16.mxu0 %v267
      %1257 = vmatpush1.bf16.msra.mxu0 %v266
      %1258 = vmatprep.subr.bf16.mxu0 %v271
      %1259 = vmatpush1.bf16.msra.mxu0 %v270
      %1260 = vmatprep.subr.bf16.mxu0 %v275
      %1261 = vmatpush1.bf16.msra.mxu0 %v274
      %1262 = vmatprep.subr.bf16.mxu0 %v279
      %1263 = vmatpush1.bf16.msra.mxu0 %v278
      %1264 = vmatprep.subr.bf16.mxu0 %v283
      %1265 = vmatpush1.bf16.msra.mxu0 %v282
      %1266 = vmatprep.subr.bf16.mxu0 %v287
      %1267 = vmatpush1.bf16.msra.mxu0 %v286
      %1268 = vmatprep.subr.bf16.mxu0 %v291
      %1269 = vmatpush1.bf16.msra.mxu0 %v290
      %1270 = vmatprep.subr.bf16.mxu0 0
      %1271 = vmatpush1.bf16.msra.mxu0 0
      %1272 = vmatprep.subr.bf16.mxu0 0
      %1273 = vmatpush1.bf16.msra.mxu0 0
      %1274 = vmatprep.subr.bf16.mxu0 0
      %1275 = vmatpush1.bf16.msra.mxu0 0
      %1276 = vmatprep.subr.bf16.mxu0 0
      %1277 = vmatpush1.bf16.msra.mxu0 0
      %1278 = vmatprep.subr.bf16.mxu0 0
      %1279 = vmatpush1.bf16.msra.mxu0 0
      %1280 = vmatprep.subr.bf16.mxu0 0
      %1281 = vmatpush1.bf16.msra.mxu0 0
      %1282 = vmatprep.subr.bf16.mxu0 0
      %1283 = vmatpush1.bf16.msra.mxu0 0
      %1284 = vmatprep.subr.bf16.mxu0 0
      %1285 = vmatpush1.bf16.msra.mxu0 0
      %1286 = vmatprep.mubr.bf16.mxu0 0
      %1287 = vmatmul.mubr.bf16.gmra.mrb[0].mxu0 %v1212
      %v1288 = vpop.f32.mrb[0].mxu0
      %v1289 = vadd.f32 %v155, %v1288
      %v1290 = vpop.f32.mrb[0].mxu0
      %v1291 = vadd.f32 %v159, %v1290
      %v1292 = vpop.f32.mrb[0].mxu0
      %v1293 = vpop.f32.mrb[0].mxu0
      %1294 = vdwg.mxu0
      %s1295 = scalar_lea.vmem [#allocation2], 320
      %1296 = vst [vmem:[%s1295] sm:$0xff] %v1248
      %1297 = vst [vmem:[%s1295 + $0x8] sm:$0xff] %v1250
      %1298 = vst [vmem:[%s1295 + $0x10] sm:$0xff] %v1289
      %1299 = vst [vmem:[%s1295 + $0x18] sm:$0xff] %v1291
      %s1300 = scalar_lea.vmem [#allocation7], 44
      %v1301 = vld [vmem:[%s1300] sm:$0xf]
      %1302 = vmatprep.subr.bf16.mxu0 %v261
      %1303 = vmatpush1.bf16.msra.mxu0 %v260
      %1304 = vmatprep.subr.bf16.mxu0 %v265
      %1305 = vmatpush1.bf16.msra.mxu0 %v264
      %1306 = vmatprep.subr.bf16.mxu0 %v269
      %1307 = vmatpush1.bf16.msra.mxu0 %v268
      %1308 = vmatprep.subr.bf16.mxu0 %v273
      %1309 = vmatpush1.bf16.msra.mxu0 %v272
      %1310 = vmatprep.subr.bf16.mxu0 %v277
      %1311 = vmatpush1.bf16.msra.mxu0 %v276
      %1312 = vmatprep.subr.bf16.mxu0 %v281
      %1313 = vmatpush1.bf16.msra.mxu0 %v280
      %1314 = vmatprep.subr.bf16.mxu0 %v285
      %1315 = vmatpush1.bf16.msra.mxu0 %v284
      %1316 = vmatprep.subr.bf16.mxu0 %v289
      %1317 = vmatpush1.bf16.msra.mxu0 %v288
      %1318 = vmatprep.subr.bf16.mxu0 0
      %1319 = vmatpush1.bf16.msra.mxu0 0
      %1320 = vmatprep.subr.bf16.mxu0 0
      %1321 = vmatpush1.bf16.msra.mxu0 0
      %1322 = vmatprep.subr.bf16.mxu0 0
      %1323 = vmatpush1.bf16.msra.mxu0 0
      %1324 = vmatprep.subr.bf16.mxu0 0
      %1325 = vmatpush1.bf16.msra.mxu0 0
      %1326 = vmatprep.subr.bf16.mxu0 0
      %1327 = vmatpush1.bf16.msra.mxu0 0
      %1328 = vmatprep.subr.bf16.mxu0 0
      %1329 = vmatpush1.bf16.msra.mxu0 0
      %1330 = vmatprep.subr.bf16.mxu0 0
      %1331 = vmatpush1.bf16.msra.mxu0 0
      %1332 = vmatprep.subr.bf16.mxu0 0
      %1333 = vmatpush1.bf16.msra.mxu0 0
      %1334 = vmatprep.mubr.bf16.mxu0 0
      %1335 = vmatmul.mubr.bf16.gmra.mrb[0].mxu0 %v1301
      %v1336 = vpop.f32.mrb[0].mxu0
      %v1337 = vadd.f32 %v147, %v1336
      %v1338 = vpop.f32.mrb[0].mxu0
      %v1339 = vadd.f32 %v151, %v1338
      %v1340 = vpop.f32.mrb[0].mxu0
      %v1341 = vpop.f32.mrb[0].mxu0
      %1342 = vdwg.mxu0
      %1343 = vmatprep.subr.bf16.mxu0 %v263
      %1344 = vmatpush1.bf16.msra.mxu0 %v262
      %1345 = vmatprep.subr.bf16.mxu0 %v267
      %1346 = vmatpush1.bf16.msra.mxu0 %v266
      %1347 = vmatprep.subr.bf16.mxu0 %v271
      %1348 = vmatpush1.bf16.msra.mxu0 %v270
      %1349 = vmatprep.subr.bf16.mxu0 %v275
      %1350 = vmatpush1.bf16.msra.mxu0 %v274
      %1351 = vmatprep.subr.bf16.mxu0 %v279
      %1352 = vmatpush1.bf16.msra.mxu0 %v278
      %1353 = vmatprep.subr.bf16.mxu0 %v283
      %1354 = vmatpush1.bf16.msra.mxu0 %v282
      %1355 = vmatprep.subr.bf16.mxu0 %v287
      %1356 = vmatpush1.bf16.msra.mxu0 %v286
      %1357 = vmatprep.subr.bf16.mxu0 %v291
      %1358 = vmatpush1.bf16.msra.mxu0 %v290
      %1359 = vmatprep.subr.bf16.mxu0 0
      %1360 = vmatpush1.bf16.msra.mxu0 0
      %1361 = vmatprep.subr.bf16.mxu0 0
      %1362 = vmatpush1.bf16.msra.mxu0 0
      %1363 = vmatprep.subr.bf16.mxu0 0
      %1364 = vmatpush1.bf16.msra.mxu0 0
      %1365 = vmatprep.subr.bf16.mxu0 0
      %1366 = vmatpush1.bf16.msra.mxu0 0
      %1367 = vmatprep.subr.bf16.mxu0 0
      %1368 = vmatpush1.bf16.msra.mxu0 0
      %1369 = vmatprep.subr.bf16.mxu0 0
      %1370 = vmatpush1.bf16.msra.mxu0 0
      %1371 = vmatprep.subr.bf16.mxu0 0
      %1372 = vmatpush1.bf16.msra.mxu0 0
      %1373 = vmatprep.subr.bf16.mxu0 0
      %1374 = vmatpush1.bf16.msra.mxu0 0
      %1375 = vmatprep.mubr.bf16.mxu0 0
      %1376 = vmatmul.mubr.bf16.gmra.mrb[0].mxu0 %v1301
      %v1377 = vpop.f32.mrb[0].mxu0
      %v1378 = vadd.f32 %v155, %v1377
      %v1379 = vpop.f32.mrb[0].mxu0
      %v1380 = vadd.f32 %v159, %v1379
      %v1381 = vpop.f32.mrb[0].mxu0
      %v1382 = vpop.f32.mrb[0].mxu0
      %1383 = vdwg.mxu0
      %s1384 = scalar_lea.vmem [#allocation2], 352
      %1385 = vst [vmem:[%s1384] sm:$0xff] %v1337
      %1386 = vst [vmem:[%s1384 + $0x8] sm:$0xff] %v1339
      %1387 = vst [vmem:[%s1384 + $0x10] sm:$0xff] %v1378
      %1388 = vst [vmem:[%s1384 + $0x18] sm:$0xff] %v1380
      %s1389 = scalar_lea.vmem [#allocation7], 48
      %v1390 = vld [vmem:[%s1389] sm:$0xf]
      %1391 = vmatprep.subr.bf16.mxu0 %v261
      %1392 = vmatpush1.bf16.msra.mxu0 %v260
      %1393 = vmatprep.subr.bf16.mxu0 %v265
      %1394 = vmatpush1.bf16.msra.mxu0 %v264
      %1395 = vmatprep.subr.bf16.mxu0 %v269
      %1396 = vmatpush1.bf16.msra.mxu0 %v268
      %1397 = vmatprep.subr.bf16.mxu0 %v273
      %1398 = vmatpush1.bf16.msra.mxu0 %v272
      %1399 = vmatprep.subr.bf16.mxu0 %v277
      %1400 = vmatpush1.bf16.msra.mxu0 %v276
      %1401 = vmatprep.subr.bf16.mxu0 %v281
      %1402 = vmatpush1.bf16.msra.mxu0 %v280
      %1403 = vmatprep.subr.bf16.mxu0 %v285
      %1404 = vmatpush1.bf16.msra.mxu0 %v284
      %1405 = vmatprep.subr.bf16.mxu0 %v289
      %1406 = vmatpush1.bf16.msra.mxu0 %v288
      %1407 = vmatprep.subr.bf16.mxu0 0
      %1408 = vmatpush1.bf16.msra.mxu0 0
      %1409 = vmatprep.subr.bf16.mxu0 0
      %1410 = vmatpush1.bf16.msra.mxu0 0
      %1411 = vmatprep.subr.bf16.mxu0 0
      %1412 = vmatpush1.bf16.msra.mxu0 0
      %1413 = vmatprep.subr.bf16.mxu0 0
      %1414 = vmatpush1.bf16.msra.mxu0 0
      %1415 = vmatprep.subr.bf16.mxu0 0
      %1416 = vmatpush1.bf16.msra.mxu0 0
      %1417 = vmatprep.subr.bf16.mxu0 0
      %1418 = vmatpush1.bf16.msra.mxu0 0
      %1419 = vmatprep.subr.bf16.mxu0 0
      %1420 = vmatpush1.bf16.msra.mxu0 0
      %1421 = vmatprep.subr.bf16.mxu0 0
      %1422 = vmatpush1.bf16.msra.mxu0 0
      %1423 = vmatprep.mubr.bf16.mxu0 0
      %1424 = vmatmul.mubr.bf16.gmra.mrb[0].mxu0 %v1390
      %v1425 = vpop.f32.mrb[0].mxu0
      %v1426 = vadd.f32 %v147, %v1425
      %v1427 = vpop.f32.mrb[0].mxu0
      %v1428 = vadd.f32 %v151, %v1427
      %v1429 = vpop.f32.mrb[0].mxu0
      %v1430 = vpop.f32.mrb[0].mxu0
      %1431 = vdwg.mxu0
      %1432 = vmatprep.subr.bf16.mxu0 %v263
      %1433 = vmatpush1.bf16.msra.mxu0 %v262
      %1434 = vmatprep.subr.bf16.mxu0 %v267
      %1435 = vmatpush1.bf16.msra.mxu0 %v266
      %1436 = vmatprep.subr.bf16.mxu0 %v271
      %1437 = vmatpush1.bf16.msra.mxu0 %v270
      %1438 = vmatprep.subr.bf16.mxu0 %v275
      %1439 = vmatpush1.bf16.msra.mxu0 %v274
      %1440 = vmatprep.subr.bf16.mxu0 %v279
      %1441 = vmatpush1.bf16.msra.mxu0 %v278
      %1442 = vmatprep.subr.bf16.mxu0 %v283
      %1443 = vmatpush1.bf16.msra.mxu0 %v282
      %1444 = vmatprep.subr.bf16.mxu0 %v287
      %1445 = vmatpush1.bf16.msra.mxu0 %v286
      %1446 = vmatprep.subr.bf16.mxu0 %v291
      %1447 = vmatpush1.bf16.msra.mxu0 %v290
      %1448 = vmatprep.subr.bf16.mxu0 0
      %1449 = vmatpush1.bf16.msra.mxu0 0
      %1450 = vmatprep.subr.bf16.mxu0 0
      %1451 = vmatpush1.bf16.msra.mxu0 0
      %1452 = vmatprep.subr.bf16.mxu0 0
      %1453 = vmatpush1.bf16.msra.mxu0 0
      %1454 = vmatprep.subr.bf16.mxu0 0
      %1455 = vmatpush1.bf16.msra.mxu0 0
      %1456 = vmatprep.subr.bf16.mxu0 0
      %1457 = vmatpush1.bf16.msra.mxu0 0
      %1458 = vmatprep.subr.bf16.mxu0 0
      %1459 = vmatpush1.bf16.msra.mxu0 0
      %1460 = vmatprep.subr.bf16.mxu0 0
      %1461 = vmatpush1.bf16.msra.mxu0 0
      %1462 = vmatprep.subr.bf16.mxu0 0
      %1463 = vmatpush1.bf16.msra.mxu0 0
      %1464 = vmatprep.mubr.bf16.mxu0 0
      %1465 = vmatmul.mubr.bf16.gmra.mrb[0].mxu0 %v1390
      %v1466 = vpop.f32.mrb[0].mxu0
      %v1467 = vadd.f32 %v155, %v1466
      %v1468 = vpop.f32.mrb[0].mxu0
      %v1469 = vadd.f32 %v159, %v1468
      %v1470 = vpop.f32.mrb[0].mxu0
      %v1471 = vpop.f32.mrb[0].mxu0
      %1472 = vdwg.mxu0
      %s1473 = scalar_lea.vmem [#allocation2], 384
      %1474 = vst [vmem:[%s1473] sm:$0xff] %v1426
      %1475 = vst [vmem:[%s1473 + $0x8] sm:$0xff] %v1428
      %1476 = vst [vmem:[%s1473 + $0x10] sm:$0xff] %v1467
      %1477 = vst [vmem:[%s1473 + $0x18] sm:$0xff] %v1469
      %s1478 = scalar_lea.vmem [#allocation7], 52
      %v1479 = vld [vmem:[%s1478] sm:$0xf]
      %1480 = vmatprep.subr.bf16.mxu0 %v261
      %1481 = vmatpush1.bf16.msra.mxu0 %v260
      %1482 = vmatprep.subr.bf16.mxu0 %v265
      %1483 = vmatpush1.bf16.msra.mxu0 %v264
      %1484 = vmatprep.subr.bf16.mxu0 %v269
      %1485 = vmatpush1.bf16.msra.mxu0 %v268
      %1486 = vmatprep.subr.bf16.mxu0 %v273
      %1487 = vmatpush1.bf16.msra.mxu0 %v272
      %1488 = vmatprep.subr.bf16.mxu0 %v277
      %1489 = vmatpush1.bf16.msra.mxu0 %v276
      %1490 = vmatprep.subr.bf16.mxu0 %v281
      %1491 = vmatpush1.bf16.msra.mxu0 %v280
      %1492 = vmatprep.subr.bf16.mxu0 %v285
      %1493 = vmatpush1.bf16.msra.mxu0 %v284
      %1494 = vmatprep.subr.bf16.mxu0 %v289
      %1495 = vmatpush1.bf16.msra.mxu0 %v288
      %1496 = vmatprep.subr.bf16.mxu0 0
      %1497 = vmatpush1.bf16.msra.mxu0 0
      %1498 = vmatprep.subr.bf16.mxu0 0
      %1499 = vmatpush1.bf16.msra.mxu0 0
      %1500 = vmatprep.subr.bf16.mxu0 0
      %1501 = vmatpush1.bf16.msra.mxu0 0
      %1502 = vmatprep.subr.bf16.mxu0 0
      %1503 = vmatpush1.bf16.msra.mxu0 0
      %1504 = vmatprep.subr.bf16.mxu0 0
      %1505 = vmatpush1.bf16.msra.mxu0 0
      %1506 = vmatprep.subr.bf16.mxu0 0
      %1507 = vmatpush1.bf16.msra.mxu0 0
      %1508 = vmatprep.subr.bf16.mxu0 0
      %1509 = vmatpush1.bf16.msra.mxu0 0
      %1510 = vmatprep.subr.bf16.mxu0 0
      %1511 = vmatpush1.bf16.msra.mxu0 0
      %1512 = vmatprep.mubr.bf16.mxu0 0
      %1513 = vmatmul.mubr.bf16.gmra.mrb[0].mxu0 %v1479
      %v1514 = vpop.f32.mrb[0].mxu0
      %v1515 = vadd.f32 %v147, %v1514
      %v1516 = vpop.f32.mrb[0].mxu0
      %v1517 = vadd.f32 %v151, %v1516
      %v1518 = vpop.f32.mrb[0].mxu0
      %v1519 = vpop.f32.mrb[0].mxu0
      %1520 = vdwg.mxu0
      %1521 = vmatprep.subr.bf16.mxu0 %v263
      %1522 = vmatpush1.bf16.msra.mxu0 %v262
      %1523 = vmatprep.subr.bf16.mxu0 %v267
      %1524 = vmatpush1.bf16.msra.mxu0 %v266
      %1525 = vmatprep.subr.bf16.mxu0 %v271
      %1526 = vmatpush1.bf16.msra.mxu0 %v270
      %1527 = vmatprep.subr.bf16.mxu0 %v275
      %1528 = vmatpush1.bf16.msra.mxu0 %v274
      %1529 = vmatprep.subr.bf16.mxu0 %v279
      %1530 = vmatpush1.bf16.msra.mxu0 %v278
      %1531 = vmatprep.subr.bf16.mxu0 %v283
      %1532 = vmatpush1.bf16.msra.mxu0 %v282
      %1533 = vmatprep.subr.bf16.mxu0 %v287
      %1534 = vmatpush1.bf16.msra.mxu0 %v286
      %1535 = vmatprep.subr.bf16.mxu0 %v291
      %1536 = vmatpush1.bf16.msra.mxu0 %v290
      %1537 = vmatprep.subr.bf16.mxu0 0
      %1538 = vmatpush1.bf16.msra.mxu0 0
      %1539 = vmatprep.subr.bf16.mxu0 0
      %1540 = vmatpush1.bf16.msra.mxu0 0
      %1541 = vmatprep.subr.bf16.mxu0 0
      %1542 = vmatpush1.bf16.msra.mxu0 0
      %1543 = vmatprep.subr.bf16.mxu0 0
      %1544 = vmatpush1.bf16.msra.mxu0 0
      %1545 = vmatprep.subr.bf16.mxu0 0
      %1546 = vmatpush1.bf16.msra.mxu0 0
      %1547 = vmatprep.subr.bf16.mxu0 0
      %1548 = vmatpush1.bf16.msra.mxu0 0
      %1549 = vmatprep.subr.bf16.mxu0 0
      %1550 = vmatpush1.bf16.msra.mxu0 0
      %1551 = vmatprep.subr.bf16.mxu0 0
      %1552 = vmatpush1.bf16.msra.mxu0 0
      %1553 = vmatprep.mubr.bf16.mxu0 0
      %1554 = vmatmul.mubr.bf16.gmra.mrb[0].mxu0 %v1479
      %v1555 = vpop.f32.mrb[0].mxu0
      %v1556 = vadd.f32 %v155, %v1555
      %v1557 = vpop.f32.mrb[0].mxu0
      %v1558 = vadd.f32 %v159, %v1557
      %v1559 = vpop.f32.mrb[0].mxu0
      %v1560 = vpop.f32.mrb[0].mxu0
      %1561 = vdwg.mxu0
      %s1562 = scalar_lea.vmem [#allocation2], 416
      %1563 = vst [vmem:[%s1562] sm:$0xff] %v1515
      %1564 = vst [vmem:[%s1562 + $0x8] sm:$0xff] %v1517
      %1565 = vst [vmem:[%s1562 + $0x10] sm:$0xff] %v1556
      %1566 = vst [vmem:[%s1562 + $0x18] sm:$0xff] %v1558
      %s1567 = scalar_lea.vmem [#allocation7], 56
      %v1568 = vld [vmem:[%s1567] sm:$0xf]
      %1569 = vmatprep.subr.bf16.mxu0 %v261
      %1570 = vmatpush1.bf16.msra.mxu0 %v260
      %1571 = vmatprep.subr.bf16.mxu0 %v265
      %1572 = vmatpush1.bf16.msra.mxu0 %v264
      %1573 = vmatprep.subr.bf16.mxu0 %v269
      %1574 = vmatpush1.bf16.msra.mxu0 %v268
      %1575 = vmatprep.subr.bf16.mxu0 %v273
      %1576 = vmatpush1.bf16.msra.mxu0 %v272
      %1577 = vmatprep.subr.bf16.mxu0 %v277
      %1578 = vmatpush1.bf16.msra.mxu0 %v276
      %1579 = vmatprep.subr.bf16.mxu0 %v281
      %1580 = vmatpush1.bf16.msra.mxu0 %v280
      %1581 = vmatprep.subr.bf16.mxu0 %v285
      %1582 = vmatpush1.bf16.msra.mxu0 %v284
      %1583 = vmatprep.subr.bf16.mxu0 %v289
      %1584 = vmatpush1.bf16.msra.mxu0 %v288
      %1585 = vmatprep.subr.bf16.mxu0 0
      %1586 = vmatpush1.bf16.msra.mxu0 0
      %1587 = vmatprep.subr.bf16.mxu0 0
      %1588 = vmatpush1.bf16.msra.mxu0 0
      %1589 = vmatprep.subr.bf16.mxu0 0
      %1590 = vmatpush1.bf16.msra.mxu0 0
      %1591 = vmatprep.subr.bf16.mxu0 0
      %1592 = vmatpush1.bf16.msra.mxu0 0
      %1593 = vmatprep.subr.bf16.mxu0 0
      %1594 = vmatpush1.bf16.msra.mxu0 0
      %1595 = vmatprep.subr.bf16.mxu0 0
      %1596 = vmatpush1.bf16.msra.mxu0 0
      %1597 = vmatprep.subr.bf16.mxu0 0
      %1598 = vmatpush1.bf16.msra.mxu0 0
      %1599 = vmatprep.subr.bf16.mxu0 0
      %1600 = vmatpush1.bf16.msra.mxu0 0
      %1601 = vmatprep.mubr.bf16.mxu0 0
      %1602 = vmatmul.mubr.bf16.gmra.mrb[0].mxu0 %v1568
      %v1603 = vpop.f32.mrb[0].mxu0
      %v1604 = vadd.f32 %v147, %v1603
      %v1605 = vpop.f32.mrb[0].mxu0
      %v1606 = vadd.f32 %v151, %v1605
      %v1607 = vpop.f32.mrb[0].mxu0
      %v1608 = vpop.f32.mrb[0].mxu0
      %1609 = vdwg.mxu0
      %1610 = vmatprep.subr.bf16.mxu0 %v263
      %1611 = vmatpush1.bf16.msra.mxu0 %v262
      %1612 = vmatprep.subr.bf16.mxu0 %v267
      %1613 = vmatpush1.bf16.msra.mxu0 %v266
      %1614 = vmatprep.subr.bf16.mxu0 %v271
      %1615 = vmatpush1.bf16.msra.mxu0 %v270
      %1616 = vmatprep.subr.bf16.mxu0 %v275
      %1617 = vmatpush1.bf16.msra.mxu0 %v274
      %1618 = vmatprep.subr.bf16.mxu0 %v279
      %1619 = vmatpush1.bf16.msra.mxu0 %v278
      %1620 = vmatprep.subr.bf16.mxu0 %v283
      %1621 = vmatpush1.bf16.msra.mxu0 %v282
      %1622 = vmatprep.subr.bf16.mxu0 %v287
      %1623 = vmatpush1.bf16.msra.mxu0 %v286
      %1624 = vmatprep.subr.bf16.mxu0 %v291
      %1625 = vmatpush1.bf16.msra.mxu0 %v290
      %1626 = vmatprep.subr.bf16.mxu0 0
      %1627 = vmatpush1.bf16.msra.mxu0 0
      %1628 = vmatprep.subr.bf16.mxu0 0
      %1629 = vmatpush1.bf16.msra.mxu0 0
      %1630 = vmatprep.subr.bf16.mxu0 0
      %1631 = vmatpush1.bf16.msra.mxu0 0
      %1632 = vmatprep.subr.bf16.mxu0 0
      %1633 = vmatpush1.bf16.msra.mxu0 0
      %1634 = vmatprep.subr.bf16.mxu0 0
      %1635 = vmatpush1.bf16.msra.mxu0 0
      %1636 = vmatprep.subr.bf16.mxu0 0
      %1637 = vmatpush1.bf16.msra.mxu0 0
      %1638 = vmatprep.subr.bf16.mxu0 0
      %1639 = vmatpush1.bf16.msra.mxu0 0
      %1640 = vmatprep.subr.bf16.mxu0 0
      %1641 = vmatpush1.bf16.msra.mxu0 0
      %1642 = vmatprep.mubr.bf16.mxu0 0
      %1643 = vmatmul.mubr.bf16.gmra.mrb[0].mxu0 %v1568
      %v1644 = vpop.f32.mrb[0].mxu0
      %v1645 = vadd.f32 %v155, %v1644
      %v1646 = vpop.f32.mrb[0].mxu0
      %v1647 = vadd.f32 %v159, %v1646
      %v1648 = vpop.f32.mrb[0].mxu0
      %v1649 = vpop.f32.mrb[0].mxu0
      %1650 = vdwg.mxu0
      %s1651 = scalar_lea.vmem [#allocation2], 448
      %1652 = vst [vmem:[%s1651] sm:$0xff] %v1604
      %1653 = vst [vmem:[%s1651 + $0x8] sm:$0xff] %v1606
      %1654 = vst [vmem:[%s1651 + $0x10] sm:$0xff] %v1645
      %1655 = vst [vmem:[%s1651 + $0x18] sm:$0xff] %v1647
      %s1656 = scalar_lea.vmem [#allocation7], 60
      %v1657 = vld [vmem:[%s1656] sm:$0xf]
      %1658 = vmatprep.subr.bf16.mxu0 %v261
      %1659 = vmatpush1.bf16.msra.mxu0 %v260
      %1660 = vmatprep.subr.bf16.mxu0 %v265
      %1661 = vmatpush1.bf16.msra.mxu0 %v264
      %1662 = vmatprep.subr.bf16.mxu0 %v269
      %1663 = vmatpush1.bf16.msra.mxu0 %v268
      %1664 = vmatprep.subr.bf16.mxu0 %v273
      %1665 = vmatpush1.bf16.msra.mxu0 %v272
      %1666 = vmatprep.subr.bf16.mxu0 %v277
      %1667 = vmatpush1.bf16.msra.mxu0 %v276
      %1668 = vmatprep.subr.bf16.mxu0 %v281
      %1669 = vmatpush1.bf16.msra.mxu0 %v280
      %1670 = vmatprep.subr.bf16.mxu0 %v285
      %1671 = vmatpush1.bf16.msra.mxu0 %v284
      %1672 = vmatprep.subr.bf16.mxu0 %v289
      %1673 = vmatpush1.bf16.msra.mxu0 %v288
      %1674 = vmatprep.subr.bf16.mxu0 0
      %1675 = vmatpush1.bf16.msra.mxu0 0
      %1676 = vmatprep.subr.bf16.mxu0 0
      %1677 = vmatpush1.bf16.msra.mxu0 0
      %1678 = vmatprep.subr.bf16.mxu0 0
      %1679 = vmatpush1.bf16.msra.mxu0 0
      %1680 = vmatprep.subr.bf16.mxu0 0
      %1681 = vmatpush1.bf16.msra.mxu0 0
      %1682 = vmatprep.subr.bf16.mxu0 0
      %1683 = vmatpush1.bf16.msra.mxu0 0
      %1684 = vmatprep.subr.bf16.mxu0 0
      %1685 = vmatpush1.bf16.msra.mxu0 0
      %1686 = vmatprep.subr.bf16.mxu0 0
      %1687 = vmatpush1.bf16.msra.mxu0 0
      %1688 = vmatprep.subr.bf16.mxu0 0
      %1689 = vmatpush1.bf16.msra.mxu0 0
      %1690 = vmatprep.mubr.bf16.mxu0 0
      %1691 = vmatmul.mubr.bf16.gmra.mrb[0].mxu0 %v1657
      %v1692 = vpop.f32.mrb[0].mxu0
      %v1693 = vadd.f32 %v147, %v1692
      %v1694 = vpop.f32.mrb[0].mxu0
      %v1695 = vadd.f32 %v151, %v1694
      %v1696 = vpop.f32.mrb[0].mxu0
      %v1697 = vpop.f32.mrb[0].mxu0
      %1698 = vdwg.mxu0
      %1699 = vmatprep.subr.bf16.mxu0 %v263
      %1700 = vmatpush1.bf16.msra.mxu0 %v262
      %1701 = vmatprep.subr.bf16.mxu0 %v267
      %1702 = vmatpush1.bf16.msra.mxu0 %v266
      %1703 = vmatprep.subr.bf16.mxu0 %v271
      %1704 = vmatpush1.bf16.msra.mxu0 %v270
      %1705 = vmatprep.subr.bf16.mxu0 %v275
      %1706 = vmatpush1.bf16.msra.mxu0 %v274
      %1707 = vmatprep.subr.bf16.mxu0 %v279
      %1708 = vmatpush1.bf16.msra.mxu0 %v278
      %1709 = vmatprep.subr.bf16.mxu0 %v283
      %1710 = vmatpush1.bf16.msra.mxu0 %v282
      %1711 = vmatprep.subr.bf16.mxu0 %v287
      %1712 = vmatpush1.bf16.msra.mxu0 %v286
      %1713 = vmatprep.subr.bf16.mxu0 %v291
      %1714 = vmatpush1.bf16.msra.mxu0 %v290
      %1715 = vmatprep.subr.bf16.mxu0 0
      %1716 = vmatpush1.bf16.msra.mxu0 0
      %1717 = vmatprep.subr.bf16.mxu0 0
      %1718 = vmatpush1.bf16.msra.mxu0 0
      %1719 = vmatprep.subr.bf16.mxu0 0
      %1720 = vmatpush1.bf16.msra.mxu0 0
      %1721 = vmatprep.subr.bf16.mxu0 0
      %1722 = vmatpush1.bf16.msra.mxu0 0
      %1723 = vmatprep.subr.bf16.mxu0 0
      %1724 = vmatpush1.bf16.msra.mxu0 0
      %1725 = vmatprep.subr.bf16.mxu0 0
      %1726 = vmatpush1.bf16.msra.mxu0 0
      %1727 = vmatprep.subr.bf16.mxu0 0
      %1728 = vmatpush1.bf16.msra.mxu0 0
      %1729 = vmatprep.subr.bf16.mxu0 0
      %1730 = vmatpush1.bf16.msra.mxu0 0
      %1731 = vmatprep.mubr.bf16.mxu0 0
      %1732 = vmatmul.mubr.bf16.gmra.mrb[0].mxu0 %v1657
      %v1733 = vpop.f32.mrb[0].mxu0
      %v1734 = vadd.f32 %v155, %v1733
      %v1735 = vpop.f32.mrb[0].mxu0
      %v1736 = vadd.f32 %v159, %v1735
      %v1737 = vpop.f32.mrb[0].mxu0
      %v1738 = vpop.f32.mrb[0].mxu0
      %1739 = vdwg.mxu0
      %s1740 = scalar_lea.vmem [#allocation2], 480
      %1741 = vst [vmem:[%s1740] sm:$0xff] %v1693
      %1742 = vst [vmem:[%s1740 + $0x8] sm:$0xff] %v1695
      %1743 = vst [vmem:[%s1740 + $0x10] sm:$0xff] %v1734
      %1744 = vst [vmem:[%s1740 + $0x18] sm:$0xff] %v1736
      %v1745 = vld [vmem:[%s2] sm:$0xff]
      %v1746 = vld [vmem:[#allocation12] sm:$0xf]
      %v1747 = vld [vmem:[#allocation12 + $0x10] sm:$0xf]
      %v1748 = vld [vmem:[#allocation12 + $0x20] sm:$0xf]
      %v1749 = vld [vmem:[#allocation12 + $0x30] sm:$0xf]
      %v1750 = vld [vmem:[#allocation12 + $0x40] sm:$0xf]
      %v1751 = vld [vmem:[#allocation12 + $0x50] sm:$0xf]
      %v1752 = vld [vmem:[#allocation12 + $0x60] sm:$0xf]
      %v1753 = vld [vmem:[#allocation12 + $0x70] sm:$0xf]
      %v1754 = vld [vmem:[#allocation12 + $0x80] sm:$0xf]
      %v1755 = vld [vmem:[#allocation12 + $0x90] sm:$0xf]
      %v1756 = vld [vmem:[#allocation12 + $0xa0] sm:$0xf]
      %v1757 = vld [vmem:[#allocation12 + $0xb0] sm:$0xf]
      %v1758 = vld [vmem:[#allocation12 + $0xc0] sm:$0xf]
      %v1759 = vld [vmem:[#allocation12 + $0xd0] sm:$0xf]
      %v1760 = vld [vmem:[#allocation12 + $0xe0] sm:$0xf]
      %v1761 = vld [vmem:[#allocation12 + $0xf0] sm:$0xf]
      %v1762 = vld [vmem:[#allocation12 + $0x4] sm:$0xf]
      %v1763 = vld [vmem:[#allocation12 + $0x14] sm:$0xf]
      %v1764 = vld [vmem:[#allocation12 + $0x24] sm:$0xf]
      %v1765 = vld [vmem:[#allocation12 + $0x34] sm:$0xf]
      %v1766 = vld [vmem:[#allocation12 + $0x44] sm:$0xf]
      %v1767 = vld [vmem:[#allocation12 + $0x54] sm:$0xf]
      %v1768 = vld [vmem:[#allocation12 + $0x64] sm:$0xf]
      %v1769 = vld [vmem:[#allocation12 + $0x74] sm:$0xf]
      %v1770 = vld [vmem:[#allocation12 + $0x84] sm:$0xf]
      %v1771 = vld [vmem:[#allocation12 + $0x94] sm:$0xf]
      %v1772 = vld [vmem:[#allocation12 + $0xa4] sm:$0xf]
      %v1773 = vld [vmem:[#allocation12 + $0xb4] sm:$0xf]
      %v1774 = vld [vmem:[#allocation12 + $0xc4] sm:$0xf]
      %v1775 = vld [vmem:[#allocation12 + $0xd4] sm:$0xf]
      %v1776 = vld [vmem:[#allocation12 + $0xe4] sm:$0xf]
      %v1777 = vld [vmem:[#allocation12 + $0xf4] sm:$0xf]
      %v1778 = vld [vmem:[#allocation12 + $0x8] sm:$0xf]
      %v1779 = vld [vmem:[#allocation12 + $0x18] sm:$0xf]
      %v1780 = vld [vmem:[#allocation12 + $0x28] sm:$0xf]
      %v1781 = vld [vmem:[#allocation12 + $0x38] sm:$0xf]
      %v1782 = vld [vmem:[#allocation12 + $0x48] sm:$0xf]
      %v1783 = vld [vmem:[#allocation12 + $0x58] sm:$0xf]
      %v1784 = vld [vmem:[#allocation12 + $0x68] sm:$0xf]
      %v1785 = vld [vmem:[#allocation12 + $0x78] sm:$0xf]
      %v1786 = vld [vmem:[#allocation12 + $0x88] sm:$0xf]
      %v1787 = vld [vmem:[#allocation12 + $0x98] sm:$0xf]
      %v1788 = vld [vmem:[#allocation12 + $0xa8] sm:$0xf]
      %v1789 = vld [vmem:[#allocation12 + $0xb8] sm:$0xf]
      %v1790 = vld [vmem:[#allocation12 + $0xc8] sm:$0xf]
      %v1791 = vld [vmem:[#allocation12 + $0xd8] sm:$0xf]
      %v1792 = vld [vmem:[#allocation12 + $0xe8] sm:$0xf]
      %v1793 = vld [vmem:[#allocation12 + $0xf8] sm:$0xf]
      %v1794 = vld [vmem:[#allocation12 + $0xc] sm:$0xf]
      %v1795 = vld [vmem:[#allocation12 + $0x1c] sm:$0xf]
      %v1796 = vld [vmem:[#allocation12 + $0x2c] sm:$0xf]
      %v1797 = vld [vmem:[#allocation12 + $0x3c] sm:$0xf]
      %v1798 = vld [vmem:[#allocation12 + $0x4c] sm:$0xf]
      %v1799 = vld [vmem:[#allocation12 + $0x5c] sm:$0xf]
      %v1800 = vld [vmem:[#allocation12 + $0x6c] sm:$0xf]
      %v1801 = vld [vmem:[#allocation12 + $0x7c] sm:$0xf]
      %v1802 = vld [vmem:[#allocation12 + $0x8c] sm:$0xf]
      %v1803 = vld [vmem:[#allocation12 + $0x9c] sm:$0xf]
      %v1804 = vld [vmem:[#allocation12 + $0xac] sm:$0xf]
      %v1805 = vld [vmem:[#allocation12 + $0xbc] sm:$0xf]
      %v1806 = vld [vmem:[#allocation12 + $0xcc] sm:$0xf]
      %v1807 = vld [vmem:[#allocation12 + $0xdc] sm:$0xf]
      %v1808 = vld [vmem:[#allocation12 + $0xec] sm:$0xf]
      %v1809 = vld [vmem:[#allocation12 + $0xfc] sm:$0xf]
      %v1810 = vld [vmem:[#allocation3] sm:$0xff]
      %v1811 = vld [vmem:[#allocation4] sm:$0xff]
      %v1812 = vpack.c.bf16 %v1810, %v1810
      %v1813 = vld [vmem:[#allocation2] sm:$0xff]
      %v1830 = vunpack.c.l.b16 %v1746
      %v1831 = vunpack.c.l.b16 %v1747
      %v1832 = vunpack.c.l.b16 %v1748
      %v1833 = vunpack.c.l.b16 %v1749
      %v1834 = vunpack.c.l.b16 %v1750
      %v1835 = vunpack.c.l.b16 %v1751
      %v1836 = vunpack.c.l.b16 %v1752
      %v1837 = vunpack.c.l.b16 %v1753
      %v1838 = vunpack.c.l.b16 %v1754
      %v1839 = vunpack.c.l.b16 %v1755
      %v1840 = vunpack.c.l.b16 %v1756
      %v1841 = vunpack.c.l.b16 %v1757
      %v1842 = vunpack.c.l.b16 %v1758
      %v1843 = vunpack.c.l.b16 %v1759
      %v1844 = vunpack.c.l.b16 %v1760
      %v1845 = vunpack.c.l.b16 %v1761
      %v1846 = vpack.c.b16 %v1831, %v1830
      %v1847 = vpack.c.b16 %v1833, %v1832
      %v1848 = vpack.c.b16 %v1835, %v1834
      %v1849 = vpack.c.b16 %v1837, %v1836
      %v1850 = vpack.c.b16 %v1839, %v1838
      %v1851 = vpack.c.b16 %v1841, %v1840
      %v1852 = vpack.c.b16 %v1843, %v1842
      %v1853 = vpack.c.b16 %v1845, %v1844
      %1862 = vmatprep.subr.bf16.mxu0 0
      %1863 = vmatpush1.bf16.msra.mxu0 %v1846
      %1864 = vmatprep.subr.bf16.mxu0 0
      %1865 = vmatpush1.bf16.msra.mxu0 %v1847
      %1866 = vmatprep.subr.bf16.mxu0 0
      %1867 = vmatpush1.bf16.msra.mxu0 %v1848
      %1868 = vmatprep.subr.bf16.mxu0 0
      %1869 = vmatpush1.bf16.msra.mxu0 %v1849
      %1870 = vmatprep.subr.bf16.mxu0 0
      %1871 = vmatpush1.bf16.msra.mxu0 %v1850
      %1872 = vmatprep.subr.bf16.mxu0 0
      %1873 = vmatpush1.bf16.msra.mxu0 %v1851
      %1874 = vmatprep.subr.bf16.mxu0 0
      %1875 = vmatpush1.bf16.msra.mxu0 %v1852
      %1876 = vmatprep.subr.bf16.mxu0 0
      %1877 = vmatpush1.bf16.msra.mxu0 %v1853
      %1878 = vmatprep.subr.bf16.mxu0 0
      %1879 = vmatpush1.bf16.msra.mxu0 0
      %1880 = vmatprep.subr.bf16.mxu0 0
      %1881 = vmatpush1.bf16.msra.mxu0 0
      %1882 = vmatprep.subr.bf16.mxu0 0
      %1883 = vmatpush1.bf16.msra.mxu0 0
      %1884 = vmatprep.subr.bf16.mxu0 0
      %1885 = vmatpush1.bf16.msra.mxu0 0
      %1886 = vmatprep.subr.bf16.mxu0 0
      %1887 = vmatpush1.bf16.msra.mxu0 0
      %1888 = vmatprep.subr.bf16.mxu0 0
      %1889 = vmatpush1.bf16.msra.mxu0 0
      %1890 = vmatprep.subr.bf16.mxu0 0
      %1891 = vmatpush1.bf16.msra.mxu0 0
      %1892 = vmatprep.subr.bf16.mxu0 0
      %1893 = vmatpush1.bf16.msra.mxu0 0
      %1894 = vmatprep.mubr.bf16.mxu0 0
      %1895 = vmatmul.mubr.bf16.gmra.mrb[0].mxu0 %v1812
      %v1896 = vpop.f32.mrb[0].mxu0
      %v1897 = vadd.f32 0.0, %v1896
      %v1898 = vpop.f32.mrb[0].mxu0
      %v1899 = vpop.f32.mrb[0].mxu0
      %v1900 = vpop.f32.mrb[0].mxu0
      %1901 = vdwg.mxu0
      %v1902 = vadd.f32 %v1813, %v1897
      %v1903 = vmul.f32 %v1902, 0.5
      %v1904 = vtanh.pop %v1903
      %v1905 = vmul.f32 %v1904, 0.5
      %v1906 = vadd.f32 %v1905, 0.5
      %v1907 = vld [vmem:[#allocation2 + $0x8] sm:$0xff]
      %v1924 = vunpack.c.l.b16 %v1762
      %v1925 = vunpack.c.l.b16 %v1763
      %v1926 = vunpack.c.l.b16 %v1764
      %v1927 = vunpack.c.l.b16 %v1765
      %v1928 = vunpack.c.l.b16 %v1766
      %v1929 = vunpack.c.l.b16 %v1767
      %v1930 = vunpack.c.l.b16 %v1768
      %v1931 = vunpack.c.l.b16 %v1769
      %v1932 = vunpack.c.l.b16 %v1770
      %v1933 = vunpack.c.l.b16 %v1771
      %v1934 = vunpack.c.l.b16 %v1772
      %v1935 = vunpack.c.l.b16 %v1773
      %v1936 = vunpack.c.l.b16 %v1774
      %v1937 = vunpack.c.l.b16 %v1775
      %v1938 = vunpack.c.l.b16 %v1776
      %v1939 = vunpack.c.l.b16 %v1777
      %v1940 = vpack.c.b16 %v1925, %v1924
      %v1941 = vpack.c.b16 %v1927, %v1926
      %v1942 = vpack.c.b16 %v1929, %v1928
      %v1943 = vpack.c.b16 %v1931, %v1930
      %v1944 = vpack.c.b16 %v1933, %v1932
      %v1945 = vpack.c.b16 %v1935, %v1934
      %v1946 = vpack.c.b16 %v1937, %v1936
      %v1947 = vpack.c.b16 %v1939, %v1938
      %1956 = vmatprep.subr.bf16.mxu0 0
      %1957 = vmatpush1.bf16.msra.mxu0 %v1940
      %1958 = vmatprep.subr.bf16.mxu0 0
      %1959 = vmatpush1.bf16.msra.mxu0 %v1941
      %1960 = vmatprep.subr.bf16.mxu0 0
      %1961 = vmatpush1.bf16.msra.mxu0 %v1942
      %1962 = vmatprep.subr.bf16.mxu0 0
      %1963 = vmatpush1.bf16.msra.mxu0 %v1943
      %1964 = vmatprep.subr.bf16.mxu0 0
      %1965 = vmatpush1.bf16.msra.mxu0 %v1944
      %1966 = vmatprep.subr.bf16.mxu0 0
      %1967 = vmatpush1.bf16.msra.mxu0 %v1945
      %1968 = vmatprep.subr.bf16.mxu0 0
      %1969 = vmatpush1.bf16.msra.mxu0 %v1946
      %1970 = vmatprep.subr.bf16.mxu0 0
      %1971 = vmatpush1.bf16.msra.mxu0 %v1947
      %1972 = vmatprep.subr.bf16.mxu0 0
      %1973 = vmatpush1.bf16.msra.mxu0 0
      %1974 = vmatprep.subr.bf16.mxu0 0
      %1975 = vmatpush1.bf16.msra.mxu0 0
      %1976 = vmatprep.subr.bf16.mxu0 0
      %1977 = vmatpush1.bf16.msra.mxu0 0
      %1978 = vmatprep.subr.bf16.mxu0 0
      %1979 = vmatpush1.bf16.msra.mxu0 0
      %1980 = vmatprep.subr.bf16.mxu0 0
      %1981 = vmatpush1.bf16.msra.mxu0 0
      %1982 = vmatprep.subr.bf16.mxu0 0
      %1983 = vmatpush1.bf16.msra.mxu0 0
      %1984 = vmatprep.subr.bf16.mxu0 0
      %1985 = vmatpush1.bf16.msra.mxu0 0
      %1986 = vmatprep.subr.bf16.mxu0 0
      %1987 = vmatpush1.bf16.msra.mxu0 0
      %1988 = vmatprep.mubr.bf16.mxu0 0
      %1989 = vmatmul.mubr.bf16.gmra.mrb[0].mxu0 %v1812
      %v1990 = vpop.f32.mrb[0].mxu0
      %v1991 = vadd.f32 0.0, %v1990
      %v1992 = vpop.f32.mrb[0].mxu0
      %v1993 = vpop.f32.mrb[0].mxu0
      %v1994 = vpop.f32.mrb[0].mxu0
      %1995 = vdwg.mxu0
      %v1996 = vadd.f32 %v1907, %v1991
      %v1997 = vmul.f32 %v1996, 0.5
      %v1998 = vtanh.pop %v1997
      %v1999 = vmul.f32 %v1998, 0.5
      %v2000 = vadd.f32 %v1999, 0.5
      %v2001 = vld [vmem:[#allocation2 + $0x10] sm:$0xff]
      %v2018 = vunpack.c.l.b16 %v1778
      %v2019 = vunpack.c.l.b16 %v1779
      %v2020 = vunpack.c.l.b16 %v1780
      %v2021 = vunpack.c.l.b16 %v1781
      %v2022 = vunpack.c.l.b16 %v1782
      %v2023 = vunpack.c.l.b16 %v1783
      %v2024 = vunpack.c.l.b16 %v1784
      %v2025 = vunpack.c.l.b16 %v1785
      %v2026 = vunpack.c.l.b16 %v1786
      %v2027 = vunpack.c.l.b16 %v1787
      %v2028 = vunpack.c.l.b16 %v1788
      %v2029 = vunpack.c.l.b16 %v1789
      %v2030 = vunpack.c.l.b16 %v1790
      %v2031 = vunpack.c.l.b16 %v1791
      %v2032 = vunpack.c.l.b16 %v1792
      %v2033 = vunpack.c.l.b16 %v1793
      %v2034 = vpack.c.b16 %v2019, %v2018
      %v2035 = vpack.c.b16 %v2021, %v2020
      %v2036 = vpack.c.b16 %v2023, %v2022
      %v2037 = vpack.c.b16 %v2025, %v2024
      %v2038 = vpack.c.b16 %v2027, %v2026
      %v2039 = vpack.c.b16 %v2029, %v2028
      %v2040 = vpack.c.b16 %v2031, %v2030
      %v2041 = vpack.c.b16 %v2033, %v2032
      %2050 = vmatprep.subr.bf16.mxu0 0
      %2051 = vmatpush1.bf16.msra.mxu0 %v2034
      %2052 = vmatprep.subr.bf16.mxu0 0
      %2053 = vmatpush1.bf16.msra.mxu0 %v2035
      %2054 = vmatprep.subr.bf16.mxu0 0
      %2055 = vmatpush1.bf16.msra.mxu0 %v2036
      %2056 = vmatprep.subr.bf16.mxu0 0
      %2057 = vmatpush1.bf16.msra.mxu0 %v2037
      %2058 = vmatprep.subr.bf16.mxu0 0
      %2059 = vmatpush1.bf16.msra.mxu0 %v2038
      %2060 = vmatprep.subr.bf16.mxu0 0
      %2061 = vmatpush1.bf16.msra.mxu0 %v2039
      %2062 = vmatprep.subr.bf16.mxu0 0
      %2063 = vmatpush1.bf16.msra.mxu0 %v2040
      %2064 = vmatprep.subr.bf16.mxu0 0
      %2065 = vmatpush1.bf16.msra.mxu0 %v2041
      %2066 = vmatprep.subr.bf16.mxu0 0
      %2067 = vmatpush1.bf16.msra.mxu0 0
      %2068 = vmatprep.subr.bf16.mxu0 0
      %2069 = vmatpush1.bf16.msra.mxu0 0
      %2070 = vmatprep.subr.bf16.mxu0 0
      %2071 = vmatpush1.bf16.msra.mxu0 0
      %2072 = vmatprep.subr.bf16.mxu0 0
      %2073 = vmatpush1.bf16.msra.mxu0 0
      %2074 = vmatprep.subr.bf16.mxu0 0
      %2075 = vmatpush1.bf16.msra.mxu0 0
      %2076 = vmatprep.subr.bf16.mxu0 0
      %2077 = vmatpush1.bf16.msra.mxu0 0
      %2078 = vmatprep.subr.bf16.mxu0 0
      %2079 = vmatpush1.bf16.msra.mxu0 0
      %2080 = vmatprep.subr.bf16.mxu0 0
      %2081 = vmatpush1.bf16.msra.mxu0 0
      %2082 = vmatprep.mubr.bf16.mxu0 0
      %2083 = vmatmul.mubr.bf16.gmra.mrb[0].mxu0 %v1812
      %v2084 = vpop.f32.mrb[0].mxu0
      %v2085 = vadd.f32 0.0, %v2084
      %v2086 = vpop.f32.mrb[0].mxu0
      %v2087 = vpop.f32.mrb[0].mxu0
      %v2088 = vpop.f32.mrb[0].mxu0
      %2089 = vdwg.mxu0
      %v2090 = vadd.f32 %v2001, %v2085
      %v2091 = vtanh.pop %v2090
      %v2092 = vld [vmem:[#allocation2 + $0x18] sm:$0xff]
      %v2109 = vunpack.c.l.b16 %v1794
      %v2110 = vunpack.c.l.b16 %v1795
      %v2111 = vunpack.c.l.b16 %v1796
      %v2112 = vunpack.c.l.b16 %v1797
      %v2113 = vunpack.c.l.b16 %v1798
      %v2114 = vunpack.c.l.b16 %v1799
      %v2115 = vunpack.c.l.b16 %v1800
      %v2116 = vunpack.c.l.b16 %v1801
      %v2117 = vunpack.c.l.b16 %v1802
      %v2118 = vunpack.c.l.b16 %v1803
      %v2119 = vunpack.c.l.b16 %v1804
      %v2120 = vunpack.c.l.b16 %v1805
      %v2121 = vunpack.c.l.b16 %v1806
      %v2122 = vunpack.c.l.b16 %v1807
      %v2123 = vunpack.c.l.b16 %v1808
      %v2124 = vunpack.c.l.b16 %v1809
      %v2125 = vpack.c.b16 %v2110, %v2109
      %v2126 = vpack.c.b16 %v2112, %v2111
      %v2127 = vpack.c.b16 %v2114, %v2113
      %v2128 = vpack.c.b16 %v2116, %v2115
      %v2129 = vpack.c.b16 %v2118, %v2117
      %v2130 = vpack.c.b16 %v2120, %v2119
      %v2131 = vpack.c.b16 %v2122, %v2121
      %v2132 = vpack.c.b16 %v2124, %v2123
      %2141 = vmatprep.subr.bf16.mxu0 0
      %2142 = vmatpush1.bf16.msra.mxu0 %v2125
      %2143 = vmatprep.subr.bf16.mxu0 0
      %2144 = vmatpush1.bf16.msra.mxu0 %v2126
      %2145 = vmatprep.subr.bf16.mxu0 0
      %2146 = vmatpush1.bf16.msra.mxu0 %v2127
      %2147 = vmatprep.subr.bf16.mxu0 0
      %2148 = vmatpush1.bf16.msra.mxu0 %v2128
      %2149 = vmatprep.subr.bf16.mxu0 0
      %2150 = vmatpush1.bf16.msra.mxu0 %v2129
      %2151 = vmatprep.subr.bf16.mxu0 0
      %2152 = vmatpush1.bf16.msra.mxu0 %v2130
      %2153 = vmatprep.subr.bf16.mxu0 0
      %2154 = vmatpush1.bf16.msra.mxu0 %v2131
      %2155 = vmatprep.subr.bf16.mxu0 0
      %2156 = vmatpush1.bf16.msra.mxu0 %v2132
      %2157 = vmatprep.subr.bf16.mxu0 0
      %2158 = vmatpush1.bf16.msra.mxu0 0
      %2159 = vmatprep.subr.bf16.mxu0 0
      %2160 = vmatpush1.bf16.msra.mxu0 0
      %2161 = vmatprep.subr.bf16.mxu0 0
      %2162 = vmatpush1.bf16.msra.mxu0 0
      %2163 = vmatprep.subr.bf16.mxu0 0
      %2164 = vmatpush1.bf16.msra.mxu0 0
      %2165 = vmatprep.subr.bf16.mxu0 0
      %2166 = vmatpush1.bf16.msra.mxu0 0
      %2167 = vmatprep.subr.bf16.mxu0 0
      %2168 = vmatpush1.bf16.msra.mxu0 0
      %2169 = vmatprep.subr.bf16.mxu0 0
      %2170 = vmatpush1.bf16.msra.mxu0 0
      %2171 = vmatprep.subr.bf16.mxu0 0
      %2172 = vmatpush1.bf16.msra.mxu0 0
      %2173 = vmatprep.mubr.bf16.mxu0 0
      %2174 = vmatmul.mubr.bf16.gmra.mrb[0].mxu0 %v1812
      %v2175 = vpop.f32.mrb[0].mxu0
      %v2176 = vadd.f32 0.0, %v2175
      %v2177 = vpop.f32.mrb[0].mxu0
      %v2178 = vpop.f32.mrb[0].mxu0
      %v2179 = vpop.f32.mrb[0].mxu0
      %2180 = vdwg.mxu0
      %v2181 = vadd.f32 %v2092, %v2176
      %v2182 = vmul.f32 %v2181, 0.5
      %v2183 = vtanh.pop %v2182
      %v2184 = vmul.f32 %v2183, 0.5
      %v2185 = vadd.f32 %v2184, 0.5
      %v2186 = vmul.f32 %v2000, %v1811
      %v2187 = vmul.f32 %v1906, %v2091
      %v2188 = vadd.f32 %v2186, %v2187
      %v2189 = vtanh.pop %v2188
      %v2190 = vmul.f32 %v2185, %v2189
      %v2191 = vstv %s83
      %vm2192 = vcmp.lt.s32.totalorder %v2191, %v1745
      %v2193 = vsel %vm2192, 1, 0
      %2194 = vset.pattern.permute.xlu0 0
      %2195 = vperm.xlu0 %2194, %v2193
      %v2196 = vpop.permute.xlu0 %2195
      %vm2197 = vcmp.eq.s32.totalorder %v2196, 1
      %v2198 = vsel %vm2197, %v2190, %v1810
      %v2199 = vsel %vm2197, %v2188, %v1811
      %v2200 = vsel %vm2197, %v2190, 0.0
      %2201 = vst [vmem:[#allocation13] sm:$0xff] %v2200
      %v2202 = vpack.c.bf16 %v2198, %v2198
      %v2203 = vld [vmem:[%s494] sm:$0xff]
      %2204 = vmatprep.subr.bf16.mxu0 0
      %2205 = vmatpush1.bf16.msra.mxu0 %v1846
      %2206 = vmatprep.subr.bf16.mxu0 0
      %2207 = vmatpush1.bf16.msra.mxu0 %v1847
      %2208 = vmatprep.subr.bf16.mxu0 0
      %2209 = vmatpush1.bf16.msra.mxu0 %v1848
      %2210 = vmatprep.subr.bf16.mxu0 0
      %2211 = vmatpush1.bf16.msra.mxu0 %v1849
      %2212 = vmatprep.subr.bf16.mxu0 0
      %2213 = vmatpush1.bf16.msra.mxu0 %v1850
      %2214 = vmatprep.subr.bf16.mxu0 0
      %2215 = vmatpush1.bf16.msra.mxu0 %v1851
      %2216 = vmatprep.subr.bf16.mxu0 0
      %2217 = vmatpush1.bf16.msra.mxu0 %v1852
      %2218 = vmatprep.subr.bf16.mxu0 0
      %2219 = vmatpush1.bf16.msra.mxu0 %v1853
      %2220 = vmatprep.subr.bf16.mxu0 0
      %2221 = vmatpush1.bf16.msra.mxu0 0
      %2222 = vmatprep.subr.bf16.mxu0 0
      %2223 = vmatpush1.bf16.msra.mxu0 0
      %2224 = vmatprep.subr.bf16.mxu0 0
      %2225 = vmatpush1.bf16.msra.mxu0 0
      %2226 = vmatprep.subr.bf16.mxu0 0
      %2227 = vmatpush1.bf16.msra.mxu0 0
      %2228 = vmatprep.subr.bf16.mxu0 0
      %2229 = vmatpush1.bf16.msra.mxu0 0
      %2230 = vmatprep.subr.bf16.mxu0 0
      %2231 = vmatpush1.bf16.msra.mxu0 0
      %2232 = vmatprep.subr.bf16.mxu0 0
      %2233 = vmatpush1.bf16.msra.mxu0 0
      %2234 = vmatprep.subr.bf16.mxu0 0
      %2235 = vmatpush1.bf16.msra.mxu0 0
      %2236 = vmatprep.mubr.bf16.mxu0 0
      %2237 = vmatmul.mubr.bf16.gmra.mrb[0].mxu0 %v2202
      %v2238 = vpop.f32.mrb[0].mxu0
      %v2239 = vadd.f32 0.0, %v2238
      %v2240 = vpop.f32.mrb[0].mxu0
      %v2241 = vpop.f32.mrb[0].mxu0
      %v2242 = vpop.f32.mrb[0].mxu0
      %2243 = vdwg.mxu0
      %v2244 = vadd.f32 %v2203, %v2239
      %v2245 = vmul.f32 %v2244, 0.5
      %v2246 = vtanh.pop %v2245
      %v2247 = vmul.f32 %v2246, 0.5
      %v2248 = vadd.f32 %v2247, 0.5
      %v2249 = vld [vmem:[%s494 + $0x8] sm:$0xff]
      %2250 = vmatprep.subr.bf16.mxu0 0
      %2251 = vmatpush1.bf16.msra.mxu0 %v1940
      %2252 = vmatprep.subr.bf16.mxu0 0
      %2253 = vmatpush1.bf16.msra.mxu0 %v1941
      %2254 = vmatprep.subr.bf16.mxu0 0
      %2255 = vmatpush1.bf16.msra.mxu0 %v1942
      %2256 = vmatprep.subr.bf16.mxu0 0
      %2257 = vmatpush1.bf16.msra.mxu0 %v1943
      %2258 = vmatprep.subr.bf16.mxu0 0
      %2259 = vmatpush1.bf16.msra.mxu0 %v1944
      %2260 = vmatprep.subr.bf16.mxu0 0
      %2261 = vmatpush1.bf16.msra.mxu0 %v1945
      %2262 = vmatprep.subr.bf16.mxu0 0
      %2263 = vmatpush1.bf16.msra.mxu0 %v1946
      %2264 = vmatprep.subr.bf16.mxu0 0
      %2265 = vmatpush1.bf16.msra.mxu0 %v1947
      %2266 = vmatprep.subr.bf16.mxu0 0
      %2267 = vmatpush1.bf16.msra.mxu0 0
      %2268 = vmatprep.subr.bf16.mxu0 0
      %2269 = vmatpush1.bf16.msra.mxu0 0
      %2270 = vmatprep.subr.bf16.mxu0 0
      %2271 = vmatpush1.bf16.msra.mxu0 0
      %2272 = vmatprep.subr.bf16.mxu0 0
      %2273 = vmatpush1.bf16.msra.mxu0 0
      %2274 = vmatprep.subr.bf16.mxu0 0
      %2275 = vmatpush1.bf16.msra.mxu0 0
      %2276 = vmatprep.subr.bf16.mxu0 0
      %2277 = vmatpush1.bf16.msra.mxu0 0
      %2278 = vmatprep.subr.bf16.mxu0 0
      %2279 = vmatpush1.bf16.msra.mxu0 0
      %2280 = vmatprep.subr.bf16.mxu0 0
      %2281 = vmatpush1.bf16.msra.mxu0 0
      %2282 = vmatprep.mubr.bf16.mxu0 0
      %2283 = vmatmul.mubr.bf16.gmra.mrb[0].mxu0 %v2202
      %v2284 = vpop.f32.mrb[0].mxu0
      %v2285 = vadd.f32 0.0, %v2284
      %v2286 = vpop.f32.mrb[0].mxu0
      %v2287 = vpop.f32.mrb[0].mxu0
      %v2288 = vpop.f32.mrb[0].mxu0
      %2289 = vdwg.mxu0
      %v2290 = vadd.f32 %v2249, %v2285
      %v2291 = vmul.f32 %v2290, 0.5
      %v2292 = vtanh.pop %v2291
      %v2293 = vmul.f32 %v2292, 0.5
      %v2294 = vadd.f32 %v2293, 0.5
      %v2295 = vld [vmem:[%s494 + $0x10] sm:$0xff]
      %2296 = vmatprep.subr.bf16.mxu0 0
      %2297 = vmatpush1.bf16.msra.mxu0 %v2034
      %2298 = vmatprep.subr.bf16.mxu0 0
      %2299 = vmatpush1.bf16.msra.mxu0 %v2035
      %2300 = vmatprep.subr.bf16.mxu0 0
      %2301 = vmatpush1.bf16.msra.mxu0 %v2036
      %2302 = vmatprep.subr.bf16.mxu0 0
      %2303 = vmatpush1.bf16.msra.mxu0 %v2037
      %2304 = vmatprep.subr.bf16.mxu0 0
      %2305 = vmatpush1.bf16.msra.mxu0 %v2038
      %2306 = vmatprep.subr.bf16.mxu0 0
      %2307 = vmatpush1.bf16.msra.mxu0 %v2039
      %2308 = vmatprep.subr.bf16.mxu0 0
      %2309 = vmatpush1.bf16.msra.mxu0 %v2040
      %2310 = vmatprep.subr.bf16.mxu0 0
      %2311 = vmatpush1.bf16.msra.mxu0 %v2041
      %2312 = vmatprep.subr.bf16.mxu0 0
      %2313 = vmatpush1.bf16.msra.mxu0 0
      %2314 = vmatprep.subr.bf16.mxu0 0
      %2315 = vmatpush1.bf16.msra.mxu0 0
      %2316 = vmatprep.subr.bf16.mxu0 0
      %2317 = vmatpush1.bf16.msra.mxu0 0
      %2318 = vmatprep.subr.bf16.mxu0 0
      %2319 = vmatpush1.bf16.msra.mxu0 0
      %2320 = vmatprep.subr.bf16.mxu0 0
      %2321 = vmatpush1.bf16.msra.mxu0 0
      %2322 = vmatprep.subr.bf16.mxu0 0
      %2323 = vmatpush1.bf16.msra.mxu0 0
      %2324 = vmatprep.subr.bf16.mxu0 0
      %2325 = vmatpush1.bf16.msra.mxu0 0
      %2326 = vmatprep.subr.bf16.mxu0 0
      %2327 = vmatpush1.bf16.msra.mxu0 0
      %2328 = vmatprep.mubr.bf16.mxu0 0
      %2329 = vmatmul.mubr.bf16.gmra.mrb[0].mxu0 %v2202
      %v2330 = vpop.f32.mrb[0].mxu0
      %v2331 = vadd.f32 0.0, %v2330
      %v2332 = vpop.f32.mrb[0].mxu0
      %v2333 = vpop.f32.mrb[0].mxu0
      %v2334 = vpop.f32.mrb[0].mxu0
      %2335 = vdwg.mxu0
      %v2336 = vadd.f32 %v2295, %v2331
      %v2337 = vtanh.pop %v2336
      %v2338 = vld [vmem:[%s494 + $0x18] sm:$0xff]
      %2339 = vmatprep.subr.bf16.mxu0 0
      %2340 = vmatpush1.bf16.msra.mxu0 %v2125
      %2341 = vmatprep.subr.bf16.mxu0 0
      %2342 = vmatpush1.bf16.msra.mxu0 %v2126
      %2343 = vmatprep.subr.bf16.mxu0 0
      %2344 = vmatpush1.bf16.msra.mxu0 %v2127
      %2345 = vmatprep.subr.bf16.mxu0 0
      %2346 = vmatpush1.bf16.msra.mxu0 %v2128
      %2347 = vmatprep.subr.bf16.mxu0 0
      %2348 = vmatpush1.bf16.msra.mxu0 %v2129
      %2349 = vmatprep.subr.bf16.mxu0 0
      %2350 = vmatpush1.bf16.msra.mxu0 %v2130
      %2351 = vmatprep.subr.bf16.mxu0 0
      %2352 = vmatpush1.bf16.msra.mxu0 %v2131
      %2353 = vmatprep.subr.bf16.mxu0 0
      %2354 = vmatpush1.bf16.msra.mxu0 %v2132
      %2355 = vmatprep.subr.bf16.mxu0 0
      %2356 = vmatpush1.bf16.msra.mxu0 0
      %2357 = vmatprep.subr.bf16.mxu0 0
      %2358 = vmatpush1.bf16.msra.mxu0 0
      %2359 = vmatprep.subr.bf16.mxu0 0
      %2360 = vmatpush1.bf16.msra.mxu0 0
      %2361 = vmatprep.subr.bf16.mxu0 0
      %2362 = vmatpush1.bf16.msra.mxu0 0
      %2363 = vmatprep.subr.bf16.mxu0 0
      %2364 = vmatpush1.bf16.msra.mxu0 0
      %2365 = vmatprep.subr.bf16.mxu0 0
      %2366 = vmatpush1.bf16.msra.mxu0 0
      %2367 = vmatprep.subr.bf16.mxu0 0
      %2368 = vmatpush1.bf16.msra.mxu0 0
      %2369 = vmatprep.subr.bf16.mxu0 0
      %2370 = vmatpush1.bf16.msra.mxu0 0
      %2371 = vmatprep.mubr.bf16.mxu0 0
      %2372 = vmatmul.mubr.bf16.gmra.mrb[0].mxu0 %v2202
      %v2373 = vpop.f32.mrb[0].mxu0
      %v2374 = vadd.f32 0.0, %v2373
      %v2375 = vpop.f32.mrb[0].mxu0
      %v2376 = vpop.f32.mrb[0].mxu0
      %v2377 = vpop.f32.mrb[0].mxu0
      %2378 = vdwg.mxu0
      %v2379 = vadd.f32 %v2338, %v2374
      %v2380 = vmul.f32 %v2379, 0.5
      %v2381 = vtanh.pop %v2380
      %v2382 = vmul.f32 %v2381, 0.5
      %v2383 = vadd.f32 %v2382, 0.5
      %v2384 = vmul.f32 %v2294, %v2199
      %v2385 = vmul.f32 %v2248, %v2337
      %v2386 = vadd.f32 %v2384, %v2385
      %v2387 = vtanh.pop %v2386
      %v2388 = vmul.f32 %v2383, %v2387
      %s2389 = sadd.s32 %s83, 1
      %v2390 = vstv %s2389
      %vm2391 = vcmp.lt.s32.totalorder %v2390, %v1745
      %v2392 = vsel %vm2391, 1, 0
      %2393 = vset.pattern.permute.xlu0 0
      %2394 = vperm.xlu0 %2393, %v2392
      %v2395 = vpop.permute.xlu0 %2394
      %vm2396 = vcmp.eq.s32.totalorder %v2395, 1
      %v2397 = vsel %vm2396, %v2388, %v2198
      %v2398 = vsel %vm2396, %v2386, %v2199
      %v2399 = vsel %vm2396, %v2388, 0.0
      %s2400 = scalar_lea.vmem [#allocation13], 8
      %2401 = vst [vmem:[%s2400] sm:$0xff] %v2399
      %v2402 = vpack.c.bf16 %v2397, %v2397
      %v2403 = vld [vmem:[%s583] sm:$0xff]
      %2404 = vmatprep.subr.bf16.mxu0 0
      %2405 = vmatpush1.bf16.msra.mxu0 %v1846
      %2406 = vmatprep.subr.bf16.mxu0 0
      %2407 = vmatpush1.bf16.msra.mxu0 %v1847
      %2408 = vmatprep.subr.bf16.mxu0 0
      %2409 = vmatpush1.bf16.msra.mxu0 %v1848
      %2410 = vmatprep.subr.bf16.mxu0 0
      %2411 = vmatpush1.bf16.msra.mxu0 %v1849
      %2412 = vmatprep.subr.bf16.mxu0 0
      %2413 = vmatpush1.bf16.msra.mxu0 %v1850
      %2414 = vmatprep.subr.bf16.mxu0 0
      %2415 = vmatpush1.bf16.msra.mxu0 %v1851
      %2416 = vmatprep.subr.bf16.mxu0 0
      %2417 = vmatpush1.bf16.msra.mxu0 %v1852
      %2418 = vmatprep.subr.bf16.mxu0 0
      %2419 = vmatpush1.bf16.msra.mxu0 %v1853
      %2420 = vmatprep.subr.bf16.mxu0 0
      %2421 = vmatpush1.bf16.msra.mxu0 0
      %2422 = vmatprep.subr.bf16.mxu0 0
      %2423 = vmatpush1.bf16.msra.mxu0 0
      %2424 = vmatprep.subr.bf16.mxu0 0
      %2425 = vmatpush1.bf16.msra.mxu0 0
      %2426 = vmatprep.subr.bf16.mxu0 0
      %2427 = vmatpush1.bf16.msra.mxu0 0
      %2428 = vmatprep.subr.bf16.mxu0 0
      %2429 = vmatpush1.bf16.msra.mxu0 0
      %2430 = vmatprep.subr.bf16.mxu0 0
      %2431 = vmatpush1.bf16.msra.mxu0 0
      %2432 = vmatprep.subr.bf16.mxu0 0
      %2433 = vmatpush1.bf16.msra.mxu0 0
      %2434 = vmatprep.subr.bf16.mxu0 0
      %2435 = vmatpush1.bf16.msra.mxu0 0
      %2436 = vmatprep.mubr.bf16.mxu0 0
      %2437 = vmatmul.mubr.bf16.gmra.mrb[0].mxu0 %v2402
      %v2438 = vpop.f32.mrb[0].mxu0
      %v2439 = vadd.f32 0.0, %v2438
      %v2440 = vpop.f32.mrb[0].mxu0
      %v2441 = vpop.f32.mrb[0].mxu0
      %v2442 = vpop.f32.mrb[0].mxu0
      %2443 = vdwg.mxu0
      %v2444 = vadd.f32 %v2403, %v2439
      %v2445 = vmul.f32 %v2444, 0.5
      %v2446 = vtanh.pop %v2445
      %v2447 = vmul.f32 %v2446, 0.5
      %v2448 = vadd.f32 %v2447, 0.5
      %v2449 = vld [vmem:[%s583 + $0x8] sm:$0xff]
      %2450 = vmatprep.subr.bf16.mxu0 0
      %2451 = vmatpush1.bf16.msra.mxu0 %v1940
      %2452 = vmatprep.subr.bf16.mxu0 0
      %2453 = vmatpush1.bf16.msra.mxu0 %v1941
      %2454 = vmatprep.subr.bf16.mxu0 0
      %2455 = vmatpush1.bf16.msra.mxu0 %v1942
      %2456 = vmatprep.subr.bf16.mxu0 0
      %2457 = vmatpush1.bf16.msra.mxu0 %v1943
      %2458 = vmatprep.subr.bf16.mxu0 0
      %2459 = vmatpush1.bf16.msra.mxu0 %v1944
      %2460 = vmatprep.subr.bf16.mxu0 0
      %2461 = vmatpush1.bf16.msra.mxu0 %v1945
      %2462 = vmatprep.subr.bf16.mxu0 0
      %2463 = vmatpush1.bf16.msra.mxu0 %v1946
      %2464 = vmatprep.subr.bf16.mxu0 0
      %2465 = vmatpush1.bf16.msra.mxu0 %v1947
      %2466 = vmatprep.subr.bf16.mxu0 0
      %2467 = vmatpush1.bf16.msra.mxu0 0
      %2468 = vmatprep.subr.bf16.mxu0 0
      %2469 = vmatpush1.bf16.msra.mxu0 0
      %2470 = vmatprep.subr.bf16.mxu0 0
      %2471 = vmatpush1.bf16.msra.mxu0 0
      %2472 = vmatprep.subr.bf16.mxu0 0
      %2473 = vmatpush1.bf16.msra.mxu0 0
      %2474 = vmatprep.subr.bf16.mxu0 0
      %2475 = vmatpush1.bf16.msra.mxu0 0
      %2476 = vmatprep.subr.bf16.mxu0 0
      %2477 = vmatpush1.bf16.msra.mxu0 0
      %2478 = vmatprep.subr.bf16.mxu0 0
      %2479 = vmatpush1.bf16.msra.mxu0 0
      %2480 = vmatprep.subr.bf16.mxu0 0
      %2481 = vmatpush1.bf16.msra.mxu0 0
      %2482 = vmatprep.mubr.bf16.mxu0 0
      %2483 = vmatmul.mubr.bf16.gmra.mrb[0].mxu0 %v2402
      %v2484 = vpop.f32.mrb[0].mxu0
      %v2485 = vadd.f32 0.0, %v2484
      %v2486 = vpop.f32.mrb[0].mxu0
      %v2487 = vpop.f32.mrb[0].mxu0
      %v2488 = vpop.f32.mrb[0].mxu0
      %2489 = vdwg.mxu0
      %v2490 = vadd.f32 %v2449, %v2485
      %v2491 = vmul.f32 %v2490, 0.5
      %v2492 = vtanh.pop %v2491
      %v2493 = vmul.f32 %v2492, 0.5
      %v2494 = vadd.f32 %v2493, 0.5
      %v2495 = vld [vmem:[%s583 + $0x10] sm:$0xff]
      %2496 = vmatprep.subr.bf16.mxu0 0
      %2497 = vmatpush1.bf16.msra.mxu0 %v2034
      %2498 = vmatprep.subr.bf16.mxu0 0
      %2499 = vmatpush1.bf16.msra.mxu0 %v2035
      %2500 = vmatprep.subr.bf16.mxu0 0
      %2501 = vmatpush1.bf16.msra.mxu0 %v2036
      %2502 = vmatprep.subr.bf16.mxu0 0
      %2503 = vmatpush1.bf16.msra.mxu0 %v2037
      %2504 = vmatprep.subr.bf16.mxu0 0
      %2505 = vmatpush1.bf16.msra.mxu0 %v2038
      %2506 = vmatprep.subr.bf16.mxu0 0
      %2507 = vmatpush1.bf16.msra.mxu0 %v2039
      %2508 = vmatprep.subr.bf16.mxu0 0
      %2509 = vmatpush1.bf16.msra.mxu0 %v2040
      %2510 = vmatprep.subr.bf16.mxu0 0
      %2511 = vmatpush1.bf16.msra.mxu0 %v2041
      %2512 = vmatprep.subr.bf16.mxu0 0
      %2513 = vmatpush1.bf16.msra.mxu0 0
      %2514 = vmatprep.subr.bf16.mxu0 0
      %2515 = vmatpush1.bf16.msra.mxu0 0
      %2516 = vmatprep.subr.bf16.mxu0 0
      %2517 = vmatpush1.bf16.msra.mxu0 0
      %2518 = vmatprep.subr.bf16.mxu0 0
      %2519 = vmatpush1.bf16.msra.mxu0 0
      %2520 = vmatprep.subr.bf16.mxu0 0
      %2521 = vmatpush1.bf16.msra.mxu0 0
      %2522 = vmatprep.subr.bf16.mxu0 0
      %2523 = vmatpush1.bf16.msra.mxu0 0
      %2524 = vmatprep.subr.bf16.mxu0 0
      %2525 = vmatpush1.bf16.msra.mxu0 0
      %2526 = vmatprep.subr.bf16.mxu0 0
      %2527 = vmatpush1.bf16.msra.mxu0 0
      %2528 = vmatprep.mubr.bf16.mxu0 0
      %2529 = vmatmul.mubr.bf16.gmra.mrb[0].mxu0 %v2402
      %v2530 = vpop.f32.mrb[0].mxu0
      %v2531 = vadd.f32 0.0, %v2530
      %v2532 = vpop.f32.mrb[0].mxu0
      %v2533 = vpop.f32.mrb[0].mxu0
      %v2534 = vpop.f32.mrb[0].mxu0
      %2535 = vdwg.mxu0
      %v2536 = vadd.f32 %v2495, %v2531
      %v2537 = vtanh.pop %v2536
      %v2538 = vld [vmem:[%s583 + $0x18] sm:$0xff]
      %2539 = vmatprep.subr.bf16.mxu0 0
      %2540 = vmatpush1.bf16.msra.mxu0 %v2125
      %2541 = vmatprep.subr.bf16.mxu0 0
      %2542 = vmatpush1.bf16.msra.mxu0 %v2126
      %2543 = vmatprep.subr.bf16.mxu0 0
      %2544 = vmatpush1.bf16.msra.mxu0 %v2127
      %2545 = vmatprep.subr.bf16.mxu0 0
      %2546 = vmatpush1.bf16.msra.mxu0 %v2128
      %2547 = vmatprep.subr.bf16.mxu0 0
      %2548 = vmatpush1.bf16.msra.mxu0 %v2129
      %2549 = vmatprep.subr.bf16.mxu0 0
      %2550 = vmatpush1.bf16.msra.mxu0 %v2130
      %2551 = vmatprep.subr.bf16.mxu0 0
      %2552 = vmatpush1.bf16.msra.mxu0 %v2131
      %2553 = vmatprep.subr.bf16.mxu0 0
      %2554 = vmatpush1.bf16.msra.mxu0 %v2132
      %2555 = vmatprep.subr.bf16.mxu0 0
      %2556 = vmatpush1.bf16.msra.mxu0 0
      %2557 = vmatprep.subr.bf16.mxu0 0
      %2558 = vmatpush1.bf16.msra.mxu0 0
      %2559 = vmatprep.subr.bf16.mxu0 0
      %2560 = vmatpush1.bf16.msra.mxu0 0
      %2561 = vmatprep.subr.bf16.mxu0 0
      %2562 = vmatpush1.bf16.msra.mxu0 0
      %2563 = vmatprep.subr.bf16.mxu0 0
      %2564 = vmatpush1.bf16.msra.mxu0 0
      %2565 = vmatprep.subr.bf16.mxu0 0
      %2566 = vmatpush1.bf16.msra.mxu0 0
      %2567 = vmatprep.subr.bf16.mxu0 0
      %2568 = vmatpush1.bf16.msra.mxu0 0
      %2569 = vmatprep.subr.bf16.mxu0 0
      %2570 = vmatpush1.bf16.msra.mxu0 0
      %2571 = vmatprep.mubr.bf16.mxu0 0
      %2572 = vmatmul.mubr.bf16.gmra.mrb[0].mxu0 %v2402
      %v2573 = vpop.f32.mrb[0].mxu0
      %v2574 = vadd.f32 0.0, %v2573
      %v2575 = vpop.f32.mrb[0].mxu0
      %v2576 = vpop.f32.mrb[0].mxu0
      %v2577 = vpop.f32.mrb[0].mxu0
      %2578 = vdwg.mxu0
      %v2579 = vadd.f32 %v2538, %v2574
      %v2580 = vmul.f32 %v2579, 0.5
      %v2581 = vtanh.pop %v2580
      %v2582 = vmul.f32 %v2581, 0.5
      %v2583 = vadd.f32 %v2582, 0.5
      %v2584 = vmul.f32 %v2494, %v2398
      %v2585 = vmul.f32 %v2448, %v2537
      %v2586 = vadd.f32 %v2584, %v2585
      %v2587 = vtanh.pop %v2586
      %v2588 = vmul.f32 %v2583, %v2587
      %s2589 = sadd.s32 %s83, 2
      %v2590 = vstv %s2589
      %vm2591 = vcmp.lt.s32.totalorder %v2590, %v1745
      %v2592 = vsel %vm2591, 1, 0
      %2593 = vset.pattern.permute.xlu0 0
      %2594 = vperm.xlu0 %2593, %v2592
      %v2595 = vpop.permute.xlu0 %2594
      %vm2596 = vcmp.eq.s32.totalorder %v2595, 1
      %v2597 = vsel %vm2596, %v2588, %v2397
      %v2598 = vsel %vm2596, %v2586, %v2398
      %v2599 = vsel %vm2596, %v2588, 0.0
      %s2600 = scalar_lea.vmem [#allocation13], 16
      %2601 = vst [vmem:[%s2600] sm:$0xff] %v2599
      %v2602 = vpack.c.bf16 %v2597, %v2597
      %v2603 = vld [vmem:[%s672] sm:$0xff]
      %2604 = vmatprep.subr.bf16.mxu0 0
      %2605 = vmatpush1.bf16.msra.mxu0 %v1846
      %2606 = vmatprep.subr.bf16.mxu0 0
      %2607 = vmatpush1.bf16.msra.mxu0 %v1847
      %2608 = vmatprep.subr.bf16.mxu0 0
      %2609 = vmatpush1.bf16.msra.mxu0 %v1848
      %2610 = vmatprep.subr.bf16.mxu0 0
      %2611 = vmatpush1.bf16.msra.mxu0 %v1849
      %2612 = vmatprep.subr.bf16.mxu0 0
      %2613 = vmatpush1.bf16.msra.mxu0 %v1850
      %2614 = vmatprep.subr.bf16.mxu0 0
      %2615 = vmatpush1.bf16.msra.mxu0 %v1851
      %2616 = vmatprep.subr.bf16.mxu0 0
      %2617 = vmatpush1.bf16.msra.mxu0 %v1852
      %2618 = vmatprep.subr.bf16.mxu0 0
      %2619 = vmatpush1.bf16.msra.mxu0 %v1853
      %2620 = vmatprep.subr.bf16.mxu0 0
      %2621 = vmatpush1.bf16.msra.mxu0 0
      %2622 = vmatprep.subr.bf16.mxu0 0
      %2623 = vmatpush1.bf16.msra.mxu0 0
      %2624 = vmatprep.subr.bf16.mxu0 0
      %2625 = vmatpush1.bf16.msra.mxu0 0
      %2626 = vmatprep.subr.bf16.mxu0 0
      %2627 = vmatpush1.bf16.msra.mxu0 0
      %2628 = vmatprep.subr.bf16.mxu0 0
      %2629 = vmatpush1.bf16.msra.mxu0 0
      %2630 = vmatprep.subr.bf16.mxu0 0
      %2631 = vmatpush1.bf16.msra.mxu0 0
      %2632 = vmatprep.subr.bf16.mxu0 0
      %2633 = vmatpush1.bf16.msra.mxu0 0
      %2634 = vmatprep.subr.bf16.mxu0 0
      %2635 = vmatpush1.bf16.msra.mxu0 0
      %2636 = vmatprep.mubr.bf16.mxu0 0
      %2637 = vmatmul.mubr.bf16.gmra.mrb[0].mxu0 %v2602
      %v2638 = vpop.f32.mrb[0].mxu0
      %v2639 = vadd.f32 0.0, %v2638
      %v2640 = vpop.f32.mrb[0].mxu0
      %v2641 = vpop.f32.mrb[0].mxu0
      %v2642 = vpop.f32.mrb[0].mxu0
      %2643 = vdwg.mxu0
      %v2644 = vadd.f32 %v2603, %v2639
      %v2645 = vmul.f32 %v2644, 0.5
      %v2646 = vtanh.pop %v2645
      %v2647 = vmul.f32 %v2646, 0.5
      %v2648 = vadd.f32 %v2647, 0.5
      %v2649 = vld [vmem:[%s672 + $0x8] sm:$0xff]
      %2650 = vmatprep.subr.bf16.mxu0 0
      %2651 = vmatpush1.bf16.msra.mxu0 %v1940
      %2652 = vmatprep.subr.bf16.mxu0 0
      %2653 = vmatpush1.bf16.msra.mxu0 %v1941
      %2654 = vmatprep.subr.bf16.mxu0 0
      %2655 = vmatpush1.bf16.msra.mxu0 %v1942
      %2656 = vmatprep.subr.bf16.mxu0 0
      %2657 = vmatpush1.bf16.msra.mxu0 %v1943
      %2658 = vmatprep.subr.bf16.mxu0 0
      %2659 = vmatpush1.bf16.msra.mxu0 %v1944
      %2660 = vmatprep.subr.bf16.mxu0 0
      %2661 = vmatpush1.bf16.msra.mxu0 %v1945
      %2662 = vmatprep.subr.bf16.mxu0 0
      %2663 = vmatpush1.bf16.msra.mxu0 %v1946
      %2664 = vmatprep.subr.bf16.mxu0 0
      %2665 = vmatpush1.bf16.msra.mxu0 %v1947
      %2666 = vmatprep.subr.bf16.mxu0 0
      %2667 = vmatpush1.bf16.msra.mxu0 0
      %2668 = vmatprep.subr.bf16.mxu0 0
      %2669 = vmatpush1.bf16.msra.mxu0 0
      %2670 = vmatprep.subr.bf16.mxu0 0
      %2671 = vmatpush1.bf16.msra.mxu0 0
      %2672 = vmatprep.subr.bf16.mxu0 0
      %2673 = vmatpush1.bf16.msra.mxu0 0
      %2674 = vmatprep.subr.bf16.mxu0 0
      %2675 = vmatpush1.bf16.msra.mxu0 0
      %2676 = vmatprep.subr.bf16.mxu0 0
      %2677 = vmatpush1.bf16.msra.mxu0 0
      %2678 = vmatprep.subr.bf16.mxu0 0
      %2679 = vmatpush1.bf16.msra.mxu0 0
      %2680 = vmatprep.subr.bf16.mxu0 0
      %2681 = vmatpush1.bf16.msra.mxu0 0
      %2682 = vmatprep.mubr.bf16.mxu0 0
      %2683 = vmatmul.mubr.bf16.gmra.mrb[0].mxu0 %v2602
      %v2684 = vpop.f32.mrb[0].mxu0
      %v2685 = vadd.f32 0.0, %v2684
      %v2686 = vpop.f32.mrb[0].mxu0
      %v2687 = vpop.f32.mrb[0].mxu0
      %v2688 = vpop.f32.mrb[0].mxu0
      %2689 = vdwg.mxu0
      %v2690 = vadd.f32 %v2649, %v2685
      %v2691 = vmul.f32 %v2690, 0.5
      %v2692 = vtanh.pop %v2691
      %v2693 = vmul.f32 %v2692, 0.5
      %v2694 = vadd.f32 %v2693, 0.5
      %v2695 = vld [vmem:[%s672 + $0x10] sm:$0xff]
      %2696 = vmatprep.subr.bf16.mxu0 0
      %2697 = vmatpush1.bf16.msra.mxu0 %v2034
      %2698 = vmatprep.subr.bf16.mxu0 0
      %2699 = vmatpush1.bf16.msra.mxu0 %v2035
      %2700 = vmatprep.subr.bf16.mxu0 0
      %2701 = vmatpush1.bf16.msra.mxu0 %v2036
      %2702 = vmatprep.subr.bf16.mxu0 0
      %2703 = vmatpush1.bf16.msra.mxu0 %v2037
      %2704 = vmatprep.subr.bf16.mxu0 0
      %2705 = vmatpush1.bf16.msra.mxu0 %v2038
      %2706 = vmatprep.subr.bf16.mxu0 0
      %2707 = vmatpush1.bf16.msra.mxu0 %v2039
      %2708 = vmatprep.subr.bf16.mxu0 0
      %2709 = vmatpush1.bf16.msra.mxu0 %v2040
      %2710 = vmatprep.subr.bf16.mxu0 0
      %2711 = vmatpush1.bf16.msra.mxu0 %v2041
      %2712 = vmatprep.subr.bf16.mxu0 0
      %2713 = vmatpush1.bf16.msra.mxu0 0
      %2714 = vmatprep.subr.bf16.mxu0 0
      %2715 = vmatpush1.bf16.msra.mxu0 0
      %2716 = vmatprep.subr.bf16.mxu0 0
      %2717 = vmatpush1.bf16.msra.mxu0 0
      %2718 = vmatprep.subr.bf16.mxu0 0
      %2719 = vmatpush1.bf16.msra.mxu0 0
      %2720 = vmatprep.subr.bf16.mxu0 0
      %2721 = vmatpush1.bf16.msra.mxu0 0
      %2722 = vmatprep.subr.bf16.mxu0 0
      %2723 = vmatpush1.bf16.msra.mxu0 0
      %2724 = vmatprep.subr.bf16.mxu0 0
      %2725 = vmatpush1.bf16.msra.mxu0 0
      %2726 = vmatprep.subr.bf16.mxu0 0
      %2727 = vmatpush1.bf16.msra.mxu0 0
      %2728 = vmatprep.mubr.bf16.mxu0 0
      %2729 = vmatmul.mubr.bf16.gmra.mrb[0].mxu0 %v2602
      %v2730 = vpop.f32.mrb[0].mxu0
      %v2731 = vadd.f32 0.0, %v2730
      %v2732 = vpop.f32.mrb[0].mxu0
      %v2733 = vpop.f32.mrb[0].mxu0
      %v2734 = vpop.f32.mrb[0].mxu0
      %2735 = vdwg.mxu0
      %v2736 = vadd.f32 %v2695, %v2731
      %v2737 = vtanh.pop %v2736
      %v2738 = vld [vmem:[%s672 + $0x18] sm:$0xff]
      %2739 = vmatprep.subr.bf16.mxu0 0
      %2740 = vmatpush1.bf16.msra.mxu0 %v2125
      %2741 = vmatprep.subr.bf16.mxu0 0
      %2742 = vmatpush1.bf16.msra.mxu0 %v2126
      %2743 = vmatprep.subr.bf16.mxu0 0
      %2744 = vmatpush1.bf16.msra.mxu0 %v2127
      %2745 = vmatprep.subr.bf16.mxu0 0
      %2746 = vmatpush1.bf16.msra.mxu0 %v2128
      %2747 = vmatprep.subr.bf16.mxu0 0
      %2748 = vmatpush1.bf16.msra.mxu0 %v2129
      %2749 = vmatprep.subr.bf16.mxu0 0
      %2750 = vmatpush1.bf16.msra.mxu0 %v2130
      %2751 = vmatprep.subr.bf16.mxu0 0
      %2752 = vmatpush1.bf16.msra.mxu0 %v2131
      %2753 = vmatprep.subr.bf16.mxu0 0
      %2754 = vmatpush1.bf16.msra.mxu0 %v2132
      %2755 = vmatprep.subr.bf16.mxu0 0
      %2756 = vmatpush1.bf16.msra.mxu0 0
      %2757 = vmatprep.subr.bf16.mxu0 0
      %2758 = vmatpush1.bf16.msra.mxu0 0
      %2759 = vmatprep.subr.bf16.mxu0 0
      %2760 = vmatpush1.bf16.msra.mxu0 0
      %2761 = vmatprep.subr.bf16.mxu0 0
      %2762 = vmatpush1.bf16.msra.mxu0 0
      %2763 = vmatprep.subr.bf16.mxu0 0
      %2764 = vmatpush1.bf16.msra.mxu0 0
      %2765 = vmatprep.subr.bf16.mxu0 0
      %2766 = vmatpush1.bf16.msra.mxu0 0
      %2767 = vmatprep.subr.bf16.mxu0 0
      %2768 = vmatpush1.bf16.msra.mxu0 0
      %2769 = vmatprep.subr.bf16.mxu0 0
      %2770 = vmatpush1.bf16.msra.mxu0 0
      %2771 = vmatprep.mubr.bf16.mxu0 0
      %2772 = vmatmul.mubr.bf16.gmra.mrb[0].mxu0 %v2602
      %v2773 = vpop.f32.mrb[0].mxu0
      %v2774 = vadd.f32 0.0, %v2773
      %v2775 = vpop.f32.mrb[0].mxu0
      %v2776 = vpop.f32.mrb[0].mxu0
      %v2777 = vpop.f32.mrb[0].mxu0
      %2778 = vdwg.mxu0
      %v2779 = vadd.f32 %v2738, %v2774
      %v2780 = vmul.f32 %v2779, 0.5
      %v2781 = vtanh.pop %v2780
      %v2782 = vmul.f32 %v2781, 0.5
      %v2783 = vadd.f32 %v2782, 0.5
      %v2784 = vmul.f32 %v2694, %v2598
      %v2785 = vmul.f32 %v2648, %v2737
      %v2786 = vadd.f32 %v2784, %v2785
      %v2787 = vtanh.pop %v2786
      %v2788 = vmul.f32 %v2783, %v2787
      %s2789 = sadd.s32 %s83, 3
      %v2790 = vstv %s2789
      %vm2791 = vcmp.lt.s32.totalorder %v2790, %v1745
      %v2792 = vsel %vm2791, 1, 0
      %2793 = vset.pattern.permute.xlu0 0
      %2794 = vperm.xlu0 %2793, %v2792
      %v2795 = vpop.permute.xlu0 %2794
      %vm2796 = vcmp.eq.s32.totalorder %v2795, 1
      %v2797 = vsel %vm2796, %v2788, %v2597
      %v2798 = vsel %vm2796, %v2786, %v2598
      %v2799 = vsel %vm2796, %v2788, 0.0
      %s2800 = scalar_lea.vmem [#allocation13], 24
      %2801 = vst [vmem:[%s2800] sm:$0xff] %v2799
      %v2802 = vpack.c.bf16 %v2797, %v2797
      %v2803 = vld [vmem:[%s761] sm:$0xff]
      %2804 = vmatprep.subr.bf16.mxu0 0
      %2805 = vmatpush1.bf16.msra.mxu0 %v1846
      %2806 = vmatprep.subr.bf16.mxu0 0
      %2807 = vmatpush1.bf16.msra.mxu0 %v1847
      %2808 = vmatprep.subr.bf16.mxu0 0
      %2809 = vmatpush1.bf16.msra.mxu0 %v1848
      %2810 = vmatprep.subr.bf16.mxu0 0
      %2811 = vmatpush1.bf16.msra.mxu0 %v1849
      %2812 = vmatprep.subr.bf16.mxu0 0
      %2813 = vmatpush1.bf16.msra.mxu0 %v1850
      %2814 = vmatprep.subr.bf16.mxu0 0
      %2815 = vmatpush1.bf16.msra.mxu0 %v1851
      %2816 = vmatprep.subr.bf16.mxu0 0
      %2817 = vmatpush1.bf16.msra.mxu0 %v1852
      %2818 = vmatprep.subr.bf16.mxu0 0
      %2819 = vmatpush1.bf16.msra.mxu0 %v1853
      %2820 = vmatprep.subr.bf16.mxu0 0
      %2821 = vmatpush1.bf16.msra.mxu0 0
      %2822 = vmatprep.subr.bf16.mxu0 0
      %2823 = vmatpush1.bf16.msra.mxu0 0
      %2824 = vmatprep.subr.bf16.mxu0 0
      %2825 = vmatpush1.bf16.msra.mxu0 0
      %2826 = vmatprep.subr.bf16.mxu0 0
      %2827 = vmatpush1.bf16.msra.mxu0 0
      %2828 = vmatprep.subr.bf16.mxu0 0
      %2829 = vmatpush1.bf16.msra.mxu0 0
      %2830 = vmatprep.subr.bf16.mxu0 0
      %2831 = vmatpush1.bf16.msra.mxu0 0
      %2832 = vmatprep.subr.bf16.mxu0 0
      %2833 = vmatpush1.bf16.msra.mxu0 0
      %2834 = vmatprep.subr.bf16.mxu0 0
      %2835 = vmatpush1.bf16.msra.mxu0 0
      %2836 = vmatprep.mubr.bf16.mxu0 0
      %2837 = vmatmul.mubr.bf16.gmra.mrb[0].mxu0 %v2802
      %v2838 = vpop.f32.mrb[0].mxu0
      %v2839 = vadd.f32 0.0, %v2838
      %v2840 = vpop.f32.mrb[0].mxu0
      %v2841 = vpop.f32.mrb[0].mxu0
      %v2842 = vpop.f32.mrb[0].mxu0
      %2843 = vdwg.mxu0
      %v2844 = vadd.f32 %v2803, %v2839
      %v2845 = vmul.f32 %v2844, 0.5
      %v2846 = vtanh.pop %v2845
      %v2847 = vmul.f32 %v2846, 0.5
      %v2848 = vadd.f32 %v2847, 0.5
      %v2849 = vld [vmem:[%s761 + $0x8] sm:$0xff]
      %2850 = vmatprep.subr.bf16.mxu0 0
      %2851 = vmatpush1.bf16.msra.mxu0 %v1940
      %2852 = vmatprep.subr.bf16.mxu0 0
      %2853 = vmatpush1.bf16.msra.mxu0 %v1941
      %2854 = vmatprep.subr.bf16.mxu0 0
      %2855 = vmatpush1.bf16.msra.mxu0 %v1942
      %2856 = vmatprep.subr.bf16.mxu0 0
      %2857 = vmatpush1.bf16.msra.mxu0 %v1943
      %2858 = vmatprep.subr.bf16.mxu0 0
      %2859 = vmatpush1.bf16.msra.mxu0 %v1944
      %2860 = vmatprep.subr.bf16.mxu0 0
      %2861 = vmatpush1.bf16.msra.mxu0 %v1945
      %2862 = vmatprep.subr.bf16.mxu0 0
      %2863 = vmatpush1.bf16.msra.mxu0 %v1946
      %2864 = vmatprep.subr.bf16.mxu0 0
      %2865 = vmatpush1.bf16.msra.mxu0 %v1947
      %2866 = vmatprep.subr.bf16.mxu0 0
      %2867 = vmatpush1.bf16.msra.mxu0 0
      %2868 = vmatprep.subr.bf16.mxu0 0
      %2869 = vmatpush1.bf16.msra.mxu0 0
      %2870 = vmatprep.subr.bf16.mxu0 0
      %2871 = vmatpush1.bf16.msra.mxu0 0
      %2872 = vmatprep.subr.bf16.mxu0 0
      %2873 = vmatpush1.bf16.msra.mxu0 0
      %2874 = vmatprep.subr.bf16.mxu0 0
      %2875 = vmatpush1.bf16.msra.mxu0 0
      %2876 = vmatprep.subr.bf16.mxu0 0
      %2877 = vmatpush1.bf16.msra.mxu0 0
      %2878 = vmatprep.subr.bf16.mxu0 0
      %2879 = vmatpush1.bf16.msra.mxu0 0
      %2880 = vmatprep.subr.bf16.mxu0 0
      %2881 = vmatpush1.bf16.msra.mxu0 0
      %2882 = vmatprep.mubr.bf16.mxu0 0
      %2883 = vmatmul.mubr.bf16.gmra.mrb[0].mxu0 %v2802
      %v2884 = vpop.f32.mrb[0].mxu0
      %v2885 = vadd.f32 0.0, %v2884
      %v2886 = vpop.f32.mrb[0].mxu0
      %v2887 = vpop.f32.mrb[0].mxu0
      %v2888 = vpop.f32.mrb[0].mxu0
      %2889 = vdwg.mxu0
      %v2890 = vadd.f32 %v2849, %v2885
      %v2891 = vmul.f32 %v2890, 0.5
      %v2892 = vtanh.pop %v2891
      %v2893 = vmul.f32 %v2892, 0.5
      %v2894 = vadd.f32 %v2893, 0.5
      %v2895 = vld [vmem:[%s761 + $0x10] sm:$0xff]
      %2896 = vmatprep.subr.bf16.mxu0 0
      %2897 = vmatpush1.bf16.msra.mxu0 %v2034
      %2898 = vmatprep.subr.bf16.mxu0 0
      %2899 = vmatpush1.bf16.msra.mxu0 %v2035
      %2900 = vmatprep.subr.bf16.mxu0 0
      %2901 = vmatpush1.bf16.msra.mxu0 %v2036
      %2902 = vmatprep.subr.bf16.mxu0 0
      %2903 = vmatpush1.bf16.msra.mxu0 %v2037
      %2904 = vmatprep.subr.bf16.mxu0 0
      %2905 = vmatpush1.bf16.msra.mxu0 %v2038
      %2906 = vmatprep.subr.bf16.mxu0 0
      %2907 = vmatpush1.bf16.msra.mxu0 %v2039
      %2908 = vmatprep.subr.bf16.mxu0 0
      %2909 = vmatpush1.bf16.msra.mxu0 %v2040
      %2910 = vmatprep.subr.bf16.mxu0 0
      %2911 = vmatpush1.bf16.msra.mxu0 %v2041
      %2912 = vmatprep.subr.bf16.mxu0 0
      %2913 = vmatpush1.bf16.msra.mxu0 0
      %2914 = vmatprep.subr.bf16.mxu0 0
      %2915 = vmatpush1.bf16.msra.mxu0 0
      %2916 = vmatprep.subr.bf16.mxu0 0
      %2917 = vmatpush1.bf16.msra.mxu0 0
      %2918 = vmatprep.subr.bf16.mxu0 0
      %2919 = vmatpush1.bf16.msra.mxu0 0
      %2920 = vmatprep.subr.bf16.mxu0 0
      %2921 = vmatpush1.bf16.msra.mxu0 0
      %2922 = vmatprep.subr.bf16.mxu0 0
      %2923 = vmatpush1.bf16.msra.mxu0 0
      %2924 = vmatprep.subr.bf16.mxu0 0
      %2925 = vmatpush1.bf16.msra.mxu0 0
      %2926 = vmatprep.subr.bf16.mxu0 0
      %2927 = vmatpush1.bf16.msra.mxu0 0
      %2928 = vmatprep.mubr.bf16.mxu0 0
      %2929 = vmatmul.mubr.bf16.gmra.mrb[0].mxu0 %v2802
      %v2930 = vpop.f32.mrb[0].mxu0
      %v2931 = vadd.f32 0.0, %v2930
      %v2932 = vpop.f32.mrb[0].mxu0
      %v2933 = vpop.f32.mrb[0].mxu0
      %v2934 = vpop.f32.mrb[0].mxu0
      %2935 = vdwg.mxu0
      %v2936 = vadd.f32 %v2895, %v2931
      %v2937 = vtanh.pop %v2936
      %v2938 = vld [vmem:[%s761 + $0x18] sm:$0xff]
      %2939 = vmatprep.subr.bf16.mxu0 0
      %2940 = vmatpush1.bf16.msra.mxu0 %v2125
      %2941 = vmatprep.subr.bf16.mxu0 0
      %2942 = vmatpush1.bf16.msra.mxu0 %v2126
      %2943 = vmatprep.subr.bf16.mxu0 0
      %2944 = vmatpush1.bf16.msra.mxu0 %v2127
      %2945 = vmatprep.subr.bf16.mxu0 0
      %2946 = vmatpush1.bf16.msra.mxu0 %v2128
      %2947 = vmatprep.subr.bf16.mxu0 0
      %2948 = vmatpush1.bf16.msra.mxu0 %v2129
      %2949 = vmatprep.subr.bf16.mxu0 0
      %2950 = vmatpush1.bf16.msra.mxu0 %v2130
      %2951 = vmatprep.subr.bf16.mxu0 0
      %2952 = vmatpush1.bf16.msra.mxu0 %v2131
      %2953 = vmatprep.subr.bf16.mxu0 0
      %2954 = vmatpush1.bf16.msra.mxu0 %v2132
      %2955 = vmatprep.subr.bf16.mxu0 0
      %2956 = vmatpush1.bf16.msra.mxu0 0
      %2957 = vmatprep.subr.bf16.mxu0 0
      %2958 = vmatpush1.bf16.msra.mxu0 0
      %2959 = vmatprep.subr.bf16.mxu0 0
      %2960 = vmatpush1.bf16.msra.mxu0 0
      %2961 = vmatprep.subr.bf16.mxu0 0
      %2962 = vmatpush1.bf16.msra.mxu0 0
      %2963 = vmatprep.subr.bf16.mxu0 0
      %2964 = vmatpush1.bf16.msra.mxu0 0
      %2965 = vmatprep.subr.bf16.mxu0 0
      %2966 = vmatpush1.bf16.msra.mxu0 0
      %2967 = vmatprep.subr.bf16.mxu0 0
      %2968 = vmatpush1.bf16.msra.mxu0 0
      %2969 = vmatprep.subr.bf16.mxu0 0
      %2970 = vmatpush1.bf16.msra.mxu0 0
      %2971 = vmatprep.mubr.bf16.mxu0 0
      %2972 = vmatmul.mubr.bf16.gmra.mrb[0].mxu0 %v2802
      %v2973 = vpop.f32.mrb[0].mxu0
      %v2974 = vadd.f32 0.0, %v2973
      %v2975 = vpop.f32.mrb[0].mxu0
      %v2976 = vpop.f32.mrb[0].mxu0
      %v2977 = vpop.f32.mrb[0].mxu0
      %2978 = vdwg.mxu0
      %v2979 = vadd.f32 %v2938, %v2974
      %v2980 = vmul.f32 %v2979, 0.5
      %v2981 = vtanh.pop %v2980
      %v2982 = vmul.f32 %v2981, 0.5
      %v2983 = vadd.f32 %v2982, 0.5
      %v2984 = vmul.f32 %v2894, %v2798
      %v2985 = vmul.f32 %v2848, %v2937
      %v2986 = vadd.f32 %v2984, %v2985
      %v2987 = vtanh.pop %v2986
      %v2988 = vmul.f32 %v2983, %v2987
      %s2989 = sadd.s32 %s83, 4
      %v2990 = vstv %s2989
      %vm2991 = vcmp.lt.s32.totalorder %v2990, %v1745
      %v2992 = vsel %vm2991, 1, 0
      %2993 = vset.pattern.permute.xlu0 0
      %2994 = vperm.xlu0 %2993, %v2992
      %v2995 = vpop.permute.xlu0 %2994
      %vm2996 = vcmp.eq.s32.totalorder %v2995, 1
      %v2997 = vsel %vm2996, %v2988, %v2797
      %v2998 = vsel %vm2996, %v2986, %v2798
      %v2999 = vsel %vm2996, %v2988, 0.0
      %s3000 = scalar_lea.vmem [#allocation13], 32
      %3001 = vst [vmem:[%s3000] sm:$0xff] %v2999
      %v3002 = vpack.c.bf16 %v2997, %v2997
      %v3003 = vld [vmem:[%s850] sm:$0xff]
      %3004 = vmatprep.subr.bf16.mxu0 0
      %3005 = vmatpush1.bf16.msra.mxu0 %v1846
      %3006 = vmatprep.subr.bf16.mxu0 0
      %3007 = vmatpush1.bf16.msra.mxu0 %v1847
      %3008 = vmatprep.subr.bf16.mxu0 0
      %3009 = vmatpush1.bf16.msra.mxu0 %v1848
      %3010 = vmatprep.subr.bf16.mxu0 0
      %3011 = vmatpush1.bf16.msra.mxu0 %v1849
      %3012 = vmatprep.subr.bf16.mxu0 0
      %3013 = vmatpush1.bf16.msra.mxu0 %v1850
      %3014 = vmatprep.subr.bf16.mxu0 0
      %3015 = vmatpush1.bf16.msra.mxu0 %v1851
      %3016 = vmatprep.subr.bf16.mxu0 0
      %3017 = vmatpush1.bf16.msra.mxu0 %v1852
      %3018 = vmatprep.subr.bf16.mxu0 0
      %3019 = vmatpush1.bf16.msra.mxu0 %v1853
      %3020 = vmatprep.subr.bf16.mxu0 0
      %3021 = vmatpush1.bf16.msra.mxu0 0
      %3022 = vmatprep.subr.bf16.mxu0 0
      %3023 = vmatpush1.bf16.msra.mxu0 0
      %3024 = vmatprep.subr.bf16.mxu0 0
      %3025 = vmatpush1.bf16.msra.mxu0 0
      %3026 = vmatprep.subr.bf16.mxu0 0
      %3027 = vmatpush1.bf16.msra.mxu0 0
      %3028 = vmatprep.subr.bf16.mxu0 0
      %3029 = vmatpush1.bf16.msra.mxu0 0
      %3030 = vmatprep.subr.bf16.mxu0 0
      %3031 = vmatpush1.bf16.msra.mxu0 0
      %3032 = vmatprep.subr.bf16.mxu0 0
      %3033 = vmatpush1.bf16.msra.mxu0 0
      %3034 = vmatprep.subr.bf16.mxu0 0
      %3035 = vmatpush1.bf16.msra.mxu0 0
      %3036 = vmatprep.mubr.bf16.mxu0 0
      %3037 = vmatmul.mubr.bf16.gmra.mrb[0].mxu0 %v3002
      %v3038 = vpop.f32.mrb[0].mxu0
      %v3039 = vadd.f32 0.0, %v3038
      %v3040 = vpop.f32.mrb[0].mxu0
      %v3041 = vpop.f32.mrb[0].mxu0
      %v3042 = vpop.f32.mrb[0].mxu0
      %3043 = vdwg.mxu0
      %v3044 = vadd.f32 %v3003, %v3039
      %v3045 = vmul.f32 %v3044, 0.5
      %v3046 = vtanh.pop %v3045
      %v3047 = vmul.f32 %v3046, 0.5
      %v3048 = vadd.f32 %v3047, 0.5
      %v3049 = vld [vmem:[%s850 + $0x8] sm:$0xff]
      %3050 = vmatprep.subr.bf16.mxu0 0
      %3051 = vmatpush1.bf16.msra.mxu0 %v1940
      %3052 = vmatprep.subr.bf16.mxu0 0
      %3053 = vmatpush1.bf16.msra.mxu0 %v1941
      %3054 = vmatprep.subr.bf16.mxu0 0
      %3055 = vmatpush1.bf16.msra.mxu0 %v1942
      %3056 = vmatprep.subr.bf16.mxu0 0
      %3057 = vmatpush1.bf16.msra.mxu0 %v1943
      %3058 = vmatprep.subr.bf16.mxu0 0
      %3059 = vmatpush1.bf16.msra.mxu0 %v1944
      %3060 = vmatprep.subr.bf16.mxu0 0
      %3061 = vmatpush1.bf16.msra.mxu0 %v1945
      %3062 = vmatprep.subr.bf16.mxu0 0
      %3063 = vmatpush1.bf16.msra.mxu0 %v1946
      %3064 = vmatprep.subr.bf16.mxu0 0
      %3065 = vmatpush1.bf16.msra.mxu0 %v1947
      %3066 = vmatprep.subr.bf16.mxu0 0
      %3067 = vmatpush1.bf16.msra.mxu0 0
      %3068 = vmatprep.subr.bf16.mxu0 0
      %3069 = vmatpush1.bf16.msra.mxu0 0
      %3070 = vmatprep.subr.bf16.mxu0 0
      %3071 = vmatpush1.bf16.msra.mxu0 0
      %3072 = vmatprep.subr.bf16.mxu0 0
      %3073 = vmatpush1.bf16.msra.mxu0 0
      %3074 = vmatprep.subr.bf16.mxu0 0
      %3075 = vmatpush1.bf16.msra.mxu0 0
      %3076 = vmatprep.subr.bf16.mxu0 0
      %3077 = vmatpush1.bf16.msra.mxu0 0
      %3078 = vmatprep.subr.bf16.mxu0 0
      %3079 = vmatpush1.bf16.msra.mxu0 0
      %3080 = vmatprep.subr.bf16.mxu0 0
      %3081 = vmatpush1.bf16.msra.mxu0 0
      %3082 = vmatprep.mubr.bf16.mxu0 0
      %3083 = vmatmul.mubr.bf16.gmra.mrb[0].mxu0 %v3002
      %v3084 = vpop.f32.mrb[0].mxu0
      %v3085 = vadd.f32 0.0, %v3084
      %v3086 = vpop.f32.mrb[0].mxu0
      %v3087 = vpop.f32.mrb[0].mxu0
      %v3088 = vpop.f32.mrb[0].mxu0
      %3089 = vdwg.mxu0
      %v3090 = vadd.f32 %v3049, %v3085
      %v3091 = vmul.f32 %v3090, 0.5
      %v3092 = vtanh.pop %v3091
      %v3093 = vmul.f32 %v3092, 0.5
      %v3094 = vadd.f32 %v3093, 0.5
      %v3095 = vld [vmem:[%s850 + $0x10] sm:$0xff]
      %3096 = vmatprep.subr.bf16.mxu0 0
      %3097 = vmatpush1.bf16.msra.mxu0 %v2034
      %3098 = vmatprep.subr.bf16.mxu0 0
      %3099 = vmatpush1.bf16.msra.mxu0 %v2035
      %3100 = vmatprep.subr.bf16.mxu0 0
      %3101 = vmatpush1.bf16.msra.mxu0 %v2036
      %3102 = vmatprep.subr.bf16.mxu0 0
      %3103 = vmatpush1.bf16.msra.mxu0 %v2037
      %3104 = vmatprep.subr.bf16.mxu0 0
      %3105 = vmatpush1.bf16.msra.mxu0 %v2038
      %3106 = vmatprep.subr.bf16.mxu0 0
      %3107 = vmatpush1.bf16.msra.mxu0 %v2039
      %3108 = vmatprep.subr.bf16.mxu0 0
      %3109 = vmatpush1.bf16.msra.mxu0 %v2040
      %3110 = vmatprep.subr.bf16.mxu0 0
      %3111 = vmatpush1.bf16.msra.mxu0 %v2041
      %3112 = vmatprep.subr.bf16.mxu0 0
      %3113 = vmatpush1.bf16.msra.mxu0 0
      %3114 = vmatprep.subr.bf16.mxu0 0
      %3115 = vmatpush1.bf16.msra.mxu0 0
      %3116 = vmatprep.subr.bf16.mxu0 0
      %3117 = vmatpush1.bf16.msra.mxu0 0
      %3118 = vmatprep.subr.bf16.mxu0 0
      %3119 = vmatpush1.bf16.msra.mxu0 0
      %3120 = vmatprep.subr.bf16.mxu0 0
      %3121 = vmatpush1.bf16.msra.mxu0 0
      %3122 = vmatprep.subr.bf16.mxu0 0
      %3123 = vmatpush1.bf16.msra.mxu0 0
      %3124 = vmatprep.subr.bf16.mxu0 0
      %3125 = vmatpush1.bf16.msra.mxu0 0
      %3126 = vmatprep.subr.bf16.mxu0 0
      %3127 = vmatpush1.bf16.msra.mxu0 0
      %3128 = vmatprep.mubr.bf16.mxu0 0
      %3129 = vmatmul.mubr.bf16.gmra.mrb[0].mxu0 %v3002
      %v3130 = vpop.f32.mrb[0].mxu0
      %v3131 = vadd.f32 0.0, %v3130
      %v3132 = vpop.f32.mrb[0].mxu0
      %v3133 = vpop.f32.mrb[0].mxu0
      %v3134 = vpop.f32.mrb[0].mxu0
      %3135 = vdwg.mxu0
      %v3136 = vadd.f32 %v3095, %v3131
      %v3137 = vtanh.pop %v3136
      %v3138 = vld [vmem:[%s850 + $0x18] sm:$0xff]
      %3139 = vmatprep.subr.bf16.mxu0 0
      %3140 = vmatpush1.bf16.msra.mxu0 %v2125
      %3141 = vmatprep.subr.bf16.mxu0 0
      %3142 = vmatpush1.bf16.msra.mxu0 %v2126
      %3143 = vmatprep.subr.bf16.mxu0 0
      %3144 = vmatpush1.bf16.msra.mxu0 %v2127
      %3145 = vmatprep.subr.bf16.mxu0 0
      %3146 = vmatpush1.bf16.msra.mxu0 %v2128
      %3147 = vmatprep.subr.bf16.mxu0 0
      %3148 = vmatpush1.bf16.msra.mxu0 %v2129
      %3149 = vmatprep.subr.bf16.mxu0 0
      %3150 = vmatpush1.bf16.msra.mxu0 %v2130
      %3151 = vmatprep.subr.bf16.mxu0 0
      %3152 = vmatpush1.bf16.msra.mxu0 %v2131
      %3153 = vmatprep.subr.bf16.mxu0 0
      %3154 = vmatpush1.bf16.msra.mxu0 %v2132
      %3155 = vmatprep.subr.bf16.mxu0 0
      %3156 = vmatpush1.bf16.msra.mxu0 0
      %3157 = vmatprep.subr.bf16.mxu0 0
      %3158 = vmatpush1.bf16.msra.mxu0 0
      %3159 = vmatprep.subr.bf16.mxu0 0
      %3160 = vmatpush1.bf16.msra.mxu0 0
      %3161 = vmatprep.subr.bf16.mxu0 0
      %3162 = vmatpush1.bf16.msra.mxu0 0
      %3163 = vmatprep.subr.bf16.mxu0 0
      %3164 = vmatpush1.bf16.msra.mxu0 0
      %3165 = vmatprep.subr.bf16.mxu0 0
      %3166 = vmatpush1.bf16.msra.mxu0 0
      %3167 = vmatprep.subr.bf16.mxu0 0
      %3168 = vmatpush1.bf16.msra.mxu0 0
      %3169 = vmatprep.subr.bf16.mxu0 0
      %3170 = vmatpush1.bf16.msra.mxu0 0
      %3171 = vmatprep.mubr.bf16.mxu0 0
      %3172 = vmatmul.mubr.bf16.gmra.mrb[0].mxu0 %v3002
      %v3173 = vpop.f32.mrb[0].mxu0
      %v3174 = vadd.f32 0.0, %v3173
      %v3175 = vpop.f32.mrb[0].mxu0
      %v3176 = vpop.f32.mrb[0].mxu0
      %v3177 = vpop.f32.mrb[0].mxu0
      %3178 = vdwg.mxu0
      %v3179 = vadd.f32 %v3138, %v3174
      %v3180 = vmul.f32 %v3179, 0.5
      %v3181 = vtanh.pop %v3180
      %v3182 = vmul.f32 %v3181, 0.5
      %v3183 = vadd.f32 %v3182, 0.5
      %v3184 = vmul.f32 %v3094, %v2998
      %v3185 = vmul.f32 %v3048, %v3137
      %v3186 = vadd.f32 %v3184, %v3185
      %v3187 = vtanh.pop %v3186
      %v3188 = vmul.f32 %v3183, %v3187
      %s3189 = sadd.s32 %s83, 5
      %v3190 = vstv %s3189
      %vm3191 = vcmp.lt.s32.totalorder %v3190, %v1745
      %v3192 = vsel %vm3191, 1, 0
      %3193 = vset.pattern.permute.xlu0 0
      %3194 = vperm.xlu0 %3193, %v3192
      %v3195 = vpop.permute.xlu0 %3194
      %vm3196 = vcmp.eq.s32.totalorder %v3195, 1
      %v3197 = vsel %vm3196, %v3188, %v2997
      %v3198 = vsel %vm3196, %v3186, %v2998
      %v3199 = vsel %vm3196, %v3188, 0.0
      %s3200 = scalar_lea.vmem [#allocation13], 40
      %3201 = vst [vmem:[%s3200] sm:$0xff] %v3199
      %v3202 = vpack.c.bf16 %v3197, %v3197
      %v3203 = vld [vmem:[%s939] sm:$0xff]
      %3204 = vmatprep.subr.bf16.mxu0 0
      %3205 = vmatpush1.bf16.msra.mxu0 %v1846
      %3206 = vmatprep.subr.bf16.mxu0 0
      %3207 = vmatpush1.bf16.msra.mxu0 %v1847
      %3208 = vmatprep.subr.bf16.mxu0 0
      %3209 = vmatpush1.bf16.msra.mxu0 %v1848
      %3210 = vmatprep.subr.bf16.mxu0 0
      %3211 = vmatpush1.bf16.msra.mxu0 %v1849
      %3212 = vmatprep.subr.bf16.mxu0 0
      %3213 = vmatpush1.bf16.msra.mxu0 %v1850
      %3214 = vmatprep.subr.bf16.mxu0 0
      %3215 = vmatpush1.bf16.msra.mxu0 %v1851
      %3216 = vmatprep.subr.bf16.mxu0 0
      %3217 = vmatpush1.bf16.msra.mxu0 %v1852
      %3218 = vmatprep.subr.bf16.mxu0 0
      %3219 = vmatpush1.bf16.msra.mxu0 %v1853
      %3220 = vmatprep.subr.bf16.mxu0 0
      %3221 = vmatpush1.bf16.msra.mxu0 0
      %3222 = vmatprep.subr.bf16.mxu0 0
      %3223 = vmatpush1.bf16.msra.mxu0 0
      %3224 = vmatprep.subr.bf16.mxu0 0
      %3225 = vmatpush1.bf16.msra.mxu0 0
      %3226 = vmatprep.subr.bf16.mxu0 0
      %3227 = vmatpush1.bf16.msra.mxu0 0
      %3228 = vmatprep.subr.bf16.mxu0 0
      %3229 = vmatpush1.bf16.msra.mxu0 0
      %3230 = vmatprep.subr.bf16.mxu0 0
      %3231 = vmatpush1.bf16.msra.mxu0 0
      %3232 = vmatprep.subr.bf16.mxu0 0
      %3233 = vmatpush1.bf16.msra.mxu0 0
      %3234 = vmatprep.subr.bf16.mxu0 0
      %3235 = vmatpush1.bf16.msra.mxu0 0
      %3236 = vmatprep.mubr.bf16.mxu0 0
      %3237 = vmatmul.mubr.bf16.gmra.mrb[0].mxu0 %v3202
      %v3238 = vpop.f32.mrb[0].mxu0
      %v3239 = vadd.f32 0.0, %v3238
      %v3240 = vpop.f32.mrb[0].mxu0
      %v3241 = vpop.f32.mrb[0].mxu0
      %v3242 = vpop.f32.mrb[0].mxu0
      %3243 = vdwg.mxu0
      %v3244 = vadd.f32 %v3203, %v3239
      %v3245 = vmul.f32 %v3244, 0.5
      %v3246 = vtanh.pop %v3245
      %v3247 = vmul.f32 %v3246, 0.5
      %v3248 = vadd.f32 %v3247, 0.5
      %v3249 = vld [vmem:[%s939 + $0x8] sm:$0xff]
      %3250 = vmatprep.subr.bf16.mxu0 0
      %3251 = vmatpush1.bf16.msra.mxu0 %v1940
      %3252 = vmatprep.subr.bf16.mxu0 0
      %3253 = vmatpush1.bf16.msra.mxu0 %v1941
      %3254 = vmatprep.subr.bf16.mxu0 0
      %3255 = vmatpush1.bf16.msra.mxu0 %v1942
      %3256 = vmatprep.subr.bf16.mxu0 0
      %3257 = vmatpush1.bf16.msra.mxu0 %v1943
      %3258 = vmatprep.subr.bf16.mxu0 0
      %3259 = vmatpush1.bf16.msra.mxu0 %v1944
      %3260 = vmatprep.subr.bf16.mxu0 0
      %3261 = vmatpush1.bf16.msra.mxu0 %v1945
      %3262 = vmatprep.subr.bf16.mxu0 0
      %3263 = vmatpush1.bf16.msra.mxu0 %v1946
      %3264 = vmatprep.subr.bf16.mxu0 0
      %3265 = vmatpush1.bf16.msra.mxu0 %v1947
      %3266 = vmatprep.subr.bf16.mxu0 0
      %3267 = vmatpush1.bf16.msra.mxu0 0
      %3268 = vmatprep.subr.bf16.mxu0 0
      %3269 = vmatpush1.bf16.msra.mxu0 0
      %3270 = vmatprep.subr.bf16.mxu0 0
      %3271 = vmatpush1.bf16.msra.mxu0 0
      %3272 = vmatprep.subr.bf16.mxu0 0
      %3273 = vmatpush1.bf16.msra.mxu0 0
      %3274 = vmatprep.subr.bf16.mxu0 0
      %3275 = vmatpush1.bf16.msra.mxu0 0
      %3276 = vmatprep.subr.bf16.mxu0 0
      %3277 = vmatpush1.bf16.msra.mxu0 0
      %3278 = vmatprep.subr.bf16.mxu0 0
      %3279 = vmatpush1.bf16.msra.mxu0 0
      %3280 = vmatprep.subr.bf16.mxu0 0
      %3281 = vmatpush1.bf16.msra.mxu0 0
      %3282 = vmatprep.mubr.bf16.mxu0 0
      %3283 = vmatmul.mubr.bf16.gmra.mrb[0].mxu0 %v3202
      %v3284 = vpop.f32.mrb[0].mxu0
      %v3285 = vadd.f32 0.0, %v3284
      %v3286 = vpop.f32.mrb[0].mxu0
      %v3287 = vpop.f32.mrb[0].mxu0
      %v3288 = vpop.f32.mrb[0].mxu0
      %3289 = vdwg.mxu0
      %v3290 = vadd.f32 %v3249, %v3285
      %v3291 = vmul.f32 %v3290, 0.5
      %v3292 = vtanh.pop %v3291
      %v3293 = vmul.f32 %v3292, 0.5
      %v3294 = vadd.f32 %v3293, 0.5
      %v3295 = vld [vmem:[%s939 + $0x10] sm:$0xff]
      %3296 = vmatprep.subr.bf16.mxu0 0
      %3297 = vmatpush1.bf16.msra.mxu0 %v2034
      %3298 = vmatprep.subr.bf16.mxu0 0
      %3299 = vmatpush1.bf16.msra.mxu0 %v2035
      %3300 = vmatprep.subr.bf16.mxu0 0
      %3301 = vmatpush1.bf16.msra.mxu0 %v2036
      %3302 = vmatprep.subr.bf16.mxu0 0
      %3303 = vmatpush1.bf16.msra.mxu0 %v2037
      %3304 = vmatprep.subr.bf16.mxu0 0
      %3305 = vmatpush1.bf16.msra.mxu0 %v2038
      %3306 = vmatprep.subr.bf16.mxu0 0
      %3307 = vmatpush1.bf16.msra.mxu0 %v2039
      %3308 = vmatprep.subr.bf16.mxu0 0
      %3309 = vmatpush1.bf16.msra.mxu0 %v2040
      %3310 = vmatprep.subr.bf16.mxu0 0
      %3311 = vmatpush1.bf16.msra.mxu0 %v2041
      %3312 = vmatprep.subr.bf16.mxu0 0
      %3313 = vmatpush1.bf16.msra.mxu0 0
      %3314 = vmatprep.subr.bf16.mxu0 0
      %3315 = vmatpush1.bf16.msra.mxu0 0
      %3316 = vmatprep.subr.bf16.mxu0 0
      %3317 = vmatpush1.bf16.msra.mxu0 0
      %3318 = vmatprep.subr.bf16.mxu0 0
      %3319 = vmatpush1.bf16.msra.mxu0 0
      %3320 = vmatprep.subr.bf16.mxu0 0
      %3321 = vmatpush1.bf16.msra.mxu0 0
      %3322 = vmatprep.subr.bf16.mxu0 0
      %3323 = vmatpush1.bf16.msra.mxu0 0
      %3324 = vmatprep.subr.bf16.mxu0 0
      %3325 = vmatpush1.bf16.msra.mxu0 0
      %3326 = vmatprep.subr.bf16.mxu0 0
      %3327 = vmatpush1.bf16.msra.mxu0 0
      %3328 = vmatprep.mubr.bf16.mxu0 0
      %3329 = vmatmul.mubr.bf16.gmra.mrb[0].mxu0 %v3202
      %v3330 = vpop.f32.mrb[0].mxu0
      %v3331 = vadd.f32 0.0, %v3330
      %v3332 = vpop.f32.mrb[0].mxu0
      %v3333 = vpop.f32.mrb[0].mxu0
      %v3334 = vpop.f32.mrb[0].mxu0
      %3335 = vdwg.mxu0
      %v3336 = vadd.f32 %v3295, %v3331
      %v3337 = vtanh.pop %v3336
      %v3338 = vld [vmem:[%s939 + $0x18] sm:$0xff]
      %3339 = vmatprep.subr.bf16.mxu0 0
      %3340 = vmatpush1.bf16.msra.mxu0 %v2125
      %3341 = vmatprep.subr.bf16.mxu0 0
      %3342 = vmatpush1.bf16.msra.mxu0 %v2126
      %3343 = vmatprep.subr.bf16.mxu0 0
      %3344 = vmatpush1.bf16.msra.mxu0 %v2127
      %3345 = vmatprep.subr.bf16.mxu0 0
      %3346 = vmatpush1.bf16.msra.mxu0 %v2128
      %3347 = vmatprep.subr.bf16.mxu0 0
      %3348 = vmatpush1.bf16.msra.mxu0 %v2129
      %3349 = vmatprep.subr.bf16.mxu0 0
      %3350 = vmatpush1.bf16.msra.mxu0 %v2130
      %3351 = vmatprep.subr.bf16.mxu0 0
      %3352 = vmatpush1.bf16.msra.mxu0 %v2131
      %3353 = vmatprep.subr.bf16.mxu0 0
      %3354 = vmatpush1.bf16.msra.mxu0 %v2132
      %3355 = vmatprep.subr.bf16.mxu0 0
      %3356 = vmatpush1.bf16.msra.mxu0 0
      %3357 = vmatprep.subr.bf16.mxu0 0
      %3358 = vmatpush1.bf16.msra.mxu0 0
      %3359 = vmatprep.subr.bf16.mxu0 0
      %3360 = vmatpush1.bf16.msra.mxu0 0
      %3361 = vmatprep.subr.bf16.mxu0 0
      %3362 = vmatpush1.bf16.msra.mxu0 0
      %3363 = vmatprep.subr.bf16.mxu0 0
      %3364 = vmatpush1.bf16.msra.mxu0 0
      %3365 = vmatprep.subr.bf16.mxu0 0
      %3366 = vmatpush1.bf16.msra.mxu0 0
      %3367 = vmatprep.subr.bf16.mxu0 0
      %3368 = vmatpush1.bf16.msra.mxu0 0
      %3369 = vmatprep.subr.bf16.mxu0 0
      %3370 = vmatpush1.bf16.msra.mxu0 0
      %3371 = vmatprep.mubr.bf16.mxu0 0
      %3372 = vmatmul.mubr.bf16.gmra.mrb[0].mxu0 %v3202
      %v3373 = vpop.f32.mrb[0].mxu0
      %v3374 = vadd.f32 0.0, %v3373
      %v3375 = vpop.f32.mrb[0].mxu0
      %v3376 = vpop.f32.mrb[0].mxu0
      %v3377 = vpop.f32.mrb[0].mxu0
      %3378 = vdwg.mxu0
      %v3379 = vadd.f32 %v3338, %v3374
      %v3380 = vmul.f32 %v3379, 0.5
      %v3381 = vtanh.pop %v3380
      %v3382 = vmul.f32 %v3381, 0.5
      %v3383 = vadd.f32 %v3382, 0.5
      %v3384 = vmul.f32 %v3294, %v3198
      %v3385 = vmul.f32 %v3248, %v3337
      %v3386 = vadd.f32 %v3384, %v3385
      %v3387 = vtanh.pop %v3386
      %v3388 = vmul.f32 %v3383, %v3387
      %s3389 = sadd.s32 %s83, 6
      %v3390 = vstv %s3389
      %vm3391 = vcmp.lt.s32.totalorder %v3390, %v1745
      %v3392 = vsel %vm3391, 1, 0
      %3393 = vset.pattern.permute.xlu0 0
      %3394 = vperm.xlu0 %3393, %v3392
      %v3395 = vpop.permute.xlu0 %3394
      %vm3396 = vcmp.eq.s32.totalorder %v3395, 1
      %v3397 = vsel %vm3396, %v3388, %v3197
      %v3398 = vsel %vm3396, %v3386, %v3198
      %v3399 = vsel %vm3396, %v3388, 0.0
      %s3400 = scalar_lea.vmem [#allocation13], 48
      %3401 = vst [vmem:[%s3400] sm:$0xff] %v3399
      %v3402 = vpack.c.bf16 %v3397, %v3397
      %v3403 = vld [vmem:[%s1028] sm:$0xff]
      %3404 = vmatprep.subr.bf16.mxu0 0
      %3405 = vmatpush1.bf16.msra.mxu0 %v1846
      %3406 = vmatprep.subr.bf16.mxu0 0
      %3407 = vmatpush1.bf16.msra.mxu0 %v1847
      %3408 = vmatprep.subr.bf16.mxu0 0
      %3409 = vmatpush1.bf16.msra.mxu0 %v1848
      %3410 = vmatprep.subr.bf16.mxu0 0
      %3411 = vmatpush1.bf16.msra.mxu0 %v1849
      %3412 = vmatprep.subr.bf16.mxu0 0
      %3413 = vmatpush1.bf16.msra.mxu0 %v1850
      %3414 = vmatprep.subr.bf16.mxu0 0
      %3415 = vmatpush1.bf16.msra.mxu0 %v1851
      %3416 = vmatprep.subr.bf16.mxu0 0
      %3417 = vmatpush1.bf16.msra.mxu0 %v1852
      %3418 = vmatprep.subr.bf16.mxu0 0
      %3419 = vmatpush1.bf16.msra.mxu0 %v1853
      %3420 = vmatprep.subr.bf16.mxu0 0
      %3421 = vmatpush1.bf16.msra.mxu0 0
      %3422 = vmatprep.subr.bf16.mxu0 0
      %3423 = vmatpush1.bf16.msra.mxu0 0
      %3424 = vmatprep.subr.bf16.mxu0 0
      %3425 = vmatpush1.bf16.msra.mxu0 0
      %3426 = vmatprep.subr.bf16.mxu0 0
      %3427 = vmatpush1.bf16.msra.mxu0 0
      %3428 = vmatprep.subr.bf16.mxu0 0
      %3429 = vmatpush1.bf16.msra.mxu0 0
      %3430 = vmatprep.subr.bf16.mxu0 0
      %3431 = vmatpush1.bf16.msra.mxu0 0
      %3432 = vmatprep.subr.bf16.mxu0 0
      %3433 = vmatpush1.bf16.msra.mxu0 0
      %3434 = vmatprep.subr.bf16.mxu0 0
      %3435 = vmatpush1.bf16.msra.mxu0 0
      %3436 = vmatprep.mubr.bf16.mxu0 0
      %3437 = vmatmul.mubr.bf16.gmra.mrb[0].mxu0 %v3402
      %v3438 = vpop.f32.mrb[0].mxu0
      %v3439 = vadd.f32 0.0, %v3438
      %v3440 = vpop.f32.mrb[0].mxu0
      %v3441 = vpop.f32.mrb[0].mxu0
      %v3442 = vpop.f32.mrb[0].mxu0
      %3443 = vdwg.mxu0
      %v3444 = vadd.f32 %v3403, %v3439
      %v3445 = vmul.f32 %v3444, 0.5
      %v3446 = vtanh.pop %v3445
      %v3447 = vmul.f32 %v3446, 0.5
      %v3448 = vadd.f32 %v3447, 0.5
      %v3449 = vld [vmem:[%s1028 + $0x8] sm:$0xff]
      %3450 = vmatprep.subr.bf16.mxu0 0
      %3451 = vmatpush1.bf16.msra.mxu0 %v1940
      %3452 = vmatprep.subr.bf16.mxu0 0
      %3453 = vmatpush1.bf16.msra.mxu0 %v1941
      %3454 = vmatprep.subr.bf16.mxu0 0
      %3455 = vmatpush1.bf16.msra.mxu0 %v1942
      %3456 = vmatprep.subr.bf16.mxu0 0
      %3457 = vmatpush1.bf16.msra.mxu0 %v1943
      %3458 = vmatprep.subr.bf16.mxu0 0
      %3459 = vmatpush1.bf16.msra.mxu0 %v1944
      %3460 = vmatprep.subr.bf16.mxu0 0
      %3461 = vmatpush1.bf16.msra.mxu0 %v1945
      %3462 = vmatprep.subr.bf16.mxu0 0
      %3463 = vmatpush1.bf16.msra.mxu0 %v1946
      %3464 = vmatprep.subr.bf16.mxu0 0
      %3465 = vmatpush1.bf16.msra.mxu0 %v1947
      %3466 = vmatprep.subr.bf16.mxu0 0
      %3467 = vmatpush1.bf16.msra.mxu0 0
      %3468 = vmatprep.subr.bf16.mxu0 0
      %3469 = vmatpush1.bf16.msra.mxu0 0
      %3470 = vmatprep.subr.bf16.mxu0 0
      %3471 = vmatpush1.bf16.msra.mxu0 0
      %3472 = vmatprep.subr.bf16.mxu0 0
      %3473 = vmatpush1.bf16.msra.mxu0 0
      %3474 = vmatprep.subr.bf16.mxu0 0
      %3475 = vmatpush1.bf16.msra.mxu0 0
      %3476 = vmatprep.subr.bf16.mxu0 0
      %3477 = vmatpush1.bf16.msra.mxu0 0
      %3478 = vmatprep.subr.bf16.mxu0 0
      %3479 = vmatpush1.bf16.msra.mxu0 0
      %3480 = vmatprep.subr.bf16.mxu0 0
      %3481 = vmatpush1.bf16.msra.mxu0 0
      %3482 = vmatprep.mubr.bf16.mxu0 0
      %3483 = vmatmul.mubr.bf16.gmra.mrb[0].mxu0 %v3402
      %v3484 = vpop.f32.mrb[0].mxu0
      %v3485 = vadd.f32 0.0, %v3484
      %v3486 = vpop.f32.mrb[0].mxu0
      %v3487 = vpop.f32.mrb[0].mxu0
      %v3488 = vpop.f32.mrb[0].mxu0
      %3489 = vdwg.mxu0
      %v3490 = vadd.f32 %v3449, %v3485
      %v3491 = vmul.f32 %v3490, 0.5
      %v3492 = vtanh.pop %v3491
      %v3493 = vmul.f32 %v3492, 0.5
      %v3494 = vadd.f32 %v3493, 0.5
      %v3495 = vld [vmem:[%s1028 + $0x10] sm:$0xff]
      %3496 = vmatprep.subr.bf16.mxu0 0
      %3497 = vmatpush1.bf16.msra.mxu0 %v2034
      %3498 = vmatprep.subr.bf16.mxu0 0
      %3499 = vmatpush1.bf16.msra.mxu0 %v2035
      %3500 = vmatprep.subr.bf16.mxu0 0
      %3501 = vmatpush1.bf16.msra.mxu0 %v2036
      %3502 = vmatprep.subr.bf16.mxu0 0
      %3503 = vmatpush1.bf16.msra.mxu0 %v2037
      %3504 = vmatprep.subr.bf16.mxu0 0
      %3505 = vmatpush1.bf16.msra.mxu0 %v2038
      %3506 = vmatprep.subr.bf16.mxu0 0
      %3507 = vmatpush1.bf16.msra.mxu0 %v2039
      %3508 = vmatprep.subr.bf16.mxu0 0
      %3509 = vmatpush1.bf16.msra.mxu0 %v2040
      %3510 = vmatprep.subr.bf16.mxu0 0
      %3511 = vmatpush1.bf16.msra.mxu0 %v2041
      %3512 = vmatprep.subr.bf16.mxu0 0
      %3513 = vmatpush1.bf16.msra.mxu0 0
      %3514 = vmatprep.subr.bf16.mxu0 0
      %3515 = vmatpush1.bf16.msra.mxu0 0
      %3516 = vmatprep.subr.bf16.mxu0 0
      %3517 = vmatpush1.bf16.msra.mxu0 0
      %3518 = vmatprep.subr.bf16.mxu0 0
      %3519 = vmatpush1.bf16.msra.mxu0 0
      %3520 = vmatprep.subr.bf16.mxu0 0
      %3521 = vmatpush1.bf16.msra.mxu0 0
      %3522 = vmatprep.subr.bf16.mxu0 0
      %3523 = vmatpush1.bf16.msra.mxu0 0
      %3524 = vmatprep.subr.bf16.mxu0 0
      %3525 = vmatpush1.bf16.msra.mxu0 0
      %3526 = vmatprep.subr.bf16.mxu0 0
      %3527 = vmatpush1.bf16.msra.mxu0 0
      %3528 = vmatprep.mubr.bf16.mxu0 0
      %3529 = vmatmul.mubr.bf16.gmra.mrb[0].mxu0 %v3402
      %v3530 = vpop.f32.mrb[0].mxu0
      %v3531 = vadd.f32 0.0, %v3530
      %v3532 = vpop.f32.mrb[0].mxu0
      %v3533 = vpop.f32.mrb[0].mxu0
      %v3534 = vpop.f32.mrb[0].mxu0
      %3535 = vdwg.mxu0
      %v3536 = vadd.f32 %v3495, %v3531
      %v3537 = vtanh.pop %v3536
      %v3538 = vld [vmem:[%s1028 + $0x18] sm:$0xff]
      %3539 = vmatprep.subr.bf16.mxu0 0
      %3540 = vmatpush1.bf16.msra.mxu0 %v2125
      %3541 = vmatprep.subr.bf16.mxu0 0
      %3542 = vmatpush1.bf16.msra.mxu0 %v2126
      %3543 = vmatprep.subr.bf16.mxu0 0
      %3544 = vmatpush1.bf16.msra.mxu0 %v2127
      %3545 = vmatprep.subr.bf16.mxu0 0
      %3546 = vmatpush1.bf16.msra.mxu0 %v2128
      %3547 = vmatprep.subr.bf16.mxu0 0
      %3548 = vmatpush1.bf16.msra.mxu0 %v2129
      %3549 = vmatprep.subr.bf16.mxu0 0
      %3550 = vmatpush1.bf16.msra.mxu0 %v2130
      %3551 = vmatprep.subr.bf16.mxu0 0
      %3552 = vmatpush1.bf16.msra.mxu0 %v2131
      %3553 = vmatprep.subr.bf16.mxu0 0
      %3554 = vmatpush1.bf16.msra.mxu0 %v2132
      %3555 = vmatprep.subr.bf16.mxu0 0
      %3556 = vmatpush1.bf16.msra.mxu0 0
      %3557 = vmatprep.subr.bf16.mxu0 0
      %3558 = vmatpush1.bf16.msra.mxu0 0
      %3559 = vmatprep.subr.bf16.mxu0 0
      %3560 = vmatpush1.bf16.msra.mxu0 0
      %3561 = vmatprep.subr.bf16.mxu0 0
      %3562 = vmatpush1.bf16.msra.mxu0 0
      %3563 = vmatprep.subr.bf16.mxu0 0
      %3564 = vmatpush1.bf16.msra.mxu0 0
      %3565 = vmatprep.subr.bf16.mxu0 0
      %3566 = vmatpush1.bf16.msra.mxu0 0
      %3567 = vmatprep.subr.bf16.mxu0 0
      %3568 = vmatpush1.bf16.msra.mxu0 0
      %3569 = vmatprep.subr.bf16.mxu0 0
      %3570 = vmatpush1.bf16.msra.mxu0 0
      %3571 = vmatprep.mubr.bf16.mxu0 0
      %3572 = vmatmul.mubr.bf16.gmra.mrb[0].mxu0 %v3402
      %v3573 = vpop.f32.mrb[0].mxu0
      %v3574 = vadd.f32 0.0, %v3573
      %v3575 = vpop.f32.mrb[0].mxu0
      %v3576 = vpop.f32.mrb[0].mxu0
      %v3577 = vpop.f32.mrb[0].mxu0
      %3578 = vdwg.mxu0
      %v3579 = vadd.f32 %v3538, %v3574
      %v3580 = vmul.f32 %v3579, 0.5
      %v3581 = vtanh.pop %v3580
      %v3582 = vmul.f32 %v3581, 0.5
      %v3583 = vadd.f32 %v3582, 0.5
      %v3584 = vmul.f32 %v3494, %v3398
      %v3585 = vmul.f32 %v3448, %v3537
      %v3586 = vadd.f32 %v3584, %v3585
      %v3587 = vtanh.pop %v3586
      %v3588 = vmul.f32 %v3583, %v3587
      %s3589 = sadd.s32 %s83, 7
      %v3590 = vstv %s3589
      %vm3591 = vcmp.lt.s32.totalorder %v3590, %v1745
      %v3592 = vsel %vm3591, 1, 0
      %3593 = vset.pattern.permute.xlu0 0
      %3594 = vperm.xlu0 %3593, %v3592
      %v3595 = vpop.permute.xlu0 %3594
      %vm3596 = vcmp.eq.s32.totalorder %v3595, 1
      %v3597 = vsel %vm3596, %v3588, %v3397
      %v3598 = vsel %vm3596, %v3586, %v3398
      %v3599 = vsel %vm3596, %v3588, 0.0
      %s3600 = scalar_lea.vmem [#allocation13], 56
      %3601 = vst [vmem:[%s3600] sm:$0xff] %v3599
      %v3602 = vpack.c.bf16 %v3597, %v3597
      %v3603 = vld [vmem:[%s1117] sm:$0xff]
      %3604 = vmatprep.subr.bf16.mxu0 0
      %3605 = vmatpush1.bf16.msra.mxu0 %v1846
      %3606 = vmatprep.subr.bf16.mxu0 0
      %3607 = vmatpush1.bf16.msra.mxu0 %v1847
      %3608 = vmatprep.subr.bf16.mxu0 0
      %3609 = vmatpush1.bf16.msra.mxu0 %v1848
      %3610 = vmatprep.subr.bf16.mxu0 0
      %3611 = vmatpush1.bf16.msra.mxu0 %v1849
      %3612 = vmatprep.subr.bf16.mxu0 0
      %3613 = vmatpush1.bf16.msra.mxu0 %v1850
      %3614 = vmatprep.subr.bf16.mxu0 0
      %3615 = vmatpush1.bf16.msra.mxu0 %v1851
      %3616 = vmatprep.subr.bf16.mxu0 0
      %3617 = vmatpush1.bf16.msra.mxu0 %v1852
      %3618 = vmatprep.subr.bf16.mxu0 0
      %3619 = vmatpush1.bf16.msra.mxu0 %v1853
      %3620 = vmatprep.subr.bf16.mxu0 0
      %3621 = vmatpush1.bf16.msra.mxu0 0
      %3622 = vmatprep.subr.bf16.mxu0 0
      %3623 = vmatpush1.bf16.msra.mxu0 0
      %3624 = vmatprep.subr.bf16.mxu0 0
      %3625 = vmatpush1.bf16.msra.mxu0 0
      %3626 = vmatprep.subr.bf16.mxu0 0
      %3627 = vmatpush1.bf16.msra.mxu0 0
      %3628 = vmatprep.subr.bf16.mxu0 0
      %3629 = vmatpush1.bf16.msra.mxu0 0
      %3630 = vmatprep.subr.bf16.mxu0 0
      %3631 = vmatpush1.bf16.msra.mxu0 0
      %3632 = vmatprep.subr.bf16.mxu0 0
      %3633 = vmatpush1.bf16.msra.mxu0 0
      %3634 = vmatprep.subr.bf16.mxu0 0
      %3635 = vmatpush1.bf16.msra.mxu0 0
      %3636 = vmatprep.mubr.bf16.mxu0 0
      %3637 = vmatmul.mubr.bf16.gmra.mrb[0].mxu0 %v3602
      %v3638 = vpop.f32.mrb[0].mxu0
      %v3639 = vadd.f32 0.0, %v3638
      %v3640 = vpop.f32.mrb[0].mxu0
      %v3641 = vpop.f32.mrb[0].mxu0
      %v3642 = vpop.f32.mrb[0].mxu0
      %3643 = vdwg.mxu0
      %v3644 = vadd.f32 %v3603, %v3639
      %v3645 = vmul.f32 %v3644, 0.5
      %v3646 = vtanh.pop %v3645
      %v3647 = vmul.f32 %v3646, 0.5
      %v3648 = vadd.f32 %v3647, 0.5
      %v3649 = vld [vmem:[%s1117 + $0x8] sm:$0xff]
      %3650 = vmatprep.subr.bf16.mxu0 0
      %3651 = vmatpush1.bf16.msra.mxu0 %v1940
      %3652 = vmatprep.subr.bf16.mxu0 0
      %3653 = vmatpush1.bf16.msra.mxu0 %v1941
      %3654 = vmatprep.subr.bf16.mxu0 0
      %3655 = vmatpush1.bf16.msra.mxu0 %v1942
      %3656 = vmatprep.subr.bf16.mxu0 0
      %3657 = vmatpush1.bf16.msra.mxu0 %v1943
      %3658 = vmatprep.subr.bf16.mxu0 0
      %3659 = vmatpush1.bf16.msra.mxu0 %v1944
      %3660 = vmatprep.subr.bf16.mxu0 0
      %3661 = vmatpush1.bf16.msra.mxu0 %v1945
      %3662 = vmatprep.subr.bf16.mxu0 0
      %3663 = vmatpush1.bf16.msra.mxu0 %v1946
      %3664 = vmatprep.subr.bf16.mxu0 0
      %3665 = vmatpush1.bf16.msra.mxu0 %v1947
      %3666 = vmatprep.subr.bf16.mxu0 0
      %3667 = vmatpush1.bf16.msra.mxu0 0
      %3668 = vmatprep.subr.bf16.mxu0 0
      %3669 = vmatpush1.bf16.msra.mxu0 0
      %3670 = vmatprep.subr.bf16.mxu0 0
      %3671 = vmatpush1.bf16.msra.mxu0 0
      %3672 = vmatprep.subr.bf16.mxu0 0
      %3673 = vmatpush1.bf16.msra.mxu0 0
      %3674 = vmatprep.subr.bf16.mxu0 0
      %3675 = vmatpush1.bf16.msra.mxu0 0
      %3676 = vmatprep.subr.bf16.mxu0 0
      %3677 = vmatpush1.bf16.msra.mxu0 0
      %3678 = vmatprep.subr.bf16.mxu0 0
      %3679 = vmatpush1.bf16.msra.mxu0 0
      %3680 = vmatprep.subr.bf16.mxu0 0
      %3681 = vmatpush1.bf16.msra.mxu0 0
      %3682 = vmatprep.mubr.bf16.mxu0 0
      %3683 = vmatmul.mubr.bf16.gmra.mrb[0].mxu0 %v3602
      %v3684 = vpop.f32.mrb[0].mxu0
      %v3685 = vadd.f32 0.0, %v3684
      %v3686 = vpop.f32.mrb[0].mxu0
      %v3687 = vpop.f32.mrb[0].mxu0
      %v3688 = vpop.f32.mrb[0].mxu0
      %3689 = vdwg.mxu0
      %v3690 = vadd.f32 %v3649, %v3685
      %v3691 = vmul.f32 %v3690, 0.5
      %v3692 = vtanh.pop %v3691
      %v3693 = vmul.f32 %v3692, 0.5
      %v3694 = vadd.f32 %v3693, 0.5
      %v3695 = vld [vmem:[%s1117 + $0x10] sm:$0xff]
      %3696 = vmatprep.subr.bf16.mxu0 0
      %3697 = vmatpush1.bf16.msra.mxu0 %v2034
      %3698 = vmatprep.subr.bf16.mxu0 0
      %3699 = vmatpush1.bf16.msra.mxu0 %v2035
      %3700 = vmatprep.subr.bf16.mxu0 0
      %3701 = vmatpush1.bf16.msra.mxu0 %v2036
      %3702 = vmatprep.subr.bf16.mxu0 0
      %3703 = vmatpush1.bf16.msra.mxu0 %v2037
      %3704 = vmatprep.subr.bf16.mxu0 0
      %3705 = vmatpush1.bf16.msra.mxu0 %v2038
      %3706 = vmatprep.subr.bf16.mxu0 0
      %3707 = vmatpush1.bf16.msra.mxu0 %v2039
      %3708 = vmatprep.subr.bf16.mxu0 0
      %3709 = vmatpush1.bf16.msra.mxu0 %v2040
      %3710 = vmatprep.subr.bf16.mxu0 0
      %3711 = vmatpush1.bf16.msra.mxu0 %v2041
      %3712 = vmatprep.subr.bf16.mxu0 0
      %3713 = vmatpush1.bf16.msra.mxu0 0
      %3714 = vmatprep.subr.bf16.mxu0 0
      %3715 = vmatpush1.bf16.msra.mxu0 0
      %3716 = vmatprep.subr.bf16.mxu0 0
      %3717 = vmatpush1.bf16.msra.mxu0 0
      %3718 = vmatprep.subr.bf16.mxu0 0
      %3719 = vmatpush1.bf16.msra.mxu0 0
      %3720 = vmatprep.subr.bf16.mxu0 0
      %3721 = vmatpush1.bf16.msra.mxu0 0
      %3722 = vmatprep.subr.bf16.mxu0 0
      %3723 = vmatpush1.bf16.msra.mxu0 0
      %3724 = vmatprep.subr.bf16.mxu0 0
      %3725 = vmatpush1.bf16.msra.mxu0 0
      %3726 = vmatprep.subr.bf16.mxu0 0
      %3727 = vmatpush1.bf16.msra.mxu0 0
      %3728 = vmatprep.mubr.bf16.mxu0 0
      %3729 = vmatmul.mubr.bf16.gmra.mrb[0].mxu0 %v3602
      %v3730 = vpop.f32.mrb[0].mxu0
      %v3731 = vadd.f32 0.0, %v3730
      %v3732 = vpop.f32.mrb[0].mxu0
      %v3733 = vpop.f32.mrb[0].mxu0
      %v3734 = vpop.f32.mrb[0].mxu0
      %3735 = vdwg.mxu0
      %v3736 = vadd.f32 %v3695, %v3731
      %v3737 = vtanh.pop %v3736
      %v3738 = vld [vmem:[%s1117 + $0x18] sm:$0xff]
      %3739 = vmatprep.subr.bf16.mxu0 0
      %3740 = vmatpush1.bf16.msra.mxu0 %v2125
      %3741 = vmatprep.subr.bf16.mxu0 0
      %3742 = vmatpush1.bf16.msra.mxu0 %v2126
      %3743 = vmatprep.subr.bf16.mxu0 0
      %3744 = vmatpush1.bf16.msra.mxu0 %v2127
      %3745 = vmatprep.subr.bf16.mxu0 0
      %3746 = vmatpush1.bf16.msra.mxu0 %v2128
      %3747 = vmatprep.subr.bf16.mxu0 0
      %3748 = vmatpush1.bf16.msra.mxu0 %v2129
      %3749 = vmatprep.subr.bf16.mxu0 0
      %3750 = vmatpush1.bf16.msra.mxu0 %v2130
      %3751 = vmatprep.subr.bf16.mxu0 0
      %3752 = vmatpush1.bf16.msra.mxu0 %v2131
      %3753 = vmatprep.subr.bf16.mxu0 0
      %3754 = vmatpush1.bf16.msra.mxu0 %v2132
      %3755 = vmatprep.subr.bf16.mxu0 0
      %3756 = vmatpush1.bf16.msra.mxu0 0
      %3757 = vmatprep.subr.bf16.mxu0 0
      %3758 = vmatpush1.bf16.msra.mxu0 0
      %3759 = vmatprep.subr.bf16.mxu0 0
      %3760 = vmatpush1.bf16.msra.mxu0 0
      %3761 = vmatprep.subr.bf16.mxu0 0
      %3762 = vmatpush1.bf16.msra.mxu0 0
      %3763 = vmatprep.subr.bf16.mxu0 0
      %3764 = vmatpush1.bf16.msra.mxu0 0
      %3765 = vmatprep.subr.bf16.mxu0 0
      %3766 = vmatpush1.bf16.msra.mxu0 0
      %3767 = vmatprep.subr.bf16.mxu0 0
      %3768 = vmatpush1.bf16.msra.mxu0 0
      %3769 = vmatprep.subr.bf16.mxu0 0
      %3770 = vmatpush1.bf16.msra.mxu0 0
      %3771 = vmatprep.mubr.bf16.mxu0 0
      %3772 = vmatmul.mubr.bf16.gmra.mrb[0].mxu0 %v3602
      %v3773 = vpop.f32.mrb[0].mxu0
      %v3774 = vadd.f32 0.0, %v3773
      %v3775 = vpop.f32.mrb[0].mxu0
      %v3776 = vpop.f32.mrb[0].mxu0
      %v3777 = vpop.f32.mrb[0].mxu0
      %3778 = vdwg.mxu0
      %v3779 = vadd.f32 %v3738, %v3774
      %v3780 = vmul.f32 %v3779, 0.5
      %v3781 = vtanh.pop %v3780
      %v3782 = vmul.f32 %v3781, 0.5
      %v3783 = vadd.f32 %v3782, 0.5
      %v3784 = vmul.f32 %v3694, %v3598
      %v3785 = vmul.f32 %v3648, %v3737
      %v3786 = vadd.f32 %v3784, %v3785
      %v3787 = vtanh.pop %v3786
      %v3788 = vmul.f32 %v3783, %v3787
      %s3789 = sadd.s32 %s83, 8
      %v3790 = vstv %s3789
      %vm3791 = vcmp.lt.s32.totalorder %v3790, %v1745
      %v3792 = vsel %vm3791, 1, 0
      %3793 = vset.pattern.permute.xlu0 0
      %3794 = vperm.xlu0 %3793, %v3792
      %v3795 = vpop.permute.xlu0 %3794
      %vm3796 = vcmp.eq.s32.totalorder %v3795, 1
      %v3797 = vsel %vm3796, %v3788, %v3597
      %v3798 = vsel %vm3796, %v3786, %v3598
      %v3799 = vsel %vm3796, %v3788, 0.0
      %s3800 = scalar_lea.vmem [#allocation13], 64
      %3801 = vst [vmem:[%s3800] sm:$0xff] %v3799
      %v3802 = vpack.c.bf16 %v3797, %v3797
      %v3803 = vld [vmem:[%s1206] sm:$0xff]
      %3804 = vmatprep.subr.bf16.mxu0 0
      %3805 = vmatpush1.bf16.msra.mxu0 %v1846
      %3806 = vmatprep.subr.bf16.mxu0 0
      %3807 = vmatpush1.bf16.msra.mxu0 %v1847
      %3808 = vmatprep.subr.bf16.mxu0 0
      %3809 = vmatpush1.bf16.msra.mxu0 %v1848
      %3810 = vmatprep.subr.bf16.mxu0 0
      %3811 = vmatpush1.bf16.msra.mxu0 %v1849
      %3812 = vmatprep.subr.bf16.mxu0 0
      %3813 = vmatpush1.bf16.msra.mxu0 %v1850
      %3814 = vmatprep.subr.bf16.mxu0 0
      %3815 = vmatpush1.bf16.msra.mxu0 %v1851
      %3816 = vmatprep.subr.bf16.mxu0 0
      %3817 = vmatpush1.bf16.msra.mxu0 %v1852
      %3818 = vmatprep.subr.bf16.mxu0 0
      %3819 = vmatpush1.bf16.msra.mxu0 %v1853
      %3820 = vmatprep.subr.bf16.mxu0 0
      %3821 = vmatpush1.bf16.msra.mxu0 0
      %3822 = vmatprep.subr.bf16.mxu0 0
      %3823 = vmatpush1.bf16.msra.mxu0 0
      %3824 = vmatprep.subr.bf16.mxu0 0
      %3825 = vmatpush1.bf16.msra.mxu0 0
      %3826 = vmatprep.subr.bf16.mxu0 0
      %3827 = vmatpush1.bf16.msra.mxu0 0
      %3828 = vmatprep.subr.bf16.mxu0 0
      %3829 = vmatpush1.bf16.msra.mxu0 0
      %3830 = vmatprep.subr.bf16.mxu0 0
      %3831 = vmatpush1.bf16.msra.mxu0 0
      %3832 = vmatprep.subr.bf16.mxu0 0
      %3833 = vmatpush1.bf16.msra.mxu0 0
      %3834 = vmatprep.subr.bf16.mxu0 0
      %3835 = vmatpush1.bf16.msra.mxu0 0
      %3836 = vmatprep.mubr.bf16.mxu0 0
      %3837 = vmatmul.mubr.bf16.gmra.mrb[0].mxu0 %v3802
      %v3838 = vpop.f32.mrb[0].mxu0
      %v3839 = vadd.f32 0.0, %v3838
      %v3840 = vpop.f32.mrb[0].mxu0
      %v3841 = vpop.f32.mrb[0].mxu0
      %v3842 = vpop.f32.mrb[0].mxu0
      %3843 = vdwg.mxu0
      %v3844 = vadd.f32 %v3803, %v3839
      %v3845 = vmul.f32 %v3844, 0.5
      %v3846 = vtanh.pop %v3845
      %v3847 = vmul.f32 %v3846, 0.5
      %v3848 = vadd.f32 %v3847, 0.5
      %v3849 = vld [vmem:[%s1206 + $0x8] sm:$0xff]
      %3850 = vmatprep.subr.bf16.mxu0 0
      %3851 = vmatpush1.bf16.msra.mxu0 %v1940
      %3852 = vmatprep.subr.bf16.mxu0 0
      %3853 = vmatpush1.bf16.msra.mxu0 %v1941
      %3854 = vmatprep.subr.bf16.mxu0 0
      %3855 = vmatpush1.bf16.msra.mxu0 %v1942
      %3856 = vmatprep.subr.bf16.mxu0 0
      %3857 = vmatpush1.bf16.msra.mxu0 %v1943
      %3858 = vmatprep.subr.bf16.mxu0 0
      %3859 = vmatpush1.bf16.msra.mxu0 %v1944
      %3860 = vmatprep.subr.bf16.mxu0 0
      %3861 = vmatpush1.bf16.msra.mxu0 %v1945
      %3862 = vmatprep.subr.bf16.mxu0 0
      %3863 = vmatpush1.bf16.msra.mxu0 %v1946
      %3864 = vmatprep.subr.bf16.mxu0 0
      %3865 = vmatpush1.bf16.msra.mxu0 %v1947
      %3866 = vmatprep.subr.bf16.mxu0 0
      %3867 = vmatpush1.bf16.msra.mxu0 0
      %3868 = vmatprep.subr.bf16.mxu0 0
      %3869 = vmatpush1.bf16.msra.mxu0 0
      %3870 = vmatprep.subr.bf16.mxu0 0
      %3871 = vmatpush1.bf16.msra.mxu0 0
      %3872 = vmatprep.subr.bf16.mxu0 0
      %3873 = vmatpush1.bf16.msra.mxu0 0
      %3874 = vmatprep.subr.bf16.mxu0 0
      %3875 = vmatpush1.bf16.msra.mxu0 0
      %3876 = vmatprep.subr.bf16.mxu0 0
      %3877 = vmatpush1.bf16.msra.mxu0 0
      %3878 = vmatprep.subr.bf16.mxu0 0
      %3879 = vmatpush1.bf16.msra.mxu0 0
      %3880 = vmatprep.subr.bf16.mxu0 0
      %3881 = vmatpush1.bf16.msra.mxu0 0
      %3882 = vmatprep.mubr.bf16.mxu0 0
      %3883 = vmatmul.mubr.bf16.gmra.mrb[0].mxu0 %v3802
      %v3884 = vpop.f32.mrb[0].mxu0
      %v3885 = vadd.f32 0.0, %v3884
      %v3886 = vpop.f32.mrb[0].mxu0
      %v3887 = vpop.f32.mrb[0].mxu0
      %v3888 = vpop.f32.mrb[0].mxu0
      %3889 = vdwg.mxu0
      %v3890 = vadd.f32 %v3849, %v3885
      %v3891 = vmul.f32 %v3890, 0.5
      %v3892 = vtanh.pop %v3891
      %v3893 = vmul.f32 %v3892, 0.5
      %v3894 = vadd.f32 %v3893, 0.5
      %v3895 = vld [vmem:[%s1206 + $0x10] sm:$0xff]
      %3896 = vmatprep.subr.bf16.mxu0 0
      %3897 = vmatpush1.bf16.msra.mxu0 %v2034
      %3898 = vmatprep.subr.bf16.mxu0 0
      %3899 = vmatpush1.bf16.msra.mxu0 %v2035
      %3900 = vmatprep.subr.bf16.mxu0 0
      %3901 = vmatpush1.bf16.msra.mxu0 %v2036
      %3902 = vmatprep.subr.bf16.mxu0 0
      %3903 = vmatpush1.bf16.msra.mxu0 %v2037
      %3904 = vmatprep.subr.bf16.mxu0 0
      %3905 = vmatpush1.bf16.msra.mxu0 %v2038
      %3906 = vmatprep.subr.bf16.mxu0 0
      %3907 = vmatpush1.bf16.msra.mxu0 %v2039
      %3908 = vmatprep.subr.bf16.mxu0 0
      %3909 = vmatpush1.bf16.msra.mxu0 %v2040
      %3910 = vmatprep.subr.bf16.mxu0 0
      %3911 = vmatpush1.bf16.msra.mxu0 %v2041
      %3912 = vmatprep.subr.bf16.mxu0 0
      %3913 = vmatpush1.bf16.msra.mxu0 0
      %3914 = vmatprep.subr.bf16.mxu0 0
      %3915 = vmatpush1.bf16.msra.mxu0 0
      %3916 = vmatprep.subr.bf16.mxu0 0
      %3917 = vmatpush1.bf16.msra.mxu0 0
      %3918 = vmatprep.subr.bf16.mxu0 0
      %3919 = vmatpush1.bf16.msra.mxu0 0
      %3920 = vmatprep.subr.bf16.mxu0 0
      %3921 = vmatpush1.bf16.msra.mxu0 0
      %3922 = vmatprep.subr.bf16.mxu0 0
      %3923 = vmatpush1.bf16.msra.mxu0 0
      %3924 = vmatprep.subr.bf16.mxu0 0
      %3925 = vmatpush1.bf16.msra.mxu0 0
      %3926 = vmatprep.subr.bf16.mxu0 0
      %3927 = vmatpush1.bf16.msra.mxu0 0
      %3928 = vmatprep.mubr.bf16.mxu0 0
      %3929 = vmatmul.mubr.bf16.gmra.mrb[0].mxu0 %v3802
      %v3930 = vpop.f32.mrb[0].mxu0
      %v3931 = vadd.f32 0.0, %v3930
      %v3932 = vpop.f32.mrb[0].mxu0
      %v3933 = vpop.f32.mrb[0].mxu0
      %v3934 = vpop.f32.mrb[0].mxu0
      %3935 = vdwg.mxu0
      %v3936 = vadd.f32 %v3895, %v3931
      %v3937 = vtanh.pop %v3936
      %v3938 = vld [vmem:[%s1206 + $0x18] sm:$0xff]
      %3939 = vmatprep.subr.bf16.mxu0 0
      %3940 = vmatpush1.bf16.msra.mxu0 %v2125
      %3941 = vmatprep.subr.bf16.mxu0 0
      %3942 = vmatpush1.bf16.msra.mxu0 %v2126
      %3943 = vmatprep.subr.bf16.mxu0 0
      %3944 = vmatpush1.bf16.msra.mxu0 %v2127
      %3945 = vmatprep.subr.bf16.mxu0 0
      %3946 = vmatpush1.bf16.msra.mxu0 %v2128
      %3947 = vmatprep.subr.bf16.mxu0 0
      %3948 = vmatpush1.bf16.msra.mxu0 %v2129
      %3949 = vmatprep.subr.bf16.mxu0 0
      %3950 = vmatpush1.bf16.msra.mxu0 %v2130
      %3951 = vmatprep.subr.bf16.mxu0 0
      %3952 = vmatpush1.bf16.msra.mxu0 %v2131
      %3953 = vmatprep.subr.bf16.mxu0 0
      %3954 = vmatpush1.bf16.msra.mxu0 %v2132
      %3955 = vmatprep.subr.bf16.mxu0 0
      %3956 = vmatpush1.bf16.msra.mxu0 0
      %3957 = vmatprep.subr.bf16.mxu0 0
      %3958 = vmatpush1.bf16.msra.mxu0 0
      %3959 = vmatprep.subr.bf16.mxu0 0
      %3960 = vmatpush1.bf16.msra.mxu0 0
      %3961 = vmatprep.subr.bf16.mxu0 0
      %3962 = vmatpush1.bf16.msra.mxu0 0
      %3963 = vmatprep.subr.bf16.mxu0 0
      %3964 = vmatpush1.bf16.msra.mxu0 0
      %3965 = vmatprep.subr.bf16.mxu0 0
      %3966 = vmatpush1.bf16.msra.mxu0 0
      %3967 = vmatprep.subr.bf16.mxu0 0
      %3968 = vmatpush1.bf16.msra.mxu0 0
      %3969 = vmatprep.subr.bf16.mxu0 0
      %3970 = vmatpush1.bf16.msra.mxu0 0
      %3971 = vmatprep.mubr.bf16.mxu0 0
      %3972 = vmatmul.mubr.bf16.gmra.mrb[0].mxu0 %v3802
      %v3973 = vpop.f32.mrb[0].mxu0
      %v3974 = vadd.f32 0.0, %v3973
      %v3975 = vpop.f32.mrb[0].mxu0
      %v3976 = vpop.f32.mrb[0].mxu0
      %v3977 = vpop.f32.mrb[0].mxu0
      %3978 = vdwg.mxu0
      %v3979 = vadd.f32 %v3938, %v3974
      %v3980 = vmul.f32 %v3979, 0.5
      %v3981 = vtanh.pop %v3980
      %v3982 = vmul.f32 %v3981, 0.5
      %v3983 = vadd.f32 %v3982, 0.5
      %v3984 = vmul.f32 %v3894, %v3798
      %v3985 = vmul.f32 %v3848, %v3937
      %v3986 = vadd.f32 %v3984, %v3985
      %v3987 = vtanh.pop %v3986
      %v3988 = vmul.f32 %v3983, %v3987
      %s3989 = sadd.s32 %s83, 9
      %v3990 = vstv %s3989
      %vm3991 = vcmp.lt.s32.totalorder %v3990, %v1745
      %v3992 = vsel %vm3991, 1, 0
      %3993 = vset.pattern.permute.xlu0 0
      %3994 = vperm.xlu0 %3993, %v3992
      %v3995 = vpop.permute.xlu0 %3994
      %vm3996 = vcmp.eq.s32.totalorder %v3995, 1
      %v3997 = vsel %vm3996, %v3988, %v3797
      %v3998 = vsel %vm3996, %v3986, %v3798
      %v3999 = vsel %vm3996, %v3988, 0.0
      %s4000 = scalar_lea.vmem [#allocation13], 72
      %4001 = vst [vmem:[%s4000] sm:$0xff] %v3999
      %v4002 = vpack.c.bf16 %v3997, %v3997
      %v4003 = vld [vmem:[%s1295] sm:$0xff]
      %4004 = vmatprep.subr.bf16.mxu0 0
      %4005 = vmatpush1.bf16.msra.mxu0 %v1846
      %4006 = vmatprep.subr.bf16.mxu0 0
      %4007 = vmatpush1.bf16.msra.mxu0 %v1847
      %4008 = vmatprep.subr.bf16.mxu0 0
      %4009 = vmatpush1.bf16.msra.mxu0 %v1848
      %4010 = vmatprep.subr.bf16.mxu0 0
      %4011 = vmatpush1.bf16.msra.mxu0 %v1849
      %4012 = vmatprep.subr.bf16.mxu0 0
      %4013 = vmatpush1.bf16.msra.mxu0 %v1850
      %4014 = vmatprep.subr.bf16.mxu0 0
      %4015 = vmatpush1.bf16.msra.mxu0 %v1851
      %4016 = vmatprep.subr.bf16.mxu0 0
      %4017 = vmatpush1.bf16.msra.mxu0 %v1852
      %4018 = vmatprep.subr.bf16.mxu0 0
      %4019 = vmatpush1.bf16.msra.mxu0 %v1853
      %4020 = vmatprep.subr.bf16.mxu0 0
      %4021 = vmatpush1.bf16.msra.mxu0 0
      %4022 = vmatprep.subr.bf16.mxu0 0
      %4023 = vmatpush1.bf16.msra.mxu0 0
      %4024 = vmatprep.subr.bf16.mxu0 0
      %4025 = vmatpush1.bf16.msra.mxu0 0
      %4026 = vmatprep.subr.bf16.mxu0 0
      %4027 = vmatpush1.bf16.msra.mxu0 0
      %4028 = vmatprep.subr.bf16.mxu0 0
      %4029 = vmatpush1.bf16.msra.mxu0 0
      %4030 = vmatprep.subr.bf16.mxu0 0
      %4031 = vmatpush1.bf16.msra.mxu0 0
      %4032 = vmatprep.subr.bf16.mxu0 0
      %4033 = vmatpush1.bf16.msra.mxu0 0
      %4034 = vmatprep.subr.bf16.mxu0 0
      %4035 = vmatpush1.bf16.msra.mxu0 0
      %4036 = vmatprep.mubr.bf16.mxu0 0
      %4037 = vmatmul.mubr.bf16.gmra.mrb[0].mxu0 %v4002
      %v4038 = vpop.f32.mrb[0].mxu0
      %v4039 = vadd.f32 0.0, %v4038
      %v4040 = vpop.f32.mrb[0].mxu0
      %v4041 = vpop.f32.mrb[0].mxu0
      %v4042 = vpop.f32.mrb[0].mxu0
      %4043 = vdwg.mxu0
      %v4044 = vadd.f32 %v4003, %v4039
      %v4045 = vmul.f32 %v4044, 0.5
      %v4046 = vtanh.pop %v4045
      %v4047 = vmul.f32 %v4046, 0.5
      %v4048 = vadd.f32 %v4047, 0.5
      %v4049 = vld [vmem:[%s1295 + $0x8] sm:$0xff]
      %4050 = vmatprep.subr.bf16.mxu0 0
      %4051 = vmatpush1.bf16.msra.mxu0 %v1940
      %4052 = vmatprep.subr.bf16.mxu0 0
      %4053 = vmatpush1.bf16.msra.mxu0 %v1941
      %4054 = vmatprep.subr.bf16.mxu0 0
      %4055 = vmatpush1.bf16.msra.mxu0 %v1942
      %4056 = vmatprep.subr.bf16.mxu0 0
      %4057 = vmatpush1.bf16.msra.mxu0 %v1943
      %4058 = vmatprep.subr.bf16.mxu0 0
      %4059 = vmatpush1.bf16.msra.mxu0 %v1944
      %4060 = vmatprep.subr.bf16.mxu0 0
      %4061 = vmatpush1.bf16.msra.mxu0 %v1945
      %4062 = vmatprep.subr.bf16.mxu0 0
      %4063 = vmatpush1.bf16.msra.mxu0 %v1946
      %4064 = vmatprep.subr.bf16.mxu0 0
      %4065 = vmatpush1.bf16.msra.mxu0 %v1947
      %4066 = vmatprep.subr.bf16.mxu0 0
      %4067 = vmatpush1.bf16.msra.mxu0 0
      %4068 = vmatprep.subr.bf16.mxu0 0
      %4069 = vmatpush1.bf16.msra.mxu0 0
      %4070 = vmatprep.subr.bf16.mxu0 0
      %4071 = vmatpush1.bf16.msra.mxu0 0
      %4072 = vmatprep.subr.bf16.mxu0 0
      %4073 = vmatpush1.bf16.msra.mxu0 0
      %4074 = vmatprep.subr.bf16.mxu0 0
      %4075 = vmatpush1.bf16.msra.mxu0 0
      %4076 = vmatprep.subr.bf16.mxu0 0
      %4077 = vmatpush1.bf16.msra.mxu0 0
      %4078 = vmatprep.subr.bf16.mxu0 0
      %4079 = vmatpush1.bf16.msra.mxu0 0
      %4080 = vmatprep.subr.bf16.mxu0 0
      %4081 = vmatpush1.bf16.msra.mxu0 0
      %4082 = vmatprep.mubr.bf16.mxu0 0
      %4083 = vmatmul.mubr.bf16.gmra.mrb[0].mxu0 %v4002
      %v4084 = vpop.f32.mrb[0].mxu0
      %v4085 = vadd.f32 0.0, %v4084
      %v4086 = vpop.f32.mrb[0].mxu0
      %v4087 = vpop.f32.mrb[0].mxu0
      %v4088 = vpop.f32.mrb[0].mxu0
      %4089 = vdwg.mxu0
      %v4090 = vadd.f32 %v4049, %v4085
      %v4091 = vmul.f32 %v4090, 0.5
      %v4092 = vtanh.pop %v4091
      %v4093 = vmul.f32 %v4092, 0.5
      %v4094 = vadd.f32 %v4093, 0.5
      %v4095 = vld [vmem:[%s1295 + $0x10] sm:$0xff]
      %4096 = vmatprep.subr.bf16.mxu0 0
      %4097 = vmatpush1.bf16.msra.mxu0 %v2034
      %4098 = vmatprep.subr.bf16.mxu0 0
      %4099 = vmatpush1.bf16.msra.mxu0 %v2035
      %4100 = vmatprep.subr.bf16.mxu0 0
      %4101 = vmatpush1.bf16.msra.mxu0 %v2036
      %4102 = vmatprep.subr.bf16.mxu0 0
      %4103 = vmatpush1.bf16.msra.mxu0 %v2037
      %4104 = vmatprep.subr.bf16.mxu0 0
      %4105 = vmatpush1.bf16.msra.mxu0 %v2038
      %4106 = vmatprep.subr.bf16.mxu0 0
      %4107 = vmatpush1.bf16.msra.mxu0 %v2039
      %4108 = vmatprep.subr.bf16.mxu0 0
      %4109 = vmatpush1.bf16.msra.mxu0 %v2040
      %4110 = vmatprep.subr.bf16.mxu0 0
      %4111 = vmatpush1.bf16.msra.mxu0 %v2041
      %4112 = vmatprep.subr.bf16.mxu0 0
      %4113 = vmatpush1.bf16.msra.mxu0 0
      %4114 = vmatprep.subr.bf16.mxu0 0
      %4115 = vmatpush1.bf16.msra.mxu0 0
      %4116 = vmatprep.subr.bf16.mxu0 0
      %4117 = vmatpush1.bf16.msra.mxu0 0
      %4118 = vmatprep.subr.bf16.mxu0 0
      %4119 = vmatpush1.bf16.msra.mxu0 0
      %4120 = vmatprep.subr.bf16.mxu0 0
      %4121 = vmatpush1.bf16.msra.mxu0 0
      %4122 = vmatprep.subr.bf16.mxu0 0
      %4123 = vmatpush1.bf16.msra.mxu0 0
      %4124 = vmatprep.subr.bf16.mxu0 0
      %4125 = vmatpush1.bf16.msra.mxu0 0
      %4126 = vmatprep.subr.bf16.mxu0 0
      %4127 = vmatpush1.bf16.msra.mxu0 0
      %4128 = vmatprep.mubr.bf16.mxu0 0
      %4129 = vmatmul.mubr.bf16.gmra.mrb[0].mxu0 %v4002
      %v4130 = vpop.f32.mrb[0].mxu0
      %v4131 = vadd.f32 0.0, %v4130
      %v4132 = vpop.f32.mrb[0].mxu0
      %v4133 = vpop.f32.mrb[0].mxu0
      %v4134 = vpop.f32.mrb[0].mxu0
      %4135 = vdwg.mxu0
      %v4136 = vadd.f32 %v4095, %v4131
      %v4137 = vtanh.pop %v4136
      %v4138 = vld [vmem:[%s1295 + $0x18] sm:$0xff]
      %4139 = vmatprep.subr.bf16.mxu0 0
      %4140 = vmatpush1.bf16.msra.mxu0 %v2125
      %4141 = vmatprep.subr.bf16.mxu0 0
      %4142 = vmatpush1.bf16.msra.mxu0 %v2126
      %4143 = vmatprep.subr.bf16.mxu0 0
      %4144 = vmatpush1.bf16.msra.mxu0 %v2127
      %4145 = vmatprep.subr.bf16.mxu0 0
      %4146 = vmatpush1.bf16.msra.mxu0 %v2128
      %4147 = vmatprep.subr.bf16.mxu0 0
      %4148 = vmatpush1.bf16.msra.mxu0 %v2129
      %4149 = vmatprep.subr.bf16.mxu0 0
      %4150 = vmatpush1.bf16.msra.mxu0 %v2130
      %4151 = vmatprep.subr.bf16.mxu0 0
      %4152 = vmatpush1.bf16.msra.mxu0 %v2131
      %4153 = vmatprep.subr.bf16.mxu0 0
      %4154 = vmatpush1.bf16.msra.mxu0 %v2132
      %4155 = vmatprep.subr.bf16.mxu0 0
      %4156 = vmatpush1.bf16.msra.mxu0 0
      %4157 = vmatprep.subr.bf16.mxu0 0
      %4158 = vmatpush1.bf16.msra.mxu0 0
      %4159 = vmatprep.subr.bf16.mxu0 0
      %4160 = vmatpush1.bf16.msra.mxu0 0
      %4161 = vmatprep.subr.bf16.mxu0 0
      %4162 = vmatpush1.bf16.msra.mxu0 0
      %4163 = vmatprep.subr.bf16.mxu0 0
      %4164 = vmatpush1.bf16.msra.mxu0 0
      %4165 = vmatprep.subr.bf16.mxu0 0
      %4166 = vmatpush1.bf16.msra.mxu0 0
      %4167 = vmatprep.subr.bf16.mxu0 0
      %4168 = vmatpush1.bf16.msra.mxu0 0
      %4169 = vmatprep.subr.bf16.mxu0 0
      %4170 = vmatpush1.bf16.msra.mxu0 0
      %4171 = vmatprep.mubr.bf16.mxu0 0
      %4172 = vmatmul.mubr.bf16.gmra.mrb[0].mxu0 %v4002
      %v4173 = vpop.f32.mrb[0].mxu0
      %v4174 = vadd.f32 0.0, %v4173
      %v4175 = vpop.f32.mrb[0].mxu0
      %v4176 = vpop.f32.mrb[0].mxu0
      %v4177 = vpop.f32.mrb[0].mxu0
      %4178 = vdwg.mxu0
      %v4179 = vadd.f32 %v4138, %v4174
      %v4180 = vmul.f32 %v4179, 0.5
      %v4181 = vtanh.pop %v4180
      %v4182 = vmul.f32 %v4181, 0.5
      %v4183 = vadd.f32 %v4182, 0.5
      %v4184 = vmul.f32 %v4094, %v3998
      %v4185 = vmul.f32 %v4048, %v4137
      %v4186 = vadd.f32 %v4184, %v4185
      %v4187 = vtanh.pop %v4186
      %v4188 = vmul.f32 %v4183, %v4187
      %s4189 = sadd.s32 %s83, 10
      %v4190 = vstv %s4189
      %vm4191 = vcmp.lt.s32.totalorder %v4190, %v1745
      %v4192 = vsel %vm4191, 1, 0
      %4193 = vset.pattern.permute.xlu0 0
      %4194 = vperm.xlu0 %4193, %v4192
      %v4195 = vpop.permute.xlu0 %4194
      %vm4196 = vcmp.eq.s32.totalorder %v4195, 1
      %v4197 = vsel %vm4196, %v4188, %v3997
      %v4198 = vsel %vm4196, %v4186, %v3998
      %v4199 = vsel %vm4196, %v4188, 0.0
      %s4200 = scalar_lea.vmem [#allocation13], 80
      %4201 = vst [vmem:[%s4200] sm:$0xff] %v4199
      %v4202 = vpack.c.bf16 %v4197, %v4197
      %v4203 = vld [vmem:[%s1384] sm:$0xff]
      %4204 = vmatprep.subr.bf16.mxu0 0
      %4205 = vmatpush1.bf16.msra.mxu0 %v1846
      %4206 = vmatprep.subr.bf16.mxu0 0
      %4207 = vmatpush1.bf16.msra.mxu0 %v1847
      %4208 = vmatprep.subr.bf16.mxu0 0
      %4209 = vmatpush1.bf16.msra.mxu0 %v1848
      %4210 = vmatprep.subr.bf16.mxu0 0
      %4211 = vmatpush1.bf16.msra.mxu0 %v1849
      %4212 = vmatprep.subr.bf16.mxu0 0
      %4213 = vmatpush1.bf16.msra.mxu0 %v1850
      %4214 = vmatprep.subr.bf16.mxu0 0
      %4215 = vmatpush1.bf16.msra.mxu0 %v1851
      %4216 = vmatprep.subr.bf16.mxu0 0
      %4217 = vmatpush1.bf16.msra.mxu0 %v1852
      %4218 = vmatprep.subr.bf16.mxu0 0
      %4219 = vmatpush1.bf16.msra.mxu0 %v1853
      %4220 = vmatprep.subr.bf16.mxu0 0
      %4221 = vmatpush1.bf16.msra.mxu0 0
      %4222 = vmatprep.subr.bf16.mxu0 0
      %4223 = vmatpush1.bf16.msra.mxu0 0
      %4224 = vmatprep.subr.bf16.mxu0 0
      %4225 = vmatpush1.bf16.msra.mxu0 0
      %4226 = vmatprep.subr.bf16.mxu0 0
      %4227 = vmatpush1.bf16.msra.mxu0 0
      %4228 = vmatprep.subr.bf16.mxu0 0
      %4229 = vmatpush1.bf16.msra.mxu0 0
      %4230 = vmatprep.subr.bf16.mxu0 0
      %4231 = vmatpush1.bf16.msra.mxu0 0
      %4232 = vmatprep.subr.bf16.mxu0 0
      %4233 = vmatpush1.bf16.msra.mxu0 0
      %4234 = vmatprep.subr.bf16.mxu0 0
      %4235 = vmatpush1.bf16.msra.mxu0 0
      %4236 = vmatprep.mubr.bf16.mxu0 0
      %4237 = vmatmul.mubr.bf16.gmra.mrb[0].mxu0 %v4202
      %v4238 = vpop.f32.mrb[0].mxu0
      %v4239 = vadd.f32 0.0, %v4238
      %v4240 = vpop.f32.mrb[0].mxu0
      %v4241 = vpop.f32.mrb[0].mxu0
      %v4242 = vpop.f32.mrb[0].mxu0
      %4243 = vdwg.mxu0
      %v4244 = vadd.f32 %v4203, %v4239
      %v4245 = vmul.f32 %v4244, 0.5
      %v4246 = vtanh.pop %v4245
      %v4247 = vmul.f32 %v4246, 0.5
      %v4248 = vadd.f32 %v4247, 0.5
      %v4249 = vld [vmem:[%s1384 + $0x8] sm:$0xff]
      %4250 = vmatprep.subr.bf16.mxu0 0
      %4251 = vmatpush1.bf16.msra.mxu0 %v1940
      %4252 = vmatprep.subr.bf16.mxu0 0
      %4253 = vmatpush1.bf16.msra.mxu0 %v1941
      %4254 = vmatprep.subr.bf16.mxu0 0
      %4255 = vmatpush1.bf16.msra.mxu0 %v1942
      %4256 = vmatprep.subr.bf16.mxu0 0
      %4257 = vmatpush1.bf16.msra.mxu0 %v1943
      %4258 = vmatprep.subr.bf16.mxu0 0
      %4259 = vmatpush1.bf16.msra.mxu0 %v1944
      %4260 = vmatprep.subr.bf16.mxu0 0
      %4261 = vmatpush1.bf16.msra.mxu0 %v1945
      %4262 = vmatprep.subr.bf16.mxu0 0
      %4263 = vmatpush1.bf16.msra.mxu0 %v1946
      %4264 = vmatprep.subr.bf16.mxu0 0
      %4265 = vmatpush1.bf16.msra.mxu0 %v1947
      %4266 = vmatprep.subr.bf16.mxu0 0
      %4267 = vmatpush1.bf16.msra.mxu0 0
      %4268 = vmatprep.subr.bf16.mxu0 0
      %4269 = vmatpush1.bf16.msra.mxu0 0
      %4270 = vmatprep.subr.bf16.mxu0 0
      %4271 = vmatpush1.bf16.msra.mxu0 0
      %4272 = vmatprep.subr.bf16.mxu0 0
      %4273 = vmatpush1.bf16.msra.mxu0 0
      %4274 = vmatprep.subr.bf16.mxu0 0
      %4275 = vmatpush1.bf16.msra.mxu0 0
      %4276 = vmatprep.subr.bf16.mxu0 0
      %4277 = vmatpush1.bf16.msra.mxu0 0
      %4278 = vmatprep.subr.bf16.mxu0 0
      %4279 = vmatpush1.bf16.msra.mxu0 0
      %4280 = vmatprep.subr.bf16.mxu0 0
      %4281 = vmatpush1.bf16.msra.mxu0 0
      %4282 = vmatprep.mubr.bf16.mxu0 0
      %4283 = vmatmul.mubr.bf16.gmra.mrb[0].mxu0 %v4202
      %v4284 = vpop.f32.mrb[0].mxu0
      %v4285 = vadd.f32 0.0, %v4284
      %v4286 = vpop.f32.mrb[0].mxu0
      %v4287 = vpop.f32.mrb[0].mxu0
      %v4288 = vpop.f32.mrb[0].mxu0
      %4289 = vdwg.mxu0
      %v4290 = vadd.f32 %v4249, %v4285
      %v4291 = vmul.f32 %v4290, 0.5
      %v4292 = vtanh.pop %v4291
      %v4293 = vmul.f32 %v4292, 0.5
      %v4294 = vadd.f32 %v4293, 0.5
      %v4295 = vld [vmem:[%s1384 + $0x10] sm:$0xff]
      %4296 = vmatprep.subr.bf16.mxu0 0
      %4297 = vmatpush1.bf16.msra.mxu0 %v2034
      %4298 = vmatprep.subr.bf16.mxu0 0
      %4299 = vmatpush1.bf16.msra.mxu0 %v2035
      %4300 = vmatprep.subr.bf16.mxu0 0
      %4301 = vmatpush1.bf16.msra.mxu0 %v2036
      %4302 = vmatprep.subr.bf16.mxu0 0
      %4303 = vmatpush1.bf16.msra.mxu0 %v2037
      %4304 = vmatprep.subr.bf16.mxu0 0
      %4305 = vmatpush1.bf16.msra.mxu0 %v2038
      %4306 = vmatprep.subr.bf16.mxu0 0
      %4307 = vmatpush1.bf16.msra.mxu0 %v2039
      %4308 = vmatprep.subr.bf16.mxu0 0
      %4309 = vmatpush1.bf16.msra.mxu0 %v2040
      %4310 = vmatprep.subr.bf16.mxu0 0
      %4311 = vmatpush1.bf16.msra.mxu0 %v2041
      %4312 = vmatprep.subr.bf16.mxu0 0
      %4313 = vmatpush1.bf16.msra.mxu0 0
      %4314 = vmatprep.subr.bf16.mxu0 0
      %4315 = vmatpush1.bf16.msra.mxu0 0
      %4316 = vmatprep.subr.bf16.mxu0 0
      %4317 = vmatpush1.bf16.msra.mxu0 0
      %4318 = vmatprep.subr.bf16.mxu0 0
      %4319 = vmatpush1.bf16.msra.mxu0 0
      %4320 = vmatprep.subr.bf16.mxu0 0
      %4321 = vmatpush1.bf16.msra.mxu0 0
      %4322 = vmatprep.subr.bf16.mxu0 0
      %4323 = vmatpush1.bf16.msra.mxu0 0
      %4324 = vmatprep.subr.bf16.mxu0 0
      %4325 = vmatpush1.bf16.msra.mxu0 0
      %4326 = vmatprep.subr.bf16.mxu0 0
      %4327 = vmatpush1.bf16.msra.mxu0 0
      %4328 = vmatprep.mubr.bf16.mxu0 0
      %4329 = vmatmul.mubr.bf16.gmra.mrb[0].mxu0 %v4202
      %v4330 = vpop.f32.mrb[0].mxu0
      %v4331 = vadd.f32 0.0, %v4330
      %v4332 = vpop.f32.mrb[0].mxu0
      %v4333 = vpop.f32.mrb[0].mxu0
      %v4334 = vpop.f32.mrb[0].mxu0
      %4335 = vdwg.mxu0
      %v4336 = vadd.f32 %v4295, %v4331
      %v4337 = vtanh.pop %v4336
      %v4338 = vld [vmem:[%s1384 + $0x18] sm:$0xff]
      %4339 = vmatprep.subr.bf16.mxu0 0
      %4340 = vmatpush1.bf16.msra.mxu0 %v2125
      %4341 = vmatprep.subr.bf16.mxu0 0
      %4342 = vmatpush1.bf16.msra.mxu0 %v2126
      %4343 = vmatprep.subr.bf16.mxu0 0
      %4344 = vmatpush1.bf16.msra.mxu0 %v2127
      %4345 = vmatprep.subr.bf16.mxu0 0
      %4346 = vmatpush1.bf16.msra.mxu0 %v2128
      %4347 = vmatprep.subr.bf16.mxu0 0
      %4348 = vmatpush1.bf16.msra.mxu0 %v2129
      %4349 = vmatprep.subr.bf16.mxu0 0
      %4350 = vmatpush1.bf16.msra.mxu0 %v2130
      %4351 = vmatprep.subr.bf16.mxu0 0
      %4352 = vmatpush1.bf16.msra.mxu0 %v2131
      %4353 = vmatprep.subr.bf16.mxu0 0
      %4354 = vmatpush1.bf16.msra.mxu0 %v2132
      %4355 = vmatprep.subr.bf16.mxu0 0
      %4356 = vmatpush1.bf16.msra.mxu0 0
      %4357 = vmatprep.subr.bf16.mxu0 0
      %4358 = vmatpush1.bf16.msra.mxu0 0
      %4359 = vmatprep.subr.bf16.mxu0 0
      %4360 = vmatpush1.bf16.msra.mxu0 0
      %4361 = vmatprep.subr.bf16.mxu0 0
      %4362 = vmatpush1.bf16.msra.mxu0 0
      %4363 = vmatprep.subr.bf16.mxu0 0
      %4364 = vmatpush1.bf16.msra.mxu0 0
      %4365 = vmatprep.subr.bf16.mxu0 0
      %4366 = vmatpush1.bf16.msra.mxu0 0
      %4367 = vmatprep.subr.bf16.mxu0 0
      %4368 = vmatpush1.bf16.msra.mxu0 0
      %4369 = vmatprep.subr.bf16.mxu0 0
      %4370 = vmatpush1.bf16.msra.mxu0 0
      %4371 = vmatprep.mubr.bf16.mxu0 0
      %4372 = vmatmul.mubr.bf16.gmra.mrb[0].mxu0 %v4202
      %v4373 = vpop.f32.mrb[0].mxu0
      %v4374 = vadd.f32 0.0, %v4373
      %v4375 = vpop.f32.mrb[0].mxu0
      %v4376 = vpop.f32.mrb[0].mxu0
      %v4377 = vpop.f32.mrb[0].mxu0
      %4378 = vdwg.mxu0
      %v4379 = vadd.f32 %v4338, %v4374
      %v4380 = vmul.f32 %v4379, 0.5
      %v4381 = vtanh.pop %v4380
      %v4382 = vmul.f32 %v4381, 0.5
      %v4383 = vadd.f32 %v4382, 0.5
      %v4384 = vmul.f32 %v4294, %v4198
      %v4385 = vmul.f32 %v4248, %v4337
      %v4386 = vadd.f32 %v4384, %v4385
      %v4387 = vtanh.pop %v4386
      %v4388 = vmul.f32 %v4383, %v4387
      %s4389 = sadd.s32 %s83, 11
      %v4390 = vstv %s4389
      %vm4391 = vcmp.lt.s32.totalorder %v4390, %v1745
      %v4392 = vsel %vm4391, 1, 0
      %4393 = vset.pattern.permute.xlu0 0
      %4394 = vperm.xlu0 %4393, %v4392
      %v4395 = vpop.permute.xlu0 %4394
      %vm4396 = vcmp.eq.s32.totalorder %v4395, 1
      %v4397 = vsel %vm4396, %v4388, %v4197
      %v4398 = vsel %vm4396, %v4386, %v4198
      %v4399 = vsel %vm4396, %v4388, 0.0
      %s4400 = scalar_lea.vmem [#allocation13], 88
      %4401 = vst [vmem:[%s4400] sm:$0xff] %v4399
      %v4402 = vpack.c.bf16 %v4397, %v4397
      %v4403 = vld [vmem:[%s1473] sm:$0xff]
      %4404 = vmatprep.subr.bf16.mxu0 0
      %4405 = vmatpush1.bf16.msra.mxu0 %v1846
      %4406 = vmatprep.subr.bf16.mxu0 0
      %4407 = vmatpush1.bf16.msra.mxu0 %v1847
      %4408 = vmatprep.subr.bf16.mxu0 0
      %4409 = vmatpush1.bf16.msra.mxu0 %v1848
      %4410 = vmatprep.subr.bf16.mxu0 0
      %4411 = vmatpush1.bf16.msra.mxu0 %v1849
      %4412 = vmatprep.subr.bf16.mxu0 0
      %4413 = vmatpush1.bf16.msra.mxu0 %v1850
      %4414 = vmatprep.subr.bf16.mxu0 0
      %4415 = vmatpush1.bf16.msra.mxu0 %v1851
      %4416 = vmatprep.subr.bf16.mxu0 0
      %4417 = vmatpush1.bf16.msra.mxu0 %v1852
      %4418 = vmatprep.subr.bf16.mxu0 0
      %4419 = vmatpush1.bf16.msra.mxu0 %v1853
      %4420 = vmatprep.subr.bf16.mxu0 0
      %4421 = vmatpush1.bf16.msra.mxu0 0
      %4422 = vmatprep.subr.bf16.mxu0 0
      %4423 = vmatpush1.bf16.msra.mxu0 0
      %4424 = vmatprep.subr.bf16.mxu0 0
      %4425 = vmatpush1.bf16.msra.mxu0 0
      %4426 = vmatprep.subr.bf16.mxu0 0
      %4427 = vmatpush1.bf16.msra.mxu0 0
      %4428 = vmatprep.subr.bf16.mxu0 0
      %4429 = vmatpush1.bf16.msra.mxu0 0
      %4430 = vmatprep.subr.bf16.mxu0 0
      %4431 = vmatpush1.bf16.msra.mxu0 0
      %4432 = vmatprep.subr.bf16.mxu0 0
      %4433 = vmatpush1.bf16.msra.mxu0 0
      %4434 = vmatprep.subr.bf16.mxu0 0
      %4435 = vmatpush1.bf16.msra.mxu0 0
      %4436 = vmatprep.mubr.bf16.mxu0 0
      %4437 = vmatmul.mubr.bf16.gmra.mrb[0].mxu0 %v4402
      %v4438 = vpop.f32.mrb[0].mxu0
      %v4439 = vadd.f32 0.0, %v4438
      %v4440 = vpop.f32.mrb[0].mxu0
      %v4441 = vpop.f32.mrb[0].mxu0
      %v4442 = vpop.f32.mrb[0].mxu0
      %4443 = vdwg.mxu0
      %v4444 = vadd.f32 %v4403, %v4439
      %v4445 = vmul.f32 %v4444, 0.5
      %v4446 = vtanh.pop %v4445
      %v4447 = vmul.f32 %v4446, 0.5
      %v4448 = vadd.f32 %v4447, 0.5
      %v4449 = vld [vmem:[%s1473 + $0x8] sm:$0xff]
      %4450 = vmatprep.subr.bf16.mxu0 0
      %4451 = vmatpush1.bf16.msra.mxu0 %v1940
      %4452 = vmatprep.subr.bf16.mxu0 0
      %4453 = vmatpush1.bf16.msra.mxu0 %v1941
      %4454 = vmatprep.subr.bf16.mxu0 0
      %4455 = vmatpush1.bf16.msra.mxu0 %v1942
      %4456 = vmatprep.subr.bf16.mxu0 0
      %4457 = vmatpush1.bf16.msra.mxu0 %v1943
      %4458 = vmatprep.subr.bf16.mxu0 0
      %4459 = vmatpush1.bf16.msra.mxu0 %v1944
      %4460 = vmatprep.subr.bf16.mxu0 0
      %4461 = vmatpush1.bf16.msra.mxu0 %v1945
      %4462 = vmatprep.subr.bf16.mxu0 0
      %4463 = vmatpush1.bf16.msra.mxu0 %v1946
      %4464 = vmatprep.subr.bf16.mxu0 0
      %4465 = vmatpush1.bf16.msra.mxu0 %v1947
      %4466 = vmatprep.subr.bf16.mxu0 0
      %4467 = vmatpush1.bf16.msra.mxu0 0
      %4468 = vmatprep.subr.bf16.mxu0 0
      %4469 = vmatpush1.bf16.msra.mxu0 0
      %4470 = vmatprep.subr.bf16.mxu0 0
      %4471 = vmatpush1.bf16.msra.mxu0 0
      %4472 = vmatprep.subr.bf16.mxu0 0
      %4473 = vmatpush1.bf16.msra.mxu0 0
      %4474 = vmatprep.subr.bf16.mxu0 0
      %4475 = vmatpush1.bf16.msra.mxu0 0
      %4476 = vmatprep.subr.bf16.mxu0 0
      %4477 = vmatpush1.bf16.msra.mxu0 0
      %4478 = vmatprep.subr.bf16.mxu0 0
      %4479 = vmatpush1.bf16.msra.mxu0 0
      %4480 = vmatprep.subr.bf16.mxu0 0
      %4481 = vmatpush1.bf16.msra.mxu0 0
      %4482 = vmatprep.mubr.bf16.mxu0 0
      %4483 = vmatmul.mubr.bf16.gmra.mrb[0].mxu0 %v4402
      %v4484 = vpop.f32.mrb[0].mxu0
      %v4485 = vadd.f32 0.0, %v4484
      %v4486 = vpop.f32.mrb[0].mxu0
      %v4487 = vpop.f32.mrb[0].mxu0
      %v4488 = vpop.f32.mrb[0].mxu0
      %4489 = vdwg.mxu0
      %v4490 = vadd.f32 %v4449, %v4485
      %v4491 = vmul.f32 %v4490, 0.5
      %v4492 = vtanh.pop %v4491
      %v4493 = vmul.f32 %v4492, 0.5
      %v4494 = vadd.f32 %v4493, 0.5
      %v4495 = vld [vmem:[%s1473 + $0x10] sm:$0xff]
      %4496 = vmatprep.subr.bf16.mxu0 0
      %4497 = vmatpush1.bf16.msra.mxu0 %v2034
      %4498 = vmatprep.subr.bf16.mxu0 0
      %4499 = vmatpush1.bf16.msra.mxu0 %v2035
      %4500 = vmatprep.subr.bf16.mxu0 0
      %4501 = vmatpush1.bf16.msra.mxu0 %v2036
      %4502 = vmatprep.subr.bf16.mxu0 0
      %4503 = vmatpush1.bf16.msra.mxu0 %v2037
      %4504 = vmatprep.subr.bf16.mxu0 0
      %4505 = vmatpush1.bf16.msra.mxu0 %v2038
      %4506 = vmatprep.subr.bf16.mxu0 0
      %4507 = vmatpush1.bf16.msra.mxu0 %v2039
      %4508 = vmatprep.subr.bf16.mxu0 0
      %4509 = vmatpush1.bf16.msra.mxu0 %v2040
      %4510 = vmatprep.subr.bf16.mxu0 0
      %4511 = vmatpush1.bf16.msra.mxu0 %v2041
      %4512 = vmatprep.subr.bf16.mxu0 0
      %4513 = vmatpush1.bf16.msra.mxu0 0
      %4514 = vmatprep.subr.bf16.mxu0 0
      %4515 = vmatpush1.bf16.msra.mxu0 0
      %4516 = vmatprep.subr.bf16.mxu0 0
      %4517 = vmatpush1.bf16.msra.mxu0 0
      %4518 = vmatprep.subr.bf16.mxu0 0
      %4519 = vmatpush1.bf16.msra.mxu0 0
      %4520 = vmatprep.subr.bf16.mxu0 0
      %4521 = vmatpush1.bf16.msra.mxu0 0
      %4522 = vmatprep.subr.bf16.mxu0 0
      %4523 = vmatpush1.bf16.msra.mxu0 0
      %4524 = vmatprep.subr.bf16.mxu0 0
      %4525 = vmatpush1.bf16.msra.mxu0 0
      %4526 = vmatprep.subr.bf16.mxu0 0
      %4527 = vmatpush1.bf16.msra.mxu0 0
      %4528 = vmatprep.mubr.bf16.mxu0 0
      %4529 = vmatmul.mubr.bf16.gmra.mrb[0].mxu0 %v4402
      %v4530 = vpop.f32.mrb[0].mxu0
      %v4531 = vadd.f32 0.0, %v4530
      %v4532 = vpop.f32.mrb[0].mxu0
      %v4533 = vpop.f32.mrb[0].mxu0
      %v4534 = vpop.f32.mrb[0].mxu0
      %4535 = vdwg.mxu0
      %v4536 = vadd.f32 %v4495, %v4531
      %v4537 = vtanh.pop %v4536
      %v4538 = vld [vmem:[%s1473 + $0x18] sm:$0xff]
      %4539 = vmatprep.subr.bf16.mxu0 0
      %4540 = vmatpush1.bf16.msra.mxu0 %v2125
      %4541 = vmatprep.subr.bf16.mxu0 0
      %4542 = vmatpush1.bf16.msra.mxu0 %v2126
      %4543 = vmatprep.subr.bf16.mxu0 0
      %4544 = vmatpush1.bf16.msra.mxu0 %v2127
      %4545 = vmatprep.subr.bf16.mxu0 0
      %4546 = vmatpush1.bf16.msra.mxu0 %v2128
      %4547 = vmatprep.subr.bf16.mxu0 0
      %4548 = vmatpush1.bf16.msra.mxu0 %v2129
      %4549 = vmatprep.subr.bf16.mxu0 0
      %4550 = vmatpush1.bf16.msra.mxu0 %v2130
      %4551 = vmatprep.subr.bf16.mxu0 0
      %4552 = vmatpush1.bf16.msra.mxu0 %v2131
      %4553 = vmatprep.subr.bf16.mxu0 0
      %4554 = vmatpush1.bf16.msra.mxu0 %v2132
      %4555 = vmatprep.subr.bf16.mxu0 0
      %4556 = vmatpush1.bf16.msra.mxu0 0
      %4557 = vmatprep.subr.bf16.mxu0 0
      %4558 = vmatpush1.bf16.msra.mxu0 0
      %4559 = vmatprep.subr.bf16.mxu0 0
      %4560 = vmatpush1.bf16.msra.mxu0 0
      %4561 = vmatprep.subr.bf16.mxu0 0
      %4562 = vmatpush1.bf16.msra.mxu0 0
      %4563 = vmatprep.subr.bf16.mxu0 0
      %4564 = vmatpush1.bf16.msra.mxu0 0
      %4565 = vmatprep.subr.bf16.mxu0 0
      %4566 = vmatpush1.bf16.msra.mxu0 0
      %4567 = vmatprep.subr.bf16.mxu0 0
      %4568 = vmatpush1.bf16.msra.mxu0 0
      %4569 = vmatprep.subr.bf16.mxu0 0
      %4570 = vmatpush1.bf16.msra.mxu0 0
      %4571 = vmatprep.mubr.bf16.mxu0 0
      %4572 = vmatmul.mubr.bf16.gmra.mrb[0].mxu0 %v4402
      %v4573 = vpop.f32.mrb[0].mxu0
      %v4574 = vadd.f32 0.0, %v4573
      %v4575 = vpop.f32.mrb[0].mxu0
      %v4576 = vpop.f32.mrb[0].mxu0
      %v4577 = vpop.f32.mrb[0].mxu0
      %4578 = vdwg.mxu0
      %v4579 = vadd.f32 %v4538, %v4574
      %v4580 = vmul.f32 %v4579, 0.5
      %v4581 = vtanh.pop %v4580
      %v4582 = vmul.f32 %v4581, 0.5
      %v4583 = vadd.f32 %v4582, 0.5
      %v4584 = vmul.f32 %v4494, %v4398
      %v4585 = vmul.f32 %v4448, %v4537
      %v4586 = vadd.f32 %v4584, %v4585
      %v4587 = vtanh.pop %v4586
      %v4588 = vmul.f32 %v4583, %v4587
      %s4589 = sadd.s32 %s83, 12
      %v4590 = vstv %s4589
      %vm4591 = vcmp.lt.s32.totalorder %v4590, %v1745
      %v4592 = vsel %vm4591, 1, 0
      %4593 = vset.pattern.permute.xlu0 0
      %4594 = vperm.xlu0 %4593, %v4592
      %v4595 = vpop.permute.xlu0 %4594
      %vm4596 = vcmp.eq.s32.totalorder %v4595, 1
      %v4597 = vsel %vm4596, %v4588, %v4397
      %v4598 = vsel %vm4596, %v4586, %v4398
      %v4599 = vsel %vm4596, %v4588, 0.0
      %s4600 = scalar_lea.vmem [#allocation13], 96
      %4601 = vst [vmem:[%s4600] sm:$0xff] %v4599
      %v4602 = vpack.c.bf16 %v4597, %v4597
      %v4603 = vld [vmem:[%s1562] sm:$0xff]
      %4604 = vmatprep.subr.bf16.mxu0 0
      %4605 = vmatpush1.bf16.msra.mxu0 %v1846
      %4606 = vmatprep.subr.bf16.mxu0 0
      %4607 = vmatpush1.bf16.msra.mxu0 %v1847
      %4608 = vmatprep.subr.bf16.mxu0 0
      %4609 = vmatpush1.bf16.msra.mxu0 %v1848
      %4610 = vmatprep.subr.bf16.mxu0 0
      %4611 = vmatpush1.bf16.msra.mxu0 %v1849
      %4612 = vmatprep.subr.bf16.mxu0 0
      %4613 = vmatpush1.bf16.msra.mxu0 %v1850
      %4614 = vmatprep.subr.bf16.mxu0 0
      %4615 = vmatpush1.bf16.msra.mxu0 %v1851
      %4616 = vmatprep.subr.bf16.mxu0 0
      %4617 = vmatpush1.bf16.msra.mxu0 %v1852
      %4618 = vmatprep.subr.bf16.mxu0 0
      %4619 = vmatpush1.bf16.msra.mxu0 %v1853
      %4620 = vmatprep.subr.bf16.mxu0 0
      %4621 = vmatpush1.bf16.msra.mxu0 0
      %4622 = vmatprep.subr.bf16.mxu0 0
      %4623 = vmatpush1.bf16.msra.mxu0 0
      %4624 = vmatprep.subr.bf16.mxu0 0
      %4625 = vmatpush1.bf16.msra.mxu0 0
      %4626 = vmatprep.subr.bf16.mxu0 0
      %4627 = vmatpush1.bf16.msra.mxu0 0
      %4628 = vmatprep.subr.bf16.mxu0 0
      %4629 = vmatpush1.bf16.msra.mxu0 0
      %4630 = vmatprep.subr.bf16.mxu0 0
      %4631 = vmatpush1.bf16.msra.mxu0 0
      %4632 = vmatprep.subr.bf16.mxu0 0
      %4633 = vmatpush1.bf16.msra.mxu0 0
      %4634 = vmatprep.subr.bf16.mxu0 0
      %4635 = vmatpush1.bf16.msra.mxu0 0
      %4636 = vmatprep.mubr.bf16.mxu0 0
      %4637 = vmatmul.mubr.bf16.gmra.mrb[0].mxu0 %v4602
      %v4638 = vpop.f32.mrb[0].mxu0
      %v4639 = vadd.f32 0.0, %v4638
      %v4640 = vpop.f32.mrb[0].mxu0
      %v4641 = vpop.f32.mrb[0].mxu0
      %v4642 = vpop.f32.mrb[0].mxu0
      %4643 = vdwg.mxu0
      %v4644 = vadd.f32 %v4603, %v4639
      %v4645 = vmul.f32 %v4644, 0.5
      %v4646 = vtanh.pop %v4645
      %v4647 = vmul.f32 %v4646, 0.5
      %v4648 = vadd.f32 %v4647, 0.5
      %v4649 = vld [vmem:[%s1562 + $0x8] sm:$0xff]
      %4650 = vmatprep.subr.bf16.mxu0 0
      %4651 = vmatpush1.bf16.msra.mxu0 %v1940
      %4652 = vmatprep.subr.bf16.mxu0 0
      %4653 = vmatpush1.bf16.msra.mxu0 %v1941
      %4654 = vmatprep.subr.bf16.mxu0 0
      %4655 = vmatpush1.bf16.msra.mxu0 %v1942
      %4656 = vmatprep.subr.bf16.mxu0 0
      %4657 = vmatpush1.bf16.msra.mxu0 %v1943
      %4658 = vmatprep.subr.bf16.mxu0 0
      %4659 = vmatpush1.bf16.msra.mxu0 %v1944
      %4660 = vmatprep.subr.bf16.mxu0 0
      %4661 = vmatpush1.bf16.msra.mxu0 %v1945
      %4662 = vmatprep.subr.bf16.mxu0 0
      %4663 = vmatpush1.bf16.msra.mxu0 %v1946
      %4664 = vmatprep.subr.bf16.mxu0 0
      %4665 = vmatpush1.bf16.msra.mxu0 %v1947
      %4666 = vmatprep.subr.bf16.mxu0 0
      %4667 = vmatpush1.bf16.msra.mxu0 0
      %4668 = vmatprep.subr.bf16.mxu0 0
      %4669 = vmatpush1.bf16.msra.mxu0 0
      %4670 = vmatprep.subr.bf16.mxu0 0
      %4671 = vmatpush1.bf16.msra.mxu0 0
      %4672 = vmatprep.subr.bf16.mxu0 0
      %4673 = vmatpush1.bf16.msra.mxu0 0
      %4674 = vmatprep.subr.bf16.mxu0 0
      %4675 = vmatpush1.bf16.msra.mxu0 0
      %4676 = vmatprep.subr.bf16.mxu0 0
      %4677 = vmatpush1.bf16.msra.mxu0 0
      %4678 = vmatprep.subr.bf16.mxu0 0
      %4679 = vmatpush1.bf16.msra.mxu0 0
      %4680 = vmatprep.subr.bf16.mxu0 0
      %4681 = vmatpush1.bf16.msra.mxu0 0
      %4682 = vmatprep.mubr.bf16.mxu0 0
      %4683 = vmatmul.mubr.bf16.gmra.mrb[0].mxu0 %v4602
      %v4684 = vpop.f32.mrb[0].mxu0
      %v4685 = vadd.f32 0.0, %v4684
      %v4686 = vpop.f32.mrb[0].mxu0
      %v4687 = vpop.f32.mrb[0].mxu0
      %v4688 = vpop.f32.mrb[0].mxu0
      %4689 = vdwg.mxu0
      %v4690 = vadd.f32 %v4649, %v4685
      %v4691 = vmul.f32 %v4690, 0.5
      %v4692 = vtanh.pop %v4691
      %v4693 = vmul.f32 %v4692, 0.5
      %v4694 = vadd.f32 %v4693, 0.5
      %v4695 = vld [vmem:[%s1562 + $0x10] sm:$0xff]
      %4696 = vmatprep.subr.bf16.mxu0 0
      %4697 = vmatpush1.bf16.msra.mxu0 %v2034
      %4698 = vmatprep.subr.bf16.mxu0 0
      %4699 = vmatpush1.bf16.msra.mxu0 %v2035
      %4700 = vmatprep.subr.bf16.mxu0 0
      %4701 = vmatpush1.bf16.msra.mxu0 %v2036
      %4702 = vmatprep.subr.bf16.mxu0 0
      %4703 = vmatpush1.bf16.msra.mxu0 %v2037
      %4704 = vmatprep.subr.bf16.mxu0 0
      %4705 = vmatpush1.bf16.msra.mxu0 %v2038
      %4706 = vmatprep.subr.bf16.mxu0 0
      %4707 = vmatpush1.bf16.msra.mxu0 %v2039
      %4708 = vmatprep.subr.bf16.mxu0 0
      %4709 = vmatpush1.bf16.msra.mxu0 %v2040
      %4710 = vmatprep.subr.bf16.mxu0 0
      %4711 = vmatpush1.bf16.msra.mxu0 %v2041
      %4712 = vmatprep.subr.bf16.mxu0 0
      %4713 = vmatpush1.bf16.msra.mxu0 0
      %4714 = vmatprep.subr.bf16.mxu0 0
      %4715 = vmatpush1.bf16.msra.mxu0 0
      %4716 = vmatprep.subr.bf16.mxu0 0
      %4717 = vmatpush1.bf16.msra.mxu0 0
      %4718 = vmatprep.subr.bf16.mxu0 0
      %4719 = vmatpush1.bf16.msra.mxu0 0
      %4720 = vmatprep.subr.bf16.mxu0 0
      %4721 = vmatpush1.bf16.msra.mxu0 0
      %4722 = vmatprep.subr.bf16.mxu0 0
      %4723 = vmatpush1.bf16.msra.mxu0 0
      %4724 = vmatprep.subr.bf16.mxu0 0
      %4725 = vmatpush1.bf16.msra.mxu0 0
      %4726 = vmatprep.subr.bf16.mxu0 0
      %4727 = vmatpush1.bf16.msra.mxu0 0
      %4728 = vmatprep.mubr.bf16.mxu0 0
      %4729 = vmatmul.mubr.bf16.gmra.mrb[0].mxu0 %v4602
      %v4730 = vpop.f32.mrb[0].mxu0
      %v4731 = vadd.f32 0.0, %v4730
      %v4732 = vpop.f32.mrb[0].mxu0
      %v4733 = vpop.f32.mrb[0].mxu0
      %v4734 = vpop.f32.mrb[0].mxu0
      %4735 = vdwg.mxu0
      %v4736 = vadd.f32 %v4695, %v4731
      %v4737 = vtanh.pop %v4736
      %v4738 = vld [vmem:[%s1562 + $0x18] sm:$0xff]
      %4739 = vmatprep.subr.bf16.mxu0 0
      %4740 = vmatpush1.bf16.msra.mxu0 %v2125
      %4741 = vmatprep.subr.bf16.mxu0 0
      %4742 = vmatpush1.bf16.msra.mxu0 %v2126
      %4743 = vmatprep.subr.bf16.mxu0 0
      %4744 = vmatpush1.bf16.msra.mxu0 %v2127
      %4745 = vmatprep.subr.bf16.mxu0 0
      %4746 = vmatpush1.bf16.msra.mxu0 %v2128
      %4747 = vmatprep.subr.bf16.mxu0 0
      %4748 = vmatpush1.bf16.msra.mxu0 %v2129
      %4749 = vmatprep.subr.bf16.mxu0 0
      %4750 = vmatpush1.bf16.msra.mxu0 %v2130
      %4751 = vmatprep.subr.bf16.mxu0 0
      %4752 = vmatpush1.bf16.msra.mxu0 %v2131
      %4753 = vmatprep.subr.bf16.mxu0 0
      %4754 = vmatpush1.bf16.msra.mxu0 %v2132
      %4755 = vmatprep.subr.bf16.mxu0 0
      %4756 = vmatpush1.bf16.msra.mxu0 0
      %4757 = vmatprep.subr.bf16.mxu0 0
      %4758 = vmatpush1.bf16.msra.mxu0 0
      %4759 = vmatprep.subr.bf16.mxu0 0
      %4760 = vmatpush1.bf16.msra.mxu0 0
      %4761 = vmatprep.subr.bf16.mxu0 0
      %4762 = vmatpush1.bf16.msra.mxu0 0
      %4763 = vmatprep.subr.bf16.mxu0 0
      %4764 = vmatpush1.bf16.msra.mxu0 0
      %4765 = vmatprep.subr.bf16.mxu0 0
      %4766 = vmatpush1.bf16.msra.mxu0 0
      %4767 = vmatprep.subr.bf16.mxu0 0
      %4768 = vmatpush1.bf16.msra.mxu0 0
      %4769 = vmatprep.subr.bf16.mxu0 0
      %4770 = vmatpush1.bf16.msra.mxu0 0
      %4771 = vmatprep.mubr.bf16.mxu0 0
      %4772 = vmatmul.mubr.bf16.gmra.mrb[0].mxu0 %v4602
      %v4773 = vpop.f32.mrb[0].mxu0
      %v4774 = vadd.f32 0.0, %v4773
      %v4775 = vpop.f32.mrb[0].mxu0
      %v4776 = vpop.f32.mrb[0].mxu0
      %v4777 = vpop.f32.mrb[0].mxu0
      %4778 = vdwg.mxu0
      %v4779 = vadd.f32 %v4738, %v4774
      %v4780 = vmul.f32 %v4779, 0.5
      %v4781 = vtanh.pop %v4780
      %v4782 = vmul.f32 %v4781, 0.5
      %v4783 = vadd.f32 %v4782, 0.5
      %v4784 = vmul.f32 %v4694, %v4598
      %v4785 = vmul.f32 %v4648, %v4737
      %v4786 = vadd.f32 %v4784, %v4785
      %v4787 = vtanh.pop %v4786
      %v4788 = vmul.f32 %v4783, %v4787
      %s4789 = sadd.s32 %s83, 13
      %v4790 = vstv %s4789
      %vm4791 = vcmp.lt.s32.totalorder %v4790, %v1745
      %v4792 = vsel %vm4791, 1, 0
      %4793 = vset.pattern.permute.xlu0 0
      %4794 = vperm.xlu0 %4793, %v4792
      %v4795 = vpop.permute.xlu0 %4794
      %vm4796 = vcmp.eq.s32.totalorder %v4795, 1
      %v4797 = vsel %vm4796, %v4788, %v4597
      %v4798 = vsel %vm4796, %v4786, %v4598
      %v4799 = vsel %vm4796, %v4788, 0.0
      %s4800 = scalar_lea.vmem [#allocation13], 104
      %4801 = vst [vmem:[%s4800] sm:$0xff] %v4799
      %v4802 = vpack.c.bf16 %v4797, %v4797
      %v4803 = vld [vmem:[%s1651] sm:$0xff]
      %4804 = vmatprep.subr.bf16.mxu0 0
      %4805 = vmatpush1.bf16.msra.mxu0 %v1846
      %4806 = vmatprep.subr.bf16.mxu0 0
      %4807 = vmatpush1.bf16.msra.mxu0 %v1847
      %4808 = vmatprep.subr.bf16.mxu0 0
      %4809 = vmatpush1.bf16.msra.mxu0 %v1848
      %4810 = vmatprep.subr.bf16.mxu0 0
      %4811 = vmatpush1.bf16.msra.mxu0 %v1849
      %4812 = vmatprep.subr.bf16.mxu0 0
      %4813 = vmatpush1.bf16.msra.mxu0 %v1850
      %4814 = vmatprep.subr.bf16.mxu0 0
      %4815 = vmatpush1.bf16.msra.mxu0 %v1851
      %4816 = vmatprep.subr.bf16.mxu0 0
      %4817 = vmatpush1.bf16.msra.mxu0 %v1852
      %4818 = vmatprep.subr.bf16.mxu0 0
      %4819 = vmatpush1.bf16.msra.mxu0 %v1853
      %4820 = vmatprep.subr.bf16.mxu0 0
      %4821 = vmatpush1.bf16.msra.mxu0 0
      %4822 = vmatprep.subr.bf16.mxu0 0
      %4823 = vmatpush1.bf16.msra.mxu0 0
      %4824 = vmatprep.subr.bf16.mxu0 0
      %4825 = vmatpush1.bf16.msra.mxu0 0
      %4826 = vmatprep.subr.bf16.mxu0 0
      %4827 = vmatpush1.bf16.msra.mxu0 0
      %4828 = vmatprep.subr.bf16.mxu0 0
      %4829 = vmatpush1.bf16.msra.mxu0 0
      %4830 = vmatprep.subr.bf16.mxu0 0
      %4831 = vmatpush1.bf16.msra.mxu0 0
      %4832 = vmatprep.subr.bf16.mxu0 0
      %4833 = vmatpush1.bf16.msra.mxu0 0
      %4834 = vmatprep.subr.bf16.mxu0 0
      %4835 = vmatpush1.bf16.msra.mxu0 0
      %4836 = vmatprep.mubr.bf16.mxu0 0
      %4837 = vmatmul.mubr.bf16.gmra.mrb[0].mxu0 %v4802
      %v4838 = vpop.f32.mrb[0].mxu0
      %v4839 = vadd.f32 0.0, %v4838
      %v4840 = vpop.f32.mrb[0].mxu0
      %v4841 = vpop.f32.mrb[0].mxu0
      %v4842 = vpop.f32.mrb[0].mxu0
      %4843 = vdwg.mxu0
      %v4844 = vadd.f32 %v4803, %v4839
      %v4845 = vmul.f32 %v4844, 0.5
      %v4846 = vtanh.pop %v4845
      %v4847 = vmul.f32 %v4846, 0.5
      %v4848 = vadd.f32 %v4847, 0.5
      %v4849 = vld [vmem:[%s1651 + $0x8] sm:$0xff]
      %4850 = vmatprep.subr.bf16.mxu0 0
      %4851 = vmatpush1.bf16.msra.mxu0 %v1940
      %4852 = vmatprep.subr.bf16.mxu0 0
      %4853 = vmatpush1.bf16.msra.mxu0 %v1941
      %4854 = vmatprep.subr.bf16.mxu0 0
      %4855 = vmatpush1.bf16.msra.mxu0 %v1942
      %4856 = vmatprep.subr.bf16.mxu0 0
      %4857 = vmatpush1.bf16.msra.mxu0 %v1943
      %4858 = vmatprep.subr.bf16.mxu0 0
      %4859 = vmatpush1.bf16.msra.mxu0 %v1944
      %4860 = vmatprep.subr.bf16.mxu0 0
      %4861 = vmatpush1.bf16.msra.mxu0 %v1945
      %4862 = vmatprep.subr.bf16.mxu0 0
      %4863 = vmatpush1.bf16.msra.mxu0 %v1946
      %4864 = vmatprep.subr.bf16.mxu0 0
      %4865 = vmatpush1.bf16.msra.mxu0 %v1947
      %4866 = vmatprep.subr.bf16.mxu0 0
      %4867 = vmatpush1.bf16.msra.mxu0 0
      %4868 = vmatprep.subr.bf16.mxu0 0
      %4869 = vmatpush1.bf16.msra.mxu0 0
      %4870 = vmatprep.subr.bf16.mxu0 0
      %4871 = vmatpush1.bf16.msra.mxu0 0
      %4872 = vmatprep.subr.bf16.mxu0 0
      %4873 = vmatpush1.bf16.msra.mxu0 0
      %4874 = vmatprep.subr.bf16.mxu0 0
      %4875 = vmatpush1.bf16.msra.mxu0 0
      %4876 = vmatprep.subr.bf16.mxu0 0
      %4877 = vmatpush1.bf16.msra.mxu0 0
      %4878 = vmatprep.subr.bf16.mxu0 0
      %4879 = vmatpush1.bf16.msra.mxu0 0
      %4880 = vmatprep.subr.bf16.mxu0 0
      %4881 = vmatpush1.bf16.msra.mxu0 0
      %4882 = vmatprep.mubr.bf16.mxu0 0
      %4883 = vmatmul.mubr.bf16.gmra.mrb[0].mxu0 %v4802
      %v4884 = vpop.f32.mrb[0].mxu0
      %v4885 = vadd.f32 0.0, %v4884
      %v4886 = vpop.f32.mrb[0].mxu0
      %v4887 = vpop.f32.mrb[0].mxu0
      %v4888 = vpop.f32.mrb[0].mxu0
      %4889 = vdwg.mxu0
      %v4890 = vadd.f32 %v4849, %v4885
      %v4891 = vmul.f32 %v4890, 0.5
      %v4892 = vtanh.pop %v4891
      %v4893 = vmul.f32 %v4892, 0.5
      %v4894 = vadd.f32 %v4893, 0.5
      %v4895 = vld [vmem:[%s1651 + $0x10] sm:$0xff]
      %4896 = vmatprep.subr.bf16.mxu0 0
      %4897 = vmatpush1.bf16.msra.mxu0 %v2034
      %4898 = vmatprep.subr.bf16.mxu0 0
      %4899 = vmatpush1.bf16.msra.mxu0 %v2035
      %4900 = vmatprep.subr.bf16.mxu0 0
      %4901 = vmatpush1.bf16.msra.mxu0 %v2036
      %4902 = vmatprep.subr.bf16.mxu0 0
      %4903 = vmatpush1.bf16.msra.mxu0 %v2037
      %4904 = vmatprep.subr.bf16.mxu0 0
      %4905 = vmatpush1.bf16.msra.mxu0 %v2038
      %4906 = vmatprep.subr.bf16.mxu0 0
      %4907 = vmatpush1.bf16.msra.mxu0 %v2039
      %4908 = vmatprep.subr.bf16.mxu0 0
      %4909 = vmatpush1.bf16.msra.mxu0 %v2040
      %4910 = vmatprep.subr.bf16.mxu0 0
      %4911 = vmatpush1.bf16.msra.mxu0 %v2041
      %4912 = vmatprep.subr.bf16.mxu0 0
      %4913 = vmatpush1.bf16.msra.mxu0 0
      %4914 = vmatprep.subr.bf16.mxu0 0
      %4915 = vmatpush1.bf16.msra.mxu0 0
      %4916 = vmatprep.subr.bf16.mxu0 0
      %4917 = vmatpush1.bf16.msra.mxu0 0
      %4918 = vmatprep.subr.bf16.mxu0 0
      %4919 = vmatpush1.bf16.msra.mxu0 0
      %4920 = vmatprep.subr.bf16.mxu0 0
      %4921 = vmatpush1.bf16.msra.mxu0 0
      %4922 = vmatprep.subr.bf16.mxu0 0
      %4923 = vmatpush1.bf16.msra.mxu0 0
      %4924 = vmatprep.subr.bf16.mxu0 0
      %4925 = vmatpush1.bf16.msra.mxu0 0
      %4926 = vmatprep.subr.bf16.mxu0 0
      %4927 = vmatpush1.bf16.msra.mxu0 0
      %4928 = vmatprep.mubr.bf16.mxu0 0
      %4929 = vmatmul.mubr.bf16.gmra.mrb[0].mxu0 %v4802
      %v4930 = vpop.f32.mrb[0].mxu0
      %v4931 = vadd.f32 0.0, %v4930
      %v4932 = vpop.f32.mrb[0].mxu0
      %v4933 = vpop.f32.mrb[0].mxu0
      %v4934 = vpop.f32.mrb[0].mxu0
      %4935 = vdwg.mxu0
      %v4936 = vadd.f32 %v4895, %v4931
      %v4937 = vtanh.pop %v4936
      %v4938 = vld [vmem:[%s1651 + $0x18] sm:$0xff]
      %4939 = vmatprep.subr.bf16.mxu0 0
      %4940 = vmatpush1.bf16.msra.mxu0 %v2125
      %4941 = vmatprep.subr.bf16.mxu0 0
      %4942 = vmatpush1.bf16.msra.mxu0 %v2126
      %4943 = vmatprep.subr.bf16.mxu0 0
      %4944 = vmatpush1.bf16.msra.mxu0 %v2127
      %4945 = vmatprep.subr.bf16.mxu0 0
      %4946 = vmatpush1.bf16.msra.mxu0 %v2128
      %4947 = vmatprep.subr.bf16.mxu0 0
      %4948 = vmatpush1.bf16.msra.mxu0 %v2129
      %4949 = vmatprep.subr.bf16.mxu0 0
      %4950 = vmatpush1.bf16.msra.mxu0 %v2130
      %4951 = vmatprep.subr.bf16.mxu0 0
      %4952 = vmatpush1.bf16.msra.mxu0 %v2131
      %4953 = vmatprep.subr.bf16.mxu0 0
      %4954 = vmatpush1.bf16.msra.mxu0 %v2132
      %4955 = vmatprep.subr.bf16.mxu0 0
      %4956 = vmatpush1.bf16.msra.mxu0 0
      %4957 = vmatprep.subr.bf16.mxu0 0
      %4958 = vmatpush1.bf16.msra.mxu0 0
      %4959 = vmatprep.subr.bf16.mxu0 0
      %4960 = vmatpush1.bf16.msra.mxu0 0
      %4961 = vmatprep.subr.bf16.mxu0 0
      %4962 = vmatpush1.bf16.msra.mxu0 0
      %4963 = vmatprep.subr.bf16.mxu0 0
      %4964 = vmatpush1.bf16.msra.mxu0 0
      %4965 = vmatprep.subr.bf16.mxu0 0
      %4966 = vmatpush1.bf16.msra.mxu0 0
      %4967 = vmatprep.subr.bf16.mxu0 0
      %4968 = vmatpush1.bf16.msra.mxu0 0
      %4969 = vmatprep.subr.bf16.mxu0 0
      %4970 = vmatpush1.bf16.msra.mxu0 0
      %4971 = vmatprep.mubr.bf16.mxu0 0
      %4972 = vmatmul.mubr.bf16.gmra.mrb[0].mxu0 %v4802
      %v4973 = vpop.f32.mrb[0].mxu0
      %v4974 = vadd.f32 0.0, %v4973
      %v4975 = vpop.f32.mrb[0].mxu0
      %v4976 = vpop.f32.mrb[0].mxu0
      %v4977 = vpop.f32.mrb[0].mxu0
      %4978 = vdwg.mxu0
      %v4979 = vadd.f32 %v4938, %v4974
      %v4980 = vmul.f32 %v4979, 0.5
      %v4981 = vtanh.pop %v4980
      %v4982 = vmul.f32 %v4981, 0.5
      %v4983 = vadd.f32 %v4982, 0.5
      %v4984 = vmul.f32 %v4894, %v4798
      %v4985 = vmul.f32 %v4848, %v4937
      %v4986 = vadd.f32 %v4984, %v4985
      %v4987 = vtanh.pop %v4986
      %v4988 = vmul.f32 %v4983, %v4987
      %s4989 = sadd.s32 %s83, 14
      %v4990 = vstv %s4989
      %vm4991 = vcmp.lt.s32.totalorder %v4990, %v1745
      %v4992 = vsel %vm4991, 1, 0
      %4993 = vset.pattern.permute.xlu0 0
      %4994 = vperm.xlu0 %4993, %v4992
      %v4995 = vpop.permute.xlu0 %4994
      %vm4996 = vcmp.eq.s32.totalorder %v4995, 1
      %v4997 = vsel %vm4996, %v4988, %v4797
      %v4998 = vsel %vm4996, %v4986, %v4798
      %v4999 = vsel %vm4996, %v4988, 0.0
      %s5000 = scalar_lea.vmem [#allocation13], 112
      %5001 = vst [vmem:[%s5000] sm:$0xff] %v4999
      %v5002 = vpack.c.bf16 %v4997, %v4997
      %v5003 = vld [vmem:[%s1740] sm:$0xff]
      %5004 = vmatprep.subr.bf16.mxu0 0
      %5005 = vmatpush1.bf16.msra.mxu0 %v1846
      %5006 = vmatprep.subr.bf16.mxu0 0
      %5007 = vmatpush1.bf16.msra.mxu0 %v1847
      %5008 = vmatprep.subr.bf16.mxu0 0
      %5009 = vmatpush1.bf16.msra.mxu0 %v1848
      %5010 = vmatprep.subr.bf16.mxu0 0
      %5011 = vmatpush1.bf16.msra.mxu0 %v1849
      %5012 = vmatprep.subr.bf16.mxu0 0
      %5013 = vmatpush1.bf16.msra.mxu0 %v1850
      %5014 = vmatprep.subr.bf16.mxu0 0
      %5015 = vmatpush1.bf16.msra.mxu0 %v1851
      %5016 = vmatprep.subr.bf16.mxu0 0
      %5017 = vmatpush1.bf16.msra.mxu0 %v1852
      %5018 = vmatprep.subr.bf16.mxu0 0
      %5019 = vmatpush1.bf16.msra.mxu0 %v1853
      %5020 = vmatprep.subr.bf16.mxu0 0
      %5021 = vmatpush1.bf16.msra.mxu0 0
      %5022 = vmatprep.subr.bf16.mxu0 0
      %5023 = vmatpush1.bf16.msra.mxu0 0
      %5024 = vmatprep.subr.bf16.mxu0 0
      %5025 = vmatpush1.bf16.msra.mxu0 0
      %5026 = vmatprep.subr.bf16.mxu0 0
      %5027 = vmatpush1.bf16.msra.mxu0 0
      %5028 = vmatprep.subr.bf16.mxu0 0
      %5029 = vmatpush1.bf16.msra.mxu0 0
      %5030 = vmatprep.subr.bf16.mxu0 0
      %5031 = vmatpush1.bf16.msra.mxu0 0
      %5032 = vmatprep.subr.bf16.mxu0 0
      %5033 = vmatpush1.bf16.msra.mxu0 0
      %5034 = vmatprep.subr.bf16.mxu0 0
      %5035 = vmatpush1.bf16.msra.mxu0 0
      %5036 = vmatprep.mubr.bf16.mxu0 0
      %5037 = vmatmul.mubr.bf16.gmra.mrb[0].mxu0 %v5002
      %v5038 = vpop.f32.mrb[0].mxu0
      %v5039 = vadd.f32 0.0, %v5038
      %v5040 = vpop.f32.mrb[0].mxu0
      %v5041 = vpop.f32.mrb[0].mxu0
      %v5042 = vpop.f32.mrb[0].mxu0
      %5043 = vdwg.mxu0
      %v5044 = vadd.f32 %v5003, %v5039
      %v5045 = vmul.f32 %v5044, 0.5
      %v5046 = vtanh.pop %v5045
      %v5047 = vmul.f32 %v5046, 0.5
      %v5048 = vadd.f32 %v5047, 0.5
      %v5049 = vld [vmem:[%s1740 + $0x8] sm:$0xff]
      %5050 = vmatprep.subr.bf16.mxu0 0
      %5051 = vmatpush1.bf16.msra.mxu0 %v1940
      %5052 = vmatprep.subr.bf16.mxu0 0
      %5053 = vmatpush1.bf16.msra.mxu0 %v1941
      %5054 = vmatprep.subr.bf16.mxu0 0
      %5055 = vmatpush1.bf16.msra.mxu0 %v1942
      %5056 = vmatprep.subr.bf16.mxu0 0
      %5057 = vmatpush1.bf16.msra.mxu0 %v1943
      %5058 = vmatprep.subr.bf16.mxu0 0
      %5059 = vmatpush1.bf16.msra.mxu0 %v1944
      %5060 = vmatprep.subr.bf16.mxu0 0
      %5061 = vmatpush1.bf16.msra.mxu0 %v1945
      %5062 = vmatprep.subr.bf16.mxu0 0
      %5063 = vmatpush1.bf16.msra.mxu0 %v1946
      %5064 = vmatprep.subr.bf16.mxu0 0
      %5065 = vmatpush1.bf16.msra.mxu0 %v1947
      %5066 = vmatprep.subr.bf16.mxu0 0
      %5067 = vmatpush1.bf16.msra.mxu0 0
      %5068 = vmatprep.subr.bf16.mxu0 0
      %5069 = vmatpush1.bf16.msra.mxu0 0
      %5070 = vmatprep.subr.bf16.mxu0 0
      %5071 = vmatpush1.bf16.msra.mxu0 0
      %5072 = vmatprep.subr.bf16.mxu0 0
      %5073 = vmatpush1.bf16.msra.mxu0 0
      %5074 = vmatprep.subr.bf16.mxu0 0
      %5075 = vmatpush1.bf16.msra.mxu0 0
      %5076 = vmatprep.subr.bf16.mxu0 0
      %5077 = vmatpush1.bf16.msra.mxu0 0
      %5078 = vmatprep.subr.bf16.mxu0 0
      %5079 = vmatpush1.bf16.msra.mxu0 0
      %5080 = vmatprep.subr.bf16.mxu0 0
      %5081 = vmatpush1.bf16.msra.mxu0 0
      %5082 = vmatprep.mubr.bf16.mxu0 0
      %5083 = vmatmul.mubr.bf16.gmra.mrb[0].mxu0 %v5002
      %v5084 = vpop.f32.mrb[0].mxu0
      %v5085 = vadd.f32 0.0, %v5084
      %v5086 = vpop.f32.mrb[0].mxu0
      %v5087 = vpop.f32.mrb[0].mxu0
      %v5088 = vpop.f32.mrb[0].mxu0
      %5089 = vdwg.mxu0
      %v5090 = vadd.f32 %v5049, %v5085
      %v5091 = vmul.f32 %v5090, 0.5
      %v5092 = vtanh.pop %v5091
      %v5093 = vmul.f32 %v5092, 0.5
      %v5094 = vadd.f32 %v5093, 0.5
      %v5095 = vld [vmem:[%s1740 + $0x10] sm:$0xff]
      %5096 = vmatprep.subr.bf16.mxu0 0
      %5097 = vmatpush1.bf16.msra.mxu0 %v2034
      %5098 = vmatprep.subr.bf16.mxu0 0
      %5099 = vmatpush1.bf16.msra.mxu0 %v2035
      %5100 = vmatprep.subr.bf16.mxu0 0
      %5101 = vmatpush1.bf16.msra.mxu0 %v2036
      %5102 = vmatprep.subr.bf16.mxu0 0
      %5103 = vmatpush1.bf16.msra.mxu0 %v2037
      %5104 = vmatprep.subr.bf16.mxu0 0
      %5105 = vmatpush1.bf16.msra.mxu0 %v2038
      %5106 = vmatprep.subr.bf16.mxu0 0
      %5107 = vmatpush1.bf16.msra.mxu0 %v2039
      %5108 = vmatprep.subr.bf16.mxu0 0
      %5109 = vmatpush1.bf16.msra.mxu0 %v2040
      %5110 = vmatprep.subr.bf16.mxu0 0
      %5111 = vmatpush1.bf16.msra.mxu0 %v2041
      %5112 = vmatprep.subr.bf16.mxu0 0
      %5113 = vmatpush1.bf16.msra.mxu0 0
      %5114 = vmatprep.subr.bf16.mxu0 0
      %5115 = vmatpush1.bf16.msra.mxu0 0
      %5116 = vmatprep.subr.bf16.mxu0 0
      %5117 = vmatpush1.bf16.msra.mxu0 0
      %5118 = vmatprep.subr.bf16.mxu0 0
      %5119 = vmatpush1.bf16.msra.mxu0 0
      %5120 = vmatprep.subr.bf16.mxu0 0
      %5121 = vmatpush1.bf16.msra.mxu0 0
      %5122 = vmatprep.subr.bf16.mxu0 0
      %5123 = vmatpush1.bf16.msra.mxu0 0
      %5124 = vmatprep.subr.bf16.mxu0 0
      %5125 = vmatpush1.bf16.msra.mxu0 0
      %5126 = vmatprep.subr.bf16.mxu0 0
      %5127 = vmatpush1.bf16.msra.mxu0 0
      %5128 = vmatprep.mubr.bf16.mxu0 0
      %5129 = vmatmul.mubr.bf16.gmra.mrb[0].mxu0 %v5002
      %v5130 = vpop.f32.mrb[0].mxu0
      %v5131 = vadd.f32 0.0, %v5130
      %v5132 = vpop.f32.mrb[0].mxu0
      %v5133 = vpop.f32.mrb[0].mxu0
      %v5134 = vpop.f32.mrb[0].mxu0
      %5135 = vdwg.mxu0
      %v5136 = vadd.f32 %v5095, %v5131
      %v5137 = vtanh.pop %v5136
      %v5138 = vld [vmem:[%s1740 + $0x18] sm:$0xff]
      %5139 = vmatprep.subr.bf16.mxu0 0
      %5140 = vmatpush1.bf16.msra.mxu0 %v2125
      %5141 = vmatprep.subr.bf16.mxu0 0
      %5142 = vmatpush1.bf16.msra.mxu0 %v2126
      %5143 = vmatprep.subr.bf16.mxu0 0
      %5144 = vmatpush1.bf16.msra.mxu0 %v2127
      %5145 = vmatprep.subr.bf16.mxu0 0
      %5146 = vmatpush1.bf16.msra.mxu0 %v2128
      %5147 = vmatprep.subr.bf16.mxu0 0
      %5148 = vmatpush1.bf16.msra.mxu0 %v2129
      %5149 = vmatprep.subr.bf16.mxu0 0
      %5150 = vmatpush1.bf16.msra.mxu0 %v2130
      %5151 = vmatprep.subr.bf16.mxu0 0
      %5152 = vmatpush1.bf16.msra.mxu0 %v2131
      %5153 = vmatprep.subr.bf16.mxu0 0
      %5154 = vmatpush1.bf16.msra.mxu0 %v2132
      %5155 = vmatprep.subr.bf16.mxu0 0
      %5156 = vmatpush1.bf16.msra.mxu0 0
      %5157 = vmatprep.subr.bf16.mxu0 0
      %5158 = vmatpush1.bf16.msra.mxu0 0
      %5159 = vmatprep.subr.bf16.mxu0 0
      %5160 = vmatpush1.bf16.msra.mxu0 0
      %5161 = vmatprep.subr.bf16.mxu0 0
      %5162 = vmatpush1.bf16.msra.mxu0 0
      %5163 = vmatprep.subr.bf16.mxu0 0
      %5164 = vmatpush1.bf16.msra.mxu0 0
      %5165 = vmatprep.subr.bf16.mxu0 0
      %5166 = vmatpush1.bf16.msra.mxu0 0
      %5167 = vmatprep.subr.bf16.mxu0 0
      %5168 = vmatpush1.bf16.msra.mxu0 0
      %5169 = vmatprep.subr.bf16.mxu0 0
      %5170 = vmatpush1.bf16.msra.mxu0 0
      %5171 = vmatprep.mubr.bf16.mxu0 0
      %5172 = vmatmul.mubr.bf16.gmra.mrb[0].mxu0 %v5002
      %v5173 = vpop.f32.mrb[0].mxu0
      %v5174 = vadd.f32 0.0, %v5173
      %v5175 = vpop.f32.mrb[0].mxu0
      %v5176 = vpop.f32.mrb[0].mxu0
      %v5177 = vpop.f32.mrb[0].mxu0
      %5178 = vdwg.mxu0
      %v5179 = vadd.f32 %v5138, %v5174
      %v5180 = vmul.f32 %v5179, 0.5
      %v5181 = vtanh.pop %v5180
      %v5182 = vmul.f32 %v5181, 0.5
      %v5183 = vadd.f32 %v5182, 0.5
      %v5184 = vmul.f32 %v5094, %v4998
      %v5185 = vmul.f32 %v5048, %v5137
      %v5186 = vadd.f32 %v5184, %v5185
      %v5187 = vtanh.pop %v5186
      %v5188 = vmul.f32 %v5183, %v5187
      %s5189 = sadd.s32 %s83, 15
      %v5190 = vstv %s5189
      %vm5191 = vcmp.lt.s32.totalorder %v5190, %v1745
      %v5192 = vsel %vm5191, 1, 0
      %5193 = vset.pattern.permute.xlu0 0
      %5194 = vperm.xlu0 %5193, %v5192
      %v5195 = vpop.permute.xlu0 %5194
      %vm5196 = vcmp.eq.s32.totalorder %v5195, 1
      %v5197 = vsel %vm5196, %v5188, %v4997
      %v5198 = vsel %vm5196, %v5186, %v4998
      %v5199 = vsel %vm5196, %v5188, 0.0
      %s5200 = scalar_lea.vmem [#allocation13], 120
      %5201 = vst [vmem:[%s5200] sm:$0xff] %v5199
      %5202 = vst [vmem:[#allocation3] sm:$0xff] %v5197
      %5203 = vst [vmem:[#allocation4] sm:$0xff] %v5198
    $region53: #{tpu_custom_call.1} parent=1 // pred_fallthru
      _
    // Predicated region
    $region54: #{tpu_custom_call.1} parent=1 // pred_check
      %p5204 = pneg %p75
    $region55: #{tpu_custom_call.1} parent=1 // pred_check_branch
      %5206 = sbr.rel (%p5204) target = $region57
    $region56: #{tpu_custom_call.1} parent=1 // pred_region
      %v5207 = vld [vmem:[#allocation3] sm:$0xff]
      %5208 = vst [vmem:[#allocation14] sm:$0xff] %v5207
      %v5209 = vld [vmem:[#allocation4] sm:$0xff]
      %5210 = vst [vmem:[#allocation16] sm:$0xff] %v5209
    $region57: #{tpu_custom_call.1} parent=1 // pred_fallthru
      _
    // Predicated region
    $region58: #{tpu_custom_call.1} parent=1 // pred_check
      _
    $region59: #{tpu_custom_call.1} parent=1 // pred_check_branch
      %5212 = sbr.rel (0) target = $region61
    $region60: #{tpu_custom_call.1} parent=1 // pred_region
      %s5214 = ssub.s32 2048, 2048
      %5215 = vsyncadd [#allocation9], %s5214
      %s5216 = sshll.u32 [#allocation13], 4
      %s5217 = int_to_ptr.vmem [resolvable:$true] %s5216
      %5222 = dma.vmem_to_hbm [thread:$0]  %s5217, 2048, %s8, [#allocation9], 128, 128, 8
    $region61: #{tpu_custom_call.1} parent=1 // pred_fallthru
      _
    // Predicated region
    $region62: #{tpu_custom_call.1} parent=1 // pred_check
      _
    $region63: #{tpu_custom_call.1} parent=1 // pred_check_branch
      %5224 = sbr.rel (0) target = $region65
    $region64: #{tpu_custom_call.1} parent=1 // pred_region
      %s5226 = ssub.s32 128, 128
      %5227 = vsyncadd [#allocation15], %s5226
      %s5229 = sshll.u32 [#allocation14], 4
      %s5230 = int_to_ptr.vmem [resolvable:$true] %s5229
      %5232 = dma.vmem_to_hbm [thread:$0]  %s5230, 128, %s9, [#allocation15]
    $region65: #{tpu_custom_call.1} parent=1 // pred_fallthru
      _
    // Predicated region
    $region66: #{tpu_custom_call.1} parent=1 // pred_check
      _
    $region67: #{tpu_custom_call.1} parent=1 // pred_check_branch
      %5234 = sbr.rel (0) target = $region69
    $region68: #{tpu_custom_call.1} parent=1 // pred_region
      %s5236 = ssub.s32 128, 128
      %5237 = vsyncadd [#allocation15], %s5236
      %s5239 = sshll.u32 [#allocation16], 4
      %s5240 = int_to_ptr.vmem [resolvable:$true] %s5239
      %5242 = dma.vmem_to_hbm [thread:$0]  %s5240, 128, %s10, [#allocation15]
    $region69: #{tpu_custom_call.1} parent=1 // pred_fallthru
      _
    // Predicated region
    $region70: #{tpu_custom_call.1} parent=1 // pred_check
      _
    $region71: #{tpu_custom_call.1} parent=1 // pred_check_branch
      %5244 = sbr.rel (0) target = $region73
    $region72: #{tpu_custom_call.1} parent=1 // pred_region
      %5245 = dma.done [#allocation9], 2048
    $region73: #{tpu_custom_call.1} parent=1 // pred_fallthru
      _
    // Predicated region
    $region74: #{tpu_custom_call.1} parent=1 // pred_check
      _
    $region75: #{tpu_custom_call.1} parent=1 // pred_check_branch
      %5247 = sbr.rel (0) target = $region77
    $region76: #{tpu_custom_call.1} parent=1 // pred_region
      %5248 = dma.done [#allocation15], 128
    $region77: #{tpu_custom_call.1} parent=1 // pred_fallthru
      _
    // Predicated region
    $region78: #{tpu_custom_call.1} parent=1 // pred_check
      _
    $region79: #{tpu_custom_call.1} parent=1 // pred_check_branch
      %5250 = sbr.rel (0) target = $region81
    $region80: #{tpu_custom_call.1} parent=1 // pred_region
      %5251 = dma.done [#allocation15], 128
    $region81: #{tpu_custom_call.1} parent=1 // pred_fallthru
      _
    %5252 = vsyncpa [#allocation8], 1
    %5253 = vsyncpa [#allocation11], 1
    %5254 = vsyncpa [#allocation9], 1
    %5255 = vsyncpa [#allocation15], 1

</llo_original>
